<compile_context>
chip_gen: v7x
topology: tpu7x:2x2x1
jax: 0.10.0
libtpu: 0.0.40
codegen_flags: <defaults>
</compile_context>

<pallas_src>
import functools

import numpy as np
import jax
import jax.numpy as jnp
from jax.experimental import pallas as pl
from jax.experimental.pallas import tpu as pltpu

LANE = 128
# Footprint per kernel is < 4 MiB, so 32 MiB is safe on every generation
# (v5e/v6e: 128 MiB physical, v7x: 64 MiB shared by 2 TCs — keep <= ~48 MiB).
_VMEM_LIMIT = 32 * 1024 * 1024


def _round_up(v, m):
    return ((v + m - 1) // m) * m


# ---------------------------------------------------------------------------
# Conv layer: channels-last im2col (one fused XLA gather) + Pallas matmul.
#   out[b] = relu(patches[b] @ Wt + bias)
#   patches[b]: (OH*OW, Cin*KH*KW) bf16   Wt: (Cin*KH*KW, Cout) bf16 (resident)
#   bias: (1, Cout) f32                   out[b]: (OH*OW, Cout) bf16
# Cout sits on the lane axis; no Cout padding, no inter-layer slices.
# ---------------------------------------------------------------------------
def _conv_mm_kernel(p_ref, w_ref, b_ref, o_ref):
    acc = jnp.dot(p_ref[...], w_ref[...], preferred_element_type=jnp.float32)
    o_ref[...] = jnp.maximum(acc + b_ref[...], 0.0).astype(o_ref.dtype)


def conv2d_relu(x, wt, bias, *, ksz, stride, padding, input_layout):
    """x: (N,C,H,W) if input_layout=='NCHW' else (N,H,W,C), bf16.
    wt: (Cin*KH*KW, Cout) bf16 with rows ordered (cin, kh, kw), i.e. the
    PyTorch weight.reshape(Cout, -1).T.  Returns (N, OH, OW, Cout) bf16."""
    ckk, cout = wt.shape
    n = x.shape[0]

    # conv_general_dilated_patches orders the patch-feature dim (cin, kh, kw)
    # (channel-major) independent of the lhs layout, which matches
    # weight.reshape(cout, -1); verified numerically in __main__.
    patches = jax.lax.conv_general_dilated_patches(
        x, filter_shape=(ksz, ksz), window_strides=(stride, stride),
        padding=((padding, padding), (padding, padding)),
        dimension_numbers=(input_layout, "OIHW", "NHWC"),
    )  # (N, OH, OW, Cin*KH*KW)
    assert patches.shape[-1] == ckk, (patches.shape, ckk)
    _, oh, ow, _ = patches.shape
    ohow = oh * ow
    patches = patches.reshape(n, ohow, ckk)

    out = pl.pallas_call(
        _conv_mm_kernel,
        out_shape=jax.ShapeDtypeStruct((n, ohow, cout), jnp.bfloat16),
        grid=(n,),
        in_specs=[
            pl.BlockSpec((None, ohow, ckk), lambda b: (b, 0, 0)),  # patches
            pl.BlockSpec((ckk, cout), lambda b: (0, 0)),           # weight
            pl.BlockSpec((1, cout), lambda b: (0, 0)),             # bias
        ],
        out_specs=pl.BlockSpec((None, ohow, cout), lambda b: (b, 0, 0)),
        compiler_params=pltpu.CompilerParams(
            dimension_semantics=("parallel",),
            vmem_limit_bytes=_VMEM_LIMIT,
        ),
    )(patches, wt, bias)
    return out.reshape(n, oh, ow, cout)


# ---------------------------------------------------------------------------
# Fused fc1 + fc2 head: y = relu(x @ W1 + b1) @ W2 + b2
# Hidden dim (512) split into two independent 256-wide chunks; each grid step
# produces a partial Q-value row, summed in a tiny XLA epilogue.  The chunk
# axis is "parallel" so both v7x TensorCores each stream half of W1; 256-wide
# tiles fill the 256-wide MXU on v6e/v7x (no downside on v5e).
# ---------------------------------------------------------------------------
def _fc_head_kernel(x_ref, w1_ref, b1_ref, w2_ref, b2_ref, o_ref):
    h = jnp.dot(x_ref[...], w1_ref[...], preferred_element_type=jnp.float32)
    h = jnp.maximum(h + b1_ref[...], 0.0)
    out = jnp.dot(h.astype(jnp.bfloat16), w2_ref[...],
                  preferred_element_type=jnp.float32)
    # Add the fc2 bias exactly once (chunk 0).
    first = (pl.program_id(0) == 0).astype(jnp.float32)
    o_ref[...] = out + first * b2_ref[...]


def fc_head(x, w1, b1, w2, b2, num_actions, *, tn=256):
    """x: (N, 3136) bf16 (channels-last flatten).  w1: (3136, 512) bf16,
    rows pre-permuted to (h, w, c) order.  b1: (1, 512) f32.
    w2: (512, AP) bf16 (pre-transposed, lane-padded).  b2: (1, AP) f32."""
    n, k1 = x.shape
    _, hidden = w1.shape
    _, ap = w2.shape
    assert hidden % tn == 0
    n_chunks = hidden // tn

    parts = pl.pallas_call(
        _fc_head_kernel,
        out_shape=jax.ShapeDtypeStruct((n_chunks, n, ap), jnp.float32),
        grid=(n_chunks,),
        in_specs=[
            pl.BlockSpec((n, k1), lambda j: (0, 0)),     # x (tiny, resident)
            pl.BlockSpec((k1, tn), lambda j: (0, j)),    # W1 column chunk
            pl.BlockSpec((1, tn), lambda j: (0, j)),     # b1 chunk
            pl.BlockSpec((tn, ap), lambda j: (j, 0)),    # W2 row chunk
            pl.BlockSpec((1, ap), lambda j: (0, 0)),     # b2
        ],
        out_specs=pl.BlockSpec((None, n, ap), lambda j: (j, 0, 0)),
        compiler_params=pltpu.CompilerParams(
            dimension_semantics=("parallel",),
            vmem_limit_bytes=_VMEM_LIMIT,
        ),
    )(x, w1, b1, w2, b2)
    # Tiny epilogue: sum the two independent hidden halves, drop lane padding.
    return parts.sum(axis=0)[:, :num_actions]


# ---------------------------------------------------------------------------
# Parameters: PyTorch-layout f32 masters + one-time kernel-layout transform.
# ---------------------------------------------------------------------------
def init_torch_params(key, in_channels, num_actions):
    """f32 parameters in PyTorch layout, matching NN_VFA._init_weights:
    conv N(0, sqrt(2/(k^2*Cin))), linear N(0, 0.15), biases zero."""
    k1, k2, k3, k4, k5 = jax.random.split(key, 5)

    def conv_w(k, cout, cin, ksz):
        std = (2.0 / (ksz * ksz * cin)) ** 0.5
        return std * jax.random.normal(k, (cout, cin, ksz, ksz), jnp.float32)

    return {
        "c1_w": conv_w(k1, 32, in_channels, 8),
        "c1_b": jnp.zeros((32,), jnp.float32),
        "c2_w": conv_w(k2, 64, 32, 4),
        "c2_b": jnp.zeros((64,), jnp.float32),
        "c3_w": conv_w(k3, 64, 64, 3),
        "c3_b": jnp.zeros((64,), jnp.float32),
        "fc1_w": 0.15 * jax.random.normal(k4, (512, 3136), jnp.float32),
        "fc1_b": jnp.zeros((512,), jnp.float32),
        "fc2_w": 0.15 * jax.random.normal(k5, (num_actions, 512), jnp.float32),
        "fc2_b": jnp.zeros((num_actions,), jnp.float32),
    }


def prepare_params(tp, num_actions):
    """One-time transform to kernel layout: conv weights (Cin*KH*KW, Cout)
    bf16 (no Cout padding), biases as (1, Cout) f32 rows, fc1 transposed with
    its input rows permuted (c,h,w)->(h,w,c) for channels-last Flatten parity,
    fc2 transposed + lane-padded to 128."""
    ap = _round_up(num_actions, LANE)

    def conv(w, b):
        cout = w.shape[0]
        wt = w.reshape(cout, -1).T.astype(jnp.bfloat16)       # (CKK, Cout)
        return wt, b.reshape(1, cout).astype(jnp.float32)

    c1_w, c1_b = conv(tp["c1_w"], tp["c1_b"])
    c2_w, c2_b = conv(tp["c2_w"], tp["c2_b"])
    c3_w, c3_b = conv(tp["c3_w"], tp["c3_b"])

    # fc1: (512, 3136) -> (3136, 512) with rows reordered (c,h,w) -> (h,w,c).
    assert tp["fc1_w"].shape == (512, 3136)
    w1 = (tp["fc1_w"].T.reshape(64, 7, 7, 512)
          .transpose(1, 2, 0, 3).reshape(3136, 512))
    fc1_w = w1.astype(jnp.bfloat16)
    fc1_b = tp["fc1_b"].reshape(1, 512).astype(jnp.float32)

    # fc2: (A, 512) -> (512, A_pad) for a lane-dense (128-wide) output.
    fc2_w = jnp.pad(tp["fc2_w"].T,
                    ((0, 0), (0, ap - num_actions))).astype(jnp.bfloat16)
    fc2_b = jnp.pad(tp["fc2_b"],
                    (0, ap - num_actions)).reshape(1, ap).astype(jnp.float32)

    return {"c1_w": c1_w, "c1_b": c1_b, "c2_w": c2_w, "c2_b": c2_b,
            "c3_w": c3_w, "c3_b": c3_b, "fc1_w": fc1_w, "fc1_b": fc1_b,
            "fc2_w": fc2_w, "fc2_b": fc2_b}


def nn_vfa_forward(params, x_nchw, *, num_actions):
    """x_nchw: (N, C*history, 84, 84), exactly like the PyTorch module.
    bf16 MXU operands with f32 accumulation / f32 elementwise (v5e-safe)."""
    x = x_nchw.astype(jnp.bfloat16)
    # conv1 consumes the NCHW input directly; its im2col emits channels-last.
    x = conv2d_relu(x, params["c1_w"], params["c1_b"],
                    ksz=8, stride=4, padding=2, input_layout="NCHW")
    x = conv2d_relu(x, params["c2_w"], params["c2_b"],
                    ksz=4, stride=2, padding=0, input_layout="NHWC")
    x = conv2d_relu(x, params["c3_w"], params["c3_b"],
                    ksz=3, stride=1, padding=0, input_layout="NHWC")
    n = x.shape[0]
    x = x.reshape(n, -1)          # (N, 3136) in (h, w, c) order
    return fc_head(x, params["fc1_w"], params["fc1_b"],
                   params["fc2_w"], params["fc2_b"], num_actions)


# ---------------------------------------------------------------------------
# Pure-XLA f32 reference of the PyTorch module (for the parity check).
# ---------------------------------------------------------------------------
def reference_forward(tp, x_nchw):
    def conv(x, w, b, stride, pad):
        y = jax.lax.conv_general_dilated(
            x, w, window_strides=(stride, stride),
            padding=((pad, pad), (pad, pad)),
            dimension_numbers=("NCHW", "OIHW", "NCHW"))
        return jax.nn.relu(y + b.reshape(1, -1, 1, 1))

    x = conv(x_nchw, tp["c1_w"], tp["c1_b"], 4, 2)
    x = conv(x, tp["c2_w"], tp["c2_b"], 2, 0)
    x = conv(x, tp["c3_w"], tp["c3_b"], 1, 0)
    x = x.reshape(x.shape[0], -1)                       # NCHW flatten (c,h,w)
    x = jax.nn.relu(x @ tp["fc1_w"].T + tp["fc1_b"])
    return x @ tp["fc2_w"].T + tp["fc2_b"]


if __name__ == "__main__":
    # The module hard-codes Linear(3136, 512) => the conv stack must output
    # 64*7*7, which pins the input frames to 84x84 (classic Atari).
    batch = 2
    n_channels, history = 1, 4          # -> 4 input channels
    img_h = img_w = 84
    num_actions = 6

    key = jax.random.PRNGKey(0)
    pkey, xkey = jax.random.split(key)
    torch_params = init_torch_params(pkey, n_channels * history, num_actions)
    params = prepare_params(torch_params, num_actions)
    x = jax.random.uniform(xkey, (batch, n_channels * history, img_h, img_w),
                           dtype=jnp.float32)

    fwd = jax.jit(functools.partial(nn_vfa_forward, num_actions=num_actions))
    q_values = fwd(params, x)
    jax.block_until_ready(q_values)
    assert q_values.shape == (batch, num_actions), q_values.shape

    # Parity check vs. the f32 reference with bf16-rounded weights/input, so
    # the comparison tests kernel structure (patch ordering, fc1 permutation)
    # rather than the bf16 quantization policy.
    tp_q = jax.tree_util.tree_map(
        lambda a: a.astype(jnp.bfloat16).astype(jnp.float32), torch_params)
    x_q = x.astype(jnp.bfloat16).astype(jnp.float32)
    ref = reference_forward(tp_q, x_q)
    np.testing.assert_allclose(np.asarray(q_values, dtype=np.float32),
                               np.asarray(ref), rtol=1e-1, atol=1e-1)
    print("KERNEL_OK")
</pallas_src>

<mosaic_0001>
module attributes {stable_mosaic.version = 11 : i64} {
  func.func @_conv_mm_kernel(%arg0: i32, %arg1: memref<1x441x256xbf16, #tpu.memory_space<vmem>>, %arg2: memref<256x32xbf16, #tpu.memory_space<vmem>>, %arg3: memref<1x32xf32, #tpu.memory_space<vmem>>, %arg4: memref<1x441x32xbf16, #tpu.memory_space<vmem>>) attributes {dimension_semantics = [#tpu.dimension_semantics<parallel>], iteration_bounds = array<i64: 2>, scalar_prefetch = 0 : i64, scratch_operands = 0 : i64, tpu.core_type = #tpu.core_type<tc>, window_params = [{transform_indices = @transform_0, window_bounds = array<i64: 1, 441, 256>}, {pipeline_mode = #tpu.pipeline_mode<synchronous>, transform_indices = @transform_1, window_bounds = array<i64: 256, 32>}, {pipeline_mode = #tpu.pipeline_mode<synchronous>, transform_indices = @transform_2, window_bounds = array<i64: 1, 32>}, {transform_indices = @transform_3, window_bounds = array<i64: 1, 441, 32>}]} {
    %c0 = arith.constant 0 : index
    %c0_0 = arith.constant 0 : index
    %c0_1 = arith.constant 0 : index
    %0 = vector.load %arg1[%c0, %c0_0, %c0_1] : memref<1x441x256xbf16, #tpu.memory_space<vmem>>, vector<1x441x256xbf16>
    %1 = vector.shape_cast %0 : vector<1x441x256xbf16> to vector<441x256xbf16>
    %c0_2 = arith.constant 0 : index
    %c0_3 = arith.constant 0 : index
    %2 = vector.load %arg2[%c0_2, %c0_3] : memref<256x32xbf16, #tpu.memory_space<vmem>>, vector<256x32xbf16>
    %cst = arith.constant dense<0.000000e+00> : vector<441x32xf32>
    %3 = tpu.matmul %1, %2, %cst {dimension_numbers = #tpu.dot_dimension_numbers<[1], [0], [0], [1], [0, 0, 1, 1], [], []>} : vector<441x256xbf16>, vector<256x32xbf16>, vector<441x32xf32> -> vector<441x32xf32>
    %c0_4 = arith.constant 0 : index
    %c0_5 = arith.constant 0 : index
    %4 = vector.load %arg3[%c0_4, %c0_5] : memref<1x32xf32, #tpu.memory_space<vmem>>, vector<1x32xf32>
    %5 = vector.broadcast %4 : vector<1x32xf32> to vector<441x32xf32>
    %6 = arith.addf %3, %5 : vector<441x32xf32>
    %cst_6 = arith.constant 0.000000e+00 : f32
    %7 = vector.broadcast %cst_6 : f32 to vector<441x32xf32>
    %8 = arith.maximumf %6, %7 : vector<441x32xf32>
    %9 = arith.truncf %8 : vector<441x32xf32> to vector<441x32xbf16>
    %c0_7 = arith.constant 0 : index
    %c0_8 = arith.constant 0 : index
    %c0_9 = arith.constant 0 : index
    %10 = vector.load %arg4[%c0_7, %c0_8, %c0_9] : memref<1x441x32xbf16, #tpu.memory_space<vmem>>, vector<1x441x32xbf16>
    %11 = vector.shape_cast %10 : vector<1x441x32xbf16> to vector<441x32xbf16>
    %12 = vector.shape_cast %9 : vector<441x32xbf16> to vector<1x441x32xbf16>
    tpu.vector_store %arg4[%c0_7, %c0_8, %c0_9], %12 {strides = array<i32>} : memref<1x441x32xbf16, #tpu.memory_space<vmem>>, vector<1x441x32xbf16>,
    return
  }
  func.func @transform_0(%arg0: i32) -> (i32, i32, i32) {
    %c0_i32 = arith.constant 0 : i32
    %c0_i32_0 = arith.constant 0 : i32
    %c0_i32_1 = arith.constant 0 : i32
    return %arg0, %c0_i32, %c0_i32_0 : i32, i32, i32
  }
  func.func @transform_1(%arg0: i32) -> (i32, i32) {
    %c0_i32 = arith.constant 0 : i32
    %c0_i32_0 = arith.constant 0 : i32
    %c0_i32_1 = arith.constant 0 : i32
    return %c0_i32, %c0_i32_0 : i32, i32
  }
  func.func @transform_2(%arg0: i32) -> (i32, i32) {
    %c0_i32 = arith.constant 0 : i32
    %c0_i32_0 = arith.constant 0 : i32
    %c0_i32_1 = arith.constant 0 : i32
    return %c0_i32, %c0_i32_0 : i32, i32
  }
  func.func @transform_3(%arg0: i32) -> (i32, i32, i32) {
    %c0_i32 = arith.constant 0 : i32
    %c0_i32_0 = arith.constant 0 : i32
    %c0_i32_1 = arith.constant 0 : i32
    return %arg0, %c0_i32, %c0_i32_0 : i32, i32, i32
  }
}

module attributes {stable_mosaic.version = 11 : i64} {
  func.func @_conv_mm_kernel(%arg0: i32, %arg1: memref<1x81x512xbf16, #tpu.memory_space<vmem>>, %arg2: memref<512x64xbf16, #tpu.memory_space<vmem>>, %arg3: memref<1x64xf32, #tpu.memory_space<vmem>>, %arg4: memref<1x81x64xbf16, #tpu.memory_space<vmem>>) attributes {dimension_semantics = [#tpu.dimension_semantics<parallel>], iteration_bounds = array<i64: 2>, scalar_prefetch = 0 : i64, scratch_operands = 0 : i64, tpu.core_type = #tpu.core_type<tc>, window_params = [{transform_indices = @transform_0, window_bounds = array<i64: 1, 81, 512>}, {pipeline_mode = #tpu.pipeline_mode<synchronous>, transform_indices = @transform_1, window_bounds = array<i64: 512, 64>}, {pipeline_mode = #tpu.pipeline_mode<synchronous>, transform_indices = @transform_2, window_bounds = array<i64: 1, 64>}, {transform_indices = @transform_3, window_bounds = array<i64: 1, 81, 64>}]} {
    %c0 = arith.constant 0 : index
    %c0_0 = arith.constant 0 : index
    %c0_1 = arith.constant 0 : index
    %0 = vector.load %arg1[%c0, %c0_0, %c0_1] : memref<1x81x512xbf16, #tpu.memory_space<vmem>>, vector<1x81x512xbf16>
    %1 = vector.shape_cast %0 : vector<1x81x512xbf16> to vector<81x512xbf16>
    %c0_2 = arith.constant 0 : index
    %c0_3 = arith.constant 0 : index
    %2 = vector.load %arg2[%c0_2, %c0_3] : memref<512x64xbf16, #tpu.memory_space<vmem>>, vector<512x64xbf16>
    %cst = arith.constant dense<0.000000e+00> : vector<81x64xf32>
    %3 = tpu.matmul %1, %2, %cst {dimension_numbers = #tpu.dot_dimension_numbers<[1], [0], [0], [1], [0, 0, 1, 1], [], []>} : vector<81x512xbf16>, vector<512x64xbf16>, vector<81x64xf32> -> vector<81x64xf32>
    %c0_4 = arith.constant 0 : index
    %c0_5 = arith.constant 0 : index
    %4 = vector.load %arg3[%c0_4, %c0_5] : memref<1x64xf32, #tpu.memory_space<vmem>>, vector<1x64xf32>
    %5 = vector.broadcast %4 : vector<1x64xf32> to vector<81x64xf32>
    %6 = arith.addf %3, %5 : vector<81x64xf32>
    %cst_6 = arith.constant 0.000000e+00 : f32
    %7 = vector.broadcast %cst_6 : f32 to vector<81x64xf32>
    %8 = arith.maximumf %6, %7 : vector<81x64xf32>
    %9 = arith.truncf %8 : vector<81x64xf32> to vector<81x64xbf16>
    %c0_7 = arith.constant 0 : index
    %c0_8 = arith.constant 0 : index
    %c0_9 = arith.constant 0 : index
    %10 = vector.load %arg4[%c0_7, %c0_8, %c0_9] : memref<1x81x64xbf16, #tpu.memory_space<vmem>>, vector<1x81x64xbf16>
    %11 = vector.shape_cast %10 : vector<1x81x64xbf16> to vector<81x64xbf16>
    %12 = vector.shape_cast %9 : vector<81x64xbf16> to vector<1x81x64xbf16>
    tpu.vector_store %arg4[%c0_7, %c0_8, %c0_9], %12 {strides = array<i32>} : memref<1x81x64xbf16, #tpu.memory_space<vmem>>, vector<1x81x64xbf16>,
    return
  }
  func.func @transform_0(%arg0: i32) -> (i32, i32, i32) {
    %c0_i32 = arith.constant 0 : i32
    %c0_i32_0 = arith.constant 0 : i32
    %c0_i32_1 = arith.constant 0 : i32
    return %arg0, %c0_i32, %c0_i32_0 : i32, i32, i32
  }
  func.func @transform_1(%arg0: i32) -> (i32, i32) {
    %c0_i32 = arith.constant 0 : i32
    %c0_i32_0 = arith.constant 0 : i32
    %c0_i32_1 = arith.constant 0 : i32
    return %c0_i32, %c0_i32_0 : i32, i32
  }
  func.func @transform_2(%arg0: i32) -> (i32, i32) {
    %c0_i32 = arith.constant 0 : i32
    %c0_i32_0 = arith.constant 0 : i32
    %c0_i32_1 = arith.constant 0 : i32
    return %c0_i32, %c0_i32_0 : i32, i32
  }
  func.func @transform_3(%arg0: i32) -> (i32, i32, i32) {
    %c0_i32 = arith.constant 0 : i32
    %c0_i32_0 = arith.constant 0 : i32
    %c0_i32_1 = arith.constant 0 : i32
    return %arg0, %c0_i32, %c0_i32_0 : i32, i32, i32
  }
}

module attributes {stable_mosaic.version = 11 : i64} {
  func.func @_conv_mm_kernel(%arg0: i32, %arg1: memref<1x49x576xbf16, #tpu.memory_space<vmem>>, %arg2: memref<576x64xbf16, #tpu.memory_space<vmem>>, %arg3: memref<1x64xf32, #tpu.memory_space<vmem>>, %arg4: memref<1x49x64xbf16, #tpu.memory_space<vmem>>) attributes {dimension_semantics = [#tpu.dimension_semantics<parallel>], iteration_bounds = array<i64: 2>, scalar_prefetch = 0 : i64, scratch_operands = 0 : i64, tpu.core_type = #tpu.core_type<tc>, window_params = [{transform_indices = @transform_0, window_bounds = array<i64: 1, 49, 576>}, {pipeline_mode = #tpu.pipeline_mode<synchronous>, transform_indices = @transform_1, window_bounds = array<i64: 576, 64>}, {pipeline_mode = #tpu.pipeline_mode<synchronous>, transform_indices = @transform_2, window_bounds = array<i64: 1, 64>}, {transform_indices = @transform_3, window_bounds = array<i64: 1, 49, 64>}]} {
    %c0 = arith.constant 0 : index
    %c0_0 = arith.constant 0 : index
    %c0_1 = arith.constant 0 : index
    %0 = vector.load %arg1[%c0, %c0_0, %c0_1] : memref<1x49x576xbf16, #tpu.memory_space<vmem>>, vector<1x49x576xbf16>
    %1 = vector.shape_cast %0 : vector<1x49x576xbf16> to vector<49x576xbf16>
    %c0_2 = arith.constant 0 : index
    %c0_3 = arith.constant 0 : index
    %2 = vector.load %arg2[%c0_2, %c0_3] : memref<576x64xbf16, #tpu.memory_space<vmem>>, vector<576x64xbf16>
    %cst = arith.constant dense<0.000000e+00> : vector<49x64xf32>
    %3 = tpu.matmul %1, %2, %cst {dimension_numbers = #tpu.dot_dimension_numbers<[1], [0], [0], [1], [0, 0, 1, 1], [], []>} : vector<49x576xbf16>, vector<576x64xbf16>, vector<49x64xf32> -> vector<49x64xf32>
    %c0_4 = arith.constant 0 : index
    %c0_5 = arith.constant 0 : index
    %4 = vector.load %arg3[%c0_4, %c0_5] : memref<1x64xf32, #tpu.memory_space<vmem>>, vector<1x64xf32>
    %5 = vector.broadcast %4 : vector<1x64xf32> to vector<49x64xf32>
    %6 = arith.addf %3, %5 : vector<49x64xf32>
    %cst_6 = arith.constant 0.000000e+00 : f32
    %7 = vector.broadcast %cst_6 : f32 to vector<49x64xf32>
    %8 = arith.maximumf %6, %7 : vector<49x64xf32>
    %9 = arith.truncf %8 : vector<49x64xf32> to vector<49x64xbf16>
    %c0_7 = arith.constant 0 : index
    %c0_8 = arith.constant 0 : index
    %c0_9 = arith.constant 0 : index
    %10 = vector.load %arg4[%c0_7, %c0_8, %c0_9] : memref<1x49x64xbf16, #tpu.memory_space<vmem>>, vector<1x49x64xbf16>
    %11 = vector.shape_cast %10 : vector<1x49x64xbf16> to vector<49x64xbf16>
    %12 = vector.shape_cast %9 : vector<49x64xbf16> to vector<1x49x64xbf16>
    tpu.vector_store %arg4[%c0_7, %c0_8, %c0_9], %12 {strides = array<i32>} : memref<1x49x64xbf16, #tpu.memory_space<vmem>>, vector<1x49x64xbf16>,
    return
  }
  func.func @transform_0(%arg0: i32) -> (i32, i32, i32) {
    %c0_i32 = arith.constant 0 : i32
    %c0_i32_0 = arith.constant 0 : i32
    %c0_i32_1 = arith.constant 0 : i32
    return %arg0, %c0_i32, %c0_i32_0 : i32, i32, i32
  }
  func.func @transform_1(%arg0: i32) -> (i32, i32) {
    %c0_i32 = arith.constant 0 : i32
    %c0_i32_0 = arith.constant 0 : i32
    %c0_i32_1 = arith.constant 0 : i32
    return %c0_i32, %c0_i32_0 : i32, i32
  }
  func.func @transform_2(%arg0: i32) -> (i32, i32) {
    %c0_i32 = arith.constant 0 : i32
    %c0_i32_0 = arith.constant 0 : i32
    %c0_i32_1 = arith.constant 0 : i32
    return %c0_i32, %c0_i32_0 : i32, i32
  }
  func.func @transform_3(%arg0: i32) -> (i32, i32, i32) {
    %c0_i32 = arith.constant 0 : i32
    %c0_i32_0 = arith.constant 0 : i32
    %c0_i32_1 = arith.constant 0 : i32
    return %arg0, %c0_i32, %c0_i32_0 : i32, i32, i32
  }
}

module attributes {stable_mosaic.version = 11 : i64} {
  func.func @_fc_head_kernel(%arg0: i32, %arg1: memref<2x3136xbf16, #tpu.memory_space<vmem>>, %arg2: memref<3136x256xbf16, #tpu.memory_space<vmem>>, %arg3: memref<1x256xf32, #tpu.memory_space<vmem>>, %arg4: memref<256x128xbf16, #tpu.memory_space<vmem>>, %arg5: memref<1x128xf32, #tpu.memory_space<vmem>>, %arg6: memref<1x2x128xf32, #tpu.memory_space<vmem>>) attributes {dimension_semantics = [#tpu.dimension_semantics<parallel>], iteration_bounds = array<i64: 2>, scalar_prefetch = 0 : i64, scratch_operands = 0 : i64, tpu.core_type = #tpu.core_type<tc>, window_params = [{pipeline_mode = #tpu.pipeline_mode<synchronous>, transform_indices = @transform_0, window_bounds = array<i64: 2, 3136>}, {transform_indices = @transform_1, window_bounds = array<i64: 3136, 256>}, {transform_indices = @transform_2, window_bounds = array<i64: 1, 256>}, {transform_indices = @transform_3, window_bounds = array<i64: 256, 128>}, {pipeline_mode = #tpu.pipeline_mode<synchronous>, transform_indices = @transform_4, window_bounds = array<i64: 1, 128>}, {transform_indices = @transform_5, window_bounds = array<i64: 1, 2, 128>}]} {
    %c0 = arith.constant 0 : index
    %c0_0 = arith.constant 0 : index
    %0 = vector.load %arg1[%c0, %c0_0] : memref<2x3136xbf16, #tpu.memory_space<vmem>>, vector<2x3136xbf16>
    %c0_1 = arith.constant 0 : index
    %c0_2 = arith.constant 0 : index
    %1 = vector.load %arg2[%c0_1, %c0_2] : memref<3136x256xbf16, #tpu.memory_space<vmem>>, vector<3136x256xbf16>
    %cst = arith.constant dense<0.000000e+00> : vector<2x256xf32>
    %2 = tpu.matmul %0, %1, %cst {dimension_numbers = #tpu.dot_dimension_numbers<[1], [0], [0], [1], [0, 0, 1, 1], [], []>} : vector<2x3136xbf16>, vector<3136x256xbf16>, vector<2x256xf32> -> vector<2x256xf32>
    %c0_3 = arith.constant 0 : index
    %c0_4 = arith.constant 0 : index
    %3 = vector.load %arg3[%c0_3, %c0_4] : memref<1x256xf32, #tpu.memory_space<vmem>>, vector<1x256xf32>
    %4 = vector.broadcast %3 : vector<1x256xf32> to vector<2x256xf32>
    %5 = arith.addf %2, %4 : vector<2x256xf32>
    %cst_5 = arith.constant 0.000000e+00 : f32
    %6 = vector.broadcast %cst_5 : f32 to vector<2x256xf32>
    %7 = arith.maximumf %5, %6 : vector<2x256xf32>
    %8 = arith.truncf %7 : vector<2x256xf32> to vector<2x256xbf16>
    %c0_6 = arith.constant 0 : index
    %c0_7 = arith.constant 0 : index
    %9 = vector.load %arg4[%c0_6, %c0_7] : memref<256x128xbf16, #tpu.memory_space<vmem>>, vector<256x128xbf16>
    %cst_8 = arith.constant dense<0.000000e+00> : vector<2x128xf32>
    %10 = tpu.matmul %8, %9, %cst_8 {dimension_numbers = #tpu.dot_dimension_numbers<[1], [0], [0], [1], [0, 0, 1, 1], [], []>} : vector<2x256xbf16>, vector<256x128xbf16>, vector<2x128xf32> -> vector<2x128xf32>
    %c0_i32 = arith.constant 0 : i32
    %11 = arith.cmpi eq, %arg0, %c0_i32 : i32
    %12 = arith.extui %11 : i1 to i32
    %13 = arith.sitofp %12 : i32 to f32
    %c0_9 = arith.constant 0 : index
    %c0_10 = arith.constant 0 : index
    %14 = vector.load %arg5[%c0_9, %c0_10] : memref<1x128xf32, #tpu.memory_space<vmem>>, vector<1x128xf32>
    %15 = vector.broadcast %13 : f32 to vector<1x128xf32>
    %16 = arith.mulf %15, %14 : vector<1x128xf32>
    %17 = vector.broadcast %16 : vector<1x128xf32> to vector<2x128xf32>
    %18 = arith.addf %10, %17 : vector<2x128xf32>
    %c0_11 = arith.constant 0 : index
    %c0_12 = arith.constant 0 : index
    %c0_13 = arith.constant 0 : index
    %19 = vector.load %arg6[%c0_11, %c0_12, %c0_13] : memref<1x2x128xf32, #tpu.memory_space<vmem>>, vector<1x2x128xf32>
    %20 = vector.shape_cast %19 : vector<1x2x128xf32> to vector<2x128xf32>
    %21 = vector.shape_cast %18 : vector<2x128xf32> to vector<1x2x128xf32>
    tpu.vector_store %arg6[%c0_11, %c0_12, %c0_13], %21 {strides = array<i32>} : memref<1x2x128xf32, #tpu.memory_space<vmem>>, vector<1x2x128xf32>,
    return
  }
  func.func @transform_0(%arg0: i32) -> (i32, i32) {
    %c0_i32 = arith.constant 0 : i32
    %c0_i32_0 = arith.constant 0 : i32
    %c0_i32_1 = arith.constant 0 : i32
    return %c0_i32, %c0_i32_0 : i32, i32
  }
  func.func @transform_1(%arg0: i32) -> (i32, i32) {
    %c0_i32 = arith.constant 0 : i32
    %c0_i32_0 = arith.constant 0 : i32
    return %c0_i32, %arg0 : i32, i32
  }
  func.func @transform_2(%arg0: i32) -> (i32, i32) {
    %c0_i32 = arith.constant 0 : i32
    %c0_i32_0 = arith.constant 0 : i32
    return %c0_i32, %arg0 : i32, i32
  }
  func.func @transform_3(%arg0: i32) -> (i32, i32) {
    %c0_i32 = arith.constant 0 : i32
    %c0_i32_0 = arith.constant 0 : i32
    return %arg0, %c0_i32 : i32, i32
  }
  func.func @transform_4(%arg0: i32) -> (i32, i32) {
    %c0_i32 = arith.constant 0 : i32
    %c0_i32_0 = arith.constant 0 : i32
    %c0_i32_1 = arith.constant 0 : i32
    return %c0_i32, %c0_i32_0 : i32, i32
  }
  func.func @transform_5(%arg0: i32) -> (i32, i32, i32) {
    %c0_i32 = arith.constant 0 : i32
    %c0_i32_0 = arith.constant 0 : i32
    %c0_i32_1 = arith.constant 0 : i32
    return %arg0, %c0_i32, %c0_i32_0 : i32, i32, i32
  }
}

</mosaic_0001>

<llo_original>
// kernel: nn_vfa_forward.4
$region0: #{nn_vfa_forward.4}
  #allocation0 [shape = 'u32[]', space=smem, size = 0x4, offset = 0x4, fixed_abs, tag = 'smem constant byte address 0x4 - core index']
  #allocation1 [shape = 'u32[144,128]{1,0:T(1,128)}', space=vmem, size = 0x12000, scoped, tag = 'internal scratch']
  %s0 = inlined_call_operand.vmem [shape: bf16[2,441,256], index: 0, kind: input, shape index: {}]
  %s1 = inlined_call_operand.vmem [shape: bf16[256,32], index: 1, kind: input, shape index: {}]
  %s2 = inlined_call_operand.vmem [shape: f32[1,32], index: 2, kind: input, shape index: {}]
  %s3 = inlined_call_operand.vmem [shape: bf16[2,441,32], index: 3, kind: output, shape index: {}]
  %s4 = sld [smem:[#allocation0]]
  $region45: #{nn_vfa_forward.4} parent=0
    _
  %s6 = ssub.s32 1, %s4
  %s7 = scalar_select 0, %s6, %s4
  loop: start=0, step=1, limit=4
  $region2: #{nn_vfa_forward.4} parent=0 // loop_pre_header
    _
  $region3: #{nn_vfa_forward.4} parent=0 // loop_header
    %s9 = sphi 0, %s13
    %p10 = scmp.ge.s32.totalorder %s9, 4
    %s19 = sphi 0, %s21
    %s22 = sphi 0, %s19
    %s23 = sphi 0, %s22
    %s39 = sphi 0, %s23
    %s43 = sphi 0, %s43
    %s45 = sphi 0, %s43
    %s46 = sphi 0, %s45
    %s60 = sphi 0, %s46
    %s64 = sphi 0, %s64
    %s66 = sphi 0, %s64
    %s67 = sphi 0, %s66
    %s81 = sphi 0, %s67
    %s87 = sphi 0, %s89
    %s90 = sphi 0, %s87
    %s91 = sphi 0, %s90
    %s107 = sphi 0, %s91
  $region4: #{nn_vfa_forward.4} parent=0 // loop_header_branch
    %12 = sbr.rel (%p10) target = $region8
  $region5: #{nn_vfa_forward.4} parent=0 // loop_body
    %s14 = ssub.s32 %s9, 1
    %s15 = ssub.s32 %s9, 2
    %s16 = sadd.s32 %s9, 1
    %s17 = ssub.s32 %s9, %s16
    %p18 = scmp.eq.s32.totalorder %s17, 0
    %s20 = sadd.s32 %s19, 1
    %s21 = scalar_select %p18, %s19, %s20
    %p24 = pneg %p18
    %p25 = scmp.eq.s32.totalorder %s9, 1
    %p26 = por %p24, %p25
    %p27 = scmp.ne.s32.totalorder %s19, %s22
    %p28 = scmp.eq.s32.totalorder %s9, 0
    %p29 = por %p27, %p28
    %p30 = scmp.ne.s32.totalorder %s19, %s22
    %p31 = scmp.eq.s32.totalorder %s14, 1
    %p32 = por %p30, %p31
    %p33 = scmp.ne.s32.totalorder %s22, %s23
    %p34 = scmp.eq.s32.totalorder %s14, 0
    %p35 = por %p33, %p34
    %p36 = scmp.ne.s32.totalorder %s22, %s23
    %p37 = scmp.eq.s32.totalorder %s15, 1
    %p38 = por %p36, %p37
    %p40 = scmp.ne.s32.totalorder %s23, %s39
    %p41 = scmp.eq.s32.totalorder %s15, 0
    %p42 = por %p40, %p41
    %s44 = sadd.s32 %s43, 1
    %p47 = scmp.eq.s32.totalorder %s9, 1
    %p48 = scmp.ne.s32.totalorder %s43, %s45
    %p49 = scmp.eq.s32.totalorder %s9, 0
    %p50 = por %p48, %p49
    %p51 = scmp.ne.s32.totalorder %s43, %s45
    %p52 = scmp.eq.s32.totalorder %s14, 1
    %p53 = por %p51, %p52
    %p54 = scmp.ne.s32.totalorder %s45, %s46
    %p55 = scmp.eq.s32.totalorder %s14, 0
    %p56 = por %p54, %p55
    %p57 = scmp.ne.s32.totalorder %s45, %s46
    %p58 = scmp.eq.s32.totalorder %s15, 1
    %p59 = por %p57, %p58
    %p61 = scmp.ne.s32.totalorder %s46, %s60
    %p62 = scmp.eq.s32.totalorder %s15, 0
    %p63 = por %p61, %p62
    %s65 = sadd.s32 %s64, 1
    %p68 = scmp.eq.s32.totalorder %s9, 1
    %p69 = scmp.ne.s32.totalorder %s64, %s66
    %p70 = scmp.eq.s32.totalorder %s9, 0
    %p71 = por %p69, %p70
    %p72 = scmp.ne.s32.totalorder %s64, %s66
    %p73 = scmp.eq.s32.totalorder %s14, 1
    %p74 = por %p72, %p73
    %p75 = scmp.ne.s32.totalorder %s66, %s67
    %p76 = scmp.eq.s32.totalorder %s14, 0
    %p77 = por %p75, %p76
    %p78 = scmp.ne.s32.totalorder %s66, %s67
    %p79 = scmp.eq.s32.totalorder %s15, 1
    %p80 = por %p78, %p79
    %p82 = scmp.ne.s32.totalorder %s67, %s81
    %p83 = scmp.eq.s32.totalorder %s15, 0
    %p84 = por %p82, %p83
    %s85 = ssub.s32 %s9, %s16
    %p86 = scmp.eq.s32.totalorder %s85, 0
    %s88 = sadd.s32 %s87, 1
    %s89 = scalar_select %p86, %s87, %s88
    %p92 = pneg %p86
    %p93 = scmp.eq.s32.totalorder %s9, 1
    %p94 = por %p92, %p93
    %p95 = scmp.ne.s32.totalorder %s87, %s90
    %p96 = scmp.eq.s32.totalorder %s9, 0
    %p97 = por %p95, %p96
    %p98 = scmp.ne.s32.totalorder %s87, %s90
    %p99 = scmp.eq.s32.totalorder %s14, 1
    %p100 = por %p98, %p99
    %p101 = scmp.ne.s32.totalorder %s90, %s91
    %p102 = scmp.eq.s32.totalorder %s14, 0
    %p103 = por %p101, %p102
    %p104 = scmp.ne.s32.totalorder %s90, %s91
    %p105 = scmp.eq.s32.totalorder %s15, 1
    %p106 = por %p104, %p105
    %p108 = scmp.ne.s32.totalorder %s91, %s107
    %p109 = scmp.eq.s32.totalorder %s15, 0
    %p110 = por %p108, %p109
    %p111 = scmp.le.s32.totalorder 1, %s9
    %p112 = scmp.lt.s32.totalorder %s9, 3
    %p113 = pnand %p111, %p112
    %p114 = pneg %p113
    // Predicated region
    $region9: #{nn_vfa_forward.4} parent=5 // pred_check
      _
    $region10: #{nn_vfa_forward.4} parent=5 // pred_check_branch
      %116 = sbr.rel (%p113) target = $region12
    $region11: #{nn_vfa_forward.4} parent=5 // pred_region
      %s117 = ssub.s32 %s9, 1
      // Predicated region
      $region13: #{nn_vfa_forward.4} parent=11 // pred_check
        %p118 = pneg %p56
      $region14: #{nn_vfa_forward.4} parent=11 // pred_check_branch
        %120 = sbr.rel (%p118) target = $region16
      $region15: #{nn_vfa_forward.4} parent=11 // pred_region
        _
      $region16: #{nn_vfa_forward.4} parent=11 // pred_fallthru
        _
      // Predicated region
      $region17: #{nn_vfa_forward.4} parent=11 // pred_check
        %p121 = pneg %p77
      $region18: #{nn_vfa_forward.4} parent=11 // pred_check_branch
        %123 = sbr.rel (%p121) target = $region20
      $region19: #{nn_vfa_forward.4} parent=11 // pred_region
        _
      $region20: #{nn_vfa_forward.4} parent=11 // pred_fallthru
        _
    $region12: #{nn_vfa_forward.4} parent=5 // pred_fallthru
      _
    %p124 = scmp.lt.s32.totalorder %s9, 2
    // Predicated region
    $region21: #{nn_vfa_forward.4} parent=5 // pred_check
      %p125 = pneg %p124
    $region22: #{nn_vfa_forward.4} parent=5 // pred_check_branch
      %127 = sbr.rel (%p125) target = $region24
    $region23: #{nn_vfa_forward.4} parent=5 // pred_region
      // Predicated region
      $region25: #{nn_vfa_forward.4} parent=23 // pred_check
        %p128 = pneg %p29
      $region26: #{nn_vfa_forward.4} parent=23 // pred_check_branch
        %130 = sbr.rel (%p128) target = $region28
      $region27: #{nn_vfa_forward.4} parent=23 // pred_region
        %p131 = scmp.lt.s32.totalorder %s9, 1
        %s132 = scalar_select %p131, %s9, 1
        %s133 = smul.addr %s132, 112
        %s134 = smul.addr %s133, 4
        %s135 = scalar_lea.vmem %s0, %s134
      $region28: #{nn_vfa_forward.4} parent=23 // pred_fallthru
        _
    $region24: #{nn_vfa_forward.4} parent=5 // pred_fallthru
      _
    %p136 = scmp.le.s32.totalorder 1, %s9
    %p137 = scmp.lt.s32.totalorder %s9, 3
    %p138 = pnand %p136, %p137
    %p139 = pneg %p138
    // Predicated region
    $region29: #{nn_vfa_forward.4} parent=5 // pred_check
      _
    $region30: #{nn_vfa_forward.4} parent=5 // pred_check_branch
      %141 = sbr.rel (%p138) target = $region32
    $region31: #{nn_vfa_forward.4} parent=5 // pred_region
      %s142 = ssub.s32 %s9, 1
      %p143 = scmp.lt.s32.totalorder %s14, 1
      %s144 = scalar_select %p143, %s14, 1
      %s145 = smul.addr %s144, 112
      %s146 = smul.addr %s145, 4
      %s147 = scalar_lea.vmem %s0, %s146
      %p148 = pneg %p35
      %p149 = pneg %p32
      %p150 = pneg %p56
      %p151 = pneg %p53
      %p152 = pneg %p77
      %p153 = pneg %p74
      %p154 = pneg %p103
      %p155 = pneg %p100
      %p156 = scmp.lt.s32.totalorder %s14, 1
      %s157 = scalar_select %p156, %s14, 1
      %s158 = smul.addr %s157, 56
      %s159 = smul.addr %s158, 4
      %s160 = scalar_lea.vmem %s3, %s159
      %p161 = scmp.lt.s32.totalorder %s14, 1
      %s162 = scalar_select %p161, %s14, 1
      %s163 = smul.addr %s162, 112
      %s164 = smul.addr %s163, 4
      %s165 = scalar_lea.vmem %s0, %s164
      %p166 = scmp.lt.s32.totalorder %s14, 1
      %s167 = scalar_select %p166, %s14, 1
      %s168 = smul.addr %s167, 56
      %s169 = smul.addr %s168, 4
      %s170 = scalar_lea.vmem %s3, %s169
      %v172 = vld [vmem:[%s165] sm:$0xff]
      %v173 = vld [vmem:[%s165 + $0x8] sm:$0xff]
      %v174 = vld [vmem:[%s165 + $0x10] sm:$0xff]
      %v175 = vld [vmem:[%s165 + $0x18] sm:$0xff]
      %v176 = vld [vmem:[%s165 + $0x20] sm:$0xff]
      %v177 = vld [vmem:[%s165 + $0x28] sm:$0xff]
      %v178 = vld [vmem:[%s165 + $0x30] sm:$0xff]
      %v179 = vld [vmem:[%s165 + $0x38] sm:$0xff]
      %v180 = vld [vmem:[%s165 + $0x40] sm:$0xff]
      %v181 = vld [vmem:[%s165 + $0x48] sm:$0xff]
      %v182 = vld [vmem:[%s165 + $0x50] sm:$0xff]
      %v183 = vld [vmem:[%s165 + $0x58] sm:$0xff]
      %v184 = vld [vmem:[%s165 + $0x60] sm:$0xff]
      %v185 = vld [vmem:[%s165 + $0x68] sm:$0xff]
      %v186 = vld [vmem:[%s165 + $0x70] sm:$0xff]
      %v187 = vld [vmem:[%s165 + $0x78] sm:$0xff]
      %v188 = vld [vmem:[%s165 + $0x80] sm:$0xff]
      %v189 = vld [vmem:[%s165 + $0x88] sm:$0xff]
      %v190 = vld [vmem:[%s165 + $0x90] sm:$0xff]
      %v191 = vld [vmem:[%s165 + $0x98] sm:$0xff]
      %v192 = vld [vmem:[%s165 + $0xa0] sm:$0xff]
      %v193 = vld [vmem:[%s165 + $0xa8] sm:$0xff]
      %v194 = vld [vmem:[%s165 + $0xb0] sm:$0xff]
      %v195 = vld [vmem:[%s165 + $0xb8] sm:$0xff]
      %v196 = vld [vmem:[%s165 + $0xc0] sm:$0xff]
      %v197 = vld [vmem:[%s165 + $0xc8] sm:$0xff]
      %v198 = vld [vmem:[%s165 + $0xd0] sm:$0xff]
      %v199 = vld [vmem:[%s165 + $0xd8] sm:$0xff]
      %v200 = vld [vmem:[%s165 + $0xe0] sm:$0xff]
      %v201 = vld [vmem:[%s165 + $0xe8] sm:$0xff]
      %v202 = vld [vmem:[%s165 + $0xf0] sm:$0xff]
      %v203 = vld [vmem:[%s165 + $0xf8] sm:$0xff]
      %v204 = vld [vmem:[%s165 + $0x100] sm:$0xff]
      %v205 = vld [vmem:[%s165 + $0x108] sm:$0xff]
      %v206 = vld [vmem:[%s165 + $0x110] sm:$0xff]
      %v207 = vld [vmem:[%s165 + $0x118] sm:$0xff]
      %v208 = vld [vmem:[%s165 + $0x120] sm:$0xff]
      %v209 = vld [vmem:[%s165 + $0x128] sm:$0xff]
      %v210 = vld [vmem:[%s165 + $0x130] sm:$0xff]
      %v211 = vld [vmem:[%s165 + $0x138] sm:$0xff]
      %v212 = vld [vmem:[%s165 + $0x140] sm:$0xff]
      %v213 = vld [vmem:[%s165 + $0x148] sm:$0xff]
      %v214 = vld [vmem:[%s165 + $0x150] sm:$0xff]
      %v215 = vld [vmem:[%s165 + $0x158] sm:$0xff]
      %v216 = vld [vmem:[%s165 + $0x160] sm:$0xff]
      %v217 = vld [vmem:[%s165 + $0x168] sm:$0xff]
      %v218 = vld [vmem:[%s165 + $0x170] sm:$0xff]
      %v219 = vld [vmem:[%s165 + $0x178] sm:$0xff]
      %v220 = vld [vmem:[%s165 + $0x180] sm:$0xff]
      %v221 = vld [vmem:[%s165 + $0x188] sm:$0xff]
      %v222 = vld [vmem:[%s165 + $0x190] sm:$0xff]
      %v223 = vld [vmem:[%s165 + $0x198] sm:$0xff]
      %v224 = vld [vmem:[%s165 + $0x1a0] sm:$0xff]
      %v225 = vld [vmem:[%s165 + $0x1a8] sm:$0xff]
      %v226 = vld [vmem:[%s165 + $0x1b0] sm:$0xff]
      %v227 = vld [vmem:[%s165 + $0x1b8] sm:$0x11]
      %v228 = vld [vmem:[%s1] sm:$0xf]
      %v229 = vld [vmem:[%s1 + $0x4] sm:$0xf]
      %v230 = vld [vmem:[%s1 + $0x8] sm:$0xf]
      %v231 = vld [vmem:[%s1 + $0xc] sm:$0xf]
      %v232 = vld [vmem:[%s1 + $0x10] sm:$0xf]
      %v233 = vld [vmem:[%s1 + $0x14] sm:$0xf]
      %v234 = vld [vmem:[%s1 + $0x18] sm:$0xf]
      %v235 = vld [vmem:[%s1 + $0x1c] sm:$0xf]
      %v236 = vld [vmem:[%s1 + $0x20] sm:$0xf]
      %v237 = vld [vmem:[%s1 + $0x24] sm:$0xf]
      %v238 = vld [vmem:[%s1 + $0x28] sm:$0xf]
      %v239 = vld [vmem:[%s1 + $0x2c] sm:$0xf]
      %v240 = vld [vmem:[%s1 + $0x30] sm:$0xf]
      %v241 = vld [vmem:[%s1 + $0x34] sm:$0xf]
      %v242 = vld [vmem:[%s1 + $0x38] sm:$0xf]
      %v243 = vld [vmem:[%s1 + $0x3c] sm:$0xf]
      %v244 = vld [vmem:[%s1 + $0x40] sm:$0xf]
      %v245 = vld [vmem:[%s1 + $0x44] sm:$0xf]
      %v246 = vld [vmem:[%s1 + $0x48] sm:$0xf]
      %v247 = vld [vmem:[%s1 + $0x4c] sm:$0xf]
      %v248 = vld [vmem:[%s1 + $0x50] sm:$0xf]
      %v249 = vld [vmem:[%s1 + $0x54] sm:$0xf]
      %v250 = vld [vmem:[%s1 + $0x58] sm:$0xf]
      %v251 = vld [vmem:[%s1 + $0x5c] sm:$0xf]
      %v252 = vld [vmem:[%s1 + $0x60] sm:$0xf]
      %v253 = vld [vmem:[%s1 + $0x64] sm:$0xf]
      %v254 = vld [vmem:[%s1 + $0x68] sm:$0xf]
      %v255 = vld [vmem:[%s1 + $0x6c] sm:$0xf]
      %v256 = vld [vmem:[%s1 + $0x70] sm:$0xf]
      %v257 = vld [vmem:[%s1 + $0x74] sm:$0xf]
      %v258 = vld [vmem:[%s1 + $0x78] sm:$0xf]
      %v259 = vld [vmem:[%s1 + $0x7c] sm:$0xf]
      %v260 = vld [vmem:[%s2] sm:$0x1]
      %v262 = vlaneseq
      %v263 = vshrl.u32 %v262, 7
      %v264 = vsub.s32 0, %v263
      %v265 = vrot.slane %v260, %v264
      %v323 = vunpack.c.l.b16 %v172
      %v324 = vunpack.c.h.b16 %v172
      %v325 = vunpack.c.l.b16 %v173
      %v326 = vunpack.c.h.b16 %v173
      %v327 = vunpack.c.l.b16 %v174
      %v328 = vunpack.c.h.b16 %v174
      %v329 = vunpack.c.l.b16 %v175
      %v330 = vunpack.c.h.b16 %v175
      %v331 = vunpack.c.l.b16 %v176
      %v332 = vunpack.c.h.b16 %v176
      %v333 = vunpack.c.l.b16 %v177
      %v334 = vunpack.c.h.b16 %v177
      %v335 = vunpack.c.l.b16 %v178
      %v336 = vunpack.c.h.b16 %v178
      %v337 = vunpack.c.l.b16 %v179
      %v338 = vunpack.c.h.b16 %v179
      %v339 = vunpack.c.l.b16 %v180
      %v340 = vunpack.c.h.b16 %v180
      %v341 = vunpack.c.l.b16 %v181
      %v342 = vunpack.c.h.b16 %v181
      %v343 = vunpack.c.l.b16 %v182
      %v344 = vunpack.c.h.b16 %v182
      %v345 = vunpack.c.l.b16 %v183
      %v346 = vunpack.c.h.b16 %v183
      %v347 = vunpack.c.l.b16 %v184
      %v348 = vunpack.c.h.b16 %v184
      %v349 = vunpack.c.l.b16 %v185
      %v350 = vunpack.c.h.b16 %v185
      %v351 = vunpack.c.l.b16 %v186
      %v352 = vunpack.c.h.b16 %v186
      %v353 = vunpack.c.l.b16 %v187
      %v354 = vunpack.c.h.b16 %v187
      %v355 = vunpack.c.l.b16 %v188
      %v356 = vunpack.c.h.b16 %v188
      %v357 = vunpack.c.l.b16 %v189
      %v358 = vunpack.c.h.b16 %v189
      %v359 = vunpack.c.l.b16 %v190
      %v360 = vunpack.c.h.b16 %v190
      %v361 = vunpack.c.l.b16 %v191
      %v362 = vunpack.c.h.b16 %v191
      %v363 = vunpack.c.l.b16 %v192
      %v364 = vunpack.c.h.b16 %v192
      %v365 = vunpack.c.l.b16 %v193
      %v366 = vunpack.c.h.b16 %v193
      %v367 = vunpack.c.l.b16 %v194
      %v368 = vunpack.c.h.b16 %v194
      %v369 = vunpack.c.l.b16 %v195
      %v370 = vunpack.c.h.b16 %v195
      %v371 = vunpack.c.l.b16 %v196
      %v372 = vunpack.c.h.b16 %v196
      %v373 = vunpack.c.l.b16 %v197
      %v374 = vunpack.c.h.b16 %v197
      %v375 = vunpack.c.l.b16 %v198
      %v376 = vunpack.c.h.b16 %v198
      %v377 = vunpack.c.l.b16 %v199
      %v378 = vunpack.c.h.b16 %v199
      %v379 = vunpack.c.l.b16 %v200
      %v380 = vunpack.c.h.b16 %v200
      %v381 = vunpack.c.l.b16 %v201
      %v382 = vunpack.c.h.b16 %v201
      %v383 = vunpack.c.l.b16 %v202
      %v384 = vunpack.c.h.b16 %v202
      %v385 = vunpack.c.l.b16 %v203
      %v386 = vunpack.c.h.b16 %v203
      %v387 = vunpack.c.l.b16 %v204
      %v388 = vunpack.c.h.b16 %v204
      %v389 = vunpack.c.l.b16 %v205
      %v390 = vunpack.c.h.b16 %v205
      %v391 = vunpack.c.l.b16 %v206
      %v392 = vunpack.c.h.b16 %v206
      %v393 = vunpack.c.l.b16 %v207
      %v394 = vunpack.c.h.b16 %v207
      %v395 = vunpack.c.l.b16 %v208
      %v396 = vunpack.c.h.b16 %v208
      %v397 = vunpack.c.l.b16 %v209
      %v398 = vunpack.c.h.b16 %v209
      %v399 = vunpack.c.l.b16 %v210
      %v400 = vunpack.c.h.b16 %v210
      %v401 = vunpack.c.l.b16 %v211
      %v402 = vunpack.c.h.b16 %v211
      %v403 = vunpack.c.l.b16 %v212
      %v404 = vunpack.c.h.b16 %v212
      %v405 = vunpack.c.l.b16 %v213
      %v406 = vunpack.c.h.b16 %v213
      %v407 = vunpack.c.l.b16 %v214
      %v408 = vunpack.c.h.b16 %v214
      %v409 = vunpack.c.l.b16 %v215
      %v410 = vunpack.c.h.b16 %v215
      %v411 = vunpack.c.l.b16 %v216
      %v412 = vunpack.c.h.b16 %v216
      %v413 = vunpack.c.l.b16 %v217
      %v414 = vunpack.c.h.b16 %v217
      %v415 = vunpack.c.l.b16 %v218
      %v416 = vunpack.c.h.b16 %v218
      %v417 = vunpack.c.l.b16 %v219
      %v418 = vunpack.c.h.b16 %v219
      %v419 = vunpack.c.l.b16 %v220
      %v420 = vunpack.c.h.b16 %v220
      %v421 = vunpack.c.l.b16 %v221
      %v422 = vunpack.c.h.b16 %v221
      %v423 = vunpack.c.l.b16 %v222
      %v424 = vunpack.c.h.b16 %v222
      %v425 = vunpack.c.l.b16 %v223
      %v426 = vunpack.c.h.b16 %v223
      %v427 = vunpack.c.l.b16 %v224
      %v428 = vunpack.c.h.b16 %v224
      %v429 = vunpack.c.l.b16 %v225
      %v430 = vunpack.c.h.b16 %v225
      %v431 = vunpack.c.l.b16 %v226
      %v432 = vunpack.c.h.b16 %v226
      %v433 = vunpack.c.l.b16 %v227
      %v434 = vunpack.c.h.b16 %v227
      %v435 = vpack.c.b16 %v325, %v323
      %v436 = vpack.c.b16 %v326, %v324
      %v437 = vpack.c.b16 %v329, %v327
      %v438 = vpack.c.b16 %v330, %v328
      %v439 = vpack.c.b16 %v333, %v331
      %v440 = vpack.c.b16 %v334, %v332
      %v441 = vpack.c.b16 %v337, %v335
      %v442 = vpack.c.b16 %v338, %v336
      %v443 = vpack.c.b16 %v341, %v339
      %v444 = vpack.c.b16 %v342, %v340
      %v445 = vpack.c.b16 %v345, %v343
      %v446 = vpack.c.b16 %v346, %v344
      %v447 = vpack.c.b16 %v349, %v347
      %v448 = vpack.c.b16 %v350, %v348
      %v449 = vpack.c.b16 %v353, %v351
      %v450 = vpack.c.b16 %v354, %v352
      %v451 = vpack.c.b16 %v357, %v355
      %v452 = vpack.c.b16 %v358, %v356
      %v453 = vpack.c.b16 %v361, %v359
      %v454 = vpack.c.b16 %v362, %v360
      %v455 = vpack.c.b16 %v365, %v363
      %v456 = vpack.c.b16 %v366, %v364
      %v457 = vpack.c.b16 %v369, %v367
      %v458 = vpack.c.b16 %v370, %v368
      %v459 = vpack.c.b16 %v373, %v371
      %v460 = vpack.c.b16 %v374, %v372
      %v461 = vpack.c.b16 %v377, %v375
      %v462 = vpack.c.b16 %v378, %v376
      %v463 = vpack.c.b16 %v381, %v379
      %v464 = vpack.c.b16 %v382, %v380
      %v465 = vpack.c.b16 %v385, %v383
      %v466 = vpack.c.b16 %v386, %v384
      %v467 = vpack.c.b16 %v389, %v387
      %v468 = vpack.c.b16 %v390, %v388
      %v469 = vpack.c.b16 %v393, %v391
      %v470 = vpack.c.b16 %v394, %v392
      %v471 = vpack.c.b16 %v397, %v395
      %v472 = vpack.c.b16 %v398, %v396
      %v473 = vpack.c.b16 %v401, %v399
      %v474 = vpack.c.b16 %v402, %v400
      %v475 = vpack.c.b16 %v405, %v403
      %v476 = vpack.c.b16 %v406, %v404
      %v477 = vpack.c.b16 %v409, %v407
      %v478 = vpack.c.b16 %v410, %v408
      %v479 = vpack.c.b16 %v413, %v411
      %v480 = vpack.c.b16 %v414, %v412
      %v481 = vpack.c.b16 %v417, %v415
      %v482 = vpack.c.b16 %v418, %v416
      %v483 = vpack.c.b16 %v421, %v419
      %v484 = vpack.c.b16 %v422, %v420
      %v485 = vpack.c.b16 %v425, %v423
      %v486 = vpack.c.b16 %v426, %v424
      %v487 = vpack.c.b16 %v429, %v427
      %v488 = vpack.c.b16 %v430, %v428
      %v489 = vpack.c.b16 %v433, %v431
      %v490 = vpack.c.b16 %v434, %v432
      %v579 = vunpack.c.l.b16 %v228
      %v580 = vunpack.c.l.b16 %v229
      %v581 = vunpack.c.l.b16 %v230
      %v582 = vunpack.c.l.b16 %v231
      %v583 = vunpack.c.l.b16 %v232
      %v584 = vunpack.c.l.b16 %v233
      %v585 = vunpack.c.l.b16 %v234
      %v586 = vunpack.c.l.b16 %v235
      %v587 = vunpack.c.l.b16 %v236
      %v588 = vunpack.c.l.b16 %v237
      %v589 = vunpack.c.l.b16 %v238
      %v590 = vunpack.c.l.b16 %v239
      %v591 = vunpack.c.l.b16 %v240
      %v592 = vunpack.c.l.b16 %v241
      %v593 = vunpack.c.l.b16 %v242
      %v594 = vunpack.c.l.b16 %v243
      %v595 = vunpack.c.l.b16 %v244
      %v596 = vunpack.c.l.b16 %v245
      %v597 = vunpack.c.l.b16 %v246
      %v598 = vunpack.c.l.b16 %v247
      %v599 = vunpack.c.l.b16 %v248
      %v600 = vunpack.c.l.b16 %v249
      %v601 = vunpack.c.l.b16 %v250
      %v602 = vunpack.c.l.b16 %v251
      %v603 = vunpack.c.l.b16 %v252
      %v604 = vunpack.c.l.b16 %v253
      %v605 = vunpack.c.l.b16 %v254
      %v606 = vunpack.c.l.b16 %v255
      %v607 = vunpack.c.l.b16 %v256
      %v608 = vunpack.c.l.b16 %v257
      %v609 = vunpack.c.l.b16 %v258
      %v610 = vunpack.c.l.b16 %v259
      %v611 = vpack.c.b16 %v580, %v579
      %v612 = vpack.c.b16 %v582, %v581
      %v613 = vpack.c.b16 %v584, %v583
      %v614 = vpack.c.b16 %v586, %v585
      %v615 = vpack.c.b16 %v588, %v587
      %v616 = vpack.c.b16 %v590, %v589
      %v617 = vpack.c.b16 %v592, %v591
      %v618 = vpack.c.b16 %v594, %v593
      %v619 = vpack.c.b16 %v596, %v595
      %v620 = vpack.c.b16 %v598, %v597
      %v621 = vpack.c.b16 %v600, %v599
      %v622 = vpack.c.b16 %v602, %v601
      %v623 = vpack.c.b16 %v604, %v603
      %v624 = vpack.c.b16 %v606, %v605
      %v625 = vpack.c.b16 %v608, %v607
      %v626 = vpack.c.b16 %v610, %v609
      %643 = vmatprep.subr.bf16.mxu0 0
      %644 = vmatpush1.bf16.msra.mxu0 %v611
      %645 = vmatprep.subr.bf16.mxu0 0
      %646 = vmatpush1.bf16.msra.mxu0 %v612
      %647 = vmatprep.subr.bf16.mxu0 0
      %648 = vmatpush1.bf16.msra.mxu0 %v613
      %649 = vmatprep.subr.bf16.mxu0 0
      %650 = vmatpush1.bf16.msra.mxu0 %v614
      %651 = vmatprep.subr.bf16.mxu0 0
      %652 = vmatpush1.bf16.msra.mxu0 %v615
      %653 = vmatprep.subr.bf16.mxu0 0
      %654 = vmatpush1.bf16.msra.mxu0 %v616
      %655 = vmatprep.subr.bf16.mxu0 0
      %656 = vmatpush1.bf16.msra.mxu0 %v617
      %657 = vmatprep.subr.bf16.mxu0 0
      %658 = vmatpush1.bf16.msra.mxu0 %v618
      %659 = vmatprep.subr.bf16.mxu0 0
      %660 = vmatpush1.bf16.msra.mxu0 %v619
      %661 = vmatprep.subr.bf16.mxu0 0
      %662 = vmatpush1.bf16.msra.mxu0 %v620
      %663 = vmatprep.subr.bf16.mxu0 0
      %664 = vmatpush1.bf16.msra.mxu0 %v621
      %665 = vmatprep.subr.bf16.mxu0 0
      %666 = vmatpush1.bf16.msra.mxu0 %v622
      %667 = vmatprep.subr.bf16.mxu0 0
      %668 = vmatpush1.bf16.msra.mxu0 %v623
      %669 = vmatprep.subr.bf16.mxu0 0
      %670 = vmatpush1.bf16.msra.mxu0 %v624
      %671 = vmatprep.subr.bf16.mxu0 0
      %672 = vmatpush1.bf16.msra.mxu0 %v625
      %673 = vmatprep.subr.bf16.mxu0 0
      %674 = vmatpush1.bf16.msra.mxu0 %v626
      %675 = vmatprep.mubr.bf16.mxu0 %v436
      %676 = vmatmul.mubr.bf16.gmra.mrb[0].mxu0 %v435
      %v677 = vpop.f32.mrb[0].mxu0
      %v678 = vadd.f32 %v265, %v677
      %v679 = vpop.f32.mrb[0].mxu0
      %v680 = vpop.f32.mrb[0].mxu0
      %v681 = vadd.f32 %v265, %v680
      %v682 = vpop.f32.mrb[0].mxu0
      %683 = vmatprep.mubr.bf16.mxu0 %v438
      %684 = vmatmul.mubr.bf16.gmra.mrb[0].mxu0 %v437
      %v685 = vpop.f32.mrb[0].mxu0
      %v686 = vadd.f32 %v265, %v685
      %v687 = vpop.f32.mrb[0].mxu0
      %v688 = vpop.f32.mrb[0].mxu0
      %v689 = vadd.f32 %v265, %v688
      %v690 = vpop.f32.mrb[0].mxu0
      %691 = vmatprep.mubr.bf16.mxu0 %v440
      %692 = vmatmul.mubr.bf16.gmra.mrb[0].mxu0 %v439
      %v693 = vpop.f32.mrb[0].mxu0
      %v694 = vadd.f32 %v265, %v693
      %v695 = vpop.f32.mrb[0].mxu0
      %v696 = vpop.f32.mrb[0].mxu0
      %v697 = vadd.f32 %v265, %v696
      %v698 = vpop.f32.mrb[0].mxu0
      %699 = vmatprep.mubr.bf16.mxu0 %v442
      %700 = vmatmul.mubr.bf16.gmra.mrb[0].mxu0 %v441
      %v701 = vpop.f32.mrb[0].mxu0
      %v702 = vadd.f32 %v265, %v701
      %v703 = vpop.f32.mrb[0].mxu0
      %v704 = vpop.f32.mrb[0].mxu0
      %v705 = vadd.f32 %v265, %v704
      %v706 = vpop.f32.mrb[0].mxu0
      %707 = vmatprep.mubr.bf16.mxu0 %v444
      %708 = vmatmul.mubr.bf16.gmra.mrb[0].mxu0 %v443
      %v709 = vpop.f32.mrb[0].mxu0
      %v710 = vadd.f32 %v265, %v709
      %v711 = vpop.f32.mrb[0].mxu0
      %v712 = vpop.f32.mrb[0].mxu0
      %v713 = vadd.f32 %v265, %v712
      %v714 = vpop.f32.mrb[0].mxu0
      %715 = vmatprep.mubr.bf16.mxu0 %v446
      %716 = vmatmul.mubr.bf16.gmra.mrb[0].mxu0 %v445
      %v717 = vpop.f32.mrb[0].mxu0
      %v718 = vadd.f32 %v265, %v717
      %v719 = vpop.f32.mrb[0].mxu0
      %v720 = vpop.f32.mrb[0].mxu0
      %v721 = vadd.f32 %v265, %v720
      %v722 = vpop.f32.mrb[0].mxu0
      %723 = vmatprep.mubr.bf16.mxu0 %v448
      %724 = vmatmul.mubr.bf16.gmra.mrb[0].mxu0 %v447
      %v725 = vpop.f32.mrb[0].mxu0
      %v726 = vadd.f32 %v265, %v725
      %v727 = vpop.f32.mrb[0].mxu0
      %v728 = vpop.f32.mrb[0].mxu0
      %v729 = vadd.f32 %v265, %v728
      %v730 = vpop.f32.mrb[0].mxu0
      %731 = vmatprep.mubr.bf16.mxu0 %v450
      %732 = vmatmul.mubr.bf16.gmra.mrb[0].mxu0 %v449
      %v733 = vpop.f32.mrb[0].mxu0
      %v734 = vadd.f32 %v265, %v733
      %v735 = vpop.f32.mrb[0].mxu0
      %v736 = vpop.f32.mrb[0].mxu0
      %v737 = vadd.f32 %v265, %v736
      %v738 = vpop.f32.mrb[0].mxu0
      %739 = vmatprep.mubr.bf16.mxu0 %v452
      %740 = vmatmul.mubr.bf16.gmra.mrb[0].mxu0 %v451
      %v741 = vpop.f32.mrb[0].mxu0
      %v742 = vadd.f32 %v265, %v741
      %v743 = vpop.f32.mrb[0].mxu0
      %v744 = vpop.f32.mrb[0].mxu0
      %v745 = vadd.f32 %v265, %v744
      %v746 = vpop.f32.mrb[0].mxu0
      %747 = vmatprep.mubr.bf16.mxu0 %v454
      %748 = vmatmul.mubr.bf16.gmra.mrb[0].mxu0 %v453
      %v749 = vpop.f32.mrb[0].mxu0
      %v750 = vadd.f32 %v265, %v749
      %v751 = vpop.f32.mrb[0].mxu0
      %v752 = vpop.f32.mrb[0].mxu0
      %v753 = vadd.f32 %v265, %v752
      %v754 = vpop.f32.mrb[0].mxu0
      %755 = vmatprep.mubr.bf16.mxu0 %v456
      %756 = vmatmul.mubr.bf16.gmra.mrb[0].mxu0 %v455
      %v757 = vpop.f32.mrb[0].mxu0
      %v758 = vadd.f32 %v265, %v757
      %v759 = vpop.f32.mrb[0].mxu0
      %v760 = vpop.f32.mrb[0].mxu0
      %v761 = vadd.f32 %v265, %v760
      %v762 = vpop.f32.mrb[0].mxu0
      %763 = vmatprep.mubr.bf16.mxu0 %v458
      %764 = vmatmul.mubr.bf16.gmra.mrb[0].mxu0 %v457
      %v765 = vpop.f32.mrb[0].mxu0
      %v766 = vadd.f32 %v265, %v765
      %v767 = vpop.f32.mrb[0].mxu0
      %v768 = vpop.f32.mrb[0].mxu0
      %v769 = vadd.f32 %v265, %v768
      %v770 = vpop.f32.mrb[0].mxu0
      %771 = vmatprep.mubr.bf16.mxu0 %v460
      %772 = vmatmul.mubr.bf16.gmra.mrb[0].mxu0 %v459
      %v773 = vpop.f32.mrb[0].mxu0
      %v774 = vadd.f32 %v265, %v773
      %v775 = vpop.f32.mrb[0].mxu0
      %v776 = vpop.f32.mrb[0].mxu0
      %v777 = vadd.f32 %v265, %v776
      %v778 = vpop.f32.mrb[0].mxu0
      %779 = vmatprep.mubr.bf16.mxu0 %v462
      %780 = vmatmul.mubr.bf16.gmra.mrb[0].mxu0 %v461
      %v781 = vpop.f32.mrb[0].mxu0
      %v782 = vadd.f32 %v265, %v781
      %v783 = vpop.f32.mrb[0].mxu0
      %v784 = vpop.f32.mrb[0].mxu0
      %v785 = vadd.f32 %v265, %v784
      %v786 = vpop.f32.mrb[0].mxu0
      %787 = vmatprep.mubr.bf16.mxu0 %v464
      %788 = vmatmul.mubr.bf16.gmra.mrb[0].mxu0 %v463
      %v789 = vpop.f32.mrb[0].mxu0
      %v790 = vadd.f32 %v265, %v789
      %v791 = vpop.f32.mrb[0].mxu0
      %v792 = vpop.f32.mrb[0].mxu0
      %v793 = vadd.f32 %v265, %v792
      %v794 = vpop.f32.mrb[0].mxu0
      %795 = vmatprep.mubr.bf16.mxu0 %v466
      %796 = vmatmul.mubr.bf16.gmra.mrb[0].mxu0 %v465
      %v797 = vpop.f32.mrb[0].mxu0
      %v798 = vadd.f32 %v265, %v797
      %v799 = vpop.f32.mrb[0].mxu0
      %v800 = vpop.f32.mrb[0].mxu0
      %v801 = vadd.f32 %v265, %v800
      %v802 = vpop.f32.mrb[0].mxu0
      %803 = vmatprep.mubr.bf16.mxu0 %v468
      %804 = vmatmul.mubr.bf16.gmra.mrb[0].mxu0 %v467
      %v805 = vpop.f32.mrb[0].mxu0
      %v806 = vadd.f32 %v265, %v805
      %v807 = vpop.f32.mrb[0].mxu0
      %v808 = vpop.f32.mrb[0].mxu0
      %v809 = vadd.f32 %v265, %v808
      %v810 = vpop.f32.mrb[0].mxu0
      %811 = vmatprep.mubr.bf16.mxu0 %v470
      %812 = vmatmul.mubr.bf16.gmra.mrb[0].mxu0 %v469
      %v813 = vpop.f32.mrb[0].mxu0
      %v814 = vadd.f32 %v265, %v813
      %v815 = vpop.f32.mrb[0].mxu0
      %v816 = vpop.f32.mrb[0].mxu0
      %v817 = vadd.f32 %v265, %v816
      %v818 = vpop.f32.mrb[0].mxu0
      %819 = vmatprep.mubr.bf16.mxu0 %v472
      %820 = vmatmul.mubr.bf16.gmra.mrb[0].mxu0 %v471
      %v821 = vpop.f32.mrb[0].mxu0
      %v822 = vadd.f32 %v265, %v821
      %v823 = vpop.f32.mrb[0].mxu0
      %v824 = vpop.f32.mrb[0].mxu0
      %v825 = vadd.f32 %v265, %v824
      %v826 = vpop.f32.mrb[0].mxu0
      %827 = vmatprep.mubr.bf16.mxu0 %v474
      %828 = vmatmul.mubr.bf16.gmra.mrb[0].mxu0 %v473
      %v829 = vpop.f32.mrb[0].mxu0
      %v830 = vadd.f32 %v265, %v829
      %v831 = vpop.f32.mrb[0].mxu0
      %v832 = vpop.f32.mrb[0].mxu0
      %v833 = vadd.f32 %v265, %v832
      %v834 = vpop.f32.mrb[0].mxu0
      %835 = vmatprep.mubr.bf16.mxu0 %v476
      %836 = vmatmul.mubr.bf16.gmra.mrb[0].mxu0 %v475
      %v837 = vpop.f32.mrb[0].mxu0
      %v838 = vadd.f32 %v265, %v837
      %v839 = vpop.f32.mrb[0].mxu0
      %v840 = vpop.f32.mrb[0].mxu0
      %v841 = vadd.f32 %v265, %v840
      %v842 = vpop.f32.mrb[0].mxu0
      %843 = vmatprep.mubr.bf16.mxu0 %v478
      %844 = vmatmul.mubr.bf16.gmra.mrb[0].mxu0 %v477
      %v845 = vpop.f32.mrb[0].mxu0
      %v846 = vadd.f32 %v265, %v845
      %v847 = vpop.f32.mrb[0].mxu0
      %v848 = vpop.f32.mrb[0].mxu0
      %v849 = vadd.f32 %v265, %v848
      %v850 = vpop.f32.mrb[0].mxu0
      %851 = vmatprep.mubr.bf16.mxu0 %v480
      %852 = vmatmul.mubr.bf16.gmra.mrb[0].mxu0 %v479
      %v853 = vpop.f32.mrb[0].mxu0
      %v854 = vadd.f32 %v265, %v853
      %v855 = vpop.f32.mrb[0].mxu0
      %v856 = vpop.f32.mrb[0].mxu0
      %v857 = vadd.f32 %v265, %v856
      %v858 = vpop.f32.mrb[0].mxu0
      %859 = vmatprep.mubr.bf16.mxu0 %v482
      %860 = vmatmul.mubr.bf16.gmra.mrb[0].mxu0 %v481
      %v861 = vpop.f32.mrb[0].mxu0
      %v862 = vadd.f32 %v265, %v861
      %v863 = vpop.f32.mrb[0].mxu0
      %v864 = vpop.f32.mrb[0].mxu0
      %v865 = vadd.f32 %v265, %v864
      %v866 = vpop.f32.mrb[0].mxu0
      %867 = vmatprep.mubr.bf16.mxu0 %v484
      %868 = vmatmul.mubr.bf16.gmra.mrb[0].mxu0 %v483
      %v869 = vpop.f32.mrb[0].mxu0
      %v870 = vadd.f32 %v265, %v869
      %v871 = vpop.f32.mrb[0].mxu0
      %v872 = vpop.f32.mrb[0].mxu0
      %v873 = vadd.f32 %v265, %v872
      %v874 = vpop.f32.mrb[0].mxu0
      %875 = vmatprep.mubr.bf16.mxu0 %v486
      %876 = vmatmul.mubr.bf16.gmra.mrb[0].mxu0 %v485
      %v877 = vpop.f32.mrb[0].mxu0
      %v878 = vadd.f32 %v265, %v877
      %v879 = vpop.f32.mrb[0].mxu0
      %v880 = vpop.f32.mrb[0].mxu0
      %v881 = vadd.f32 %v265, %v880
      %v882 = vpop.f32.mrb[0].mxu0
      %883 = vmatprep.mubr.bf16.mxu0 %v488
      %884 = vmatmul.mubr.bf16.gmra.mrb[0].mxu0 %v487
      %v885 = vpop.f32.mrb[0].mxu0
      %v886 = vadd.f32 %v265, %v885
      %v887 = vpop.f32.mrb[0].mxu0
      %v888 = vpop.f32.mrb[0].mxu0
      %v889 = vadd.f32 %v265, %v888
      %v890 = vpop.f32.mrb[0].mxu0
      %891 = vmatprep.mubr.bf16.mxu0 %v490
      %892 = vmatmul.mubr.bf16.gmra.mrb[0].mxu0 %v489
      %v893 = vpop.f32.mrb[0].mxu0
      %v894 = vadd.f32 %v265, %v893
      %v895 = vpop.f32.mrb[0].mxu0
      %v896 = vpop.f32.mrb[0].mxu0
      %v897 = vadd.f32 %v265, %v896
      %v898 = vpop.f32.mrb[0].mxu0
      %899 = vdwg.mxu0
      %v900 = vmax.f32 %v678, 0.0
      %v901 = vmax.f32 %v681, 0.0
      %v902 = vmax.f32 %v686, 0.0
      %v903 = vmax.f32 %v689, 0.0
      %v904 = vmax.f32 %v694, 0.0
      %v905 = vmax.f32 %v697, 0.0
      %v906 = vmax.f32 %v702, 0.0
      %v907 = vmax.f32 %v705, 0.0
      %v908 = vmax.f32 %v710, 0.0
      %v909 = vmax.f32 %v713, 0.0
      %v910 = vmax.f32 %v718, 0.0
      %v911 = vmax.f32 %v721, 0.0
      %v912 = vmax.f32 %v726, 0.0
      %v913 = vmax.f32 %v729, 0.0
      %v914 = vmax.f32 %v734, 0.0
      %v915 = vmax.f32 %v737, 0.0
      %v916 = vmax.f32 %v742, 0.0
      %v917 = vmax.f32 %v745, 0.0
      %v918 = vmax.f32 %v750, 0.0
      %v919 = vmax.f32 %v753, 0.0
      %v920 = vmax.f32 %v758, 0.0
      %v921 = vmax.f32 %v761, 0.0
      %v922 = vmax.f32 %v766, 0.0
      %v923 = vmax.f32 %v769, 0.0
      %v924 = vmax.f32 %v774, 0.0
      %v925 = vmax.f32 %v777, 0.0
      %v926 = vmax.f32 %v782, 0.0
      %v927 = vmax.f32 %v785, 0.0
      %v928 = vmax.f32 %v790, 0.0
      %v929 = vmax.f32 %v793, 0.0
      %v930 = vmax.f32 %v798, 0.0
      %v931 = vmax.f32 %v801, 0.0
      %v932 = vmax.f32 %v806, 0.0
      %v933 = vmax.f32 %v809, 0.0
      %v934 = vmax.f32 %v814, 0.0
      %v935 = vmax.f32 %v817, 0.0
      %v936 = vmax.f32 %v822, 0.0
      %v937 = vmax.f32 %v825, 0.0
      %v938 = vmax.f32 %v830, 0.0
      %v939 = vmax.f32 %v833, 0.0
      %v940 = vmax.f32 %v838, 0.0
      %v941 = vmax.f32 %v841, 0.0
      %v942 = vmax.f32 %v846, 0.0
      %v943 = vmax.f32 %v849, 0.0
      %v944 = vmax.f32 %v854, 0.0
      %v945 = vmax.f32 %v857, 0.0
      %v946 = vmax.f32 %v862, 0.0
      %v947 = vmax.f32 %v865, 0.0
      %v948 = vmax.f32 %v870, 0.0
      %v949 = vmax.f32 %v873, 0.0
      %v950 = vmax.f32 %v878, 0.0
      %v951 = vmax.f32 %v881, 0.0
      %v952 = vmax.f32 %v886, 0.0
      %v953 = vmax.f32 %v889, 0.0
      %v954 = vmax.f32 %v894, 0.0
      %v955 = vmax.f32 %v897, 0.0
      %v956 = vpack.c.bf16 %v901, %v900
      %v957 = vpack.c.bf16 %v903, %v902
      %v958 = vpack.c.bf16 %v905, %v904
      %v959 = vpack.c.bf16 %v907, %v906
      %v960 = vpack.c.bf16 %v909, %v908
      %v961 = vpack.c.bf16 %v911, %v910
      %v962 = vpack.c.bf16 %v913, %v912
      %v963 = vpack.c.bf16 %v915, %v914
      %v964 = vpack.c.bf16 %v917, %v916
      %v965 = vpack.c.bf16 %v919, %v918
      %v966 = vpack.c.bf16 %v921, %v920
      %v967 = vpack.c.bf16 %v923, %v922
      %v968 = vpack.c.bf16 %v925, %v924
      %v969 = vpack.c.bf16 %v927, %v926
      %v970 = vpack.c.bf16 %v929, %v928
      %v971 = vpack.c.bf16 %v931, %v930
      %v972 = vpack.c.bf16 %v933, %v932
      %v973 = vpack.c.bf16 %v935, %v934
      %v974 = vpack.c.bf16 %v937, %v936
      %v975 = vpack.c.bf16 %v939, %v938
      %v976 = vpack.c.bf16 %v941, %v940
      %v977 = vpack.c.bf16 %v943, %v942
      %v978 = vpack.c.bf16 %v945, %v944
      %v979 = vpack.c.bf16 %v947, %v946
      %v980 = vpack.c.bf16 %v949, %v948
      %v981 = vpack.c.bf16 %v951, %v950
      %v982 = vpack.c.bf16 %v953, %v952
      %v983 = vpack.c.bf16 %v955, %v954
      %v1012 = vunpack.c.l.b16 %v956
      %v1013 = vunpack.c.h.b16 %v956
      %v1014 = vunpack.c.l.b16 %v957
      %v1015 = vunpack.c.h.b16 %v957
      %v1016 = vunpack.c.l.b16 %v958
      %v1017 = vunpack.c.h.b16 %v958
      %v1018 = vunpack.c.l.b16 %v959
      %v1019 = vunpack.c.h.b16 %v959
      %v1020 = vunpack.c.l.b16 %v960
      %v1021 = vunpack.c.h.b16 %v960
      %v1022 = vunpack.c.l.b16 %v961
      %v1023 = vunpack.c.h.b16 %v961
      %v1024 = vunpack.c.l.b16 %v962
      %v1025 = vunpack.c.h.b16 %v962
      %v1026 = vunpack.c.l.b16 %v963
      %v1027 = vunpack.c.h.b16 %v963
      %v1028 = vunpack.c.l.b16 %v964
      %v1029 = vunpack.c.h.b16 %v964
      %v1030 = vunpack.c.l.b16 %v965
      %v1031 = vunpack.c.h.b16 %v965
      %v1032 = vunpack.c.l.b16 %v966
      %v1033 = vunpack.c.h.b16 %v966
      %v1034 = vunpack.c.l.b16 %v967
      %v1035 = vunpack.c.h.b16 %v967
      %v1036 = vunpack.c.l.b16 %v968
      %v1037 = vunpack.c.h.b16 %v968
      %v1038 = vunpack.c.l.b16 %v969
      %v1039 = vunpack.c.h.b16 %v969
      %v1040 = vunpack.c.l.b16 %v970
      %v1041 = vunpack.c.h.b16 %v970
      %v1042 = vunpack.c.l.b16 %v971
      %v1043 = vunpack.c.h.b16 %v971
      %v1044 = vunpack.c.l.b16 %v972
      %v1045 = vunpack.c.h.b16 %v972
      %v1046 = vunpack.c.l.b16 %v973
      %v1047 = vunpack.c.h.b16 %v973
      %v1048 = vunpack.c.l.b16 %v974
      %v1049 = vunpack.c.h.b16 %v974
      %v1050 = vunpack.c.l.b16 %v975
      %v1051 = vunpack.c.h.b16 %v975
      %v1052 = vunpack.c.l.b16 %v976
      %v1053 = vunpack.c.h.b16 %v976
      %v1054 = vunpack.c.l.b16 %v977
      %v1055 = vunpack.c.h.b16 %v977
      %v1056 = vunpack.c.l.b16 %v978
      %v1057 = vunpack.c.h.b16 %v978
      %v1058 = vunpack.c.l.b16 %v979
      %v1059 = vunpack.c.h.b16 %v979
      %v1060 = vunpack.c.l.b16 %v980
      %v1061 = vunpack.c.h.b16 %v980
      %v1062 = vunpack.c.l.b16 %v981
      %v1063 = vunpack.c.h.b16 %v981
      %v1064 = vunpack.c.l.b16 %v982
      %v1065 = vunpack.c.h.b16 %v982
      %v1066 = vunpack.c.l.b16 %v983
      %v1067 = vunpack.c.h.b16 %v983
      %v1068 = vpack.c.b16 %v1012, %v1012
      %v1069 = vpack.c.b16 %v1013, %v1013
      %v1070 = vpack.c.b16 %v1014, %v1014
      %v1071 = vpack.c.b16 %v1015, %v1015
      %v1072 = vpack.c.b16 %v1016, %v1016
      %v1073 = vpack.c.b16 %v1017, %v1017
      %v1074 = vpack.c.b16 %v1018, %v1018
      %v1075 = vpack.c.b16 %v1019, %v1019
      %v1076 = vpack.c.b16 %v1020, %v1020
      %v1077 = vpack.c.b16 %v1021, %v1021
      %v1078 = vpack.c.b16 %v1022, %v1022
      %v1079 = vpack.c.b16 %v1023, %v1023
      %v1080 = vpack.c.b16 %v1024, %v1024
      %v1081 = vpack.c.b16 %v1025, %v1025
      %v1082 = vpack.c.b16 %v1026, %v1026
      %v1083 = vpack.c.b16 %v1027, %v1027
      %v1084 = vpack.c.b16 %v1028, %v1028
      %v1085 = vpack.c.b16 %v1029, %v1029
      %v1086 = vpack.c.b16 %v1030, %v1030
      %v1087 = vpack.c.b16 %v1031, %v1031
      %v1088 = vpack.c.b16 %v1032, %v1032
      %v1089 = vpack.c.b16 %v1033, %v1033
      %v1090 = vpack.c.b16 %v1034, %v1034
      %v1091 = vpack.c.b16 %v1035, %v1035
      %v1092 = vpack.c.b16 %v1036, %v1036
      %v1093 = vpack.c.b16 %v1037, %v1037
      %v1094 = vpack.c.b16 %v1038, %v1038
      %v1095 = vpack.c.b16 %v1039, %v1039
      %v1096 = vpack.c.b16 %v1040, %v1040
      %v1097 = vpack.c.b16 %v1041, %v1041
      %v1098 = vpack.c.b16 %v1042, %v1042
      %v1099 = vpack.c.b16 %v1043, %v1043
      %v1100 = vpack.c.b16 %v1044, %v1044
      %v1101 = vpack.c.b16 %v1045, %v1045
      %v1102 = vpack.c.b16 %v1046, %v1046
      %v1103 = vpack.c.b16 %v1047, %v1047
      %v1104 = vpack.c.b16 %v1048, %v1048
      %v1105 = vpack.c.b16 %v1049, %v1049
      %v1106 = vpack.c.b16 %v1050, %v1050
      %v1107 = vpack.c.b16 %v1051, %v1051
      %v1108 = vpack.c.b16 %v1052, %v1052
      %v1109 = vpack.c.b16 %v1053, %v1053
      %v1110 = vpack.c.b16 %v1054, %v1054
      %v1111 = vpack.c.b16 %v1055, %v1055
      %v1112 = vpack.c.b16 %v1056, %v1056
      %v1113 = vpack.c.b16 %v1057, %v1057
      %v1114 = vpack.c.b16 %v1058, %v1058
      %v1115 = vpack.c.b16 %v1059, %v1059
      %v1116 = vpack.c.b16 %v1060, %v1060
      %v1117 = vpack.c.b16 %v1061, %v1061
      %v1118 = vpack.c.b16 %v1062, %v1062
      %v1119 = vpack.c.b16 %v1063, %v1063
      %v1120 = vpack.c.b16 %v1064, %v1064
      %v1121 = vpack.c.b16 %v1065, %v1065
      %v1122 = vpack.c.b16 %v1066, %v1066
      %v1123 = vpack.c.b16 %v1067, %v1067
      %vm1180 = vcmask 257024
      %1181 = vst.msk [vmem:[%s170] sm:$0xf] %vm1180, %v1068
      %1182 = vst.msk [vmem:[%s170 + $0x4] sm:$0xf] %vm1180, %v1069
      %1183 = vst.msk [vmem:[%s170 + $0x8] sm:$0xf] %vm1180, %v1070
      %1184 = vst.msk [vmem:[%s170 + $0xc] sm:$0xf] %vm1180, %v1071
      %1185 = vst.msk [vmem:[%s170 + $0x10] sm:$0xf] %vm1180, %v1072
      %1186 = vst.msk [vmem:[%s170 + $0x14] sm:$0xf] %vm1180, %v1073
      %1187 = vst.msk [vmem:[%s170 + $0x18] sm:$0xf] %vm1180, %v1074
      %1188 = vst.msk [vmem:[%s170 + $0x1c] sm:$0xf] %vm1180, %v1075
      %1189 = vst.msk [vmem:[%s170 + $0x20] sm:$0xf] %vm1180, %v1076
      %1190 = vst.msk [vmem:[%s170 + $0x24] sm:$0xf] %vm1180, %v1077
      %1191 = vst.msk [vmem:[%s170 + $0x28] sm:$0xf] %vm1180, %v1078
      %1192 = vst.msk [vmem:[%s170 + $0x2c] sm:$0xf] %vm1180, %v1079
      %1193 = vst.msk [vmem:[%s170 + $0x30] sm:$0xf] %vm1180, %v1080
      %1194 = vst.msk [vmem:[%s170 + $0x34] sm:$0xf] %vm1180, %v1081
      %1195 = vst.msk [vmem:[%s170 + $0x38] sm:$0xf] %vm1180, %v1082
      %1196 = vst.msk [vmem:[%s170 + $0x3c] sm:$0xf] %vm1180, %v1083
      %1197 = vst.msk [vmem:[%s170 + $0x40] sm:$0xf] %vm1180, %v1084
      %1198 = vst.msk [vmem:[%s170 + $0x44] sm:$0xf] %vm1180, %v1085
      %1199 = vst.msk [vmem:[%s170 + $0x48] sm:$0xf] %vm1180, %v1086
      %1200 = vst.msk [vmem:[%s170 + $0x4c] sm:$0xf] %vm1180, %v1087
      %1201 = vst.msk [vmem:[%s170 + $0x50] sm:$0xf] %vm1180, %v1088
      %1202 = vst.msk [vmem:[%s170 + $0x54] sm:$0xf] %vm1180, %v1089
      %1203 = vst.msk [vmem:[%s170 + $0x58] sm:$0xf] %vm1180, %v1090
      %1204 = vst.msk [vmem:[%s170 + $0x5c] sm:$0xf] %vm1180, %v1091
      %1205 = vst.msk [vmem:[%s170 + $0x60] sm:$0xf] %vm1180, %v1092
      %1206 = vst.msk [vmem:[%s170 + $0x64] sm:$0xf] %vm1180, %v1093
      %1207 = vst.msk [vmem:[%s170 + $0x68] sm:$0xf] %vm1180, %v1094
      %1208 = vst.msk [vmem:[%s170 + $0x6c] sm:$0xf] %vm1180, %v1095
      %1209 = vst.msk [vmem:[%s170 + $0x70] sm:$0xf] %vm1180, %v1096
      %1210 = vst.msk [vmem:[%s170 + $0x74] sm:$0xf] %vm1180, %v1097
      %1211 = vst.msk [vmem:[%s170 + $0x78] sm:$0xf] %vm1180, %v1098
      %1212 = vst.msk [vmem:[%s170 + $0x7c] sm:$0xf] %vm1180, %v1099
      %1213 = vst.msk [vmem:[%s170 + $0x80] sm:$0xf] %vm1180, %v1100
      %1214 = vst.msk [vmem:[%s170 + $0x84] sm:$0xf] %vm1180, %v1101
      %1215 = vst.msk [vmem:[%s170 + $0x88] sm:$0xf] %vm1180, %v1102
      %1216 = vst.msk [vmem:[%s170 + $0x8c] sm:$0xf] %vm1180, %v1103
      %1217 = vst.msk [vmem:[%s170 + $0x90] sm:$0xf] %vm1180, %v1104
      %1218 = vst.msk [vmem:[%s170 + $0x94] sm:$0xf] %vm1180, %v1105
      %1219 = vst.msk [vmem:[%s170 + $0x98] sm:$0xf] %vm1180, %v1106
      %1220 = vst.msk [vmem:[%s170 + $0x9c] sm:$0xf] %vm1180, %v1107
      %1221 = vst.msk [vmem:[%s170 + $0xa0] sm:$0xf] %vm1180, %v1108
      %1222 = vst.msk [vmem:[%s170 + $0xa4] sm:$0xf] %vm1180, %v1109
      %1223 = vst.msk [vmem:[%s170 + $0xa8] sm:$0xf] %vm1180, %v1110
      %1224 = vst.msk [vmem:[%s170 + $0xac] sm:$0xf] %vm1180, %v1111
      %1225 = vst.msk [vmem:[%s170 + $0xb0] sm:$0xf] %vm1180, %v1112
      %1226 = vst.msk [vmem:[%s170 + $0xb4] sm:$0xf] %vm1180, %v1113
      %1227 = vst.msk [vmem:[%s170 + $0xb8] sm:$0xf] %vm1180, %v1114
      %1228 = vst.msk [vmem:[%s170 + $0xbc] sm:$0xf] %vm1180, %v1115
      %1229 = vst.msk [vmem:[%s170 + $0xc0] sm:$0xf] %vm1180, %v1116
      %1230 = vst.msk [vmem:[%s170 + $0xc4] sm:$0xf] %vm1180, %v1117
      %1231 = vst.msk [vmem:[%s170 + $0xc8] sm:$0xf] %vm1180, %v1118
      %1232 = vst.msk [vmem:[%s170 + $0xcc] sm:$0xf] %vm1180, %v1119
      %1233 = vst.msk [vmem:[%s170 + $0xd0] sm:$0xf] %vm1180, %v1120
      %1234 = vst.msk [vmem:[%s170 + $0xd4] sm:$0xf] %vm1180, %v1121
      %1235 = vst.msk [vmem:[%s170 + $0xd8] sm:$0xf] %vm1180, %v1122
      %vm1236 = vcmask 253952
      %vm1237 = vsmask.f32 256
      %vm1238 = vmand %vm1236, %vm1237
      %v1239 = vld [vmem:[%s170 + $0xdc] sm:$0x1]
      %v1240 = vsel %vm1238, %v1123, %v1239
      %1241 = vst [vmem:[%s170 + $0xdc] sm:$0x1] %v1240
      %p1242 = scmp.lt.s32.totalorder %s14, 1
      %s1243 = scalar_select %p1242, %s14, 1
      %s1244 = smul.addr %s1243, 56
      %s1245 = smul.addr %s1244, 4
      %s1246 = scalar_lea.vmem %s3, %s1245
      // Predicated region
      $region33: #{nn_vfa_forward.4} parent=31 // pred_check
        %p1247 = pneg %p100
      $region34: #{nn_vfa_forward.4} parent=31 // pred_check_branch
        %1249 = sbr.rel (%p1247) target = $region36
      $region35: #{nn_vfa_forward.4} parent=31 // pred_region
        _
      $region36: #{nn_vfa_forward.4} parent=31 // pred_fallthru
        _
    $region32: #{nn_vfa_forward.4} parent=5 // pred_fallthru
      _
    %p1250 = scmp.le.s32.totalorder 2, %s9
    // Predicated region
    $region37: #{nn_vfa_forward.4} parent=5 // pred_check
      %p1251 = pneg %p1250
    $region38: #{nn_vfa_forward.4} parent=5 // pred_check_branch
      %1253 = sbr.rel (%p1251) target = $region40
    $region39: #{nn_vfa_forward.4} parent=5 // pred_region
      %s1254 = ssub.s32 %s9, 2
      // Predicated region
      $region41: #{nn_vfa_forward.4} parent=39 // pred_check
        %p1255 = pneg %p106
      $region42: #{nn_vfa_forward.4} parent=39 // pred_check_branch
        %1257 = sbr.rel (%p1255) target = $region44
      $region43: #{nn_vfa_forward.4} parent=39 // pred_region
        %p1258 = scmp.lt.s32.totalorder %s15, 1
        %s1259 = scalar_select %p1258, %s15, 1
        %s1260 = smul.addr %s1259, 56
        %s1261 = smul.addr %s1260, 4
        %s1262 = scalar_lea.vmem %s3, %s1261
      $region44: #{nn_vfa_forward.4} parent=39 // pred_fallthru
        _
    $region40: #{nn_vfa_forward.4} parent=5 // pred_fallthru
      _
  $region6: #{nn_vfa_forward.4} parent=0 // loop_footer
    %s13 = sadd.s32 1, %s9
  $region7: #{nn_vfa_forward.4} parent=0 // loop_footer_branch
    %8 = sbr.rel target = $region3
  $region8: #{nn_vfa_forward.4} parent=0 // loop_exit
    _

// kernel: nn_vfa_forward.5
$region0: #{nn_vfa_forward.5}
  #allocation0 [shape = 'u32[]', space=smem, size = 0x4, offset = 0x4, fixed_abs, tag = 'smem constant byte address 0x4 - core index']
  #allocation1 [shape = 'u32[144,128]{1,0:T(1,128)}', space=vmem, size = 0x12000, scoped, tag = 'internal scratch']
  %s0 = inlined_call_operand.vmem [shape: bf16[2,81,512], index: 0, kind: input, shape index: {}]
  %s1 = inlined_call_operand.vmem [shape: bf16[512,64], index: 1, kind: input, shape index: {}]
  %s2 = inlined_call_operand.vmem [shape: f32[1,64], index: 2, kind: input, shape index: {}]
  %s3 = inlined_call_operand.vmem [shape: bf16[2,81,64], index: 3, kind: output, shape index: {}]
  %s4 = sld [smem:[#allocation0]]
  $region45: #{nn_vfa_forward.5} parent=0
    _
  %s6 = ssub.s32 1, %s4
  %s7 = scalar_select 0, %s6, %s4
  loop: start=0, step=1, limit=4
  $region2: #{nn_vfa_forward.5} parent=0 // loop_pre_header
    _
  $region3: #{nn_vfa_forward.5} parent=0 // loop_header
    %s9 = sphi 0, %s13
    %p10 = scmp.ge.s32.totalorder %s9, 4
    %s19 = sphi 0, %s21
    %s22 = sphi 0, %s19
    %s23 = sphi 0, %s22
    %s39 = sphi 0, %s23
    %s43 = sphi 0, %s43
    %s45 = sphi 0, %s43
    %s46 = sphi 0, %s45
    %s60 = sphi 0, %s46
    %s64 = sphi 0, %s64
    %s66 = sphi 0, %s64
    %s67 = sphi 0, %s66
    %s81 = sphi 0, %s67
    %s87 = sphi 0, %s89
    %s90 = sphi 0, %s87
    %s91 = sphi 0, %s90
    %s107 = sphi 0, %s91
  $region4: #{nn_vfa_forward.5} parent=0 // loop_header_branch
    %12 = sbr.rel (%p10) target = $region8
  $region5: #{nn_vfa_forward.5} parent=0 // loop_body
    %s14 = ssub.s32 %s9, 1
    %s15 = ssub.s32 %s9, 2
    %s16 = sadd.s32 %s9, 1
    %s17 = ssub.s32 %s9, %s16
    %p18 = scmp.eq.s32.totalorder %s17, 0
    %s20 = sadd.s32 %s19, 1
    %s21 = scalar_select %p18, %s19, %s20
    %p24 = pneg %p18
    %p25 = scmp.eq.s32.totalorder %s9, 1
    %p26 = por %p24, %p25
    %p27 = scmp.ne.s32.totalorder %s19, %s22
    %p28 = scmp.eq.s32.totalorder %s9, 0
    %p29 = por %p27, %p28
    %p30 = scmp.ne.s32.totalorder %s19, %s22
    %p31 = scmp.eq.s32.totalorder %s14, 1
    %p32 = por %p30, %p31
    %p33 = scmp.ne.s32.totalorder %s22, %s23
    %p34 = scmp.eq.s32.totalorder %s14, 0
    %p35 = por %p33, %p34
    %p36 = scmp.ne.s32.totalorder %s22, %s23
    %p37 = scmp.eq.s32.totalorder %s15, 1
    %p38 = por %p36, %p37
    %p40 = scmp.ne.s32.totalorder %s23, %s39
    %p41 = scmp.eq.s32.totalorder %s15, 0
    %p42 = por %p40, %p41
    %s44 = sadd.s32 %s43, 1
    %p47 = scmp.eq.s32.totalorder %s9, 1
    %p48 = scmp.ne.s32.totalorder %s43, %s45
    %p49 = scmp.eq.s32.totalorder %s9, 0
    %p50 = por %p48, %p49
    %p51 = scmp.ne.s32.totalorder %s43, %s45
    %p52 = scmp.eq.s32.totalorder %s14, 1
    %p53 = por %p51, %p52
    %p54 = scmp.ne.s32.totalorder %s45, %s46
    %p55 = scmp.eq.s32.totalorder %s14, 0
    %p56 = por %p54, %p55
    %p57 = scmp.ne.s32.totalorder %s45, %s46
    %p58 = scmp.eq.s32.totalorder %s15, 1
    %p59 = por %p57, %p58
    %p61 = scmp.ne.s32.totalorder %s46, %s60
    %p62 = scmp.eq.s32.totalorder %s15, 0
    %p63 = por %p61, %p62
    %s65 = sadd.s32 %s64, 1
    %p68 = scmp.eq.s32.totalorder %s9, 1
    %p69 = scmp.ne.s32.totalorder %s64, %s66
    %p70 = scmp.eq.s32.totalorder %s9, 0
    %p71 = por %p69, %p70
    %p72 = scmp.ne.s32.totalorder %s64, %s66
    %p73 = scmp.eq.s32.totalorder %s14, 1
    %p74 = por %p72, %p73
    %p75 = scmp.ne.s32.totalorder %s66, %s67
    %p76 = scmp.eq.s32.totalorder %s14, 0
    %p77 = por %p75, %p76
    %p78 = scmp.ne.s32.totalorder %s66, %s67
    %p79 = scmp.eq.s32.totalorder %s15, 1
    %p80 = por %p78, %p79
    %p82 = scmp.ne.s32.totalorder %s67, %s81
    %p83 = scmp.eq.s32.totalorder %s15, 0
    %p84 = por %p82, %p83
    %s85 = ssub.s32 %s9, %s16
    %p86 = scmp.eq.s32.totalorder %s85, 0
    %s88 = sadd.s32 %s87, 1
    %s89 = scalar_select %p86, %s87, %s88
    %p92 = pneg %p86
    %p93 = scmp.eq.s32.totalorder %s9, 1
    %p94 = por %p92, %p93
    %p95 = scmp.ne.s32.totalorder %s87, %s90
    %p96 = scmp.eq.s32.totalorder %s9, 0
    %p97 = por %p95, %p96
    %p98 = scmp.ne.s32.totalorder %s87, %s90
    %p99 = scmp.eq.s32.totalorder %s14, 1
    %p100 = por %p98, %p99
    %p101 = scmp.ne.s32.totalorder %s90, %s91
    %p102 = scmp.eq.s32.totalorder %s14, 0
    %p103 = por %p101, %p102
    %p104 = scmp.ne.s32.totalorder %s90, %s91
    %p105 = scmp.eq.s32.totalorder %s15, 1
    %p106 = por %p104, %p105
    %p108 = scmp.ne.s32.totalorder %s91, %s107
    %p109 = scmp.eq.s32.totalorder %s15, 0
    %p110 = por %p108, %p109
    %p111 = scmp.le.s32.totalorder 1, %s9
    %p112 = scmp.lt.s32.totalorder %s9, 3
    %p113 = pnand %p111, %p112
    %p114 = pneg %p113
    // Predicated region
    $region9: #{nn_vfa_forward.5} parent=5 // pred_check
      _
    $region10: #{nn_vfa_forward.5} parent=5 // pred_check_branch
      %116 = sbr.rel (%p113) target = $region12
    $region11: #{nn_vfa_forward.5} parent=5 // pred_region
      %s117 = ssub.s32 %s9, 1
      // Predicated region
      $region13: #{nn_vfa_forward.5} parent=11 // pred_check
        %p118 = pneg %p56
      $region14: #{nn_vfa_forward.5} parent=11 // pred_check_branch
        %120 = sbr.rel (%p118) target = $region16
      $region15: #{nn_vfa_forward.5} parent=11 // pred_region
        _
      $region16: #{nn_vfa_forward.5} parent=11 // pred_fallthru
        _
      // Predicated region
      $region17: #{nn_vfa_forward.5} parent=11 // pred_check
        %p121 = pneg %p77
      $region18: #{nn_vfa_forward.5} parent=11 // pred_check_branch
        %123 = sbr.rel (%p121) target = $region20
      $region19: #{nn_vfa_forward.5} parent=11 // pred_region
        _
      $region20: #{nn_vfa_forward.5} parent=11 // pred_fallthru
        _
    $region12: #{nn_vfa_forward.5} parent=5 // pred_fallthru
      _
    %p124 = scmp.lt.s32.totalorder %s9, 2
    // Predicated region
    $region21: #{nn_vfa_forward.5} parent=5 // pred_check
      %p125 = pneg %p124
    $region22: #{nn_vfa_forward.5} parent=5 // pred_check_branch
      %127 = sbr.rel (%p125) target = $region24
    $region23: #{nn_vfa_forward.5} parent=5 // pred_region
      // Predicated region
      $region25: #{nn_vfa_forward.5} parent=23 // pred_check
        %p128 = pneg %p29
      $region26: #{nn_vfa_forward.5} parent=23 // pred_check_branch
        %130 = sbr.rel (%p128) target = $region28
      $region27: #{nn_vfa_forward.5} parent=23 // pred_region
        %p131 = scmp.lt.s32.totalorder %s9, 1
        %s132 = scalar_select %p131, %s9, 1
        %s133 = smul.addr %s132, 44
        %s134 = smul.addr %s133, 4
        %s135 = scalar_lea.vmem %s0, %s134
      $region28: #{nn_vfa_forward.5} parent=23 // pred_fallthru
        _
    $region24: #{nn_vfa_forward.5} parent=5 // pred_fallthru
      _
    %p136 = scmp.le.s32.totalorder 1, %s9
    %p137 = scmp.lt.s32.totalorder %s9, 3
    %p138 = pnand %p136, %p137
    %p139 = pneg %p138
    // Predicated region
    $region29: #{nn_vfa_forward.5} parent=5 // pred_check
      _
    $region30: #{nn_vfa_forward.5} parent=5 // pred_check_branch
      %141 = sbr.rel (%p138) target = $region32
    $region31: #{nn_vfa_forward.5} parent=5 // pred_region
      %s142 = ssub.s32 %s9, 1
      %p143 = scmp.lt.s32.totalorder %s14, 1
      %s144 = scalar_select %p143, %s14, 1
      %s145 = smul.addr %s144, 44
      %s146 = smul.addr %s145, 4
      %s147 = scalar_lea.vmem %s0, %s146
      %p148 = pneg %p35
      %p149 = pneg %p32
      %p150 = pneg %p56
      %p151 = pneg %p53
      %p152 = pneg %p77
      %p153 = pneg %p74
      %p154 = pneg %p103
      %p155 = pneg %p100
      %p156 = scmp.lt.s32.totalorder %s14, 1
      %s157 = scalar_select %p156, %s14, 1
      %s158 = smul.addr %s157, 11
      %s159 = smul.addr %s158, 4
      %s160 = scalar_lea.vmem %s3, %s159
      %p161 = scmp.lt.s32.totalorder %s14, 1
      %s162 = scalar_select %p161, %s14, 1
      %s163 = smul.addr %s162, 44
      %s164 = smul.addr %s163, 4
      %s165 = scalar_lea.vmem %s0, %s164
      %p166 = scmp.lt.s32.totalorder %s14, 1
      %s167 = scalar_select %p166, %s14, 1
      %s168 = smul.addr %s167, 11
      %s169 = smul.addr %s168, 4
      %s170 = scalar_lea.vmem %s3, %s169
      %v172 = vld [vmem:[%s165] sm:$0xff]
      %v173 = vld [vmem:[%s165 + $0x8] sm:$0xff]
      %v174 = vld [vmem:[%s165 + $0x10] sm:$0xff]
      %v175 = vld [vmem:[%s165 + $0x18] sm:$0xff]
      %v176 = vld [vmem:[%s165 + $0x20] sm:$0xff]
      %v177 = vld [vmem:[%s165 + $0x28] sm:$0xff]
      %v178 = vld [vmem:[%s165 + $0x30] sm:$0xff]
      %v179 = vld [vmem:[%s165 + $0x38] sm:$0xff]
      %v180 = vld [vmem:[%s165 + $0x40] sm:$0xff]
      %v181 = vld [vmem:[%s165 + $0x48] sm:$0xff]
      %v182 = vld [vmem:[%s165 + $0x50] sm:$0xff]
      %v183 = vld [vmem:[%s165 + $0x58] sm:$0xff]
      %v184 = vld [vmem:[%s165 + $0x60] sm:$0xff]
      %v185 = vld [vmem:[%s165 + $0x68] sm:$0xff]
      %v186 = vld [vmem:[%s165 + $0x70] sm:$0xff]
      %v187 = vld [vmem:[%s165 + $0x78] sm:$0xff]
      %v188 = vld [vmem:[%s165 + $0x80] sm:$0xff]
      %v189 = vld [vmem:[%s165 + $0x88] sm:$0xff]
      %v190 = vld [vmem:[%s165 + $0x90] sm:$0xff]
      %v191 = vld [vmem:[%s165 + $0x98] sm:$0xff]
      %v192 = vld [vmem:[%s165 + $0xa0] sm:$0x11]
      %v193 = vld [vmem:[%s165 + $0xa8] sm:$0x11]
      %v194 = vld [vmem:[%s1] sm:$0xf]
      %v195 = vld [vmem:[%s1 + $0x4] sm:$0xf]
      %v196 = vld [vmem:[%s1 + $0x8] sm:$0xf]
      %v197 = vld [vmem:[%s1 + $0xc] sm:$0xf]
      %v198 = vld [vmem:[%s1 + $0x10] sm:$0xf]
      %v199 = vld [vmem:[%s1 + $0x14] sm:$0xf]
      %v200 = vld [vmem:[%s1 + $0x18] sm:$0xf]
      %v201 = vld [vmem:[%s1 + $0x1c] sm:$0xf]
      %v202 = vld [vmem:[%s1 + $0x20] sm:$0xf]
      %v203 = vld [vmem:[%s1 + $0x24] sm:$0xf]
      %v204 = vld [vmem:[%s1 + $0x28] sm:$0xf]
      %v205 = vld [vmem:[%s1 + $0x2c] sm:$0xf]
      %v206 = vld [vmem:[%s1 + $0x30] sm:$0xf]
      %v207 = vld [vmem:[%s1 + $0x34] sm:$0xf]
      %v208 = vld [vmem:[%s1 + $0x38] sm:$0xf]
      %v209 = vld [vmem:[%s1 + $0x3c] sm:$0xf]
      %v210 = vld [vmem:[%s1 + $0x40] sm:$0xf]
      %v211 = vld [vmem:[%s1 + $0x44] sm:$0xf]
      %v212 = vld [vmem:[%s1 + $0x48] sm:$0xf]
      %v213 = vld [vmem:[%s1 + $0x4c] sm:$0xf]
      %v214 = vld [vmem:[%s1 + $0x50] sm:$0xf]
      %v215 = vld [vmem:[%s1 + $0x54] sm:$0xf]
      %v216 = vld [vmem:[%s1 + $0x58] sm:$0xf]
      %v217 = vld [vmem:[%s1 + $0x5c] sm:$0xf]
      %v218 = vld [vmem:[%s1 + $0x60] sm:$0xf]
      %v219 = vld [vmem:[%s1 + $0x64] sm:$0xf]
      %v220 = vld [vmem:[%s1 + $0x68] sm:$0xf]
      %v221 = vld [vmem:[%s1 + $0x6c] sm:$0xf]
      %v222 = vld [vmem:[%s1 + $0x70] sm:$0xf]
      %v223 = vld [vmem:[%s1 + $0x74] sm:$0xf]
      %v224 = vld [vmem:[%s1 + $0x78] sm:$0xf]
      %v225 = vld [vmem:[%s1 + $0x7c] sm:$0xf]
      %v226 = vld [vmem:[%s1 + $0x80] sm:$0xf]
      %v227 = vld [vmem:[%s1 + $0x84] sm:$0xf]
      %v228 = vld [vmem:[%s1 + $0x88] sm:$0xf]
      %v229 = vld [vmem:[%s1 + $0x8c] sm:$0xf]
      %v230 = vld [vmem:[%s1 + $0x90] sm:$0xf]
      %v231 = vld [vmem:[%s1 + $0x94] sm:$0xf]
      %v232 = vld [vmem:[%s1 + $0x98] sm:$0xf]
      %v233 = vld [vmem:[%s1 + $0x9c] sm:$0xf]
      %v234 = vld [vmem:[%s1 + $0xa0] sm:$0xf]
      %v235 = vld [vmem:[%s1 + $0xa4] sm:$0xf]
      %v236 = vld [vmem:[%s1 + $0xa8] sm:$0xf]
      %v237 = vld [vmem:[%s1 + $0xac] sm:$0xf]
      %v238 = vld [vmem:[%s1 + $0xb0] sm:$0xf]
      %v239 = vld [vmem:[%s1 + $0xb4] sm:$0xf]
      %v240 = vld [vmem:[%s1 + $0xb8] sm:$0xf]
      %v241 = vld [vmem:[%s1 + $0xbc] sm:$0xf]
      %v242 = vld [vmem:[%s1 + $0xc0] sm:$0xf]
      %v243 = vld [vmem:[%s1 + $0xc4] sm:$0xf]
      %v244 = vld [vmem:[%s1 + $0xc8] sm:$0xf]
      %v245 = vld [vmem:[%s1 + $0xcc] sm:$0xf]
      %v246 = vld [vmem:[%s1 + $0xd0] sm:$0xf]
      %v247 = vld [vmem:[%s1 + $0xd4] sm:$0xf]
      %v248 = vld [vmem:[%s1 + $0xd8] sm:$0xf]
      %v249 = vld [vmem:[%s1 + $0xdc] sm:$0xf]
      %v250 = vld [vmem:[%s1 + $0xe0] sm:$0xf]
      %v251 = vld [vmem:[%s1 + $0xe4] sm:$0xf]
      %v252 = vld [vmem:[%s1 + $0xe8] sm:$0xf]
      %v253 = vld [vmem:[%s1 + $0xec] sm:$0xf]
      %v254 = vld [vmem:[%s1 + $0xf0] sm:$0xf]
      %v255 = vld [vmem:[%s1 + $0xf4] sm:$0xf]
      %v256 = vld [vmem:[%s1 + $0xf8] sm:$0xf]
      %v257 = vld [vmem:[%s1 + $0xfc] sm:$0xf]
      %v258 = vld [vmem:[%s2] sm:$0x1]
      %v260 = vlaneseq
      %v261 = vshrl.u32 %v260, 7
      %v262 = vsub.s32 0, %v261
      %v263 = vrot.slane %v258, %v262
      %v287 = vunpack.c.l.b16 %v172
      %v288 = vunpack.c.h.b16 %v172
      %v289 = vunpack.c.l.b16 %v173
      %v290 = vunpack.c.h.b16 %v173
      %v291 = vunpack.c.l.b16 %v174
      %v292 = vunpack.c.h.b16 %v174
      %v293 = vunpack.c.l.b16 %v175
      %v294 = vunpack.c.h.b16 %v175
      %v295 = vunpack.c.l.b16 %v176
      %v296 = vunpack.c.h.b16 %v176
      %v297 = vunpack.c.l.b16 %v177
      %v298 = vunpack.c.h.b16 %v177
      %v299 = vunpack.c.l.b16 %v178
      %v300 = vunpack.c.h.b16 %v178
      %v301 = vunpack.c.l.b16 %v179
      %v302 = vunpack.c.h.b16 %v179
      %v303 = vunpack.c.l.b16 %v180
      %v304 = vunpack.c.h.b16 %v180
      %v305 = vunpack.c.l.b16 %v181
      %v306 = vunpack.c.h.b16 %v181
      %v307 = vunpack.c.l.b16 %v182
      %v308 = vunpack.c.h.b16 %v182
      %v309 = vunpack.c.l.b16 %v183
      %v310 = vunpack.c.h.b16 %v183
      %v311 = vunpack.c.l.b16 %v184
      %v312 = vunpack.c.h.b16 %v184
      %v313 = vunpack.c.l.b16 %v185
      %v314 = vunpack.c.h.b16 %v185
      %v315 = vunpack.c.l.b16 %v186
      %v316 = vunpack.c.h.b16 %v186
      %v317 = vunpack.c.l.b16 %v187
      %v318 = vunpack.c.h.b16 %v187
      %v319 = vunpack.c.l.b16 %v188
      %v320 = vunpack.c.h.b16 %v188
      %v321 = vunpack.c.l.b16 %v189
      %v322 = vunpack.c.h.b16 %v189
      %v323 = vunpack.c.l.b16 %v190
      %v324 = vunpack.c.h.b16 %v190
      %v325 = vunpack.c.l.b16 %v191
      %v326 = vunpack.c.h.b16 %v191
      %v327 = vunpack.c.l.b16 %v192
      %v328 = vunpack.c.h.b16 %v192
      %v329 = vunpack.c.l.b16 %v193
      %v330 = vunpack.c.h.b16 %v193
      %v331 = vpack.c.b16 %v291, %v287
      %v332 = vpack.c.b16 %v292, %v288
      %v333 = vpack.c.b16 %v293, %v289
      %v334 = vpack.c.b16 %v294, %v290
      %v335 = vpack.c.b16 %v299, %v295
      %v336 = vpack.c.b16 %v300, %v296
      %v337 = vpack.c.b16 %v301, %v297
      %v338 = vpack.c.b16 %v302, %v298
      %v339 = vpack.c.b16 %v307, %v303
      %v340 = vpack.c.b16 %v308, %v304
      %v341 = vpack.c.b16 %v309, %v305
      %v342 = vpack.c.b16 %v310, %v306
      %v343 = vpack.c.b16 %v315, %v311
      %v344 = vpack.c.b16 %v316, %v312
      %v345 = vpack.c.b16 %v317, %v313
      %v346 = vpack.c.b16 %v318, %v314
      %v347 = vpack.c.b16 %v323, %v319
      %v348 = vpack.c.b16 %v324, %v320
      %v349 = vpack.c.b16 %v325, %v321
      %v350 = vpack.c.b16 %v326, %v322
      %v351 = vpack.c.b16 %v327, %v327
      %v352 = vpack.c.b16 %v328, %v328
      %v353 = vpack.c.b16 %v329, %v329
      %v354 = vpack.c.b16 %v330, %v330
      %v443 = vunpack.c.l.b16 %v194
      %v444 = vunpack.c.l.b16 %v195
      %v445 = vunpack.c.l.b16 %v196
      %v446 = vunpack.c.l.b16 %v197
      %v447 = vunpack.c.l.b16 %v198
      %v448 = vunpack.c.l.b16 %v199
      %v449 = vunpack.c.l.b16 %v200
      %v450 = vunpack.c.l.b16 %v201
      %v451 = vunpack.c.l.b16 %v202
      %v452 = vunpack.c.l.b16 %v203
      %v453 = vunpack.c.l.b16 %v204
      %v454 = vunpack.c.l.b16 %v205
      %v455 = vunpack.c.l.b16 %v206
      %v456 = vunpack.c.l.b16 %v207
      %v457 = vunpack.c.l.b16 %v208
      %v458 = vunpack.c.l.b16 %v209
      %v459 = vunpack.c.l.b16 %v210
      %v460 = vunpack.c.l.b16 %v211
      %v461 = vunpack.c.l.b16 %v212
      %v462 = vunpack.c.l.b16 %v213
      %v463 = vunpack.c.l.b16 %v214
      %v464 = vunpack.c.l.b16 %v215
      %v465 = vunpack.c.l.b16 %v216
      %v466 = vunpack.c.l.b16 %v217
      %v467 = vunpack.c.l.b16 %v218
      %v468 = vunpack.c.l.b16 %v219
      %v469 = vunpack.c.l.b16 %v220
      %v470 = vunpack.c.l.b16 %v221
      %v471 = vunpack.c.l.b16 %v222
      %v472 = vunpack.c.l.b16 %v223
      %v473 = vunpack.c.l.b16 %v224
      %v474 = vunpack.c.l.b16 %v225
      %v475 = vunpack.c.l.b16 %v226
      %v476 = vunpack.c.l.b16 %v227
      %v477 = vunpack.c.l.b16 %v228
      %v478 = vunpack.c.l.b16 %v229
      %v479 = vunpack.c.l.b16 %v230
      %v480 = vunpack.c.l.b16 %v231
      %v481 = vunpack.c.l.b16 %v232
      %v482 = vunpack.c.l.b16 %v233
      %v483 = vunpack.c.l.b16 %v234
      %v484 = vunpack.c.l.b16 %v235
      %v485 = vunpack.c.l.b16 %v236
      %v486 = vunpack.c.l.b16 %v237
      %v487 = vunpack.c.l.b16 %v238
      %v488 = vunpack.c.l.b16 %v239
      %v489 = vunpack.c.l.b16 %v240
      %v490 = vunpack.c.l.b16 %v241
      %v491 = vunpack.c.l.b16 %v242
      %v492 = vunpack.c.l.b16 %v243
      %v493 = vunpack.c.l.b16 %v244
      %v494 = vunpack.c.l.b16 %v245
      %v495 = vunpack.c.l.b16 %v246
      %v496 = vunpack.c.l.b16 %v247
      %v497 = vunpack.c.l.b16 %v248
      %v498 = vunpack.c.l.b16 %v249
      %v499 = vunpack.c.l.b16 %v250
      %v500 = vunpack.c.l.b16 %v251
      %v501 = vunpack.c.l.b16 %v252
      %v502 = vunpack.c.l.b16 %v253
      %v503 = vunpack.c.l.b16 %v254
      %v504 = vunpack.c.l.b16 %v255
      %v505 = vunpack.c.l.b16 %v256
      %v506 = vunpack.c.l.b16 %v257
      %v507 = vpack.c.b16 %v444, %v443
      %v508 = vpack.c.b16 %v446, %v445
      %v509 = vpack.c.b16 %v448, %v447
      %v510 = vpack.c.b16 %v450, %v449
      %v511 = vpack.c.b16 %v452, %v451
      %v512 = vpack.c.b16 %v454, %v453
      %v513 = vpack.c.b16 %v456, %v455
      %v514 = vpack.c.b16 %v458, %v457
      %v515 = vpack.c.b16 %v460, %v459
      %v516 = vpack.c.b16 %v462, %v461
      %v517 = vpack.c.b16 %v464, %v463
      %v518 = vpack.c.b16 %v466, %v465
      %v519 = vpack.c.b16 %v468, %v467
      %v520 = vpack.c.b16 %v470, %v469
      %v521 = vpack.c.b16 %v472, %v471
      %v522 = vpack.c.b16 %v474, %v473
      %v523 = vpack.c.b16 %v476, %v475
      %v524 = vpack.c.b16 %v478, %v477
      %v525 = vpack.c.b16 %v480, %v479
      %v526 = vpack.c.b16 %v482, %v481
      %v527 = vpack.c.b16 %v484, %v483
      %v528 = vpack.c.b16 %v486, %v485
      %v529 = vpack.c.b16 %v488, %v487
      %v530 = vpack.c.b16 %v490, %v489
      %v531 = vpack.c.b16 %v492, %v491
      %v532 = vpack.c.b16 %v494, %v493
      %v533 = vpack.c.b16 %v496, %v495
      %v534 = vpack.c.b16 %v498, %v497
      %v535 = vpack.c.b16 %v500, %v499
      %v536 = vpack.c.b16 %v502, %v501
      %v537 = vpack.c.b16 %v504, %v503
      %v538 = vpack.c.b16 %v506, %v505
      %571 = vmatprep.subr.bf16.mxu0 0
      %572 = vmatpush1.bf16.msra.mxu0 %v507
      %573 = vmatprep.subr.bf16.mxu0 0
      %574 = vmatpush1.bf16.msra.mxu0 %v508
      %575 = vmatprep.subr.bf16.mxu0 0
      %576 = vmatpush1.bf16.msra.mxu0 %v509
      %577 = vmatprep.subr.bf16.mxu0 0
      %578 = vmatpush1.bf16.msra.mxu0 %v510
      %579 = vmatprep.subr.bf16.mxu0 0
      %580 = vmatpush1.bf16.msra.mxu0 %v511
      %581 = vmatprep.subr.bf16.mxu0 0
      %582 = vmatpush1.bf16.msra.mxu0 %v512
      %583 = vmatprep.subr.bf16.mxu0 0
      %584 = vmatpush1.bf16.msra.mxu0 %v513
      %585 = vmatprep.subr.bf16.mxu0 0
      %586 = vmatpush1.bf16.msra.mxu0 %v514
      %587 = vmatprep.subr.bf16.mxu0 0
      %588 = vmatpush1.bf16.msra.mxu0 %v515
      %589 = vmatprep.subr.bf16.mxu0 0
      %590 = vmatpush1.bf16.msra.mxu0 %v516
      %591 = vmatprep.subr.bf16.mxu0 0
      %592 = vmatpush1.bf16.msra.mxu0 %v517
      %593 = vmatprep.subr.bf16.mxu0 0
      %594 = vmatpush1.bf16.msra.mxu0 %v518
      %595 = vmatprep.subr.bf16.mxu0 0
      %596 = vmatpush1.bf16.msra.mxu0 %v519
      %597 = vmatprep.subr.bf16.mxu0 0
      %598 = vmatpush1.bf16.msra.mxu0 %v520
      %599 = vmatprep.subr.bf16.mxu0 0
      %600 = vmatpush1.bf16.msra.mxu0 %v521
      %601 = vmatprep.subr.bf16.mxu0 0
      %602 = vmatpush1.bf16.msra.mxu0 %v522
      %603 = vmatprep.mubr.bf16.mxu0 %v332
      %604 = vmatmul.mubr.bf16.gmra.mrb[0].mxu0 %v331
      %v605 = vpop.f32.mrb[0].mxu0
      %v606 = vadd.f32 %v263, %v605
      %v607 = vpop.f32.mrb[0].mxu0
      %v608 = vpop.f32.mrb[0].mxu0
      %v609 = vadd.f32 %v263, %v608
      %v610 = vpop.f32.mrb[0].mxu0
      %611 = vmatprep.mubr.bf16.mxu0 %v336
      %612 = vmatmul.mubr.bf16.gmra.mrb[0].mxu0 %v335
      %v613 = vpop.f32.mrb[0].mxu0
      %v614 = vadd.f32 %v263, %v613
      %v615 = vpop.f32.mrb[0].mxu0
      %v616 = vpop.f32.mrb[0].mxu0
      %v617 = vadd.f32 %v263, %v616
      %v618 = vpop.f32.mrb[0].mxu0
      %619 = vmatprep.mubr.bf16.mxu0 %v340
      %620 = vmatmul.mubr.bf16.gmra.mrb[0].mxu0 %v339
      %v621 = vpop.f32.mrb[0].mxu0
      %v622 = vadd.f32 %v263, %v621
      %v623 = vpop.f32.mrb[0].mxu0
      %v624 = vpop.f32.mrb[0].mxu0
      %v625 = vadd.f32 %v263, %v624
      %v626 = vpop.f32.mrb[0].mxu0
      %627 = vmatprep.mubr.bf16.mxu0 %v344
      %628 = vmatmul.mubr.bf16.gmra.mrb[0].mxu0 %v343
      %v629 = vpop.f32.mrb[0].mxu0
      %v630 = vadd.f32 %v263, %v629
      %v631 = vpop.f32.mrb[0].mxu0
      %v632 = vpop.f32.mrb[0].mxu0
      %v633 = vadd.f32 %v263, %v632
      %v634 = vpop.f32.mrb[0].mxu0
      %635 = vmatprep.mubr.bf16.mxu0 %v348
      %636 = vmatmul.mubr.bf16.gmra.mrb[0].mxu0 %v347
      %v637 = vpop.f32.mrb[0].mxu0
      %v638 = vadd.f32 %v263, %v637
      %v639 = vpop.f32.mrb[0].mxu0
      %v640 = vpop.f32.mrb[0].mxu0
      %v641 = vadd.f32 %v263, %v640
      %v642 = vpop.f32.mrb[0].mxu0
      %643 = vmatprep.mubr.bf16.mxu0 %v352
      %644 = vmatmul.mubr.bf16.gmra.mrb[0].mxu0 %v351
      %v645 = vpop.f32.mrb[0].mxu0
      %v646 = vadd.f32 %v263, %v645
      %v647 = vpop.f32.mrb[0].mxu0
      %v648 = vpop.f32.mrb[0].mxu0
      %v649 = vpop.f32.mrb[0].mxu0
      %650 = vdwg.mxu0
      %651 = vmatprep.subr.bf16.mxu0 0
      %652 = vmatpush1.bf16.msra.mxu0 %v523
      %653 = vmatprep.subr.bf16.mxu0 0
      %654 = vmatpush1.bf16.msra.mxu0 %v524
      %655 = vmatprep.subr.bf16.mxu0 0
      %656 = vmatpush1.bf16.msra.mxu0 %v525
      %657 = vmatprep.subr.bf16.mxu0 0
      %658 = vmatpush1.bf16.msra.mxu0 %v526
      %659 = vmatprep.subr.bf16.mxu0 0
      %660 = vmatpush1.bf16.msra.mxu0 %v527
      %661 = vmatprep.subr.bf16.mxu0 0
      %662 = vmatpush1.bf16.msra.mxu0 %v528
      %663 = vmatprep.subr.bf16.mxu0 0
      %664 = vmatpush1.bf16.msra.mxu0 %v529
      %665 = vmatprep.subr.bf16.mxu0 0
      %666 = vmatpush1.bf16.msra.mxu0 %v530
      %667 = vmatprep.subr.bf16.mxu0 0
      %668 = vmatpush1.bf16.msra.mxu0 %v531
      %669 = vmatprep.subr.bf16.mxu0 0
      %670 = vmatpush1.bf16.msra.mxu0 %v532
      %671 = vmatprep.subr.bf16.mxu0 0
      %672 = vmatpush1.bf16.msra.mxu0 %v533
      %673 = vmatprep.subr.bf16.mxu0 0
      %674 = vmatpush1.bf16.msra.mxu0 %v534
      %675 = vmatprep.subr.bf16.mxu0 0
      %676 = vmatpush1.bf16.msra.mxu0 %v535
      %677 = vmatprep.subr.bf16.mxu0 0
      %678 = vmatpush1.bf16.msra.mxu0 %v536
      %679 = vmatprep.subr.bf16.mxu0 0
      %680 = vmatpush1.bf16.msra.mxu0 %v537
      %681 = vmatprep.subr.bf16.mxu0 0
      %682 = vmatpush1.bf16.msra.mxu0 %v538
      %683 = vmatprep.mubr.bf16.mxu0 %v334
      %684 = vmatmul.mubr.bf16.gmra.mrb[0].mxu0 %v333
      %v685 = vpop.f32.mrb[0].mxu0
      %v686 = vadd.f32 %v606, %v685
      %v687 = vpop.f32.mrb[0].mxu0
      %v688 = vpop.f32.mrb[0].mxu0
      %v689 = vadd.f32 %v609, %v688
      %v690 = vpop.f32.mrb[0].mxu0
      %691 = vmatprep.mubr.bf16.mxu0 %v338
      %692 = vmatmul.mubr.bf16.gmra.mrb[0].mxu0 %v337
      %v693 = vpop.f32.mrb[0].mxu0
      %v694 = vadd.f32 %v614, %v693
      %v695 = vpop.f32.mrb[0].mxu0
      %v696 = vpop.f32.mrb[0].mxu0
      %v697 = vadd.f32 %v617, %v696
      %v698 = vpop.f32.mrb[0].mxu0
      %699 = vmatprep.mubr.bf16.mxu0 %v342
      %700 = vmatmul.mubr.bf16.gmra.mrb[0].mxu0 %v341
      %v701 = vpop.f32.mrb[0].mxu0
      %v702 = vadd.f32 %v622, %v701
      %v703 = vpop.f32.mrb[0].mxu0
      %v704 = vpop.f32.mrb[0].mxu0
      %v705 = vadd.f32 %v625, %v704
      %v706 = vpop.f32.mrb[0].mxu0
      %707 = vmatprep.mubr.bf16.mxu0 %v346
      %708 = vmatmul.mubr.bf16.gmra.mrb[0].mxu0 %v345
      %v709 = vpop.f32.mrb[0].mxu0
      %v710 = vadd.f32 %v630, %v709
      %v711 = vpop.f32.mrb[0].mxu0
      %v712 = vpop.f32.mrb[0].mxu0
      %v713 = vadd.f32 %v633, %v712
      %v714 = vpop.f32.mrb[0].mxu0
      %715 = vmatprep.mubr.bf16.mxu0 %v350
      %716 = vmatmul.mubr.bf16.gmra.mrb[0].mxu0 %v349
      %v717 = vpop.f32.mrb[0].mxu0
      %v718 = vadd.f32 %v638, %v717
      %v719 = vpop.f32.mrb[0].mxu0
      %v720 = vpop.f32.mrb[0].mxu0
      %v721 = vadd.f32 %v641, %v720
      %v722 = vpop.f32.mrb[0].mxu0
      %723 = vmatprep.mubr.bf16.mxu0 %v354
      %724 = vmatmul.mubr.bf16.gmra.mrb[0].mxu0 %v353
      %v725 = vpop.f32.mrb[0].mxu0
      %v726 = vadd.f32 %v646, %v725
      %v727 = vpop.f32.mrb[0].mxu0
      %v728 = vpop.f32.mrb[0].mxu0
      %v729 = vpop.f32.mrb[0].mxu0
      %730 = vdwg.mxu0
      %v731 = vmax.f32 %v686, 0.0
      %v732 = vmax.f32 %v689, 0.0
      %v733 = vmax.f32 %v694, 0.0
      %v734 = vmax.f32 %v697, 0.0
      %v735 = vmax.f32 %v702, 0.0
      %v736 = vmax.f32 %v705, 0.0
      %v737 = vmax.f32 %v710, 0.0
      %v738 = vmax.f32 %v713, 0.0
      %v739 = vmax.f32 %v718, 0.0
      %v740 = vmax.f32 %v721, 0.0
      %v741 = vmax.f32 %v726, 0.0
      %v742 = vpack.c.bf16 %v732, %v731
      %v743 = vpack.c.bf16 %v734, %v733
      %v744 = vpack.c.bf16 %v736, %v735
      %v745 = vpack.c.bf16 %v738, %v737
      %v746 = vpack.c.bf16 %v740, %v739
      %v747 = vpack.c.bf16 %v741, %v741
      %v754 = vunpack.c.l.b16 %v742
      %v755 = vunpack.c.h.b16 %v742
      %v756 = vunpack.c.l.b16 %v743
      %v757 = vunpack.c.h.b16 %v743
      %v758 = vunpack.c.l.b16 %v744
      %v759 = vunpack.c.h.b16 %v744
      %v760 = vunpack.c.l.b16 %v745
      %v761 = vunpack.c.h.b16 %v745
      %v762 = vunpack.c.l.b16 %v746
      %v763 = vunpack.c.h.b16 %v746
      %v764 = vunpack.c.l.b16 %v747
      %v765 = vpack.c.b16 %v754, %v754
      %v766 = vpack.c.b16 %v755, %v755
      %v767 = vpack.c.b16 %v756, %v756
      %v768 = vpack.c.b16 %v757, %v757
      %v769 = vpack.c.b16 %v758, %v758
      %v770 = vpack.c.b16 %v759, %v759
      %v771 = vpack.c.b16 %v760, %v760
      %v772 = vpack.c.b16 %v761, %v761
      %v773 = vpack.c.b16 %v762, %v762
      %v774 = vpack.c.b16 %v763, %v763
      %v775 = vpack.c.b16 %v764, %v764
      %vm787 = vcmask 519168
      %788 = vst.msk [vmem:[%s170] sm:$0xf] %vm787, %v765
      %789 = vst.msk [vmem:[%s170 + $0x4] sm:$0xf] %vm787, %v766
      %790 = vst.msk [vmem:[%s170 + $0x8] sm:$0xf] %vm787, %v767
      %791 = vst.msk [vmem:[%s170 + $0xc] sm:$0xf] %vm787, %v768
      %792 = vst.msk [vmem:[%s170 + $0x10] sm:$0xf] %vm787, %v769
      %793 = vst.msk [vmem:[%s170 + $0x14] sm:$0xf] %vm787, %v770
      %794 = vst.msk [vmem:[%s170 + $0x18] sm:$0xf] %vm787, %v771
      %795 = vst.msk [vmem:[%s170 + $0x1c] sm:$0xf] %vm787, %v772
      %796 = vst.msk [vmem:[%s170 + $0x20] sm:$0xf] %vm787, %v773
      %797 = vst.msk [vmem:[%s170 + $0x24] sm:$0xf] %vm787, %v774
      %vm798 = vcmask 516096
      %vm799 = vsmask.f32 256
      %vm800 = vmand %vm798, %vm799
      %v801 = vld [vmem:[%s170 + $0x28] sm:$0x1]
      %v802 = vsel %vm800, %v775, %v801
      %803 = vst [vmem:[%s170 + $0x28] sm:$0x1] %v802
      %p804 = scmp.lt.s32.totalorder %s14, 1
      %s805 = scalar_select %p804, %s14, 1
      %s806 = smul.addr %s805, 11
      %s807 = smul.addr %s806, 4
      %s808 = scalar_lea.vmem %s3, %s807
      // Predicated region
      $region33: #{nn_vfa_forward.5} parent=31 // pred_check
        %p809 = pneg %p100
      $region34: #{nn_vfa_forward.5} parent=31 // pred_check_branch
        %811 = sbr.rel (%p809) target = $region36
      $region35: #{nn_vfa_forward.5} parent=31 // pred_region
        _
      $region36: #{nn_vfa_forward.5} parent=31 // pred_fallthru
        _
    $region32: #{nn_vfa_forward.5} parent=5 // pred_fallthru
      _
    %p812 = scmp.le.s32.totalorder 2, %s9
    // Predicated region
    $region37: #{nn_vfa_forward.5} parent=5 // pred_check
      %p813 = pneg %p812
    $region38: #{nn_vfa_forward.5} parent=5 // pred_check_branch
      %815 = sbr.rel (%p813) target = $region40
    $region39: #{nn_vfa_forward.5} parent=5 // pred_region
      %s816 = ssub.s32 %s9, 2
      // Predicated region
      $region41: #{nn_vfa_forward.5} parent=39 // pred_check
        %p817 = pneg %p106
      $region42: #{nn_vfa_forward.5} parent=39 // pred_check_branch
        %819 = sbr.rel (%p817) target = $region44
      $region43: #{nn_vfa_forward.5} parent=39 // pred_region
        %p820 = scmp.lt.s32.totalorder %s15, 1
        %s821 = scalar_select %p820, %s15, 1
        %s822 = smul.addr %s821, 11
        %s823 = smul.addr %s822, 4
        %s824 = scalar_lea.vmem %s3, %s823
      $region44: #{nn_vfa_forward.5} parent=39 // pred_fallthru
        _
    $region40: #{nn_vfa_forward.5} parent=5 // pred_fallthru
      _
  $region6: #{nn_vfa_forward.5} parent=0 // loop_footer
    %s13 = sadd.s32 1, %s9
  $region7: #{nn_vfa_forward.5} parent=0 // loop_footer_branch
    %8 = sbr.rel target = $region3
  $region8: #{nn_vfa_forward.5} parent=0 // loop_exit
    _

// kernel: nn_vfa_forward.6
$region0: #{nn_vfa_forward.6}
  #allocation0 [shape = 'u32[]', space=smem, size = 0x4, offset = 0x4, fixed_abs, tag = 'smem constant byte address 0x4 - core index']
  #allocation1 [shape = 'u32[144,128]{1,0:T(1,128)}', space=vmem, size = 0x12000, scoped, tag = 'internal scratch']
  %s0 = inlined_call_operand.vmem [shape: bf16[2,49,576], index: 0, kind: input, shape index: {}]
  %s1 = inlined_call_operand.vmem [shape: bf16[576,64], index: 1, kind: input, shape index: {}]
  %s2 = inlined_call_operand.vmem [shape: f32[1,64], index: 2, kind: input, shape index: {}]
  %s3 = inlined_call_operand.vmem [shape: bf16[2,49,64], index: 3, kind: output, shape index: {}]
  %s4 = sld [smem:[#allocation0]]
  $region45: #{nn_vfa_forward.6} parent=0
    _
  %s6 = ssub.s32 1, %s4
  %s7 = scalar_select 0, %s6, %s4
  loop: start=0, step=1, limit=4
  $region2: #{nn_vfa_forward.6} parent=0 // loop_pre_header
    _
  $region3: #{nn_vfa_forward.6} parent=0 // loop_header
    %s9 = sphi 0, %s13
    %p10 = scmp.ge.s32.totalorder %s9, 4
    %s19 = sphi 0, %s21
    %s22 = sphi 0, %s19
    %s23 = sphi 0, %s22
    %s39 = sphi 0, %s23
    %s43 = sphi 0, %s43
    %s45 = sphi 0, %s43
    %s46 = sphi 0, %s45
    %s60 = sphi 0, %s46
    %s64 = sphi 0, %s64
    %s66 = sphi 0, %s64
    %s67 = sphi 0, %s66
    %s81 = sphi 0, %s67
    %s87 = sphi 0, %s89
    %s90 = sphi 0, %s87
    %s91 = sphi 0, %s90
    %s107 = sphi 0, %s91
  $region4: #{nn_vfa_forward.6} parent=0 // loop_header_branch
    %12 = sbr.rel (%p10) target = $region8
  $region5: #{nn_vfa_forward.6} parent=0 // loop_body
    %s14 = ssub.s32 %s9, 1
    %s15 = ssub.s32 %s9, 2
    %s16 = sadd.s32 %s9, 1
    %s17 = ssub.s32 %s9, %s16
    %p18 = scmp.eq.s32.totalorder %s17, 0
    %s20 = sadd.s32 %s19, 1
    %s21 = scalar_select %p18, %s19, %s20
    %p24 = pneg %p18
    %p25 = scmp.eq.s32.totalorder %s9, 1
    %p26 = por %p24, %p25
    %p27 = scmp.ne.s32.totalorder %s19, %s22
    %p28 = scmp.eq.s32.totalorder %s9, 0
    %p29 = por %p27, %p28
    %p30 = scmp.ne.s32.totalorder %s19, %s22
    %p31 = scmp.eq.s32.totalorder %s14, 1
    %p32 = por %p30, %p31
    %p33 = scmp.ne.s32.totalorder %s22, %s23
    %p34 = scmp.eq.s32.totalorder %s14, 0
    %p35 = por %p33, %p34
    %p36 = scmp.ne.s32.totalorder %s22, %s23
    %p37 = scmp.eq.s32.totalorder %s15, 1
    %p38 = por %p36, %p37
    %p40 = scmp.ne.s32.totalorder %s23, %s39
    %p41 = scmp.eq.s32.totalorder %s15, 0
    %p42 = por %p40, %p41
    %s44 = sadd.s32 %s43, 1
    %p47 = scmp.eq.s32.totalorder %s9, 1
    %p48 = scmp.ne.s32.totalorder %s43, %s45
    %p49 = scmp.eq.s32.totalorder %s9, 0
    %p50 = por %p48, %p49
    %p51 = scmp.ne.s32.totalorder %s43, %s45
    %p52 = scmp.eq.s32.totalorder %s14, 1
    %p53 = por %p51, %p52
    %p54 = scmp.ne.s32.totalorder %s45, %s46
    %p55 = scmp.eq.s32.totalorder %s14, 0
    %p56 = por %p54, %p55
    %p57 = scmp.ne.s32.totalorder %s45, %s46
    %p58 = scmp.eq.s32.totalorder %s15, 1
    %p59 = por %p57, %p58
    %p61 = scmp.ne.s32.totalorder %s46, %s60
    %p62 = scmp.eq.s32.totalorder %s15, 0
    %p63 = por %p61, %p62
    %s65 = sadd.s32 %s64, 1
    %p68 = scmp.eq.s32.totalorder %s9, 1
    %p69 = scmp.ne.s32.totalorder %s64, %s66
    %p70 = scmp.eq.s32.totalorder %s9, 0
    %p71 = por %p69, %p70
    %p72 = scmp.ne.s32.totalorder %s64, %s66
    %p73 = scmp.eq.s32.totalorder %s14, 1
    %p74 = por %p72, %p73
    %p75 = scmp.ne.s32.totalorder %s66, %s67
    %p76 = scmp.eq.s32.totalorder %s14, 0
    %p77 = por %p75, %p76
    %p78 = scmp.ne.s32.totalorder %s66, %s67
    %p79 = scmp.eq.s32.totalorder %s15, 1
    %p80 = por %p78, %p79
    %p82 = scmp.ne.s32.totalorder %s67, %s81
    %p83 = scmp.eq.s32.totalorder %s15, 0
    %p84 = por %p82, %p83
    %s85 = ssub.s32 %s9, %s16
    %p86 = scmp.eq.s32.totalorder %s85, 0
    %s88 = sadd.s32 %s87, 1
    %s89 = scalar_select %p86, %s87, %s88
    %p92 = pneg %p86
    %p93 = scmp.eq.s32.totalorder %s9, 1
    %p94 = por %p92, %p93
    %p95 = scmp.ne.s32.totalorder %s87, %s90
    %p96 = scmp.eq.s32.totalorder %s9, 0
    %p97 = por %p95, %p96
    %p98 = scmp.ne.s32.totalorder %s87, %s90
    %p99 = scmp.eq.s32.totalorder %s14, 1
    %p100 = por %p98, %p99
    %p101 = scmp.ne.s32.totalorder %s90, %s91
    %p102 = scmp.eq.s32.totalorder %s14, 0
    %p103 = por %p101, %p102
    %p104 = scmp.ne.s32.totalorder %s90, %s91
    %p105 = scmp.eq.s32.totalorder %s15, 1
    %p106 = por %p104, %p105
    %p108 = scmp.ne.s32.totalorder %s91, %s107
    %p109 = scmp.eq.s32.totalorder %s15, 0
    %p110 = por %p108, %p109
    %p111 = scmp.le.s32.totalorder 1, %s9
    %p112 = scmp.lt.s32.totalorder %s9, 3
    %p113 = pnand %p111, %p112
    %p114 = pneg %p113
    // Predicated region
    $region9: #{nn_vfa_forward.6} parent=5 // pred_check
      _
    $region10: #{nn_vfa_forward.6} parent=5 // pred_check_branch
      %116 = sbr.rel (%p113) target = $region12
    $region11: #{nn_vfa_forward.6} parent=5 // pred_region
      %s117 = ssub.s32 %s9, 1
      // Predicated region
      $region13: #{nn_vfa_forward.6} parent=11 // pred_check
        %p118 = pneg %p56
      $region14: #{nn_vfa_forward.6} parent=11 // pred_check_branch
        %120 = sbr.rel (%p118) target = $region16
      $region15: #{nn_vfa_forward.6} parent=11 // pred_region
        _
      $region16: #{nn_vfa_forward.6} parent=11 // pred_fallthru
        _
      // Predicated region
      $region17: #{nn_vfa_forward.6} parent=11 // pred_check
        %p121 = pneg %p77
      $region18: #{nn_vfa_forward.6} parent=11 // pred_check_branch
        %123 = sbr.rel (%p121) target = $region20
      $region19: #{nn_vfa_forward.6} parent=11 // pred_region
        _
      $region20: #{nn_vfa_forward.6} parent=11 // pred_fallthru
        _
    $region12: #{nn_vfa_forward.6} parent=5 // pred_fallthru
      _
    %p124 = scmp.lt.s32.totalorder %s9, 2
    // Predicated region
    $region21: #{nn_vfa_forward.6} parent=5 // pred_check
      %p125 = pneg %p124
    $region22: #{nn_vfa_forward.6} parent=5 // pred_check_branch
      %127 = sbr.rel (%p125) target = $region24
    $region23: #{nn_vfa_forward.6} parent=5 // pred_region
      // Predicated region
      $region25: #{nn_vfa_forward.6} parent=23 // pred_check
        %p128 = pneg %p29
      $region26: #{nn_vfa_forward.6} parent=23 // pred_check_branch
        %130 = sbr.rel (%p128) target = $region28
      $region27: #{nn_vfa_forward.6} parent=23 // pred_region
        %p131 = scmp.lt.s32.totalorder %s9, 1
        %s132 = scalar_select %p131, %s9, 1
        %s133 = smul.addr %s132, 35
        %s134 = smul.addr %s133, 4
        %s135 = scalar_lea.vmem %s0, %s134
      $region28: #{nn_vfa_forward.6} parent=23 // pred_fallthru
        _
    $region24: #{nn_vfa_forward.6} parent=5 // pred_fallthru
      _
    %p136 = scmp.le.s32.totalorder 1, %s9
    %p137 = scmp.lt.s32.totalorder %s9, 3
    %p138 = pnand %p136, %p137
    %p139 = pneg %p138
    // Predicated region
    $region29: #{nn_vfa_forward.6} parent=5 // pred_check
      _
    $region30: #{nn_vfa_forward.6} parent=5 // pred_check_branch
      %141 = sbr.rel (%p138) target = $region32
    $region31: #{nn_vfa_forward.6} parent=5 // pred_region
      %s142 = ssub.s32 %s9, 1
      %p143 = scmp.lt.s32.totalorder %s14, 1
      %s144 = scalar_select %p143, %s14, 1
      %s145 = smul.addr %s144, 35
      %s146 = smul.addr %s145, 4
      %s147 = scalar_lea.vmem %s0, %s146
      %p148 = pneg %p35
      %p149 = pneg %p32
      %p150 = pneg %p56
      %p151 = pneg %p53
      %p152 = pneg %p77
      %p153 = pneg %p74
      %p154 = pneg %p103
      %p155 = pneg %p100
      %p156 = scmp.lt.s32.totalorder %s14, 1
      %s157 = scalar_select %p156, %s14, 1
      %s158 = smul.addr %s157, 7
      %s159 = smul.addr %s158, 4
      %s160 = scalar_lea.vmem %s3, %s159
      %p161 = scmp.lt.s32.totalorder %s14, 1
      %s162 = scalar_select %p161, %s14, 1
      %s163 = smul.addr %s162, 35
      %s164 = smul.addr %s163, 4
      %s165 = scalar_lea.vmem %s0, %s164
      %p166 = scmp.lt.s32.totalorder %s14, 1
      %s167 = scalar_select %p166, %s14, 1
      %s168 = smul.addr %s167, 7
      %s169 = smul.addr %s168, 4
      %s170 = scalar_lea.vmem %s3, %s169
      %v172 = vld [vmem:[%s165] sm:$0xff]
      %v173 = vld [vmem:[%s165 + $0x8] sm:$0xff]
      %v174 = vld [vmem:[%s165 + $0x10] sm:$0xf]
      %v175 = vld [vmem:[%s165 + $0x14] sm:$0xff]
      %v176 = vld [vmem:[%s165 + $0x1c] sm:$0xff]
      %v177 = vld [vmem:[%s165 + $0x24] sm:$0xf]
      %v178 = vld [vmem:[%s165 + $0x28] sm:$0xff]
      %v179 = vld [vmem:[%s165 + $0x30] sm:$0xff]
      %v180 = vld [vmem:[%s165 + $0x38] sm:$0xf]
      %v181 = vld [vmem:[%s165 + $0x3c] sm:$0xff]
      %v182 = vld [vmem:[%s165 + $0x44] sm:$0xff]
      %v183 = vld [vmem:[%s165 + $0x4c] sm:$0xf]
      %v184 = vld [vmem:[%s165 + $0x50] sm:$0xff]
      %v185 = vld [vmem:[%s165 + $0x58] sm:$0xff]
      %v186 = vld [vmem:[%s165 + $0x60] sm:$0xf]
      %v187 = vld [vmem:[%s165 + $0x64] sm:$0xff]
      %v188 = vld [vmem:[%s165 + $0x6c] sm:$0xff]
      %v189 = vld [vmem:[%s165 + $0x74] sm:$0xf]
      %v190 = vld [vmem:[%s165 + $0x78] sm:$0x11]
      %v191 = vld [vmem:[%s165 + $0x80] sm:$0x11]
      %v192 = vld [vmem:[%s165 + $0x88] sm:$0x1]
      %v193 = vld [vmem:[%s1] sm:$0xf]
      %v194 = vld [vmem:[%s1 + $0x4] sm:$0xf]
      %v195 = vld [vmem:[%s1 + $0x8] sm:$0xf]
      %v196 = vld [vmem:[%s1 + $0xc] sm:$0xf]
      %v197 = vld [vmem:[%s1 + $0x10] sm:$0xf]
      %v198 = vld [vmem:[%s1 + $0x14] sm:$0xf]
      %v199 = vld [vmem:[%s1 + $0x18] sm:$0xf]
      %v200 = vld [vmem:[%s1 + $0x1c] sm:$0xf]
      %v201 = vld [vmem:[%s1 + $0x20] sm:$0xf]
      %v202 = vld [vmem:[%s1 + $0x24] sm:$0xf]
      %v203 = vld [vmem:[%s1 + $0x28] sm:$0xf]
      %v204 = vld [vmem:[%s1 + $0x2c] sm:$0xf]
      %v205 = vld [vmem:[%s1 + $0x30] sm:$0xf]
      %v206 = vld [vmem:[%s1 + $0x34] sm:$0xf]
      %v207 = vld [vmem:[%s1 + $0x38] sm:$0xf]
      %v208 = vld [vmem:[%s1 + $0x3c] sm:$0xf]
      %v209 = vld [vmem:[%s1 + $0x40] sm:$0xf]
      %v210 = vld [vmem:[%s1 + $0x44] sm:$0xf]
      %v211 = vld [vmem:[%s1 + $0x48] sm:$0xf]
      %v212 = vld [vmem:[%s1 + $0x4c] sm:$0xf]
      %v213 = vld [vmem:[%s1 + $0x50] sm:$0xf]
      %v214 = vld [vmem:[%s1 + $0x54] sm:$0xf]
      %v215 = vld [vmem:[%s1 + $0x58] sm:$0xf]
      %v216 = vld [vmem:[%s1 + $0x5c] sm:$0xf]
      %v217 = vld [vmem:[%s1 + $0x60] sm:$0xf]
      %v218 = vld [vmem:[%s1 + $0x64] sm:$0xf]
      %v219 = vld [vmem:[%s1 + $0x68] sm:$0xf]
      %v220 = vld [vmem:[%s1 + $0x6c] sm:$0xf]
      %v221 = vld [vmem:[%s1 + $0x70] sm:$0xf]
      %v222 = vld [vmem:[%s1 + $0x74] sm:$0xf]
      %v223 = vld [vmem:[%s1 + $0x78] sm:$0xf]
      %v224 = vld [vmem:[%s1 + $0x7c] sm:$0xf]
      %v225 = vld [vmem:[%s1 + $0x80] sm:$0xf]
      %v226 = vld [vmem:[%s1 + $0x84] sm:$0xf]
      %v227 = vld [vmem:[%s1 + $0x88] sm:$0xf]
      %v228 = vld [vmem:[%s1 + $0x8c] sm:$0xf]
      %v229 = vld [vmem:[%s1 + $0x90] sm:$0xf]
      %v230 = vld [vmem:[%s1 + $0x94] sm:$0xf]
      %v231 = vld [vmem:[%s1 + $0x98] sm:$0xf]
      %v232 = vld [vmem:[%s1 + $0x9c] sm:$0xf]
      %v233 = vld [vmem:[%s1 + $0xa0] sm:$0xf]
      %v234 = vld [vmem:[%s1 + $0xa4] sm:$0xf]
      %v235 = vld [vmem:[%s1 + $0xa8] sm:$0xf]
      %v236 = vld [vmem:[%s1 + $0xac] sm:$0xf]
      %v237 = vld [vmem:[%s1 + $0xb0] sm:$0xf]
      %v238 = vld [vmem:[%s1 + $0xb4] sm:$0xf]
      %v239 = vld [vmem:[%s1 + $0xb8] sm:$0xf]
      %v240 = vld [vmem:[%s1 + $0xbc] sm:$0xf]
      %v241 = vld [vmem:[%s1 + $0xc0] sm:$0xf]
      %v242 = vld [vmem:[%s1 + $0xc4] sm:$0xf]
      %v243 = vld [vmem:[%s1 + $0xc8] sm:$0xf]
      %v244 = vld [vmem:[%s1 + $0xcc] sm:$0xf]
      %v245 = vld [vmem:[%s1 + $0xd0] sm:$0xf]
      %v246 = vld [vmem:[%s1 + $0xd4] sm:$0xf]
      %v247 = vld [vmem:[%s1 + $0xd8] sm:$0xf]
      %v248 = vld [vmem:[%s1 + $0xdc] sm:$0xf]
      %v249 = vld [vmem:[%s1 + $0xe0] sm:$0xf]
      %v250 = vld [vmem:[%s1 + $0xe4] sm:$0xf]
      %v251 = vld [vmem:[%s1 + $0xe8] sm:$0xf]
      %v252 = vld [vmem:[%s1 + $0xec] sm:$0xf]
      %v253 = vld [vmem:[%s1 + $0xf0] sm:$0xf]
      %v254 = vld [vmem:[%s1 + $0xf4] sm:$0xf]
      %v255 = vld [vmem:[%s1 + $0xf8] sm:$0xf]
      %v256 = vld [vmem:[%s1 + $0xfc] sm:$0xf]
      %v257 = vld [vmem:[%s1 + $0x100] sm:$0xf]
      %v258 = vld [vmem:[%s1 + $0x104] sm:$0xf]
      %v259 = vld [vmem:[%s1 + $0x108] sm:$0xf]
      %v260 = vld [vmem:[%s1 + $0x10c] sm:$0xf]
      %v261 = vld [vmem:[%s1 + $0x110] sm:$0xf]
      %v262 = vld [vmem:[%s1 + $0x114] sm:$0xf]
      %v263 = vld [vmem:[%s1 + $0x118] sm:$0xf]
      %v264 = vld [vmem:[%s1 + $0x11c] sm:$0xf]
      %v265 = vld [vmem:[%s2] sm:$0x1]
      %v267 = vlaneseq
      %v268 = vshrl.u32 %v267, 7
      %v269 = vsub.s32 0, %v268
      %v270 = vrot.slane %v265, %v269
      %v293 = vunpack.c.l.b16 %v172
      %v294 = vunpack.c.h.b16 %v172
      %v295 = vunpack.c.l.b16 %v173
      %v296 = vunpack.c.h.b16 %v173
      %v297 = vunpack.c.l.b16 %v174
      %v298 = vunpack.c.l.b16 %v175
      %v299 = vunpack.c.h.b16 %v175
      %v300 = vunpack.c.l.b16 %v176
      %v301 = vunpack.c.h.b16 %v176
      %v302 = vunpack.c.l.b16 %v177
      %v303 = vunpack.c.l.b16 %v178
      %v304 = vunpack.c.h.b16 %v178
      %v305 = vunpack.c.l.b16 %v179
      %v306 = vunpack.c.h.b16 %v179
      %v307 = vunpack.c.l.b16 %v180
      %v308 = vunpack.c.l.b16 %v181
      %v309 = vunpack.c.h.b16 %v181
      %v310 = vunpack.c.l.b16 %v182
      %v311 = vunpack.c.h.b16 %v182
      %v312 = vunpack.c.l.b16 %v183
      %v313 = vunpack.c.l.b16 %v184
      %v314 = vunpack.c.h.b16 %v184
      %v315 = vunpack.c.l.b16 %v185
      %v316 = vunpack.c.h.b16 %v185
      %v317 = vunpack.c.l.b16 %v186
      %v318 = vunpack.c.l.b16 %v187
      %v319 = vunpack.c.h.b16 %v187
      %v320 = vunpack.c.l.b16 %v188
      %v321 = vunpack.c.h.b16 %v188
      %v322 = vunpack.c.l.b16 %v189
      %v323 = vunpack.c.l.b16 %v190
      %v324 = vunpack.c.h.b16 %v190
      %v325 = vunpack.c.l.b16 %v191
      %v326 = vunpack.c.h.b16 %v191
      %v327 = vunpack.c.l.b16 %v192
      %v328 = vpack.c.b16 %v298, %v293
      %v329 = vpack.c.b16 %v299, %v294
      %v330 = vpack.c.b16 %v300, %v295
      %v331 = vpack.c.b16 %v301, %v296
      %v332 = vpack.c.b16 %v302, %v297
      %v333 = vpack.c.b16 %v308, %v303
      %v334 = vpack.c.b16 %v309, %v304
      %v335 = vpack.c.b16 %v310, %v305
      %v336 = vpack.c.b16 %v311, %v306
      %v337 = vpack.c.b16 %v312, %v307
      %v338 = vpack.c.b16 %v318, %v313
      %v339 = vpack.c.b16 %v319, %v314
      %v340 = vpack.c.b16 %v320, %v315
      %v341 = vpack.c.b16 %v321, %v316
      %v342 = vpack.c.b16 %v322, %v317
      %v343 = vpack.c.b16 %v323, %v323
      %v344 = vpack.c.b16 %v324, %v324
      %v345 = vpack.c.b16 %v325, %v325
      %v346 = vpack.c.b16 %v326, %v326
      %v347 = vpack.c.b16 %v327, %v327
      %v436 = vunpack.c.l.b16 %v193
      %v437 = vunpack.c.l.b16 %v194
      %v438 = vunpack.c.l.b16 %v195
      %v439 = vunpack.c.l.b16 %v196
      %v440 = vunpack.c.l.b16 %v197
      %v441 = vunpack.c.l.b16 %v198
      %v442 = vunpack.c.l.b16 %v199
      %v443 = vunpack.c.l.b16 %v200
      %v444 = vunpack.c.l.b16 %v201
      %v445 = vunpack.c.l.b16 %v202
      %v446 = vunpack.c.l.b16 %v203
      %v447 = vunpack.c.l.b16 %v204
      %v448 = vunpack.c.l.b16 %v205
      %v449 = vunpack.c.l.b16 %v206
      %v450 = vunpack.c.l.b16 %v207
      %v451 = vunpack.c.l.b16 %v208
      %v452 = vunpack.c.l.b16 %v209
      %v453 = vunpack.c.l.b16 %v210
      %v454 = vunpack.c.l.b16 %v211
      %v455 = vunpack.c.l.b16 %v212
      %v456 = vunpack.c.l.b16 %v213
      %v457 = vunpack.c.l.b16 %v214
      %v458 = vunpack.c.l.b16 %v215
      %v459 = vunpack.c.l.b16 %v216
      %v460 = vunpack.c.l.b16 %v217
      %v461 = vunpack.c.l.b16 %v218
      %v462 = vunpack.c.l.b16 %v219
      %v463 = vunpack.c.l.b16 %v220
      %v464 = vunpack.c.l.b16 %v221
      %v465 = vunpack.c.l.b16 %v222
      %v466 = vunpack.c.l.b16 %v223
      %v467 = vunpack.c.l.b16 %v224
      %v468 = vunpack.c.l.b16 %v225
      %v469 = vunpack.c.l.b16 %v226
      %v470 = vunpack.c.l.b16 %v227
      %v471 = vunpack.c.l.b16 %v228
      %v472 = vunpack.c.l.b16 %v229
      %v473 = vunpack.c.l.b16 %v230
      %v474 = vunpack.c.l.b16 %v231
      %v475 = vunpack.c.l.b16 %v232
      %v476 = vunpack.c.l.b16 %v233
      %v477 = vunpack.c.l.b16 %v234
      %v478 = vunpack.c.l.b16 %v235
      %v479 = vunpack.c.l.b16 %v236
      %v480 = vunpack.c.l.b16 %v237
      %v481 = vunpack.c.l.b16 %v238
      %v482 = vunpack.c.l.b16 %v239
      %v483 = vunpack.c.l.b16 %v240
      %v484 = vunpack.c.l.b16 %v241
      %v485 = vunpack.c.l.b16 %v242
      %v486 = vunpack.c.l.b16 %v243
      %v487 = vunpack.c.l.b16 %v244
      %v488 = vunpack.c.l.b16 %v245
      %v489 = vunpack.c.l.b16 %v246
      %v490 = vunpack.c.l.b16 %v247
      %v491 = vunpack.c.l.b16 %v248
      %v492 = vunpack.c.l.b16 %v249
      %v493 = vunpack.c.l.b16 %v250
      %v494 = vunpack.c.l.b16 %v251
      %v495 = vunpack.c.l.b16 %v252
      %v496 = vunpack.c.l.b16 %v253
      %v497 = vunpack.c.l.b16 %v254
      %v498 = vunpack.c.l.b16 %v255
      %v499 = vunpack.c.l.b16 %v256
      %v500 = vunpack.c.l.b16 %v257
      %v501 = vunpack.c.l.b16 %v258
      %v502 = vunpack.c.l.b16 %v259
      %v503 = vunpack.c.l.b16 %v260
      %v504 = vunpack.c.l.b16 %v261
      %v505 = vunpack.c.l.b16 %v262
      %v506 = vunpack.c.l.b16 %v263
      %v507 = vunpack.c.l.b16 %v264
      %v508 = vpack.c.b16 %v437, %v436
      %v509 = vpack.c.b16 %v439, %v438
      %v510 = vpack.c.b16 %v441, %v440
      %v511 = vpack.c.b16 %v443, %v442
      %v512 = vpack.c.b16 %v445, %v444
      %v513 = vpack.c.b16 %v447, %v446
      %v514 = vpack.c.b16 %v449, %v448
      %v515 = vpack.c.b16 %v451, %v450
      %v516 = vpack.c.b16 %v453, %v452
      %v517 = vpack.c.b16 %v455, %v454
      %v518 = vpack.c.b16 %v457, %v456
      %v519 = vpack.c.b16 %v459, %v458
      %v520 = vpack.c.b16 %v461, %v460
      %v521 = vpack.c.b16 %v463, %v462
      %v522 = vpack.c.b16 %v465, %v464
      %v523 = vpack.c.b16 %v467, %v466
      %v524 = vpack.c.b16 %v469, %v468
      %v525 = vpack.c.b16 %v471, %v470
      %v526 = vpack.c.b16 %v473, %v472
      %v527 = vpack.c.b16 %v475, %v474
      %v528 = vpack.c.b16 %v477, %v476
      %v529 = vpack.c.b16 %v479, %v478
      %v530 = vpack.c.b16 %v481, %v480
      %v531 = vpack.c.b16 %v483, %v482
      %v532 = vpack.c.b16 %v485, %v484
      %v533 = vpack.c.b16 %v487, %v486
      %v534 = vpack.c.b16 %v489, %v488
      %v535 = vpack.c.b16 %v491, %v490
      %v536 = vpack.c.b16 %v493, %v492
      %v537 = vpack.c.b16 %v495, %v494
      %v538 = vpack.c.b16 %v497, %v496
      %v539 = vpack.c.b16 %v499, %v498
      %v540 = vpack.c.b16 %v501, %v500
      %v541 = vpack.c.b16 %v503, %v502
      %v542 = vpack.c.b16 %v505, %v504
      %v543 = vpack.c.b16 %v507, %v506
      %vm580 = vcmask 523264
      %v582 = vsel %vm580, %v332, 0
      %v585 = vsel %vm580, %v337, 0
      %v588 = vsel %vm580, %v342, 0
      %v591 = vsel %vm580, %v347, 0
      %593 = vmatprep.subr.bf16.mxu0 0
      %594 = vmatpush1.bf16.msra.mxu0 %v508
      %595 = vmatprep.subr.bf16.mxu0 0
      %596 = vmatpush1.bf16.msra.mxu0 %v509
      %597 = vmatprep.subr.bf16.mxu0 0
      %598 = vmatpush1.bf16.msra.mxu0 %v510
      %599 = vmatprep.subr.bf16.mxu0 0
      %600 = vmatpush1.bf16.msra.mxu0 %v511
      %601 = vmatprep.subr.bf16.mxu0 0
      %602 = vmatpush1.bf16.msra.mxu0 %v512
      %603 = vmatprep.subr.bf16.mxu0 0
      %604 = vmatpush1.bf16.msra.mxu0 %v513
      %605 = vmatprep.subr.bf16.mxu0 0
      %606 = vmatpush1.bf16.msra.mxu0 %v514
      %607 = vmatprep.subr.bf16.mxu0 0
      %608 = vmatpush1.bf16.msra.mxu0 %v515
      %609 = vmatprep.subr.bf16.mxu0 0
      %610 = vmatpush1.bf16.msra.mxu0 %v516
      %611 = vmatprep.subr.bf16.mxu0 0
      %612 = vmatpush1.bf16.msra.mxu0 %v517
      %613 = vmatprep.subr.bf16.mxu0 0
      %614 = vmatpush1.bf16.msra.mxu0 %v518
      %615 = vmatprep.subr.bf16.mxu0 0
      %616 = vmatpush1.bf16.msra.mxu0 %v519
      %617 = vmatprep.subr.bf16.mxu0 0
      %618 = vmatpush1.bf16.msra.mxu0 %v520
      %619 = vmatprep.subr.bf16.mxu0 0
      %620 = vmatpush1.bf16.msra.mxu0 %v521
      %621 = vmatprep.subr.bf16.mxu0 0
      %622 = vmatpush1.bf16.msra.mxu0 %v522
      %623 = vmatprep.subr.bf16.mxu0 0
      %624 = vmatpush1.bf16.msra.mxu0 %v523
      %625 = vmatprep.mubr.bf16.mxu0 %v329
      %626 = vmatmul.mubr.bf16.gmra.mrb[0].mxu0 %v328
      %v627 = vpop.f32.mrb[0].mxu0
      %v628 = vadd.f32 %v270, %v627
      %v629 = vpop.f32.mrb[0].mxu0
      %v630 = vpop.f32.mrb[0].mxu0
      %v631 = vadd.f32 %v270, %v630
      %v632 = vpop.f32.mrb[0].mxu0
      %633 = vmatprep.mubr.bf16.mxu0 %v334
      %634 = vmatmul.mubr.bf16.gmra.mrb[0].mxu0 %v333
      %v635 = vpop.f32.mrb[0].mxu0
      %v636 = vadd.f32 %v270, %v635
      %v637 = vpop.f32.mrb[0].mxu0
      %v638 = vpop.f32.mrb[0].mxu0
      %v639 = vadd.f32 %v270, %v638
      %v640 = vpop.f32.mrb[0].mxu0
      %641 = vmatprep.mubr.bf16.mxu0 %v339
      %642 = vmatmul.mubr.bf16.gmra.mrb[0].mxu0 %v338
      %v643 = vpop.f32.mrb[0].mxu0
      %v644 = vadd.f32 %v270, %v643
      %v645 = vpop.f32.mrb[0].mxu0
      %v646 = vpop.f32.mrb[0].mxu0
      %v647 = vadd.f32 %v270, %v646
      %v648 = vpop.f32.mrb[0].mxu0
      %649 = vmatprep.mubr.bf16.mxu0 %v344
      %650 = vmatmul.mubr.bf16.gmra.mrb[0].mxu0 %v343
      %v651 = vpop.f32.mrb[0].mxu0
      %v652 = vadd.f32 %v270, %v651
      %v653 = vpop.f32.mrb[0].mxu0
      %v654 = vpop.f32.mrb[0].mxu0
      %v655 = vpop.f32.mrb[0].mxu0
      %656 = vdwg.mxu0
      %657 = vmatprep.subr.bf16.mxu0 0
      %658 = vmatpush1.bf16.msra.mxu0 %v524
      %659 = vmatprep.subr.bf16.mxu0 0
      %660 = vmatpush1.bf16.msra.mxu0 %v525
      %661 = vmatprep.subr.bf16.mxu0 0
      %662 = vmatpush1.bf16.msra.mxu0 %v526
      %663 = vmatprep.subr.bf16.mxu0 0
      %664 = vmatpush1.bf16.msra.mxu0 %v527
      %665 = vmatprep.subr.bf16.mxu0 0
      %666 = vmatpush1.bf16.msra.mxu0 %v528
      %667 = vmatprep.subr.bf16.mxu0 0
      %668 = vmatpush1.bf16.msra.mxu0 %v529
      %669 = vmatprep.subr.bf16.mxu0 0
      %670 = vmatpush1.bf16.msra.mxu0 %v530
      %671 = vmatprep.subr.bf16.mxu0 0
      %672 = vmatpush1.bf16.msra.mxu0 %v531
      %673 = vmatprep.subr.bf16.mxu0 0
      %674 = vmatpush1.bf16.msra.mxu0 %v532
      %675 = vmatprep.subr.bf16.mxu0 0
      %676 = vmatpush1.bf16.msra.mxu0 %v533
      %677 = vmatprep.subr.bf16.mxu0 0
      %678 = vmatpush1.bf16.msra.mxu0 %v534
      %679 = vmatprep.subr.bf16.mxu0 0
      %680 = vmatpush1.bf16.msra.mxu0 %v535
      %681 = vmatprep.subr.bf16.mxu0 0
      %682 = vmatpush1.bf16.msra.mxu0 %v536
      %683 = vmatprep.subr.bf16.mxu0 0
      %684 = vmatpush1.bf16.msra.mxu0 %v537
      %685 = vmatprep.subr.bf16.mxu0 0
      %686 = vmatpush1.bf16.msra.mxu0 %v538
      %687 = vmatprep.subr.bf16.mxu0 0
      %688 = vmatpush1.bf16.msra.mxu0 %v539
      %689 = vmatprep.mubr.bf16.mxu0 %v331
      %690 = vmatmul.mubr.bf16.gmra.mrb[0].mxu0 %v330
      %v691 = vpop.f32.mrb[0].mxu0
      %v692 = vadd.f32 %v628, %v691
      %v693 = vpop.f32.mrb[0].mxu0
      %v694 = vpop.f32.mrb[0].mxu0
      %v695 = vadd.f32 %v631, %v694
      %v696 = vpop.f32.mrb[0].mxu0
      %697 = vmatprep.mubr.bf16.mxu0 %v336
      %698 = vmatmul.mubr.bf16.gmra.mrb[0].mxu0 %v335
      %v699 = vpop.f32.mrb[0].mxu0
      %v700 = vadd.f32 %v636, %v699
      %v701 = vpop.f32.mrb[0].mxu0
      %v702 = vpop.f32.mrb[0].mxu0
      %v703 = vadd.f32 %v639, %v702
      %v704 = vpop.f32.mrb[0].mxu0
      %705 = vmatprep.mubr.bf16.mxu0 %v341
      %706 = vmatmul.mubr.bf16.gmra.mrb[0].mxu0 %v340
      %v707 = vpop.f32.mrb[0].mxu0
      %v708 = vadd.f32 %v644, %v707
      %v709 = vpop.f32.mrb[0].mxu0
      %v710 = vpop.f32.mrb[0].mxu0
      %v711 = vadd.f32 %v647, %v710
      %v712 = vpop.f32.mrb[0].mxu0
      %713 = vmatprep.mubr.bf16.mxu0 %v346
      %714 = vmatmul.mubr.bf16.gmra.mrb[0].mxu0 %v345
      %v715 = vpop.f32.mrb[0].mxu0
      %v716 = vadd.f32 %v652, %v715
      %v717 = vpop.f32.mrb[0].mxu0
      %v718 = vpop.f32.mrb[0].mxu0
      %v719 = vpop.f32.mrb[0].mxu0
      %720 = vdwg.mxu0
      %721 = vmatprep.subr.bf16.mxu0 0
      %722 = vmatpush1.bf16.msra.mxu0 %v540
      %723 = vmatprep.subr.bf16.mxu0 0
      %724 = vmatpush1.bf16.msra.mxu0 %v541
      %725 = vmatprep.subr.bf16.mxu0 0
      %726 = vmatpush1.bf16.msra.mxu0 %v542
      %727 = vmatprep.subr.bf16.mxu0 0
      %728 = vmatpush1.bf16.msra.mxu0 %v543
      %729 = vmatprep.subr.bf16.mxu0 0
      %730 = vmatpush1.bf16.msra.mxu0 0
      %731 = vmatprep.subr.bf16.mxu0 0
      %732 = vmatpush1.bf16.msra.mxu0 0
      %733 = vmatprep.subr.bf16.mxu0 0
      %734 = vmatpush1.bf16.msra.mxu0 0
      %735 = vmatprep.subr.bf16.mxu0 0
      %736 = vmatpush1.bf16.msra.mxu0 0
      %737 = vmatprep.subr.bf16.mxu0 0
      %738 = vmatpush1.bf16.msra.mxu0 0
      %739 = vmatprep.subr.bf16.mxu0 0
      %740 = vmatpush1.bf16.msra.mxu0 0
      %741 = vmatprep.subr.bf16.mxu0 0
      %742 = vmatpush1.bf16.msra.mxu0 0
      %743 = vmatprep.subr.bf16.mxu0 0
      %744 = vmatpush1.bf16.msra.mxu0 0
      %745 = vmatprep.subr.bf16.mxu0 0
      %746 = vmatpush1.bf16.msra.mxu0 0
      %747 = vmatprep.subr.bf16.mxu0 0
      %748 = vmatpush1.bf16.msra.mxu0 0
      %749 = vmatprep.subr.bf16.mxu0 0
      %750 = vmatpush1.bf16.msra.mxu0 0
      %751 = vmatprep.subr.bf16.mxu0 0
      %752 = vmatpush1.bf16.msra.mxu0 0
      %753 = vmatprep.mubr.bf16.mxu0 0
      %754 = vmatmul.mubr.bf16.gmra.mrb[0].mxu0 %v582
      %v755 = vpop.f32.mrb[0].mxu0
      %v756 = vadd.f32 %v692, %v755
      %v757 = vpop.f32.mrb[0].mxu0
      %v758 = vpop.f32.mrb[0].mxu0
      %v759 = vadd.f32 %v695, %v758
      %v760 = vpop.f32.mrb[0].mxu0
      %761 = vmatprep.mubr.bf16.mxu0 0
      %762 = vmatmul.mubr.bf16.gmra.mrb[0].mxu0 %v585
      %v763 = vpop.f32.mrb[0].mxu0
      %v764 = vadd.f32 %v700, %v763
      %v765 = vpop.f32.mrb[0].mxu0
      %v766 = vpop.f32.mrb[0].mxu0
      %v767 = vadd.f32 %v703, %v766
      %v768 = vpop.f32.mrb[0].mxu0
      %769 = vmatprep.mubr.bf16.mxu0 0
      %770 = vmatmul.mubr.bf16.gmra.mrb[0].mxu0 %v588
      %v771 = vpop.f32.mrb[0].mxu0
      %v772 = vadd.f32 %v708, %v771
      %v773 = vpop.f32.mrb[0].mxu0
      %v774 = vpop.f32.mrb[0].mxu0
      %v775 = vadd.f32 %v711, %v774
      %v776 = vpop.f32.mrb[0].mxu0
      %777 = vmatprep.mubr.bf16.mxu0 0
      %778 = vmatmul.mubr.bf16.gmra.mrb[0].mxu0 %v591
      %v779 = vpop.f32.mrb[0].mxu0
      %v780 = vadd.f32 %v716, %v779
      %v781 = vpop.f32.mrb[0].mxu0
      %v782 = vpop.f32.mrb[0].mxu0
      %v783 = vpop.f32.mrb[0].mxu0
      %784 = vdwg.mxu0
      %v785 = vmax.f32 %v756, 0.0
      %v786 = vmax.f32 %v759, 0.0
      %v787 = vmax.f32 %v764, 0.0
      %v788 = vmax.f32 %v767, 0.0
      %v789 = vmax.f32 %v772, 0.0
      %v790 = vmax.f32 %v775, 0.0
      %v791 = vmax.f32 %v780, 0.0
      %v792 = vpack.c.bf16 %v786, %v785
      %v793 = vpack.c.bf16 %v788, %v787
      %v794 = vpack.c.bf16 %v790, %v789
      %v795 = vpack.c.bf16 %v791, %v791
      %v800 = vunpack.c.l.b16 %v792
      %v801 = vunpack.c.h.b16 %v792
      %v802 = vunpack.c.l.b16 %v793
      %v803 = vunpack.c.h.b16 %v793
      %v804 = vunpack.c.l.b16 %v794
      %v805 = vunpack.c.h.b16 %v794
      %v806 = vunpack.c.l.b16 %v795
      %v807 = vpack.c.b16 %v800, %v800
      %v808 = vpack.c.b16 %v801, %v801
      %v809 = vpack.c.b16 %v802, %v802
      %v810 = vpack.c.b16 %v803, %v803
      %v811 = vpack.c.b16 %v804, %v804
      %v812 = vpack.c.b16 %v805, %v805
      %v813 = vpack.c.b16 %v806, %v806
      %vm821 = vcmask 519168
      %822 = vst.msk [vmem:[%s170] sm:$0xf] %vm821, %v807
      %823 = vst.msk [vmem:[%s170 + $0x4] sm:$0xf] %vm821, %v808
      %824 = vst.msk [vmem:[%s170 + $0x8] sm:$0xf] %vm821, %v809
      %825 = vst.msk [vmem:[%s170 + $0xc] sm:$0xf] %vm821, %v810
      %826 = vst.msk [vmem:[%s170 + $0x10] sm:$0xf] %vm821, %v811
      %827 = vst.msk [vmem:[%s170 + $0x14] sm:$0xf] %vm821, %v812
      %vm828 = vcmask 516096
      %vm829 = vsmask.f32 256
      %vm830 = vmand %vm828, %vm829
      %v831 = vld [vmem:[%s170 + $0x18] sm:$0x1]
      %v832 = vsel %vm830, %v813, %v831
      %833 = vst [vmem:[%s170 + $0x18] sm:$0x1] %v832
      %p834 = scmp.lt.s32.totalorder %s14, 1
      %s835 = scalar_select %p834, %s14, 1
      %s836 = smul.addr %s835, 7
      %s837 = smul.addr %s836, 4
      %s838 = scalar_lea.vmem %s3, %s837
      // Predicated region
      $region33: #{nn_vfa_forward.6} parent=31 // pred_check
        %p839 = pneg %p100
      $region34: #{nn_vfa_forward.6} parent=31 // pred_check_branch
        %841 = sbr.rel (%p839) target = $region36
      $region35: #{nn_vfa_forward.6} parent=31 // pred_region
        _
      $region36: #{nn_vfa_forward.6} parent=31 // pred_fallthru
        _
    $region32: #{nn_vfa_forward.6} parent=5 // pred_fallthru
      _
    %p842 = scmp.le.s32.totalorder 2, %s9
    // Predicated region
    $region37: #{nn_vfa_forward.6} parent=5 // pred_check
      %p843 = pneg %p842
    $region38: #{nn_vfa_forward.6} parent=5 // pred_check_branch
      %845 = sbr.rel (%p843) target = $region40
    $region39: #{nn_vfa_forward.6} parent=5 // pred_region
      %s846 = ssub.s32 %s9, 2
      // Predicated region
      $region41: #{nn_vfa_forward.6} parent=39 // pred_check
        %p847 = pneg %p106
      $region42: #{nn_vfa_forward.6} parent=39 // pred_check_branch
        %849 = sbr.rel (%p847) target = $region44
      $region43: #{nn_vfa_forward.6} parent=39 // pred_region
        %p850 = scmp.lt.s32.totalorder %s15, 1
        %s851 = scalar_select %p850, %s15, 1
        %s852 = smul.addr %s851, 7
        %s853 = smul.addr %s852, 4
        %s854 = scalar_lea.vmem %s3, %s853
      $region44: #{nn_vfa_forward.6} parent=39 // pred_fallthru
        _
    $region40: #{nn_vfa_forward.6} parent=5 // pred_fallthru
      _
  $region6: #{nn_vfa_forward.6} parent=0 // loop_footer
    %s13 = sadd.s32 1, %s9
  $region7: #{nn_vfa_forward.6} parent=0 // loop_footer_branch
    %8 = sbr.rel target = $region3
  $region8: #{nn_vfa_forward.6} parent=0 // loop_exit
    _

// kernel: nn_vfa_forward.7
$region0: #{nn_vfa_forward.7}
  #allocation0 [shape = 'u32[]', space=smem, size = 0x4, offset = 0x4, fixed_abs, tag = 'smem constant byte address 0x4 - core index']
  #allocation1 [shape = 'u32[144,128]{1,0:T(1,128)}', space=vmem, size = 0x12000, scoped, tag = 'internal scratch']
  %s0 = inlined_call_operand.vmem [shape: bf16[2,3136], index: 0, kind: input, shape index: {}]
  %s1 = inlined_call_operand.vmem [shape: bf16[3136,512], index: 1, kind: input, shape index: {}]
  %s2 = inlined_call_operand.vmem [shape: f32[1,512], index: 2, kind: input, shape index: {}]
  %s3 = inlined_call_operand.vmem [shape: bf16[512,128], index: 3, kind: input, shape index: {}]
  %s4 = inlined_call_operand.vmem [shape: f32[1,128], index: 4, kind: input, shape index: {}]
  %s5 = inlined_call_operand.vmem [shape: f32[2,2,128], index: 5, kind: output, shape index: {}]
  %s6 = sld [smem:[#allocation0]]
  $region91: #{nn_vfa_forward.7} parent=0
    _
  %s8 = ssub.s32 1, %s6
  %s9 = scalar_select 0, %s8, %s6
  $region1: #{nn_vfa_forward.7} parent=0
    #allocation2 [shape = 'u8[3211264]{0}', space=vmem, size = 0x310000, scoped, tag = 'input window, operand 1']
    loop: start=0, step=1, limit=4
    $region2: #{nn_vfa_forward.7} parent=1 // loop_pre_header
      _
    $region3: #{nn_vfa_forward.7} parent=1 // loop_header
      %s11 = sphi 0, %s15
      %p12 = scmp.ge.s32.totalorder %s11, 4
      %s19 = sphi 0, %s19
      %s21 = sphi 0, %s19
      %s22 = sphi 0, %s21
      %s36 = sphi 0, %s22
      %s42 = sphi 0, %s44
      %s45 = sphi 0, %s42
      %s46 = sphi 0, %s45
      %s62 = sphi 0, %s46
      %s68 = sphi 0, %s70
      %s71 = sphi 0, %s68
      %s72 = sphi 0, %s71
      %s88 = sphi 0, %s72
      %s94 = sphi 0, %s96
      %s97 = sphi 0, %s94
      %s98 = sphi 0, %s97
      %s114 = sphi 0, %s98
      %s118 = sphi 0, %s118
      %s120 = sphi 0, %s118
      %s121 = sphi 0, %s120
      %s135 = sphi 0, %s121
      %s141 = sphi 0, %s143
      %s144 = sphi 0, %s141
      %s145 = sphi 0, %s144
      %s161 = sphi 0, %s145
    $region4: #{nn_vfa_forward.7} parent=1 // loop_header_branch
      %14 = sbr.rel (%p12) target = $region8
    $region5: #{nn_vfa_forward.7} parent=1 // loop_body
      %s16 = ssub.s32 %s11, 1
      %s17 = ssub.s32 %s11, 2
      %s18 = sadd.s32 %s11, 1
      %s20 = sadd.s32 %s19, 1
      %p23 = scmp.eq.s32.totalorder %s11, 1
      %p24 = scmp.ne.s32.totalorder %s19, %s21
      %p25 = scmp.eq.s32.totalorder %s11, 0
      %p26 = por %p24, %p25
      %p27 = scmp.ne.s32.totalorder %s19, %s21
      %p28 = scmp.eq.s32.totalorder %s16, 1
      %p29 = por %p27, %p28
      %p30 = scmp.ne.s32.totalorder %s21, %s22
      %p31 = scmp.eq.s32.totalorder %s16, 0
      %p32 = por %p30, %p31
      %p33 = scmp.ne.s32.totalorder %s21, %s22
      %p34 = scmp.eq.s32.totalorder %s17, 1
      %p35 = por %p33, %p34
      %p37 = scmp.ne.s32.totalorder %s22, %s36
      %p38 = scmp.eq.s32.totalorder %s17, 0
      %p39 = por %p37, %p38
      %s40 = ssub.s32 %s11, %s18
      %p41 = scmp.eq.s32.totalorder %s40, 0
      %s43 = sadd.s32 %s42, 1
      %s44 = scalar_select %p41, %s42, %s43
      %p47 = pneg %p41
      %p48 = scmp.eq.s32.totalorder %s11, 1
      %p49 = por %p47, %p48
      %p50 = scmp.ne.s32.totalorder %s42, %s45
      %p51 = scmp.eq.s32.totalorder %s11, 0
      %p52 = por %p50, %p51
      %p53 = scmp.ne.s32.totalorder %s42, %s45
      %p54 = scmp.eq.s32.totalorder %s16, 1
      %p55 = por %p53, %p54
      %p56 = scmp.ne.s32.totalorder %s45, %s46
      %p57 = scmp.eq.s32.totalorder %s16, 0
      %p58 = por %p56, %p57
      %p59 = scmp.ne.s32.totalorder %s45, %s46
      %p60 = scmp.eq.s32.totalorder %s17, 1
      %p61 = por %p59, %p60
      %p63 = scmp.ne.s32.totalorder %s46, %s62
      %p64 = scmp.eq.s32.totalorder %s17, 0
      %p65 = por %p63, %p64
      %s66 = ssub.s32 %s11, %s18
      %p67 = scmp.eq.s32.totalorder %s66, 0
      %s69 = sadd.s32 %s68, 1
      %s70 = scalar_select %p67, %s68, %s69
      %p73 = pneg %p67
      %p74 = scmp.eq.s32.totalorder %s11, 1
      %p75 = por %p73, %p74
      %p76 = scmp.ne.s32.totalorder %s68, %s71
      %p77 = scmp.eq.s32.totalorder %s11, 0
      %p78 = por %p76, %p77
      %p79 = scmp.ne.s32.totalorder %s68, %s71
      %p80 = scmp.eq.s32.totalorder %s16, 1
      %p81 = por %p79, %p80
      %p82 = scmp.ne.s32.totalorder %s71, %s72
      %p83 = scmp.eq.s32.totalorder %s16, 0
      %p84 = por %p82, %p83
      %p85 = scmp.ne.s32.totalorder %s71, %s72
      %p86 = scmp.eq.s32.totalorder %s17, 1
      %p87 = por %p85, %p86
      %p89 = scmp.ne.s32.totalorder %s72, %s88
      %p90 = scmp.eq.s32.totalorder %s17, 0
      %p91 = por %p89, %p90
      %s92 = ssub.s32 %s11, %s18
      %p93 = scmp.eq.s32.totalorder %s92, 0
      %s95 = sadd.s32 %s94, 1
      %s96 = scalar_select %p93, %s94, %s95
      %p99 = pneg %p93
      %p100 = scmp.eq.s32.totalorder %s11, 1
      %p101 = por %p99, %p100
      %p102 = scmp.ne.s32.totalorder %s94, %s97
      %p103 = scmp.eq.s32.totalorder %s11, 0
      %p104 = por %p102, %p103
      %p105 = scmp.ne.s32.totalorder %s94, %s97
      %p106 = scmp.eq.s32.totalorder %s16, 1
      %p107 = por %p105, %p106
      %p108 = scmp.ne.s32.totalorder %s97, %s98
      %p109 = scmp.eq.s32.totalorder %s16, 0
      %p110 = por %p108, %p109
      %p111 = scmp.ne.s32.totalorder %s97, %s98
      %p112 = scmp.eq.s32.totalorder %s17, 1
      %p113 = por %p111, %p112
      %p115 = scmp.ne.s32.totalorder %s98, %s114
      %p116 = scmp.eq.s32.totalorder %s17, 0
      %p117 = por %p115, %p116
      %s119 = sadd.s32 %s118, 1
      %p122 = scmp.eq.s32.totalorder %s11, 1
      %p123 = scmp.ne.s32.totalorder %s118, %s120
      %p124 = scmp.eq.s32.totalorder %s11, 0
      %p125 = por %p123, %p124
      %p126 = scmp.ne.s32.totalorder %s118, %s120
      %p127 = scmp.eq.s32.totalorder %s16, 1
      %p128 = por %p126, %p127
      %p129 = scmp.ne.s32.totalorder %s120, %s121
      %p130 = scmp.eq.s32.totalorder %s16, 0
      %p131 = por %p129, %p130
      %p132 = scmp.ne.s32.totalorder %s120, %s121
      %p133 = scmp.eq.s32.totalorder %s17, 1
      %p134 = por %p132, %p133
      %p136 = scmp.ne.s32.totalorder %s121, %s135
      %p137 = scmp.eq.s32.totalorder %s17, 0
      %p138 = por %p136, %p137
      %s139 = ssub.s32 %s11, %s18
      %p140 = scmp.eq.s32.totalorder %s139, 0
      %s142 = sadd.s32 %s141, 1
      %s143 = scalar_select %p140, %s141, %s142
      %p146 = pneg %p140
      %p147 = scmp.eq.s32.totalorder %s11, 1
      %p148 = por %p146, %p147
      %p149 = scmp.ne.s32.totalorder %s141, %s144
      %p150 = scmp.eq.s32.totalorder %s11, 0
      %p151 = por %p149, %p150
      %p152 = scmp.ne.s32.totalorder %s141, %s144
      %p153 = scmp.eq.s32.totalorder %s16, 1
      %p154 = por %p152, %p153
      %p155 = scmp.ne.s32.totalorder %s144, %s145
      %p156 = scmp.eq.s32.totalorder %s16, 0
      %p157 = por %p155, %p156
      %p158 = scmp.ne.s32.totalorder %s144, %s145
      %p159 = scmp.eq.s32.totalorder %s17, 1
      %p160 = por %p158, %p159
      %p162 = scmp.ne.s32.totalorder %s145, %s161
      %p163 = scmp.eq.s32.totalorder %s17, 0
      %p164 = por %p162, %p163
      %p165 = scmp.le.s32.totalorder 1, %s11
      %p166 = scmp.lt.s32.totalorder %s11, 3
      %p167 = pnand %p165, %p166
      %p168 = pneg %p167
      // Predicated region
      $region9: #{nn_vfa_forward.7} parent=5 // pred_check
        _
      $region10: #{nn_vfa_forward.7} parent=5 // pred_check_branch
        %170 = sbr.rel (%p167) target = $region12
      $region11: #{nn_vfa_forward.7} parent=5 // pred_region
        %s171 = ssub.s32 %s11, 1
        // Predicated region
        $region13: #{nn_vfa_forward.7} parent=11 // pred_check
          %p172 = pneg %p32
        $region14: #{nn_vfa_forward.7} parent=11 // pred_check_branch
          %174 = sbr.rel (%p172) target = $region16
        $region15: #{nn_vfa_forward.7} parent=11 // pred_region
          _
        $region16: #{nn_vfa_forward.7} parent=11 // pred_fallthru
          _
        // Predicated region
        $region17: #{nn_vfa_forward.7} parent=11 // pred_check
          %p175 = pneg %p131
        $region18: #{nn_vfa_forward.7} parent=11 // pred_check_branch
          %177 = sbr.rel (%p175) target = $region20
        $region19: #{nn_vfa_forward.7} parent=11 // pred_region
          _
        $region20: #{nn_vfa_forward.7} parent=11 // pred_fallthru
          _
      $region12: #{nn_vfa_forward.7} parent=5 // pred_fallthru
        _
      %p178 = scmp.lt.s32.totalorder %s11, 2
      // Predicated region
      $region21: #{nn_vfa_forward.7} parent=5 // pred_check
        %p179 = pneg %p178
      $region22: #{nn_vfa_forward.7} parent=5 // pred_check_branch
        %181 = sbr.rel (%p179) target = $region24
      $region23: #{nn_vfa_forward.7} parent=5 // pred_region
        // Predicated region
        $region25: #{nn_vfa_forward.7} parent=23 // pred_check
          %p182 = pneg %p52
        $region26: #{nn_vfa_forward.7} parent=23 // pred_check_branch
          %184 = sbr.rel (%p182) target = $region28
        $region27: #{nn_vfa_forward.7} parent=23 // pred_region
          %s185 = sand.u32 %s42, 1
          %s186 = sand.u32 %s42, 1
          %s187 = smul.addr %s186, 3136
          %s188 = scalar_lea.vmem [#allocation2], %s187
          %s189 = smul.u32 2, %s11
          %s190 = smul.addr %s189, 4
          %s191 = scalar_lea.vmem %s1, %s190
          // Predicated region
          $region29: #{nn_vfa_forward.7} parent=27 // pred_check
            _
          $region30: #{nn_vfa_forward.7} parent=27 // pred_check_branch
            %193 = sbr.rel (0) target = $region32
          $region31: #{nn_vfa_forward.7} parent=27 // pred_region
            // Predicated region
            $region33: #{nn_vfa_forward.7} parent=31 // pred_check
              _
            $region34: #{nn_vfa_forward.7} parent=31 // pred_check_branch
              %195 = sbr.rel (0) target = $region36
            $region35: #{nn_vfa_forward.7} parent=31 // pred_region
              // Predicated region
              $region48: #{nn_vfa_forward.7} parent=35 // pred_check
                _
              $region49: #{nn_vfa_forward.7} parent=35 // pred_check_branch
                %992 = sbr.rel (0) target = $region51
              $region50: #{nn_vfa_forward.7} parent=35 // pred_region
                loop: start=0, step=1, limit=1
                $region52: #{nn_vfa_forward.7} parent=50 // loop_pre_header
                  _
                $region53: #{nn_vfa_forward.7} parent=50 // loop_header
                  %s994 = sphi 0, %s998
                  %p995 = scmp.ge.s32.totalorder %s994, 1
                  %s999 = sphi %s191, %s191
                  %s1000 = sphi %s188, %s188
                $region54: #{nn_vfa_forward.7} parent=50 // loop_header_branch
                  %997 = sbr.rel (%p995) target = $region58
                $region55: #{nn_vfa_forward.7} parent=50 // loop_body
                  %v1001 = vld [vmem:[%s999] sm:$0xff]
                  %1002 = vst [vmem:[%s1000] sm:$0xff] %v1001
                  %v1003 = vld [vmem:[%s999 + $0x10] sm:$0xff]
                  %1004 = vst [vmem:[%s1000 + $0x8] sm:$0xff] %v1003
                  %v1005 = vld [vmem:[%s999 + $0x20] sm:$0xff]
                  %1006 = vst [vmem:[%s1000 + $0x10] sm:$0xff] %v1005
                  %v1007 = vld [vmem:[%s999 + $0x30] sm:$0xff]
                  %1008 = vst [vmem:[%s1000 + $0x18] sm:$0xff] %v1007
                  %v1009 = vld [vmem:[%s999 + $0x40] sm:$0xff]
                  %1010 = vst [vmem:[%s1000 + $0x20] sm:$0xff] %v1009
                  %v1011 = vld [vmem:[%s999 + $0x50] sm:$0xff]
                  %1012 = vst [vmem:[%s1000 + $0x28] sm:$0xff] %v1011
                  %v1013 = vld [vmem:[%s999 + $0x60] sm:$0xff]
                  %1014 = vst [vmem:[%s1000 + $0x30] sm:$0xff] %v1013
                  %v1015 = vld [vmem:[%s999 + $0x70] sm:$0xff]
                  %1016 = vst [vmem:[%s1000 + $0x38] sm:$0xff] %v1015
                  %v1017 = vld [vmem:[%s999 + $0x80] sm:$0xff]
                  %1018 = vst [vmem:[%s1000 + $0x40] sm:$0xff] %v1017
                  %v1019 = vld [vmem:[%s999 + $0x90] sm:$0xff]
                  %1020 = vst [vmem:[%s1000 + $0x48] sm:$0xff] %v1019
                  %v1021 = vld [vmem:[%s999 + $0xa0] sm:$0xff]
                  %1022 = vst [vmem:[%s1000 + $0x50] sm:$0xff] %v1021
                  %v1023 = vld [vmem:[%s999 + $0xb0] sm:$0xff]
                  %1024 = vst [vmem:[%s1000 + $0x58] sm:$0xff] %v1023
                  %v1025 = vld [vmem:[%s999 + $0xc0] sm:$0xff]
                  %1026 = vst [vmem:[%s1000 + $0x60] sm:$0xff] %v1025
                  %v1027 = vld [vmem:[%s999 + $0xd0] sm:$0xff]
                  %1028 = vst [vmem:[%s1000 + $0x68] sm:$0xff] %v1027
                  %v1029 = vld [vmem:[%s999 + $0xe0] sm:$0xff]
                  %1030 = vst [vmem:[%s1000 + $0x70] sm:$0xff] %v1029
                  %v1031 = vld [vmem:[%s999 + $0xf0] sm:$0xff]
                  %1032 = vst [vmem:[%s1000 + $0x78] sm:$0xff] %v1031
                  %v1033 = vld [vmem:[%s999 + $0x100] sm:$0xff]
                  %1034 = vst [vmem:[%s1000 + $0x80] sm:$0xff] %v1033
                  %v1035 = vld [vmem:[%s999 + $0x110] sm:$0xff]
                  %1036 = vst [vmem:[%s1000 + $0x88] sm:$0xff] %v1035
                  %v1037 = vld [vmem:[%s999 + $0x120] sm:$0xff]
                  %1038 = vst [vmem:[%s1000 + $0x90] sm:$0xff] %v1037
                  %v1039 = vld [vmem:[%s999 + $0x130] sm:$0xff]
                  %1040 = vst [vmem:[%s1000 + $0x98] sm:$0xff] %v1039
                  %v1041 = vld [vmem:[%s999 + $0x140] sm:$0xff]
                  %1042 = vst [vmem:[%s1000 + $0xa0] sm:$0xff] %v1041
                  %v1043 = vld [vmem:[%s999 + $0x150] sm:$0xff]
                  %1044 = vst [vmem:[%s1000 + $0xa8] sm:$0xff] %v1043
                  %v1045 = vld [vmem:[%s999 + $0x160] sm:$0xff]
                  %1046 = vst [vmem:[%s1000 + $0xb0] sm:$0xff] %v1045
                  %v1047 = vld [vmem:[%s999 + $0x170] sm:$0xff]
                  %1048 = vst [vmem:[%s1000 + $0xb8] sm:$0xff] %v1047
                  %v1049 = vld [vmem:[%s999 + $0x180] sm:$0xff]
                  %1050 = vst [vmem:[%s1000 + $0xc0] sm:$0xff] %v1049
                  %v1051 = vld [vmem:[%s999 + $0x190] sm:$0xff]
                  %1052 = vst [vmem:[%s1000 + $0xc8] sm:$0xff] %v1051
                  %v1053 = vld [vmem:[%s999 + $0x1a0] sm:$0xff]
                  %1054 = vst [vmem:[%s1000 + $0xd0] sm:$0xff] %v1053
                  %v1055 = vld [vmem:[%s999 + $0x1b0] sm:$0xff]
                  %1056 = vst [vmem:[%s1000 + $0xd8] sm:$0xff] %v1055
                  %v1057 = vld [vmem:[%s999 + $0x1c0] sm:$0xff]
                  %1058 = vst [vmem:[%s1000 + $0xe0] sm:$0xff] %v1057
                  %v1059 = vld [vmem:[%s999 + $0x1d0] sm:$0xff]
                  %1060 = vst [vmem:[%s1000 + $0xe8] sm:$0xff] %v1059
                  %v1061 = vld [vmem:[%s999 + $0x1e0] sm:$0xff]
                  %1062 = vst [vmem:[%s1000 + $0xf0] sm:$0xff] %v1061
                  %v1063 = vld [vmem:[%s999 + $0x1f0] sm:$0xff]
                  %1064 = vst [vmem:[%s1000 + $0xf8] sm:$0xff] %v1063
                  %v1065 = vld [vmem:[%s999 + $0x200] sm:$0xff]
                  %1066 = vst [vmem:[%s1000 + $0x100] sm:$0xff] %v1065
                  %v1067 = vld [vmem:[%s999 + $0x210] sm:$0xff]
                  %1068 = vst [vmem:[%s1000 + $0x108] sm:$0xff] %v1067
                  %v1069 = vld [vmem:[%s999 + $0x220] sm:$0xff]
                  %1070 = vst [vmem:[%s1000 + $0x110] sm:$0xff] %v1069
                  %v1071 = vld [vmem:[%s999 + $0x230] sm:$0xff]
                  %1072 = vst [vmem:[%s1000 + $0x118] sm:$0xff] %v1071
                  %v1073 = vld [vmem:[%s999 + $0x240] sm:$0xff]
                  %1074 = vst [vmem:[%s1000 + $0x120] sm:$0xff] %v1073
                  %v1075 = vld [vmem:[%s999 + $0x250] sm:$0xff]
                  %1076 = vst [vmem:[%s1000 + $0x128] sm:$0xff] %v1075
                  %v1077 = vld [vmem:[%s999 + $0x260] sm:$0xff]
                  %1078 = vst [vmem:[%s1000 + $0x130] sm:$0xff] %v1077
                  %v1079 = vld [vmem:[%s999 + $0x270] sm:$0xff]
                  %1080 = vst [vmem:[%s1000 + $0x138] sm:$0xff] %v1079
                  %v1081 = vld [vmem:[%s999 + $0x280] sm:$0xff]
                  %1082 = vst [vmem:[%s1000 + $0x140] sm:$0xff] %v1081
                  %v1083 = vld [vmem:[%s999 + $0x290] sm:$0xff]
                  %1084 = vst [vmem:[%s1000 + $0x148] sm:$0xff] %v1083
                  %v1085 = vld [vmem:[%s999 + $0x2a0] sm:$0xff]
                  %1086 = vst [vmem:[%s1000 + $0x150] sm:$0xff] %v1085
                  %v1087 = vld [vmem:[%s999 + $0x2b0] sm:$0xff]
                  %1088 = vst [vmem:[%s1000 + $0x158] sm:$0xff] %v1087
                  %v1089 = vld [vmem:[%s999 + $0x2c0] sm:$0xff]
                  %1090 = vst [vmem:[%s1000 + $0x160] sm:$0xff] %v1089
                  %v1091 = vld [vmem:[%s999 + $0x2d0] sm:$0xff]
                  %1092 = vst [vmem:[%s1000 + $0x168] sm:$0xff] %v1091
                  %v1093 = vld [vmem:[%s999 + $0x2e0] sm:$0xff]
                  %1094 = vst [vmem:[%s1000 + $0x170] sm:$0xff] %v1093
                  %v1095 = vld [vmem:[%s999 + $0x2f0] sm:$0xff]
                  %1096 = vst [vmem:[%s1000 + $0x178] sm:$0xff] %v1095
                  %v1097 = vld [vmem:[%s999 + $0x300] sm:$0xff]
                  %1098 = vst [vmem:[%s1000 + $0x180] sm:$0xff] %v1097
                  %v1099 = vld [vmem:[%s999 + $0x310] sm:$0xff]
                  %1100 = vst [vmem:[%s1000 + $0x188] sm:$0xff] %v1099
                  %v1101 = vld [vmem:[%s999 + $0x320] sm:$0xff]
                  %1102 = vst [vmem:[%s1000 + $0x190] sm:$0xff] %v1101
                  %v1103 = vld [vmem:[%s999 + $0x330] sm:$0xff]
                  %1104 = vst [vmem:[%s1000 + $0x198] sm:$0xff] %v1103
                  %v1105 = vld [vmem:[%s999 + $0x340] sm:$0xff]
                  %1106 = vst [vmem:[%s1000 + $0x1a0] sm:$0xff] %v1105
                  %v1107 = vld [vmem:[%s999 + $0x350] sm:$0xff]
                  %1108 = vst [vmem:[%s1000 + $0x1a8] sm:$0xff] %v1107
                  %v1109 = vld [vmem:[%s999 + $0x360] sm:$0xff]
                  %1110 = vst [vmem:[%s1000 + $0x1b0] sm:$0xff] %v1109
                  %v1111 = vld [vmem:[%s999 + $0x370] sm:$0xff]
                  %1112 = vst [vmem:[%s1000 + $0x1b8] sm:$0xff] %v1111
                  %v1113 = vld [vmem:[%s999 + $0x380] sm:$0xff]
                  %1114 = vst [vmem:[%s1000 + $0x1c0] sm:$0xff] %v1113
                  %v1115 = vld [vmem:[%s999 + $0x390] sm:$0xff]
                  %1116 = vst [vmem:[%s1000 + $0x1c8] sm:$0xff] %v1115
                  %v1117 = vld [vmem:[%s999 + $0x3a0] sm:$0xff]
                  %1118 = vst [vmem:[%s1000 + $0x1d0] sm:$0xff] %v1117
                  %v1119 = vld [vmem:[%s999 + $0x3b0] sm:$0xff]
                  %1120 = vst [vmem:[%s1000 + $0x1d8] sm:$0xff] %v1119
                  %v1121 = vld [vmem:[%s999 + $0x3c0] sm:$0xff]
                  %1122 = vst [vmem:[%s1000 + $0x1e0] sm:$0xff] %v1121
                  %v1123 = vld [vmem:[%s999 + $0x3d0] sm:$0xff]
                  %1124 = vst [vmem:[%s1000 + $0x1e8] sm:$0xff] %v1123
                  %v1125 = vld [vmem:[%s999 + $0x3e0] sm:$0xff]
                  %1126 = vst [vmem:[%s1000 + $0x1f0] sm:$0xff] %v1125
                  %v1127 = vld [vmem:[%s999 + $0x3f0] sm:$0xff]
                  %1128 = vst [vmem:[%s1000 + $0x1f8] sm:$0xff] %v1127
                  %v1129 = vld [vmem:[%s999 + $0x400] sm:$0xff]
                  %1130 = vst [vmem:[%s1000 + $0x200] sm:$0xff] %v1129
                  %v1131 = vld [vmem:[%s999 + $0x410] sm:$0xff]
                  %1132 = vst [vmem:[%s1000 + $0x208] sm:$0xff] %v1131
                  %v1133 = vld [vmem:[%s999 + $0x420] sm:$0xff]
                  %1134 = vst [vmem:[%s1000 + $0x210] sm:$0xff] %v1133
                  %v1135 = vld [vmem:[%s999 + $0x430] sm:$0xff]
                  %1136 = vst [vmem:[%s1000 + $0x218] sm:$0xff] %v1135
                  %v1137 = vld [vmem:[%s999 + $0x440] sm:$0xff]
                  %1138 = vst [vmem:[%s1000 + $0x220] sm:$0xff] %v1137
                  %v1139 = vld [vmem:[%s999 + $0x450] sm:$0xff]
                  %1140 = vst [vmem:[%s1000 + $0x228] sm:$0xff] %v1139
                  %v1141 = vld [vmem:[%s999 + $0x460] sm:$0xff]
                  %1142 = vst [vmem:[%s1000 + $0x230] sm:$0xff] %v1141
                  %v1143 = vld [vmem:[%s999 + $0x470] sm:$0xff]
                  %1144 = vst [vmem:[%s1000 + $0x238] sm:$0xff] %v1143
                  %v1145 = vld [vmem:[%s999 + $0x480] sm:$0xff]
                  %1146 = vst [vmem:[%s1000 + $0x240] sm:$0xff] %v1145
                  %v1147 = vld [vmem:[%s999 + $0x490] sm:$0xff]
                  %1148 = vst [vmem:[%s1000 + $0x248] sm:$0xff] %v1147
                  %v1149 = vld [vmem:[%s999 + $0x4a0] sm:$0xff]
                  %1150 = vst [vmem:[%s1000 + $0x250] sm:$0xff] %v1149
                  %v1151 = vld [vmem:[%s999 + $0x4b0] sm:$0xff]
                  %1152 = vst [vmem:[%s1000 + $0x258] sm:$0xff] %v1151
                  %v1153 = vld [vmem:[%s999 + $0x4c0] sm:$0xff]
                  %1154 = vst [vmem:[%s1000 + $0x260] sm:$0xff] %v1153
                  %v1155 = vld [vmem:[%s999 + $0x4d0] sm:$0xff]
                  %1156 = vst [vmem:[%s1000 + $0x268] sm:$0xff] %v1155
                  %v1157 = vld [vmem:[%s999 + $0x4e0] sm:$0xff]
                  %1158 = vst [vmem:[%s1000 + $0x270] sm:$0xff] %v1157
                  %v1159 = vld [vmem:[%s999 + $0x4f0] sm:$0xff]
                  %1160 = vst [vmem:[%s1000 + $0x278] sm:$0xff] %v1159
                  %v1161 = vld [vmem:[%s999 + $0x500] sm:$0xff]
                  %1162 = vst [vmem:[%s1000 + $0x280] sm:$0xff] %v1161
                  %v1163 = vld [vmem:[%s999 + $0x510] sm:$0xff]
                  %1164 = vst [vmem:[%s1000 + $0x288] sm:$0xff] %v1163
                  %v1165 = vld [vmem:[%s999 + $0x520] sm:$0xff]
                  %1166 = vst [vmem:[%s1000 + $0x290] sm:$0xff] %v1165
                  %v1167 = vld [vmem:[%s999 + $0x530] sm:$0xff]
                  %1168 = vst [vmem:[%s1000 + $0x298] sm:$0xff] %v1167
                  %v1169 = vld [vmem:[%s999 + $0x540] sm:$0xff]
                  %1170 = vst [vmem:[%s1000 + $0x2a0] sm:$0xff] %v1169
                  %v1171 = vld [vmem:[%s999 + $0x550] sm:$0xff]
                  %1172 = vst [vmem:[%s1000 + $0x2a8] sm:$0xff] %v1171
                  %v1173 = vld [vmem:[%s999 + $0x560] sm:$0xff]
                  %1174 = vst [vmem:[%s1000 + $0x2b0] sm:$0xff] %v1173
                  %v1175 = vld [vmem:[%s999 + $0x570] sm:$0xff]
                  %1176 = vst [vmem:[%s1000 + $0x2b8] sm:$0xff] %v1175
                  %v1177 = vld [vmem:[%s999 + $0x580] sm:$0xff]
                  %1178 = vst [vmem:[%s1000 + $0x2c0] sm:$0xff] %v1177
                  %v1179 = vld [vmem:[%s999 + $0x590] sm:$0xff]
                  %1180 = vst [vmem:[%s1000 + $0x2c8] sm:$0xff] %v1179
                  %v1181 = vld [vmem:[%s999 + $0x5a0] sm:$0xff]
                  %1182 = vst [vmem:[%s1000 + $0x2d0] sm:$0xff] %v1181
                  %v1183 = vld [vmem:[%s999 + $0x5b0] sm:$0xff]
                  %1184 = vst [vmem:[%s1000 + $0x2d8] sm:$0xff] %v1183
                  %v1185 = vld [vmem:[%s999 + $0x5c0] sm:$0xff]
                  %1186 = vst [vmem:[%s1000 + $0x2e0] sm:$0xff] %v1185
                  %v1187 = vld [vmem:[%s999 + $0x5d0] sm:$0xff]
                  %1188 = vst [vmem:[%s1000 + $0x2e8] sm:$0xff] %v1187
                  %v1189 = vld [vmem:[%s999 + $0x5e0] sm:$0xff]
                  %1190 = vst [vmem:[%s1000 + $0x2f0] sm:$0xff] %v1189
                  %v1191 = vld [vmem:[%s999 + $0x5f0] sm:$0xff]
                  %1192 = vst [vmem:[%s1000 + $0x2f8] sm:$0xff] %v1191
                  %v1193 = vld [vmem:[%s999 + $0x600] sm:$0xff]
                  %1194 = vst [vmem:[%s1000 + $0x300] sm:$0xff] %v1193
                  %v1195 = vld [vmem:[%s999 + $0x610] sm:$0xff]
                  %1196 = vst [vmem:[%s1000 + $0x308] sm:$0xff] %v1195
                  %v1197 = vld [vmem:[%s999 + $0x620] sm:$0xff]
                  %1198 = vst [vmem:[%s1000 + $0x310] sm:$0xff] %v1197
                  %v1199 = vld [vmem:[%s999 + $0x630] sm:$0xff]
                  %1200 = vst [vmem:[%s1000 + $0x318] sm:$0xff] %v1199
                  %v1201 = vld [vmem:[%s999 + $0x640] sm:$0xff]
                  %1202 = vst [vmem:[%s1000 + $0x320] sm:$0xff] %v1201
                  %v1203 = vld [vmem:[%s999 + $0x650] sm:$0xff]
                  %1204 = vst [vmem:[%s1000 + $0x328] sm:$0xff] %v1203
                  %v1205 = vld [vmem:[%s999 + $0x660] sm:$0xff]
                  %1206 = vst [vmem:[%s1000 + $0x330] sm:$0xff] %v1205
                  %v1207 = vld [vmem:[%s999 + $0x670] sm:$0xff]
                  %1208 = vst [vmem:[%s1000 + $0x338] sm:$0xff] %v1207
                  %v1209 = vld [vmem:[%s999 + $0x680] sm:$0xff]
                  %1210 = vst [vmem:[%s1000 + $0x340] sm:$0xff] %v1209
                  %v1211 = vld [vmem:[%s999 + $0x690] sm:$0xff]
                  %1212 = vst [vmem:[%s1000 + $0x348] sm:$0xff] %v1211
                  %v1213 = vld [vmem:[%s999 + $0x6a0] sm:$0xff]
                  %1214 = vst [vmem:[%s1000 + $0x350] sm:$0xff] %v1213
                  %v1215 = vld [vmem:[%s999 + $0x6b0] sm:$0xff]
                  %1216 = vst [vmem:[%s1000 + $0x358] sm:$0xff] %v1215
                  %v1217 = vld [vmem:[%s999 + $0x6c0] sm:$0xff]
                  %1218 = vst [vmem:[%s1000 + $0x360] sm:$0xff] %v1217
                  %v1219 = vld [vmem:[%s999 + $0x6d0] sm:$0xff]
                  %1220 = vst [vmem:[%s1000 + $0x368] sm:$0xff] %v1219
                  %v1221 = vld [vmem:[%s999 + $0x6e0] sm:$0xff]
                  %1222 = vst [vmem:[%s1000 + $0x370] sm:$0xff] %v1221
                  %v1223 = vld [vmem:[%s999 + $0x6f0] sm:$0xff]
                  %1224 = vst [vmem:[%s1000 + $0x378] sm:$0xff] %v1223
                  %v1225 = vld [vmem:[%s999 + $0x700] sm:$0xff]
                  %1226 = vst [vmem:[%s1000 + $0x380] sm:$0xff] %v1225
                  %v1227 = vld [vmem:[%s999 + $0x710] sm:$0xff]
                  %1228 = vst [vmem:[%s1000 + $0x388] sm:$0xff] %v1227
                  %v1229 = vld [vmem:[%s999 + $0x720] sm:$0xff]
                  %1230 = vst [vmem:[%s1000 + $0x390] sm:$0xff] %v1229
                  %v1231 = vld [vmem:[%s999 + $0x730] sm:$0xff]
                  %1232 = vst [vmem:[%s1000 + $0x398] sm:$0xff] %v1231
                  %v1233 = vld [vmem:[%s999 + $0x740] sm:$0xff]
                  %1234 = vst [vmem:[%s1000 + $0x3a0] sm:$0xff] %v1233
                  %v1235 = vld [vmem:[%s999 + $0x750] sm:$0xff]
                  %1236 = vst [vmem:[%s1000 + $0x3a8] sm:$0xff] %v1235
                  %v1237 = vld [vmem:[%s999 + $0x760] sm:$0xff]
                  %1238 = vst [vmem:[%s1000 + $0x3b0] sm:$0xff] %v1237
                  %v1239 = vld [vmem:[%s999 + $0x770] sm:$0xff]
                  %1240 = vst [vmem:[%s1000 + $0x3b8] sm:$0xff] %v1239
                  %v1241 = vld [vmem:[%s999 + $0x780] sm:$0xff]
                  %1242 = vst [vmem:[%s1000 + $0x3c0] sm:$0xff] %v1241
                  %v1243 = vld [vmem:[%s999 + $0x790] sm:$0xff]
                  %1244 = vst [vmem:[%s1000 + $0x3c8] sm:$0xff] %v1243
                  %v1245 = vld [vmem:[%s999 + $0x7a0] sm:$0xff]
                  %1246 = vst [vmem:[%s1000 + $0x3d0] sm:$0xff] %v1245
                  %v1247 = vld [vmem:[%s999 + $0x7b0] sm:$0xff]
                  %1248 = vst [vmem:[%s1000 + $0x3d8] sm:$0xff] %v1247
                  %v1249 = vld [vmem:[%s999 + $0x7c0] sm:$0xff]
                  %1250 = vst [vmem:[%s1000 + $0x3e0] sm:$0xff] %v1249
                  %v1251 = vld [vmem:[%s999 + $0x7d0] sm:$0xff]
                  %1252 = vst [vmem:[%s1000 + $0x3e8] sm:$0xff] %v1251
                  %v1253 = vld [vmem:[%s999 + $0x7e0] sm:$0xff]
                  %1254 = vst [vmem:[%s1000 + $0x3f0] sm:$0xff] %v1253
                  %v1255 = vld [vmem:[%s999 + $0x7f0] sm:$0xff]
                  %1256 = vst [vmem:[%s1000 + $0x3f8] sm:$0xff] %v1255
                  %v1257 = vld [vmem:[%s999 + $0x800] sm:$0xff]
                  %1258 = vst [vmem:[%s1000 + $0x400] sm:$0xff] %v1257
                  %v1259 = vld [vmem:[%s999 + $0x810] sm:$0xff]
                  %1260 = vst [vmem:[%s1000 + $0x408] sm:$0xff] %v1259
                  %v1261 = vld [vmem:[%s999 + $0x820] sm:$0xff]
                  %1262 = vst [vmem:[%s1000 + $0x410] sm:$0xff] %v1261
                  %v1263 = vld [vmem:[%s999 + $0x830] sm:$0xff]
                  %1264 = vst [vmem:[%s1000 + $0x418] sm:$0xff] %v1263
                  %v1265 = vld [vmem:[%s999 + $0x840] sm:$0xff]
                  %1266 = vst [vmem:[%s1000 + $0x420] sm:$0xff] %v1265
                  %v1267 = vld [vmem:[%s999 + $0x850] sm:$0xff]
                  %1268 = vst [vmem:[%s1000 + $0x428] sm:$0xff] %v1267
                  %v1269 = vld [vmem:[%s999 + $0x860] sm:$0xff]
                  %1270 = vst [vmem:[%s1000 + $0x430] sm:$0xff] %v1269
                  %v1271 = vld [vmem:[%s999 + $0x870] sm:$0xff]
                  %1272 = vst [vmem:[%s1000 + $0x438] sm:$0xff] %v1271
                  %v1273 = vld [vmem:[%s999 + $0x880] sm:$0xff]
                  %1274 = vst [vmem:[%s1000 + $0x440] sm:$0xff] %v1273
                  %v1275 = vld [vmem:[%s999 + $0x890] sm:$0xff]
                  %1276 = vst [vmem:[%s1000 + $0x448] sm:$0xff] %v1275
                  %v1277 = vld [vmem:[%s999 + $0x8a0] sm:$0xff]
                  %1278 = vst [vmem:[%s1000 + $0x450] sm:$0xff] %v1277
                  %v1279 = vld [vmem:[%s999 + $0x8b0] sm:$0xff]
                  %1280 = vst [vmem:[%s1000 + $0x458] sm:$0xff] %v1279
                  %v1281 = vld [vmem:[%s999 + $0x8c0] sm:$0xff]
                  %1282 = vst [vmem:[%s1000 + $0x460] sm:$0xff] %v1281
                  %v1283 = vld [vmem:[%s999 + $0x8d0] sm:$0xff]
                  %1284 = vst [vmem:[%s1000 + $0x468] sm:$0xff] %v1283
                  %v1285 = vld [vmem:[%s999 + $0x8e0] sm:$0xff]
                  %1286 = vst [vmem:[%s1000 + $0x470] sm:$0xff] %v1285
                  %v1287 = vld [vmem:[%s999 + $0x8f0] sm:$0xff]
                  %1288 = vst [vmem:[%s1000 + $0x478] sm:$0xff] %v1287
                  %v1289 = vld [vmem:[%s999 + $0x900] sm:$0xff]
                  %1290 = vst [vmem:[%s1000 + $0x480] sm:$0xff] %v1289
                  %v1291 = vld [vmem:[%s999 + $0x910] sm:$0xff]
                  %1292 = vst [vmem:[%s1000 + $0x488] sm:$0xff] %v1291
                  %v1293 = vld [vmem:[%s999 + $0x920] sm:$0xff]
                  %1294 = vst [vmem:[%s1000 + $0x490] sm:$0xff] %v1293
                  %v1295 = vld [vmem:[%s999 + $0x930] sm:$0xff]
                  %1296 = vst [vmem:[%s1000 + $0x498] sm:$0xff] %v1295
                  %v1297 = vld [vmem:[%s999 + $0x940] sm:$0xff]
                  %1298 = vst [vmem:[%s1000 + $0x4a0] sm:$0xff] %v1297
                  %v1299 = vld [vmem:[%s999 + $0x950] sm:$0xff]
                  %1300 = vst [vmem:[%s1000 + $0x4a8] sm:$0xff] %v1299
                  %v1301 = vld [vmem:[%s999 + $0x960] sm:$0xff]
                  %1302 = vst [vmem:[%s1000 + $0x4b0] sm:$0xff] %v1301
                  %v1303 = vld [vmem:[%s999 + $0x970] sm:$0xff]
                  %1304 = vst [vmem:[%s1000 + $0x4b8] sm:$0xff] %v1303
                  %v1305 = vld [vmem:[%s999 + $0x980] sm:$0xff]
                  %1306 = vst [vmem:[%s1000 + $0x4c0] sm:$0xff] %v1305
                  %v1307 = vld [vmem:[%s999 + $0x990] sm:$0xff]
                  %1308 = vst [vmem:[%s1000 + $0x4c8] sm:$0xff] %v1307
                  %v1309 = vld [vmem:[%s999 + $0x9a0] sm:$0xff]
                  %1310 = vst [vmem:[%s1000 + $0x4d0] sm:$0xff] %v1309
                  %v1311 = vld [vmem:[%s999 + $0x9b0] sm:$0xff]
                  %1312 = vst [vmem:[%s1000 + $0x4d8] sm:$0xff] %v1311
                  %v1313 = vld [vmem:[%s999 + $0x9c0] sm:$0xff]
                  %1314 = vst [vmem:[%s1000 + $0x4e0] sm:$0xff] %v1313
                  %v1315 = vld [vmem:[%s999 + $0x9d0] sm:$0xff]
                  %1316 = vst [vmem:[%s1000 + $0x4e8] sm:$0xff] %v1315
                  %v1317 = vld [vmem:[%s999 + $0x9e0] sm:$0xff]
                  %1318 = vst [vmem:[%s1000 + $0x4f0] sm:$0xff] %v1317
                  %v1319 = vld [vmem:[%s999 + $0x9f0] sm:$0xff]
                  %1320 = vst [vmem:[%s1000 + $0x4f8] sm:$0xff] %v1319
                  %v1321 = vld [vmem:[%s999 + $0xa00] sm:$0xff]
                  %1322 = vst [vmem:[%s1000 + $0x500] sm:$0xff] %v1321
                  %v1323 = vld [vmem:[%s999 + $0xa10] sm:$0xff]
                  %1324 = vst [vmem:[%s1000 + $0x508] sm:$0xff] %v1323
                  %v1325 = vld [vmem:[%s999 + $0xa20] sm:$0xff]
                  %1326 = vst [vmem:[%s1000 + $0x510] sm:$0xff] %v1325
                  %v1327 = vld [vmem:[%s999 + $0xa30] sm:$0xff]
                  %1328 = vst [vmem:[%s1000 + $0x518] sm:$0xff] %v1327
                  %v1329 = vld [vmem:[%s999 + $0xa40] sm:$0xff]
                  %1330 = vst [vmem:[%s1000 + $0x520] sm:$0xff] %v1329
                  %v1331 = vld [vmem:[%s999 + $0xa50] sm:$0xff]
                  %1332 = vst [vmem:[%s1000 + $0x528] sm:$0xff] %v1331
                  %v1333 = vld [vmem:[%s999 + $0xa60] sm:$0xff]
                  %1334 = vst [vmem:[%s1000 + $0x530] sm:$0xff] %v1333
                  %v1335 = vld [vmem:[%s999 + $0xa70] sm:$0xff]
                  %1336 = vst [vmem:[%s1000 + $0x538] sm:$0xff] %v1335
                  %v1337 = vld [vmem:[%s999 + $0xa80] sm:$0xff]
                  %1338 = vst [vmem:[%s1000 + $0x540] sm:$0xff] %v1337
                  %v1339 = vld [vmem:[%s999 + $0xa90] sm:$0xff]
                  %1340 = vst [vmem:[%s1000 + $0x548] sm:$0xff] %v1339
                  %v1341 = vld [vmem:[%s999 + $0xaa0] sm:$0xff]
                  %1342 = vst [vmem:[%s1000 + $0x550] sm:$0xff] %v1341
                  %v1343 = vld [vmem:[%s999 + $0xab0] sm:$0xff]
                  %1344 = vst [vmem:[%s1000 + $0x558] sm:$0xff] %v1343
                  %v1345 = vld [vmem:[%s999 + $0xac0] sm:$0xff]
                  %1346 = vst [vmem:[%s1000 + $0x560] sm:$0xff] %v1345
                  %v1347 = vld [vmem:[%s999 + $0xad0] sm:$0xff]
                  %1348 = vst [vmem:[%s1000 + $0x568] sm:$0xff] %v1347
                  %v1349 = vld [vmem:[%s999 + $0xae0] sm:$0xff]
                  %1350 = vst [vmem:[%s1000 + $0x570] sm:$0xff] %v1349
                  %v1351 = vld [vmem:[%s999 + $0xaf0] sm:$0xff]
                  %1352 = vst [vmem:[%s1000 + $0x578] sm:$0xff] %v1351
                  %v1353 = vld [vmem:[%s999 + $0xb00] sm:$0xff]
                  %1354 = vst [vmem:[%s1000 + $0x580] sm:$0xff] %v1353
                  %v1355 = vld [vmem:[%s999 + $0xb10] sm:$0xff]
                  %1356 = vst [vmem:[%s1000 + $0x588] sm:$0xff] %v1355
                  %v1357 = vld [vmem:[%s999 + $0xb20] sm:$0xff]
                  %1358 = vst [vmem:[%s1000 + $0x590] sm:$0xff] %v1357
                  %v1359 = vld [vmem:[%s999 + $0xb30] sm:$0xff]
                  %1360 = vst [vmem:[%s1000 + $0x598] sm:$0xff] %v1359
                  %v1361 = vld [vmem:[%s999 + $0xb40] sm:$0xff]
                  %1362 = vst [vmem:[%s1000 + $0x5a0] sm:$0xff] %v1361
                  %v1363 = vld [vmem:[%s999 + $0xb50] sm:$0xff]
                  %1364 = vst [vmem:[%s1000 + $0x5a8] sm:$0xff] %v1363
                  %v1365 = vld [vmem:[%s999 + $0xb60] sm:$0xff]
                  %1366 = vst [vmem:[%s1000 + $0x5b0] sm:$0xff] %v1365
                  %v1367 = vld [vmem:[%s999 + $0xb70] sm:$0xff]
                  %1368 = vst [vmem:[%s1000 + $0x5b8] sm:$0xff] %v1367
                  %v1369 = vld [vmem:[%s999 + $0xb80] sm:$0xff]
                  %1370 = vst [vmem:[%s1000 + $0x5c0] sm:$0xff] %v1369
                  %v1371 = vld [vmem:[%s999 + $0xb90] sm:$0xff]
                  %1372 = vst [vmem:[%s1000 + $0x5c8] sm:$0xff] %v1371
                  %v1373 = vld [vmem:[%s999 + $0xba0] sm:$0xff]
                  %1374 = vst [vmem:[%s1000 + $0x5d0] sm:$0xff] %v1373
                  %v1375 = vld [vmem:[%s999 + $0xbb0] sm:$0xff]
                  %1376 = vst [vmem:[%s1000 + $0x5d8] sm:$0xff] %v1375
                  %v1377 = vld [vmem:[%s999 + $0xbc0] sm:$0xff]
                  %1378 = vst [vmem:[%s1000 + $0x5e0] sm:$0xff] %v1377
                  %v1379 = vld [vmem:[%s999 + $0xbd0] sm:$0xff]
                  %1380 = vst [vmem:[%s1000 + $0x5e8] sm:$0xff] %v1379
                  %v1381 = vld [vmem:[%s999 + $0xbe0] sm:$0xff]
                  %1382 = vst [vmem:[%s1000 + $0x5f0] sm:$0xff] %v1381
                  %v1383 = vld [vmem:[%s999 + $0xbf0] sm:$0xff]
                  %1384 = vst [vmem:[%s1000 + $0x5f8] sm:$0xff] %v1383
                  %v1385 = vld [vmem:[%s999 + $0xc00] sm:$0xff]
                  %1386 = vst [vmem:[%s1000 + $0x600] sm:$0xff] %v1385
                  %v1387 = vld [vmem:[%s999 + $0xc10] sm:$0xff]
                  %1388 = vst [vmem:[%s1000 + $0x608] sm:$0xff] %v1387
                  %v1389 = vld [vmem:[%s999 + $0xc20] sm:$0xff]
                  %1390 = vst [vmem:[%s1000 + $0x610] sm:$0xff] %v1389
                  %v1391 = vld [vmem:[%s999 + $0xc30] sm:$0xff]
                  %1392 = vst [vmem:[%s1000 + $0x618] sm:$0xff] %v1391
                  %v1393 = vld [vmem:[%s999 + $0xc40] sm:$0xff]
                  %1394 = vst [vmem:[%s1000 + $0x620] sm:$0xff] %v1393
                  %v1395 = vld [vmem:[%s999 + $0xc50] sm:$0xff]
                  %1396 = vst [vmem:[%s1000 + $0x628] sm:$0xff] %v1395
                  %v1397 = vld [vmem:[%s999 + $0xc60] sm:$0xff]
                  %1398 = vst [vmem:[%s1000 + $0x630] sm:$0xff] %v1397
                  %v1399 = vld [vmem:[%s999 + $0xc70] sm:$0xff]
                  %1400 = vst [vmem:[%s1000 + $0x638] sm:$0xff] %v1399
                  %v1401 = vld [vmem:[%s999 + $0xc80] sm:$0xff]
                  %1402 = vst [vmem:[%s1000 + $0x640] sm:$0xff] %v1401
                  %v1403 = vld [vmem:[%s999 + $0xc90] sm:$0xff]
                  %1404 = vst [vmem:[%s1000 + $0x648] sm:$0xff] %v1403
                  %v1405 = vld [vmem:[%s999 + $0xca0] sm:$0xff]
                  %1406 = vst [vmem:[%s1000 + $0x650] sm:$0xff] %v1405
                  %v1407 = vld [vmem:[%s999 + $0xcb0] sm:$0xff]
                  %1408 = vst [vmem:[%s1000 + $0x658] sm:$0xff] %v1407
                  %v1409 = vld [vmem:[%s999 + $0xcc0] sm:$0xff]
                  %1410 = vst [vmem:[%s1000 + $0x660] sm:$0xff] %v1409
                  %v1411 = vld [vmem:[%s999 + $0xcd0] sm:$0xff]
                  %1412 = vst [vmem:[%s1000 + $0x668] sm:$0xff] %v1411
                  %v1413 = vld [vmem:[%s999 + $0xce0] sm:$0xff]
                  %1414 = vst [vmem:[%s1000 + $0x670] sm:$0xff] %v1413
                  %v1415 = vld [vmem:[%s999 + $0xcf0] sm:$0xff]
                  %1416 = vst [vmem:[%s1000 + $0x678] sm:$0xff] %v1415
                  %v1417 = vld [vmem:[%s999 + $0xd00] sm:$0xff]
                  %1418 = vst [vmem:[%s1000 + $0x680] sm:$0xff] %v1417
                  %v1419 = vld [vmem:[%s999 + $0xd10] sm:$0xff]
                  %1420 = vst [vmem:[%s1000 + $0x688] sm:$0xff] %v1419
                  %v1421 = vld [vmem:[%s999 + $0xd20] sm:$0xff]
                  %1422 = vst [vmem:[%s1000 + $0x690] sm:$0xff] %v1421
                  %v1423 = vld [vmem:[%s999 + $0xd30] sm:$0xff]
                  %1424 = vst [vmem:[%s1000 + $0x698] sm:$0xff] %v1423
                  %v1425 = vld [vmem:[%s999 + $0xd40] sm:$0xff]
                  %1426 = vst [vmem:[%s1000 + $0x6a0] sm:$0xff] %v1425
                  %v1427 = vld [vmem:[%s999 + $0xd50] sm:$0xff]
                  %1428 = vst [vmem:[%s1000 + $0x6a8] sm:$0xff] %v1427
                  %v1429 = vld [vmem:[%s999 + $0xd60] sm:$0xff]
                  %1430 = vst [vmem:[%s1000 + $0x6b0] sm:$0xff] %v1429
                  %v1431 = vld [vmem:[%s999 + $0xd70] sm:$0xff]
                  %1432 = vst [vmem:[%s1000 + $0x6b8] sm:$0xff] %v1431
                  %v1433 = vld [vmem:[%s999 + $0xd80] sm:$0xff]
                  %1434 = vst [vmem:[%s1000 + $0x6c0] sm:$0xff] %v1433
                  %v1435 = vld [vmem:[%s999 + $0xd90] sm:$0xff]
                  %1436 = vst [vmem:[%s1000 + $0x6c8] sm:$0xff] %v1435
                  %v1437 = vld [vmem:[%s999 + $0xda0] sm:$0xff]
                  %1438 = vst [vmem:[%s1000 + $0x6d0] sm:$0xff] %v1437
                  %v1439 = vld [vmem:[%s999 + $0xdb0] sm:$0xff]
                  %1440 = vst [vmem:[%s1000 + $0x6d8] sm:$0xff] %v1439
                  %v1441 = vld [vmem:[%s999 + $0xdc0] sm:$0xff]
                  %1442 = vst [vmem:[%s1000 + $0x6e0] sm:$0xff] %v1441
                  %v1443 = vld [vmem:[%s999 + $0xdd0] sm:$0xff]
                  %1444 = vst [vmem:[%s1000 + $0x6e8] sm:$0xff] %v1443
                  %v1445 = vld [vmem:[%s999 + $0xde0] sm:$0xff]
                  %1446 = vst [vmem:[%s1000 + $0x6f0] sm:$0xff] %v1445
                  %v1447 = vld [vmem:[%s999 + $0xdf0] sm:$0xff]
                  %1448 = vst [vmem:[%s1000 + $0x6f8] sm:$0xff] %v1447
                  %v1449 = vld [vmem:[%s999 + $0xe00] sm:$0xff]
                  %1450 = vst [vmem:[%s1000 + $0x700] sm:$0xff] %v1449
                  %v1451 = vld [vmem:[%s999 + $0xe10] sm:$0xff]
                  %1452 = vst [vmem:[%s1000 + $0x708] sm:$0xff] %v1451
                  %v1453 = vld [vmem:[%s999 + $0xe20] sm:$0xff]
                  %1454 = vst [vmem:[%s1000 + $0x710] sm:$0xff] %v1453
                  %v1455 = vld [vmem:[%s999 + $0xe30] sm:$0xff]
                  %1456 = vst [vmem:[%s1000 + $0x718] sm:$0xff] %v1455
                  %v1457 = vld [vmem:[%s999 + $0xe40] sm:$0xff]
                  %1458 = vst [vmem:[%s1000 + $0x720] sm:$0xff] %v1457
                  %v1459 = vld [vmem:[%s999 + $0xe50] sm:$0xff]
                  %1460 = vst [vmem:[%s1000 + $0x728] sm:$0xff] %v1459
                  %v1461 = vld [vmem:[%s999 + $0xe60] sm:$0xff]
                  %1462 = vst [vmem:[%s1000 + $0x730] sm:$0xff] %v1461
                  %v1463 = vld [vmem:[%s999 + $0xe70] sm:$0xff]
                  %1464 = vst [vmem:[%s1000 + $0x738] sm:$0xff] %v1463
                  %v1465 = vld [vmem:[%s999 + $0xe80] sm:$0xff]
                  %1466 = vst [vmem:[%s1000 + $0x740] sm:$0xff] %v1465
                  %v1467 = vld [vmem:[%s999 + $0xe90] sm:$0xff]
                  %1468 = vst [vmem:[%s1000 + $0x748] sm:$0xff] %v1467
                  %v1469 = vld [vmem:[%s999 + $0xea0] sm:$0xff]
                  %1470 = vst [vmem:[%s1000 + $0x750] sm:$0xff] %v1469
                  %v1471 = vld [vmem:[%s999 + $0xeb0] sm:$0xff]
                  %1472 = vst [vmem:[%s1000 + $0x758] sm:$0xff] %v1471
                  %v1473 = vld [vmem:[%s999 + $0xec0] sm:$0xff]
                  %1474 = vst [vmem:[%s1000 + $0x760] sm:$0xff] %v1473
                  %v1475 = vld [vmem:[%s999 + $0xed0] sm:$0xff]
                  %1476 = vst [vmem:[%s1000 + $0x768] sm:$0xff] %v1475
                  %v1477 = vld [vmem:[%s999 + $0xee0] sm:$0xff]
                  %1478 = vst [vmem:[%s1000 + $0x770] sm:$0xff] %v1477
                  %v1479 = vld [vmem:[%s999 + $0xef0] sm:$0xff]
                  %1480 = vst [vmem:[%s1000 + $0x778] sm:$0xff] %v1479
                  %v1481 = vld [vmem:[%s999 + $0xf00] sm:$0xff]
                  %1482 = vst [vmem:[%s1000 + $0x780] sm:$0xff] %v1481
                  %v1483 = vld [vmem:[%s999 + $0xf10] sm:$0xff]
                  %1484 = vst [vmem:[%s1000 + $0x788] sm:$0xff] %v1483
                  %v1485 = vld [vmem:[%s999 + $0xf20] sm:$0xff]
                  %1486 = vst [vmem:[%s1000 + $0x790] sm:$0xff] %v1485
                  %v1487 = vld [vmem:[%s999 + $0xf30] sm:$0xff]
                  %1488 = vst [vmem:[%s1000 + $0x798] sm:$0xff] %v1487
                  %v1489 = vld [vmem:[%s999 + $0xf40] sm:$0xff]
                  %1490 = vst [vmem:[%s1000 + $0x7a0] sm:$0xff] %v1489
                  %v1491 = vld [vmem:[%s999 + $0xf50] sm:$0xff]
                  %1492 = vst [vmem:[%s1000 + $0x7a8] sm:$0xff] %v1491
                  %v1493 = vld [vmem:[%s999 + $0xf60] sm:$0xff]
                  %1494 = vst [vmem:[%s1000 + $0x7b0] sm:$0xff] %v1493
                  %v1495 = vld [vmem:[%s999 + $0xf70] sm:$0xff]
                  %1496 = vst [vmem:[%s1000 + $0x7b8] sm:$0xff] %v1495
                  %v1497 = vld [vmem:[%s999 + $0xf80] sm:$0xff]
                  %1498 = vst [vmem:[%s1000 + $0x7c0] sm:$0xff] %v1497
                  %v1499 = vld [vmem:[%s999 + $0xf90] sm:$0xff]
                  %1500 = vst [vmem:[%s1000 + $0x7c8] sm:$0xff] %v1499
                  %v1501 = vld [vmem:[%s999 + $0xfa0] sm:$0xff]
                  %1502 = vst [vmem:[%s1000 + $0x7d0] sm:$0xff] %v1501
                  %v1503 = vld [vmem:[%s999 + $0xfb0] sm:$0xff]
                  %1504 = vst [vmem:[%s1000 + $0x7d8] sm:$0xff] %v1503
                  %v1505 = vld [vmem:[%s999 + $0xfc0] sm:$0xff]
                  %1506 = vst [vmem:[%s1000 + $0x7e0] sm:$0xff] %v1505
                  %v1507 = vld [vmem:[%s999 + $0xfd0] sm:$0xff]
                  %1508 = vst [vmem:[%s1000 + $0x7e8] sm:$0xff] %v1507
                  %v1509 = vld [vmem:[%s999 + $0xfe0] sm:$0xff]
                  %1510 = vst [vmem:[%s1000 + $0x7f0] sm:$0xff] %v1509
                  %v1511 = vld [vmem:[%s999 + $0xff0] sm:$0xff]
                  %1512 = vst [vmem:[%s1000 + $0x7f8] sm:$0xff] %v1511
                  %v1513 = vld [vmem:[%s999 + $0x1000] sm:$0xff]
                  %1514 = vst [vmem:[%s1000 + $0x800] sm:$0xff] %v1513
                  %v1515 = vld [vmem:[%s999 + $0x1010] sm:$0xff]
                  %1516 = vst [vmem:[%s1000 + $0x808] sm:$0xff] %v1515
                  %v1517 = vld [vmem:[%s999 + $0x1020] sm:$0xff]
                  %1518 = vst [vmem:[%s1000 + $0x810] sm:$0xff] %v1517
                  %v1519 = vld [vmem:[%s999 + $0x1030] sm:$0xff]
                  %1520 = vst [vmem:[%s1000 + $0x818] sm:$0xff] %v1519
                  %v1521 = vld [vmem:[%s999 + $0x1040] sm:$0xff]
                  %1522 = vst [vmem:[%s1000 + $0x820] sm:$0xff] %v1521
                  %v1523 = vld [vmem:[%s999 + $0x1050] sm:$0xff]
                  %1524 = vst [vmem:[%s1000 + $0x828] sm:$0xff] %v1523
                  %v1525 = vld [vmem:[%s999 + $0x1060] sm:$0xff]
                  %1526 = vst [vmem:[%s1000 + $0x830] sm:$0xff] %v1525
                  %v1527 = vld [vmem:[%s999 + $0x1070] sm:$0xff]
                  %1528 = vst [vmem:[%s1000 + $0x838] sm:$0xff] %v1527
                  %v1529 = vld [vmem:[%s999 + $0x1080] sm:$0xff]
                  %1530 = vst [vmem:[%s1000 + $0x840] sm:$0xff] %v1529
                  %v1531 = vld [vmem:[%s999 + $0x1090] sm:$0xff]
                  %1532 = vst [vmem:[%s1000 + $0x848] sm:$0xff] %v1531
                  %v1533 = vld [vmem:[%s999 + $0x10a0] sm:$0xff]
                  %1534 = vst [vmem:[%s1000 + $0x850] sm:$0xff] %v1533
                  %v1535 = vld [vmem:[%s999 + $0x10b0] sm:$0xff]
                  %1536 = vst [vmem:[%s1000 + $0x858] sm:$0xff] %v1535
                  %v1537 = vld [vmem:[%s999 + $0x10c0] sm:$0xff]
                  %1538 = vst [vmem:[%s1000 + $0x860] sm:$0xff] %v1537
                  %v1539 = vld [vmem:[%s999 + $0x10d0] sm:$0xff]
                  %1540 = vst [vmem:[%s1000 + $0x868] sm:$0xff] %v1539
                  %v1541 = vld [vmem:[%s999 + $0x10e0] sm:$0xff]
                  %1542 = vst [vmem:[%s1000 + $0x870] sm:$0xff] %v1541
                  %v1543 = vld [vmem:[%s999 + $0x10f0] sm:$0xff]
                  %1544 = vst [vmem:[%s1000 + $0x878] sm:$0xff] %v1543
                  %v1545 = vld [vmem:[%s999 + $0x1100] sm:$0xff]
                  %1546 = vst [vmem:[%s1000 + $0x880] sm:$0xff] %v1545
                  %v1547 = vld [vmem:[%s999 + $0x1110] sm:$0xff]
                  %1548 = vst [vmem:[%s1000 + $0x888] sm:$0xff] %v1547
                  %v1549 = vld [vmem:[%s999 + $0x1120] sm:$0xff]
                  %1550 = vst [vmem:[%s1000 + $0x890] sm:$0xff] %v1549
                  %v1551 = vld [vmem:[%s999 + $0x1130] sm:$0xff]
                  %1552 = vst [vmem:[%s1000 + $0x898] sm:$0xff] %v1551
                  %v1553 = vld [vmem:[%s999 + $0x1140] sm:$0xff]
                  %1554 = vst [vmem:[%s1000 + $0x8a0] sm:$0xff] %v1553
                  %v1555 = vld [vmem:[%s999 + $0x1150] sm:$0xff]
                  %1556 = vst [vmem:[%s1000 + $0x8a8] sm:$0xff] %v1555
                  %v1557 = vld [vmem:[%s999 + $0x1160] sm:$0xff]
                  %1558 = vst [vmem:[%s1000 + $0x8b0] sm:$0xff] %v1557
                  %v1559 = vld [vmem:[%s999 + $0x1170] sm:$0xff]
                  %1560 = vst [vmem:[%s1000 + $0x8b8] sm:$0xff] %v1559
                  %v1561 = vld [vmem:[%s999 + $0x1180] sm:$0xff]
                  %1562 = vst [vmem:[%s1000 + $0x8c0] sm:$0xff] %v1561
                  %v1563 = vld [vmem:[%s999 + $0x1190] sm:$0xff]
                  %1564 = vst [vmem:[%s1000 + $0x8c8] sm:$0xff] %v1563
                  %v1565 = vld [vmem:[%s999 + $0x11a0] sm:$0xff]
                  %1566 = vst [vmem:[%s1000 + $0x8d0] sm:$0xff] %v1565
                  %v1567 = vld [vmem:[%s999 + $0x11b0] sm:$0xff]
                  %1568 = vst [vmem:[%s1000 + $0x8d8] sm:$0xff] %v1567
                  %v1569 = vld [vmem:[%s999 + $0x11c0] sm:$0xff]
                  %1570 = vst [vmem:[%s1000 + $0x8e0] sm:$0xff] %v1569
                  %v1571 = vld [vmem:[%s999 + $0x11d0] sm:$0xff]
                  %1572 = vst [vmem:[%s1000 + $0x8e8] sm:$0xff] %v1571
                  %v1573 = vld [vmem:[%s999 + $0x11e0] sm:$0xff]
                  %1574 = vst [vmem:[%s1000 + $0x8f0] sm:$0xff] %v1573
                  %v1575 = vld [vmem:[%s999 + $0x11f0] sm:$0xff]
                  %1576 = vst [vmem:[%s1000 + $0x8f8] sm:$0xff] %v1575
                  %v1577 = vld [vmem:[%s999 + $0x1200] sm:$0xff]
                  %1578 = vst [vmem:[%s1000 + $0x900] sm:$0xff] %v1577
                  %v1579 = vld [vmem:[%s999 + $0x1210] sm:$0xff]
                  %1580 = vst [vmem:[%s1000 + $0x908] sm:$0xff] %v1579
                  %v1581 = vld [vmem:[%s999 + $0x1220] sm:$0xff]
                  %1582 = vst [vmem:[%s1000 + $0x910] sm:$0xff] %v1581
                  %v1583 = vld [vmem:[%s999 + $0x1230] sm:$0xff]
                  %1584 = vst [vmem:[%s1000 + $0x918] sm:$0xff] %v1583
                  %v1585 = vld [vmem:[%s999 + $0x1240] sm:$0xff]
                  %1586 = vst [vmem:[%s1000 + $0x920] sm:$0xff] %v1585
                  %v1587 = vld [vmem:[%s999 + $0x1250] sm:$0xff]
                  %1588 = vst [vmem:[%s1000 + $0x928] sm:$0xff] %v1587
                  %v1589 = vld [vmem:[%s999 + $0x1260] sm:$0xff]
                  %1590 = vst [vmem:[%s1000 + $0x930] sm:$0xff] %v1589
                  %v1591 = vld [vmem:[%s999 + $0x1270] sm:$0xff]
                  %1592 = vst [vmem:[%s1000 + $0x938] sm:$0xff] %v1591
                  %v1593 = vld [vmem:[%s999 + $0x1280] sm:$0xff]
                  %1594 = vst [vmem:[%s1000 + $0x940] sm:$0xff] %v1593
                  %v1595 = vld [vmem:[%s999 + $0x1290] sm:$0xff]
                  %1596 = vst [vmem:[%s1000 + $0x948] sm:$0xff] %v1595
                  %v1597 = vld [vmem:[%s999 + $0x12a0] sm:$0xff]
                  %1598 = vst [vmem:[%s1000 + $0x950] sm:$0xff] %v1597
                  %v1599 = vld [vmem:[%s999 + $0x12b0] sm:$0xff]
                  %1600 = vst [vmem:[%s1000 + $0x958] sm:$0xff] %v1599
                  %v1601 = vld [vmem:[%s999 + $0x12c0] sm:$0xff]
                  %1602 = vst [vmem:[%s1000 + $0x960] sm:$0xff] %v1601
                  %v1603 = vld [vmem:[%s999 + $0x12d0] sm:$0xff]
                  %1604 = vst [vmem:[%s1000 + $0x968] sm:$0xff] %v1603
                  %v1605 = vld [vmem:[%s999 + $0x12e0] sm:$0xff]
                  %1606 = vst [vmem:[%s1000 + $0x970] sm:$0xff] %v1605
                  %v1607 = vld [vmem:[%s999 + $0x12f0] sm:$0xff]
                  %1608 = vst [vmem:[%s1000 + $0x978] sm:$0xff] %v1607
                  %v1609 = vld [vmem:[%s999 + $0x1300] sm:$0xff]
                  %1610 = vst [vmem:[%s1000 + $0x980] sm:$0xff] %v1609
                  %v1611 = vld [vmem:[%s999 + $0x1310] sm:$0xff]
                  %1612 = vst [vmem:[%s1000 + $0x988] sm:$0xff] %v1611
                  %v1613 = vld [vmem:[%s999 + $0x1320] sm:$0xff]
                  %1614 = vst [vmem:[%s1000 + $0x990] sm:$0xff] %v1613
                  %v1615 = vld [vmem:[%s999 + $0x1330] sm:$0xff]
                  %1616 = vst [vmem:[%s1000 + $0x998] sm:$0xff] %v1615
                  %v1617 = vld [vmem:[%s999 + $0x1340] sm:$0xff]
                  %1618 = vst [vmem:[%s1000 + $0x9a0] sm:$0xff] %v1617
                  %v1619 = vld [vmem:[%s999 + $0x1350] sm:$0xff]
                  %1620 = vst [vmem:[%s1000 + $0x9a8] sm:$0xff] %v1619
                  %v1621 = vld [vmem:[%s999 + $0x1360] sm:$0xff]
                  %1622 = vst [vmem:[%s1000 + $0x9b0] sm:$0xff] %v1621
                  %v1623 = vld [vmem:[%s999 + $0x1370] sm:$0xff]
                  %1624 = vst [vmem:[%s1000 + $0x9b8] sm:$0xff] %v1623
                  %v1625 = vld [vmem:[%s999 + $0x1380] sm:$0xff]
                  %1626 = vst [vmem:[%s1000 + $0x9c0] sm:$0xff] %v1625
                  %v1627 = vld [vmem:[%s999 + $0x1390] sm:$0xff]
                  %1628 = vst [vmem:[%s1000 + $0x9c8] sm:$0xff] %v1627
                  %v1629 = vld [vmem:[%s999 + $0x13a0] sm:$0xff]
                  %1630 = vst [vmem:[%s1000 + $0x9d0] sm:$0xff] %v1629
                  %v1631 = vld [vmem:[%s999 + $0x13b0] sm:$0xff]
                  %1632 = vst [vmem:[%s1000 + $0x9d8] sm:$0xff] %v1631
                  %v1633 = vld [vmem:[%s999 + $0x13c0] sm:$0xff]
                  %1634 = vst [vmem:[%s1000 + $0x9e0] sm:$0xff] %v1633
                  %v1635 = vld [vmem:[%s999 + $0x13d0] sm:$0xff]
                  %1636 = vst [vmem:[%s1000 + $0x9e8] sm:$0xff] %v1635
                  %v1637 = vld [vmem:[%s999 + $0x13e0] sm:$0xff]
                  %1638 = vst [vmem:[%s1000 + $0x9f0] sm:$0xff] %v1637
                  %v1639 = vld [vmem:[%s999 + $0x13f0] sm:$0xff]
                  %1640 = vst [vmem:[%s1000 + $0x9f8] sm:$0xff] %v1639
                  %v1641 = vld [vmem:[%s999 + $0x1400] sm:$0xff]
                  %1642 = vst [vmem:[%s1000 + $0xa00] sm:$0xff] %v1641
                  %v1643 = vld [vmem:[%s999 + $0x1410] sm:$0xff]
                  %1644 = vst [vmem:[%s1000 + $0xa08] sm:$0xff] %v1643
                  %v1645 = vld [vmem:[%s999 + $0x1420] sm:$0xff]
                  %1646 = vst [vmem:[%s1000 + $0xa10] sm:$0xff] %v1645
                  %v1647 = vld [vmem:[%s999 + $0x1430] sm:$0xff]
                  %1648 = vst [vmem:[%s1000 + $0xa18] sm:$0xff] %v1647
                  %v1649 = vld [vmem:[%s999 + $0x1440] sm:$0xff]
                  %1650 = vst [vmem:[%s1000 + $0xa20] sm:$0xff] %v1649
                  %v1651 = vld [vmem:[%s999 + $0x1450] sm:$0xff]
                  %1652 = vst [vmem:[%s1000 + $0xa28] sm:$0xff] %v1651
                  %v1653 = vld [vmem:[%s999 + $0x1460] sm:$0xff]
                  %1654 = vst [vmem:[%s1000 + $0xa30] sm:$0xff] %v1653
                  %v1655 = vld [vmem:[%s999 + $0x1470] sm:$0xff]
                  %1656 = vst [vmem:[%s1000 + $0xa38] sm:$0xff] %v1655
                  %v1657 = vld [vmem:[%s999 + $0x1480] sm:$0xff]
                  %1658 = vst [vmem:[%s1000 + $0xa40] sm:$0xff] %v1657
                  %v1659 = vld [vmem:[%s999 + $0x1490] sm:$0xff]
                  %1660 = vst [vmem:[%s1000 + $0xa48] sm:$0xff] %v1659
                  %v1661 = vld [vmem:[%s999 + $0x14a0] sm:$0xff]
                  %1662 = vst [vmem:[%s1000 + $0xa50] sm:$0xff] %v1661
                  %v1663 = vld [vmem:[%s999 + $0x14b0] sm:$0xff]
                  %1664 = vst [vmem:[%s1000 + $0xa58] sm:$0xff] %v1663
                  %v1665 = vld [vmem:[%s999 + $0x14c0] sm:$0xff]
                  %1666 = vst [vmem:[%s1000 + $0xa60] sm:$0xff] %v1665
                  %v1667 = vld [vmem:[%s999 + $0x14d0] sm:$0xff]
                  %1668 = vst [vmem:[%s1000 + $0xa68] sm:$0xff] %v1667
                  %v1669 = vld [vmem:[%s999 + $0x14e0] sm:$0xff]
                  %1670 = vst [vmem:[%s1000 + $0xa70] sm:$0xff] %v1669
                  %v1671 = vld [vmem:[%s999 + $0x14f0] sm:$0xff]
                  %1672 = vst [vmem:[%s1000 + $0xa78] sm:$0xff] %v1671
                  %v1673 = vld [vmem:[%s999 + $0x1500] sm:$0xff]
                  %1674 = vst [vmem:[%s1000 + $0xa80] sm:$0xff] %v1673
                  %v1675 = vld [vmem:[%s999 + $0x1510] sm:$0xff]
                  %1676 = vst [vmem:[%s1000 + $0xa88] sm:$0xff] %v1675
                  %v1677 = vld [vmem:[%s999 + $0x1520] sm:$0xff]
                  %1678 = vst [vmem:[%s1000 + $0xa90] sm:$0xff] %v1677
                  %v1679 = vld [vmem:[%s999 + $0x1530] sm:$0xff]
                  %1680 = vst [vmem:[%s1000 + $0xa98] sm:$0xff] %v1679
                  %v1681 = vld [vmem:[%s999 + $0x1540] sm:$0xff]
                  %1682 = vst [vmem:[%s1000 + $0xaa0] sm:$0xff] %v1681
                  %v1683 = vld [vmem:[%s999 + $0x1550] sm:$0xff]
                  %1684 = vst [vmem:[%s1000 + $0xaa8] sm:$0xff] %v1683
                  %v1685 = vld [vmem:[%s999 + $0x1560] sm:$0xff]
                  %1686 = vst [vmem:[%s1000 + $0xab0] sm:$0xff] %v1685
                  %v1687 = vld [vmem:[%s999 + $0x1570] sm:$0xff]
                  %1688 = vst [vmem:[%s1000 + $0xab8] sm:$0xff] %v1687
                  %v1689 = vld [vmem:[%s999 + $0x1580] sm:$0xff]
                  %1690 = vst [vmem:[%s1000 + $0xac0] sm:$0xff] %v1689
                  %v1691 = vld [vmem:[%s999 + $0x1590] sm:$0xff]
                  %1692 = vst [vmem:[%s1000 + $0xac8] sm:$0xff] %v1691
                  %v1693 = vld [vmem:[%s999 + $0x15a0] sm:$0xff]
                  %1694 = vst [vmem:[%s1000 + $0xad0] sm:$0xff] %v1693
                  %v1695 = vld [vmem:[%s999 + $0x15b0] sm:$0xff]
                  %1696 = vst [vmem:[%s1000 + $0xad8] sm:$0xff] %v1695
                  %v1697 = vld [vmem:[%s999 + $0x15c0] sm:$0xff]
                  %1698 = vst [vmem:[%s1000 + $0xae0] sm:$0xff] %v1697
                  %v1699 = vld [vmem:[%s999 + $0x15d0] sm:$0xff]
                  %1700 = vst [vmem:[%s1000 + $0xae8] sm:$0xff] %v1699
                  %v1701 = vld [vmem:[%s999 + $0x15e0] sm:$0xff]
                  %1702 = vst [vmem:[%s1000 + $0xaf0] sm:$0xff] %v1701
                  %v1703 = vld [vmem:[%s999 + $0x15f0] sm:$0xff]
                  %1704 = vst [vmem:[%s1000 + $0xaf8] sm:$0xff] %v1703
                  %v1705 = vld [vmem:[%s999 + $0x1600] sm:$0xff]
                  %1706 = vst [vmem:[%s1000 + $0xb00] sm:$0xff] %v1705
                  %v1707 = vld [vmem:[%s999 + $0x1610] sm:$0xff]
                  %1708 = vst [vmem:[%s1000 + $0xb08] sm:$0xff] %v1707
                  %v1709 = vld [vmem:[%s999 + $0x1620] sm:$0xff]
                  %1710 = vst [vmem:[%s1000 + $0xb10] sm:$0xff] %v1709
                  %v1711 = vld [vmem:[%s999 + $0x1630] sm:$0xff]
                  %1712 = vst [vmem:[%s1000 + $0xb18] sm:$0xff] %v1711
                  %v1713 = vld [vmem:[%s999 + $0x1640] sm:$0xff]
                  %1714 = vst [vmem:[%s1000 + $0xb20] sm:$0xff] %v1713
                  %v1715 = vld [vmem:[%s999 + $0x1650] sm:$0xff]
                  %1716 = vst [vmem:[%s1000 + $0xb28] sm:$0xff] %v1715
                  %v1717 = vld [vmem:[%s999 + $0x1660] sm:$0xff]
                  %1718 = vst [vmem:[%s1000 + $0xb30] sm:$0xff] %v1717
                  %v1719 = vld [vmem:[%s999 + $0x1670] sm:$0xff]
                  %1720 = vst [vmem:[%s1000 + $0xb38] sm:$0xff] %v1719
                  %v1721 = vld [vmem:[%s999 + $0x1680] sm:$0xff]
                  %1722 = vst [vmem:[%s1000 + $0xb40] sm:$0xff] %v1721
                  %v1723 = vld [vmem:[%s999 + $0x1690] sm:$0xff]
                  %1724 = vst [vmem:[%s1000 + $0xb48] sm:$0xff] %v1723
                  %v1725 = vld [vmem:[%s999 + $0x16a0] sm:$0xff]
                  %1726 = vst [vmem:[%s1000 + $0xb50] sm:$0xff] %v1725
                  %v1727 = vld [vmem:[%s999 + $0x16b0] sm:$0xff]
                  %1728 = vst [vmem:[%s1000 + $0xb58] sm:$0xff] %v1727
                  %v1729 = vld [vmem:[%s999 + $0x16c0] sm:$0xff]
                  %1730 = vst [vmem:[%s1000 + $0xb60] sm:$0xff] %v1729
                  %v1731 = vld [vmem:[%s999 + $0x16d0] sm:$0xff]
                  %1732 = vst [vmem:[%s1000 + $0xb68] sm:$0xff] %v1731
                  %v1733 = vld [vmem:[%s999 + $0x16e0] sm:$0xff]
                  %1734 = vst [vmem:[%s1000 + $0xb70] sm:$0xff] %v1733
                  %v1735 = vld [vmem:[%s999 + $0x16f0] sm:$0xff]
                  %1736 = vst [vmem:[%s1000 + $0xb78] sm:$0xff] %v1735
                  %v1737 = vld [vmem:[%s999 + $0x1700] sm:$0xff]
                  %1738 = vst [vmem:[%s1000 + $0xb80] sm:$0xff] %v1737
                  %v1739 = vld [vmem:[%s999 + $0x1710] sm:$0xff]
                  %1740 = vst [vmem:[%s1000 + $0xb88] sm:$0xff] %v1739
                  %v1741 = vld [vmem:[%s999 + $0x1720] sm:$0xff]
                  %1742 = vst [vmem:[%s1000 + $0xb90] sm:$0xff] %v1741
                  %v1743 = vld [vmem:[%s999 + $0x1730] sm:$0xff]
                  %1744 = vst [vmem:[%s1000 + $0xb98] sm:$0xff] %v1743
                  %v1745 = vld [vmem:[%s999 + $0x1740] sm:$0xff]
                  %1746 = vst [vmem:[%s1000 + $0xba0] sm:$0xff] %v1745
                  %v1747 = vld [vmem:[%s999 + $0x1750] sm:$0xff]
                  %1748 = vst [vmem:[%s1000 + $0xba8] sm:$0xff] %v1747
                  %v1749 = vld [vmem:[%s999 + $0x1760] sm:$0xff]
                  %1750 = vst [vmem:[%s1000 + $0xbb0] sm:$0xff] %v1749
                  %v1751 = vld [vmem:[%s999 + $0x1770] sm:$0xff]
                  %1752 = vst [vmem:[%s1000 + $0xbb8] sm:$0xff] %v1751
                  %v1753 = vld [vmem:[%s999 + $0x1780] sm:$0xff]
                  %1754 = vst [vmem:[%s1000 + $0xbc0] sm:$0xff] %v1753
                  %v1755 = vld [vmem:[%s999 + $0x1790] sm:$0xff]
                  %1756 = vst [vmem:[%s1000 + $0xbc8] sm:$0xff] %v1755
                  %v1757 = vld [vmem:[%s999 + $0x17a0] sm:$0xff]
                  %1758 = vst [vmem:[%s1000 + $0xbd0] sm:$0xff] %v1757
                  %v1759 = vld [vmem:[%s999 + $0x17b0] sm:$0xff]
                  %1760 = vst [vmem:[%s1000 + $0xbd8] sm:$0xff] %v1759
                  %v1761 = vld [vmem:[%s999 + $0x17c0] sm:$0xff]
                  %1762 = vst [vmem:[%s1000 + $0xbe0] sm:$0xff] %v1761
                  %v1763 = vld [vmem:[%s999 + $0x17d0] sm:$0xff]
                  %1764 = vst [vmem:[%s1000 + $0xbe8] sm:$0xff] %v1763
                  %v1765 = vld [vmem:[%s999 + $0x17e0] sm:$0xff]
                  %1766 = vst [vmem:[%s1000 + $0xbf0] sm:$0xff] %v1765
                  %v1767 = vld [vmem:[%s999 + $0x17f0] sm:$0xff]
                  %1768 = vst [vmem:[%s1000 + $0xbf8] sm:$0xff] %v1767
                  %v1769 = vld [vmem:[%s999 + $0x1800] sm:$0xff]
                  %1770 = vst [vmem:[%s1000 + $0xc00] sm:$0xff] %v1769
                  %v1771 = vld [vmem:[%s999 + $0x1810] sm:$0xff]
                  %1772 = vst [vmem:[%s1000 + $0xc08] sm:$0xff] %v1771
                  %v1773 = vld [vmem:[%s999 + $0x1820] sm:$0xff]
                  %1774 = vst [vmem:[%s1000 + $0xc10] sm:$0xff] %v1773
                  %v1775 = vld [vmem:[%s999 + $0x1830] sm:$0xff]
                  %1776 = vst [vmem:[%s1000 + $0xc18] sm:$0xff] %v1775
                  %v1777 = vld [vmem:[%s999 + $0x1840] sm:$0xff]
                  %1778 = vst [vmem:[%s1000 + $0xc20] sm:$0xff] %v1777
                  %v1779 = vld [vmem:[%s999 + $0x1850] sm:$0xff]
                  %1780 = vst [vmem:[%s1000 + $0xc28] sm:$0xff] %v1779
                  %v1781 = vld [vmem:[%s999 + $0x1860] sm:$0xff]
                  %1782 = vst [vmem:[%s1000 + $0xc30] sm:$0xff] %v1781
                  %v1783 = vld [vmem:[%s999 + $0x1870] sm:$0xff]
                  %1784 = vst [vmem:[%s1000 + $0xc38] sm:$0xff] %v1783
                $region56: #{nn_vfa_forward.7} parent=50 // loop_footer
                  %s998 = sadd.s32 1, %s994
                $region57: #{nn_vfa_forward.7} parent=50 // loop_footer_branch
                  %993 = sbr.rel target = $region53
                $region58: #{nn_vfa_forward.7} parent=50 // loop_exit
                  _
              $region51: #{nn_vfa_forward.7} parent=35 // pred_fallthru
                _
              // Predicated region
              $region59: #{nn_vfa_forward.7} parent=35 // pred_check
                _
              $region60: #{nn_vfa_forward.7} parent=35 // pred_check_branch
                %1786 = sbr.rel target = $region62
              $region61: #{nn_vfa_forward.7} parent=35 // pred_region
                _
              $region62: #{nn_vfa_forward.7} parent=35 // pred_fallthru
                _
            $region36: #{nn_vfa_forward.7} parent=31 // pred_fallthru
              _
            // Predicated region
            $region37: #{nn_vfa_forward.7} parent=31 // pred_check
              _
            $region38: #{nn_vfa_forward.7} parent=31 // pred_check_branch
              %197 = sbr.rel target = $region40
            $region39: #{nn_vfa_forward.7} parent=31 // pred_region
              loop: start=0, step=1, limit=1
              $region41: #{nn_vfa_forward.7} parent=39 // loop_pre_header
                _
              $region42: #{nn_vfa_forward.7} parent=39 // loop_header
                %s200 = sphi 0, %s204
                %p201 = scmp.ge.s32.totalorder %s200, 1
                %s205 = sphi %s191, %s191
                %s206 = sphi %s188, %s188
              $region43: #{nn_vfa_forward.7} parent=39 // loop_header_branch
                %203 = sbr.rel (%p201) target = $region47
              $region44: #{nn_vfa_forward.7} parent=39 // loop_body
                %v207 = vld [vmem:[%s205] sm:$0xff]
                %208 = vst [vmem:[%s206] sm:$0xff] %v207
                %v209 = vld [vmem:[%s205 + $0x10] sm:$0xff]
                %210 = vst [vmem:[%s206 + $0x8] sm:$0xff] %v209
                %v211 = vld [vmem:[%s205 + $0x20] sm:$0xff]
                %212 = vst [vmem:[%s206 + $0x10] sm:$0xff] %v211
                %v213 = vld [vmem:[%s205 + $0x30] sm:$0xff]
                %214 = vst [vmem:[%s206 + $0x18] sm:$0xff] %v213
                %v215 = vld [vmem:[%s205 + $0x40] sm:$0xff]
                %216 = vst [vmem:[%s206 + $0x20] sm:$0xff] %v215
                %v217 = vld [vmem:[%s205 + $0x50] sm:$0xff]
                %218 = vst [vmem:[%s206 + $0x28] sm:$0xff] %v217
                %v219 = vld [vmem:[%s205 + $0x60] sm:$0xff]
                %220 = vst [vmem:[%s206 + $0x30] sm:$0xff] %v219
                %v221 = vld [vmem:[%s205 + $0x70] sm:$0xff]
                %222 = vst [vmem:[%s206 + $0x38] sm:$0xff] %v221
                %v223 = vld [vmem:[%s205 + $0x80] sm:$0xff]
                %224 = vst [vmem:[%s206 + $0x40] sm:$0xff] %v223
                %v225 = vld [vmem:[%s205 + $0x90] sm:$0xff]
                %226 = vst [vmem:[%s206 + $0x48] sm:$0xff] %v225
                %v227 = vld [vmem:[%s205 + $0xa0] sm:$0xff]
                %228 = vst [vmem:[%s206 + $0x50] sm:$0xff] %v227
                %v229 = vld [vmem:[%s205 + $0xb0] sm:$0xff]
                %230 = vst [vmem:[%s206 + $0x58] sm:$0xff] %v229
                %v231 = vld [vmem:[%s205 + $0xc0] sm:$0xff]
                %232 = vst [vmem:[%s206 + $0x60] sm:$0xff] %v231
                %v233 = vld [vmem:[%s205 + $0xd0] sm:$0xff]
                %234 = vst [vmem:[%s206 + $0x68] sm:$0xff] %v233
                %v235 = vld [vmem:[%s205 + $0xe0] sm:$0xff]
                %236 = vst [vmem:[%s206 + $0x70] sm:$0xff] %v235
                %v237 = vld [vmem:[%s205 + $0xf0] sm:$0xff]
                %238 = vst [vmem:[%s206 + $0x78] sm:$0xff] %v237
                %v239 = vld [vmem:[%s205 + $0x100] sm:$0xff]
                %240 = vst [vmem:[%s206 + $0x80] sm:$0xff] %v239
                %v241 = vld [vmem:[%s205 + $0x110] sm:$0xff]
                %242 = vst [vmem:[%s206 + $0x88] sm:$0xff] %v241
                %v243 = vld [vmem:[%s205 + $0x120] sm:$0xff]
                %244 = vst [vmem:[%s206 + $0x90] sm:$0xff] %v243
                %v245 = vld [vmem:[%s205 + $0x130] sm:$0xff]
                %246 = vst [vmem:[%s206 + $0x98] sm:$0xff] %v245
                %v247 = vld [vmem:[%s205 + $0x140] sm:$0xff]
                %248 = vst [vmem:[%s206 + $0xa0] sm:$0xff] %v247
                %v249 = vld [vmem:[%s205 + $0x150] sm:$0xff]
                %250 = vst [vmem:[%s206 + $0xa8] sm:$0xff] %v249
                %v251 = vld [vmem:[%s205 + $0x160] sm:$0xff]
                %252 = vst [vmem:[%s206 + $0xb0] sm:$0xff] %v251
                %v253 = vld [vmem:[%s205 + $0x170] sm:$0xff]
                %254 = vst [vmem:[%s206 + $0xb8] sm:$0xff] %v253
                %v255 = vld [vmem:[%s205 + $0x180] sm:$0xff]
                %256 = vst [vmem:[%s206 + $0xc0] sm:$0xff] %v255
                %v257 = vld [vmem:[%s205 + $0x190] sm:$0xff]
                %258 = vst [vmem:[%s206 + $0xc8] sm:$0xff] %v257
                %v259 = vld [vmem:[%s205 + $0x1a0] sm:$0xff]
                %260 = vst [vmem:[%s206 + $0xd0] sm:$0xff] %v259
                %v261 = vld [vmem:[%s205 + $0x1b0] sm:$0xff]
                %262 = vst [vmem:[%s206 + $0xd8] sm:$0xff] %v261
                %v263 = vld [vmem:[%s205 + $0x1c0] sm:$0xff]
                %264 = vst [vmem:[%s206 + $0xe0] sm:$0xff] %v263
                %v265 = vld [vmem:[%s205 + $0x1d0] sm:$0xff]
                %266 = vst [vmem:[%s206 + $0xe8] sm:$0xff] %v265
                %v267 = vld [vmem:[%s205 + $0x1e0] sm:$0xff]
                %268 = vst [vmem:[%s206 + $0xf0] sm:$0xff] %v267
                %v269 = vld [vmem:[%s205 + $0x1f0] sm:$0xff]
                %270 = vst [vmem:[%s206 + $0xf8] sm:$0xff] %v269
                %v271 = vld [vmem:[%s205 + $0x200] sm:$0xff]
                %272 = vst [vmem:[%s206 + $0x100] sm:$0xff] %v271
                %v273 = vld [vmem:[%s205 + $0x210] sm:$0xff]
                %274 = vst [vmem:[%s206 + $0x108] sm:$0xff] %v273
                %v275 = vld [vmem:[%s205 + $0x220] sm:$0xff]
                %276 = vst [vmem:[%s206 + $0x110] sm:$0xff] %v275
                %v277 = vld [vmem:[%s205 + $0x230] sm:$0xff]
                %278 = vst [vmem:[%s206 + $0x118] sm:$0xff] %v277
                %v279 = vld [vmem:[%s205 + $0x240] sm:$0xff]
                %280 = vst [vmem:[%s206 + $0x120] sm:$0xff] %v279
                %v281 = vld [vmem:[%s205 + $0x250] sm:$0xff]
                %282 = vst [vmem:[%s206 + $0x128] sm:$0xff] %v281
                %v283 = vld [vmem:[%s205 + $0x260] sm:$0xff]
                %284 = vst [vmem:[%s206 + $0x130] sm:$0xff] %v283
                %v285 = vld [vmem:[%s205 + $0x270] sm:$0xff]
                %286 = vst [vmem:[%s206 + $0x138] sm:$0xff] %v285
                %v287 = vld [vmem:[%s205 + $0x280] sm:$0xff]
                %288 = vst [vmem:[%s206 + $0x140] sm:$0xff] %v287
                %v289 = vld [vmem:[%s205 + $0x290] sm:$0xff]
                %290 = vst [vmem:[%s206 + $0x148] sm:$0xff] %v289
                %v291 = vld [vmem:[%s205 + $0x2a0] sm:$0xff]
                %292 = vst [vmem:[%s206 + $0x150] sm:$0xff] %v291
                %v293 = vld [vmem:[%s205 + $0x2b0] sm:$0xff]
                %294 = vst [vmem:[%s206 + $0x158] sm:$0xff] %v293
                %v295 = vld [vmem:[%s205 + $0x2c0] sm:$0xff]
                %296 = vst [vmem:[%s206 + $0x160] sm:$0xff] %v295
                %v297 = vld [vmem:[%s205 + $0x2d0] sm:$0xff]
                %298 = vst [vmem:[%s206 + $0x168] sm:$0xff] %v297
                %v299 = vld [vmem:[%s205 + $0x2e0] sm:$0xff]
                %300 = vst [vmem:[%s206 + $0x170] sm:$0xff] %v299
                %v301 = vld [vmem:[%s205 + $0x2f0] sm:$0xff]
                %302 = vst [vmem:[%s206 + $0x178] sm:$0xff] %v301
                %v303 = vld [vmem:[%s205 + $0x300] sm:$0xff]
                %304 = vst [vmem:[%s206 + $0x180] sm:$0xff] %v303
                %v305 = vld [vmem:[%s205 + $0x310] sm:$0xff]
                %306 = vst [vmem:[%s206 + $0x188] sm:$0xff] %v305
                %v307 = vld [vmem:[%s205 + $0x320] sm:$0xff]
                %308 = vst [vmem:[%s206 + $0x190] sm:$0xff] %v307
                %v309 = vld [vmem:[%s205 + $0x330] sm:$0xff]
                %310 = vst [vmem:[%s206 + $0x198] sm:$0xff] %v309
                %v311 = vld [vmem:[%s205 + $0x340] sm:$0xff]
                %312 = vst [vmem:[%s206 + $0x1a0] sm:$0xff] %v311
                %v313 = vld [vmem:[%s205 + $0x350] sm:$0xff]
                %314 = vst [vmem:[%s206 + $0x1a8] sm:$0xff] %v313
                %v315 = vld [vmem:[%s205 + $0x360] sm:$0xff]
                %316 = vst [vmem:[%s206 + $0x1b0] sm:$0xff] %v315
                %v317 = vld [vmem:[%s205 + $0x370] sm:$0xff]
                %318 = vst [vmem:[%s206 + $0x1b8] sm:$0xff] %v317
                %v319 = vld [vmem:[%s205 + $0x380] sm:$0xff]
                %320 = vst [vmem:[%s206 + $0x1c0] sm:$0xff] %v319
                %v321 = vld [vmem:[%s205 + $0x390] sm:$0xff]
                %322 = vst [vmem:[%s206 + $0x1c8] sm:$0xff] %v321
                %v323 = vld [vmem:[%s205 + $0x3a0] sm:$0xff]
                %324 = vst [vmem:[%s206 + $0x1d0] sm:$0xff] %v323
                %v325 = vld [vmem:[%s205 + $0x3b0] sm:$0xff]
                %326 = vst [vmem:[%s206 + $0x1d8] sm:$0xff] %v325
                %v327 = vld [vmem:[%s205 + $0x3c0] sm:$0xff]
                %328 = vst [vmem:[%s206 + $0x1e0] sm:$0xff] %v327
                %v329 = vld [vmem:[%s205 + $0x3d0] sm:$0xff]
                %330 = vst [vmem:[%s206 + $0x1e8] sm:$0xff] %v329
                %v331 = vld [vmem:[%s205 + $0x3e0] sm:$0xff]
                %332 = vst [vmem:[%s206 + $0x1f0] sm:$0xff] %v331
                %v333 = vld [vmem:[%s205 + $0x3f0] sm:$0xff]
                %334 = vst [vmem:[%s206 + $0x1f8] sm:$0xff] %v333
                %v335 = vld [vmem:[%s205 + $0x400] sm:$0xff]
                %336 = vst [vmem:[%s206 + $0x200] sm:$0xff] %v335
                %v337 = vld [vmem:[%s205 + $0x410] sm:$0xff]
                %338 = vst [vmem:[%s206 + $0x208] sm:$0xff] %v337
                %v339 = vld [vmem:[%s205 + $0x420] sm:$0xff]
                %340 = vst [vmem:[%s206 + $0x210] sm:$0xff] %v339
                %v341 = vld [vmem:[%s205 + $0x430] sm:$0xff]
                %342 = vst [vmem:[%s206 + $0x218] sm:$0xff] %v341
                %v343 = vld [vmem:[%s205 + $0x440] sm:$0xff]
                %344 = vst [vmem:[%s206 + $0x220] sm:$0xff] %v343
                %v345 = vld [vmem:[%s205 + $0x450] sm:$0xff]
                %346 = vst [vmem:[%s206 + $0x228] sm:$0xff] %v345
                %v347 = vld [vmem:[%s205 + $0x460] sm:$0xff]
                %348 = vst [vmem:[%s206 + $0x230] sm:$0xff] %v347
                %v349 = vld [vmem:[%s205 + $0x470] sm:$0xff]
                %350 = vst [vmem:[%s206 + $0x238] sm:$0xff] %v349
                %v351 = vld [vmem:[%s205 + $0x480] sm:$0xff]
                %352 = vst [vmem:[%s206 + $0x240] sm:$0xff] %v351
                %v353 = vld [vmem:[%s205 + $0x490] sm:$0xff]
                %354 = vst [vmem:[%s206 + $0x248] sm:$0xff] %v353
                %v355 = vld [vmem:[%s205 + $0x4a0] sm:$0xff]
                %356 = vst [vmem:[%s206 + $0x250] sm:$0xff] %v355
                %v357 = vld [vmem:[%s205 + $0x4b0] sm:$0xff]
                %358 = vst [vmem:[%s206 + $0x258] sm:$0xff] %v357
                %v359 = vld [vmem:[%s205 + $0x4c0] sm:$0xff]
                %360 = vst [vmem:[%s206 + $0x260] sm:$0xff] %v359
                %v361 = vld [vmem:[%s205 + $0x4d0] sm:$0xff]
                %362 = vst [vmem:[%s206 + $0x268] sm:$0xff] %v361
                %v363 = vld [vmem:[%s205 + $0x4e0] sm:$0xff]
                %364 = vst [vmem:[%s206 + $0x270] sm:$0xff] %v363
                %v365 = vld [vmem:[%s205 + $0x4f0] sm:$0xff]
                %366 = vst [vmem:[%s206 + $0x278] sm:$0xff] %v365
                %v367 = vld [vmem:[%s205 + $0x500] sm:$0xff]
                %368 = vst [vmem:[%s206 + $0x280] sm:$0xff] %v367
                %v369 = vld [vmem:[%s205 + $0x510] sm:$0xff]
                %370 = vst [vmem:[%s206 + $0x288] sm:$0xff] %v369
                %v371 = vld [vmem:[%s205 + $0x520] sm:$0xff]
                %372 = vst [vmem:[%s206 + $0x290] sm:$0xff] %v371
                %v373 = vld [vmem:[%s205 + $0x530] sm:$0xff]
                %374 = vst [vmem:[%s206 + $0x298] sm:$0xff] %v373
                %v375 = vld [vmem:[%s205 + $0x540] sm:$0xff]
                %376 = vst [vmem:[%s206 + $0x2a0] sm:$0xff] %v375
                %v377 = vld [vmem:[%s205 + $0x550] sm:$0xff]
                %378 = vst [vmem:[%s206 + $0x2a8] sm:$0xff] %v377
                %v379 = vld [vmem:[%s205 + $0x560] sm:$0xff]
                %380 = vst [vmem:[%s206 + $0x2b0] sm:$0xff] %v379
                %v381 = vld [vmem:[%s205 + $0x570] sm:$0xff]
                %382 = vst [vmem:[%s206 + $0x2b8] sm:$0xff] %v381
                %v383 = vld [vmem:[%s205 + $0x580] sm:$0xff]
                %384 = vst [vmem:[%s206 + $0x2c0] sm:$0xff] %v383
                %v385 = vld [vmem:[%s205 + $0x590] sm:$0xff]
                %386 = vst [vmem:[%s206 + $0x2c8] sm:$0xff] %v385
                %v387 = vld [vmem:[%s205 + $0x5a0] sm:$0xff]
                %388 = vst [vmem:[%s206 + $0x2d0] sm:$0xff] %v387
                %v389 = vld [vmem:[%s205 + $0x5b0] sm:$0xff]
                %390 = vst [vmem:[%s206 + $0x2d8] sm:$0xff] %v389
                %v391 = vld [vmem:[%s205 + $0x5c0] sm:$0xff]
                %392 = vst [vmem:[%s206 + $0x2e0] sm:$0xff] %v391
                %v393 = vld [vmem:[%s205 + $0x5d0] sm:$0xff]
                %394 = vst [vmem:[%s206 + $0x2e8] sm:$0xff] %v393
                %v395 = vld [vmem:[%s205 + $0x5e0] sm:$0xff]
                %396 = vst [vmem:[%s206 + $0x2f0] sm:$0xff] %v395
                %v397 = vld [vmem:[%s205 + $0x5f0] sm:$0xff]
                %398 = vst [vmem:[%s206 + $0x2f8] sm:$0xff] %v397
                %v399 = vld [vmem:[%s205 + $0x600] sm:$0xff]
                %400 = vst [vmem:[%s206 + $0x300] sm:$0xff] %v399
                %v401 = vld [vmem:[%s205 + $0x610] sm:$0xff]
                %402 = vst [vmem:[%s206 + $0x308] sm:$0xff] %v401
                %v403 = vld [vmem:[%s205 + $0x620] sm:$0xff]
                %404 = vst [vmem:[%s206 + $0x310] sm:$0xff] %v403
                %v405 = vld [vmem:[%s205 + $0x630] sm:$0xff]
                %406 = vst [vmem:[%s206 + $0x318] sm:$0xff] %v405
                %v407 = vld [vmem:[%s205 + $0x640] sm:$0xff]
                %408 = vst [vmem:[%s206 + $0x320] sm:$0xff] %v407
                %v409 = vld [vmem:[%s205 + $0x650] sm:$0xff]
                %410 = vst [vmem:[%s206 + $0x328] sm:$0xff] %v409
                %v411 = vld [vmem:[%s205 + $0x660] sm:$0xff]
                %412 = vst [vmem:[%s206 + $0x330] sm:$0xff] %v411
                %v413 = vld [vmem:[%s205 + $0x670] sm:$0xff]
                %414 = vst [vmem:[%s206 + $0x338] sm:$0xff] %v413
                %v415 = vld [vmem:[%s205 + $0x680] sm:$0xff]
                %416 = vst [vmem:[%s206 + $0x340] sm:$0xff] %v415
                %v417 = vld [vmem:[%s205 + $0x690] sm:$0xff]
                %418 = vst [vmem:[%s206 + $0x348] sm:$0xff] %v417
                %v419 = vld [vmem:[%s205 + $0x6a0] sm:$0xff]
                %420 = vst [vmem:[%s206 + $0x350] sm:$0xff] %v419
                %v421 = vld [vmem:[%s205 + $0x6b0] sm:$0xff]
                %422 = vst [vmem:[%s206 + $0x358] sm:$0xff] %v421
                %v423 = vld [vmem:[%s205 + $0x6c0] sm:$0xff]
                %424 = vst [vmem:[%s206 + $0x360] sm:$0xff] %v423
                %v425 = vld [vmem:[%s205 + $0x6d0] sm:$0xff]
                %426 = vst [vmem:[%s206 + $0x368] sm:$0xff] %v425
                %v427 = vld [vmem:[%s205 + $0x6e0] sm:$0xff]
                %428 = vst [vmem:[%s206 + $0x370] sm:$0xff] %v427
                %v429 = vld [vmem:[%s205 + $0x6f0] sm:$0xff]
                %430 = vst [vmem:[%s206 + $0x378] sm:$0xff] %v429
                %v431 = vld [vmem:[%s205 + $0x700] sm:$0xff]
                %432 = vst [vmem:[%s206 + $0x380] sm:$0xff] %v431
                %v433 = vld [vmem:[%s205 + $0x710] sm:$0xff]
                %434 = vst [vmem:[%s206 + $0x388] sm:$0xff] %v433
                %v435 = vld [vmem:[%s205 + $0x720] sm:$0xff]
                %436 = vst [vmem:[%s206 + $0x390] sm:$0xff] %v435
                %v437 = vld [vmem:[%s205 + $0x730] sm:$0xff]
                %438 = vst [vmem:[%s206 + $0x398] sm:$0xff] %v437
                %v439 = vld [vmem:[%s205 + $0x740] sm:$0xff]
                %440 = vst [vmem:[%s206 + $0x3a0] sm:$0xff] %v439
                %v441 = vld [vmem:[%s205 + $0x750] sm:$0xff]
                %442 = vst [vmem:[%s206 + $0x3a8] sm:$0xff] %v441
                %v443 = vld [vmem:[%s205 + $0x760] sm:$0xff]
                %444 = vst [vmem:[%s206 + $0x3b0] sm:$0xff] %v443
                %v445 = vld [vmem:[%s205 + $0x770] sm:$0xff]
                %446 = vst [vmem:[%s206 + $0x3b8] sm:$0xff] %v445
                %v447 = vld [vmem:[%s205 + $0x780] sm:$0xff]
                %448 = vst [vmem:[%s206 + $0x3c0] sm:$0xff] %v447
                %v449 = vld [vmem:[%s205 + $0x790] sm:$0xff]
                %450 = vst [vmem:[%s206 + $0x3c8] sm:$0xff] %v449
                %v451 = vld [vmem:[%s205 + $0x7a0] sm:$0xff]
                %452 = vst [vmem:[%s206 + $0x3d0] sm:$0xff] %v451
                %v453 = vld [vmem:[%s205 + $0x7b0] sm:$0xff]
                %454 = vst [vmem:[%s206 + $0x3d8] sm:$0xff] %v453
                %v455 = vld [vmem:[%s205 + $0x7c0] sm:$0xff]
                %456 = vst [vmem:[%s206 + $0x3e0] sm:$0xff] %v455
                %v457 = vld [vmem:[%s205 + $0x7d0] sm:$0xff]
                %458 = vst [vmem:[%s206 + $0x3e8] sm:$0xff] %v457
                %v459 = vld [vmem:[%s205 + $0x7e0] sm:$0xff]
                %460 = vst [vmem:[%s206 + $0x3f0] sm:$0xff] %v459
                %v461 = vld [vmem:[%s205 + $0x7f0] sm:$0xff]
                %462 = vst [vmem:[%s206 + $0x3f8] sm:$0xff] %v461
                %v463 = vld [vmem:[%s205 + $0x800] sm:$0xff]
                %464 = vst [vmem:[%s206 + $0x400] sm:$0xff] %v463
                %v465 = vld [vmem:[%s205 + $0x810] sm:$0xff]
                %466 = vst [vmem:[%s206 + $0x408] sm:$0xff] %v465
                %v467 = vld [vmem:[%s205 + $0x820] sm:$0xff]
                %468 = vst [vmem:[%s206 + $0x410] sm:$0xff] %v467
                %v469 = vld [vmem:[%s205 + $0x830] sm:$0xff]
                %470 = vst [vmem:[%s206 + $0x418] sm:$0xff] %v469
                %v471 = vld [vmem:[%s205 + $0x840] sm:$0xff]
                %472 = vst [vmem:[%s206 + $0x420] sm:$0xff] %v471
                %v473 = vld [vmem:[%s205 + $0x850] sm:$0xff]
                %474 = vst [vmem:[%s206 + $0x428] sm:$0xff] %v473
                %v475 = vld [vmem:[%s205 + $0x860] sm:$0xff]
                %476 = vst [vmem:[%s206 + $0x430] sm:$0xff] %v475
                %v477 = vld [vmem:[%s205 + $0x870] sm:$0xff]
                %478 = vst [vmem:[%s206 + $0x438] sm:$0xff] %v477
                %v479 = vld [vmem:[%s205 + $0x880] sm:$0xff]
                %480 = vst [vmem:[%s206 + $0x440] sm:$0xff] %v479
                %v481 = vld [vmem:[%s205 + $0x890] sm:$0xff]
                %482 = vst [vmem:[%s206 + $0x448] sm:$0xff] %v481
                %v483 = vld [vmem:[%s205 + $0x8a0] sm:$0xff]
                %484 = vst [vmem:[%s206 + $0x450] sm:$0xff] %v483
                %v485 = vld [vmem:[%s205 + $0x8b0] sm:$0xff]
                %486 = vst [vmem:[%s206 + $0x458] sm:$0xff] %v485
                %v487 = vld [vmem:[%s205 + $0x8c0] sm:$0xff]
                %488 = vst [vmem:[%s206 + $0x460] sm:$0xff] %v487
                %v489 = vld [vmem:[%s205 + $0x8d0] sm:$0xff]
                %490 = vst [vmem:[%s206 + $0x468] sm:$0xff] %v489
                %v491 = vld [vmem:[%s205 + $0x8e0] sm:$0xff]
                %492 = vst [vmem:[%s206 + $0x470] sm:$0xff] %v491
                %v493 = vld [vmem:[%s205 + $0x8f0] sm:$0xff]
                %494 = vst [vmem:[%s206 + $0x478] sm:$0xff] %v493
                %v495 = vld [vmem:[%s205 + $0x900] sm:$0xff]
                %496 = vst [vmem:[%s206 + $0x480] sm:$0xff] %v495
                %v497 = vld [vmem:[%s205 + $0x910] sm:$0xff]
                %498 = vst [vmem:[%s206 + $0x488] sm:$0xff] %v497
                %v499 = vld [vmem:[%s205 + $0x920] sm:$0xff]
                %500 = vst [vmem:[%s206 + $0x490] sm:$0xff] %v499
                %v501 = vld [vmem:[%s205 + $0x930] sm:$0xff]
                %502 = vst [vmem:[%s206 + $0x498] sm:$0xff] %v501
                %v503 = vld [vmem:[%s205 + $0x940] sm:$0xff]
                %504 = vst [vmem:[%s206 + $0x4a0] sm:$0xff] %v503
                %v505 = vld [vmem:[%s205 + $0x950] sm:$0xff]
                %506 = vst [vmem:[%s206 + $0x4a8] sm:$0xff] %v505
                %v507 = vld [vmem:[%s205 + $0x960] sm:$0xff]
                %508 = vst [vmem:[%s206 + $0x4b0] sm:$0xff] %v507
                %v509 = vld [vmem:[%s205 + $0x970] sm:$0xff]
                %510 = vst [vmem:[%s206 + $0x4b8] sm:$0xff] %v509
                %v511 = vld [vmem:[%s205 + $0x980] sm:$0xff]
                %512 = vst [vmem:[%s206 + $0x4c0] sm:$0xff] %v511
                %v513 = vld [vmem:[%s205 + $0x990] sm:$0xff]
                %514 = vst [vmem:[%s206 + $0x4c8] sm:$0xff] %v513
                %v515 = vld [vmem:[%s205 + $0x9a0] sm:$0xff]
                %516 = vst [vmem:[%s206 + $0x4d0] sm:$0xff] %v515
                %v517 = vld [vmem:[%s205 + $0x9b0] sm:$0xff]
                %518 = vst [vmem:[%s206 + $0x4d8] sm:$0xff] %v517
                %v519 = vld [vmem:[%s205 + $0x9c0] sm:$0xff]
                %520 = vst [vmem:[%s206 + $0x4e0] sm:$0xff] %v519
                %v521 = vld [vmem:[%s205 + $0x9d0] sm:$0xff]
                %522 = vst [vmem:[%s206 + $0x4e8] sm:$0xff] %v521
                %v523 = vld [vmem:[%s205 + $0x9e0] sm:$0xff]
                %524 = vst [vmem:[%s206 + $0x4f0] sm:$0xff] %v523
                %v525 = vld [vmem:[%s205 + $0x9f0] sm:$0xff]
                %526 = vst [vmem:[%s206 + $0x4f8] sm:$0xff] %v525
                %v527 = vld [vmem:[%s205 + $0xa00] sm:$0xff]
                %528 = vst [vmem:[%s206 + $0x500] sm:$0xff] %v527
                %v529 = vld [vmem:[%s205 + $0xa10] sm:$0xff]
                %530 = vst [vmem:[%s206 + $0x508] sm:$0xff] %v529
                %v531 = vld [vmem:[%s205 + $0xa20] sm:$0xff]
                %532 = vst [vmem:[%s206 + $0x510] sm:$0xff] %v531
                %v533 = vld [vmem:[%s205 + $0xa30] sm:$0xff]
                %534 = vst [vmem:[%s206 + $0x518] sm:$0xff] %v533
                %v535 = vld [vmem:[%s205 + $0xa40] sm:$0xff]
                %536 = vst [vmem:[%s206 + $0x520] sm:$0xff] %v535
                %v537 = vld [vmem:[%s205 + $0xa50] sm:$0xff]
                %538 = vst [vmem:[%s206 + $0x528] sm:$0xff] %v537
                %v539 = vld [vmem:[%s205 + $0xa60] sm:$0xff]
                %540 = vst [vmem:[%s206 + $0x530] sm:$0xff] %v539
                %v541 = vld [vmem:[%s205 + $0xa70] sm:$0xff]
                %542 = vst [vmem:[%s206 + $0x538] sm:$0xff] %v541
                %v543 = vld [vmem:[%s205 + $0xa80] sm:$0xff]
                %544 = vst [vmem:[%s206 + $0x540] sm:$0xff] %v543
                %v545 = vld [vmem:[%s205 + $0xa90] sm:$0xff]
                %546 = vst [vmem:[%s206 + $0x548] sm:$0xff] %v545
                %v547 = vld [vmem:[%s205 + $0xaa0] sm:$0xff]
                %548 = vst [vmem:[%s206 + $0x550] sm:$0xff] %v547
                %v549 = vld [vmem:[%s205 + $0xab0] sm:$0xff]
                %550 = vst [vmem:[%s206 + $0x558] sm:$0xff] %v549
                %v551 = vld [vmem:[%s205 + $0xac0] sm:$0xff]
                %552 = vst [vmem:[%s206 + $0x560] sm:$0xff] %v551
                %v553 = vld [vmem:[%s205 + $0xad0] sm:$0xff]
                %554 = vst [vmem:[%s206 + $0x568] sm:$0xff] %v553
                %v555 = vld [vmem:[%s205 + $0xae0] sm:$0xff]
                %556 = vst [vmem:[%s206 + $0x570] sm:$0xff] %v555
                %v557 = vld [vmem:[%s205 + $0xaf0] sm:$0xff]
                %558 = vst [vmem:[%s206 + $0x578] sm:$0xff] %v557
                %v559 = vld [vmem:[%s205 + $0xb00] sm:$0xff]
                %560 = vst [vmem:[%s206 + $0x580] sm:$0xff] %v559
                %v561 = vld [vmem:[%s205 + $0xb10] sm:$0xff]
                %562 = vst [vmem:[%s206 + $0x588] sm:$0xff] %v561
                %v563 = vld [vmem:[%s205 + $0xb20] sm:$0xff]
                %564 = vst [vmem:[%s206 + $0x590] sm:$0xff] %v563
                %v565 = vld [vmem:[%s205 + $0xb30] sm:$0xff]
                %566 = vst [vmem:[%s206 + $0x598] sm:$0xff] %v565
                %v567 = vld [vmem:[%s205 + $0xb40] sm:$0xff]
                %568 = vst [vmem:[%s206 + $0x5a0] sm:$0xff] %v567
                %v569 = vld [vmem:[%s205 + $0xb50] sm:$0xff]
                %570 = vst [vmem:[%s206 + $0x5a8] sm:$0xff] %v569
                %v571 = vld [vmem:[%s205 + $0xb60] sm:$0xff]
                %572 = vst [vmem:[%s206 + $0x5b0] sm:$0xff] %v571
                %v573 = vld [vmem:[%s205 + $0xb70] sm:$0xff]
                %574 = vst [vmem:[%s206 + $0x5b8] sm:$0xff] %v573
                %v575 = vld [vmem:[%s205 + $0xb80] sm:$0xff]
                %576 = vst [vmem:[%s206 + $0x5c0] sm:$0xff] %v575
                %v577 = vld [vmem:[%s205 + $0xb90] sm:$0xff]
                %578 = vst [vmem:[%s206 + $0x5c8] sm:$0xff] %v577
                %v579 = vld [vmem:[%s205 + $0xba0] sm:$0xff]
                %580 = vst [vmem:[%s206 + $0x5d0] sm:$0xff] %v579
                %v581 = vld [vmem:[%s205 + $0xbb0] sm:$0xff]
                %582 = vst [vmem:[%s206 + $0x5d8] sm:$0xff] %v581
                %v583 = vld [vmem:[%s205 + $0xbc0] sm:$0xff]
                %584 = vst [vmem:[%s206 + $0x5e0] sm:$0xff] %v583
                %v585 = vld [vmem:[%s205 + $0xbd0] sm:$0xff]
                %586 = vst [vmem:[%s206 + $0x5e8] sm:$0xff] %v585
                %v587 = vld [vmem:[%s205 + $0xbe0] sm:$0xff]
                %588 = vst [vmem:[%s206 + $0x5f0] sm:$0xff] %v587
                %v589 = vld [vmem:[%s205 + $0xbf0] sm:$0xff]
                %590 = vst [vmem:[%s206 + $0x5f8] sm:$0xff] %v589
                %v591 = vld [vmem:[%s205 + $0xc00] sm:$0xff]
                %592 = vst [vmem:[%s206 + $0x600] sm:$0xff] %v591
                %v593 = vld [vmem:[%s205 + $0xc10] sm:$0xff]
                %594 = vst [vmem:[%s206 + $0x608] sm:$0xff] %v593
                %v595 = vld [vmem:[%s205 + $0xc20] sm:$0xff]
                %596 = vst [vmem:[%s206 + $0x610] sm:$0xff] %v595
                %v597 = vld [vmem:[%s205 + $0xc30] sm:$0xff]
                %598 = vst [vmem:[%s206 + $0x618] sm:$0xff] %v597
                %v599 = vld [vmem:[%s205 + $0xc40] sm:$0xff]
                %600 = vst [vmem:[%s206 + $0x620] sm:$0xff] %v599
                %v601 = vld [vmem:[%s205 + $0xc50] sm:$0xff]
                %602 = vst [vmem:[%s206 + $0x628] sm:$0xff] %v601
                %v603 = vld [vmem:[%s205 + $0xc60] sm:$0xff]
                %604 = vst [vmem:[%s206 + $0x630] sm:$0xff] %v603
                %v605 = vld [vmem:[%s205 + $0xc70] sm:$0xff]
                %606 = vst [vmem:[%s206 + $0x638] sm:$0xff] %v605
                %v607 = vld [vmem:[%s205 + $0xc80] sm:$0xff]
                %608 = vst [vmem:[%s206 + $0x640] sm:$0xff] %v607
                %v609 = vld [vmem:[%s205 + $0xc90] sm:$0xff]
                %610 = vst [vmem:[%s206 + $0x648] sm:$0xff] %v609
                %v611 = vld [vmem:[%s205 + $0xca0] sm:$0xff]
                %612 = vst [vmem:[%s206 + $0x650] sm:$0xff] %v611
                %v613 = vld [vmem:[%s205 + $0xcb0] sm:$0xff]
                %614 = vst [vmem:[%s206 + $0x658] sm:$0xff] %v613
                %v615 = vld [vmem:[%s205 + $0xcc0] sm:$0xff]
                %616 = vst [vmem:[%s206 + $0x660] sm:$0xff] %v615
                %v617 = vld [vmem:[%s205 + $0xcd0] sm:$0xff]
                %618 = vst [vmem:[%s206 + $0x668] sm:$0xff] %v617
                %v619 = vld [vmem:[%s205 + $0xce0] sm:$0xff]
                %620 = vst [vmem:[%s206 + $0x670] sm:$0xff] %v619
                %v621 = vld [vmem:[%s205 + $0xcf0] sm:$0xff]
                %622 = vst [vmem:[%s206 + $0x678] sm:$0xff] %v621
                %v623 = vld [vmem:[%s205 + $0xd00] sm:$0xff]
                %624 = vst [vmem:[%s206 + $0x680] sm:$0xff] %v623
                %v625 = vld [vmem:[%s205 + $0xd10] sm:$0xff]
                %626 = vst [vmem:[%s206 + $0x688] sm:$0xff] %v625
                %v627 = vld [vmem:[%s205 + $0xd20] sm:$0xff]
                %628 = vst [vmem:[%s206 + $0x690] sm:$0xff] %v627
                %v629 = vld [vmem:[%s205 + $0xd30] sm:$0xff]
                %630 = vst [vmem:[%s206 + $0x698] sm:$0xff] %v629
                %v631 = vld [vmem:[%s205 + $0xd40] sm:$0xff]
                %632 = vst [vmem:[%s206 + $0x6a0] sm:$0xff] %v631
                %v633 = vld [vmem:[%s205 + $0xd50] sm:$0xff]
                %634 = vst [vmem:[%s206 + $0x6a8] sm:$0xff] %v633
                %v635 = vld [vmem:[%s205 + $0xd60] sm:$0xff]
                %636 = vst [vmem:[%s206 + $0x6b0] sm:$0xff] %v635
                %v637 = vld [vmem:[%s205 + $0xd70] sm:$0xff]
                %638 = vst [vmem:[%s206 + $0x6b8] sm:$0xff] %v637
                %v639 = vld [vmem:[%s205 + $0xd80] sm:$0xff]
                %640 = vst [vmem:[%s206 + $0x6c0] sm:$0xff] %v639
                %v641 = vld [vmem:[%s205 + $0xd90] sm:$0xff]
                %642 = vst [vmem:[%s206 + $0x6c8] sm:$0xff] %v641
                %v643 = vld [vmem:[%s205 + $0xda0] sm:$0xff]
                %644 = vst [vmem:[%s206 + $0x6d0] sm:$0xff] %v643
                %v645 = vld [vmem:[%s205 + $0xdb0] sm:$0xff]
                %646 = vst [vmem:[%s206 + $0x6d8] sm:$0xff] %v645
                %v647 = vld [vmem:[%s205 + $0xdc0] sm:$0xff]
                %648 = vst [vmem:[%s206 + $0x6e0] sm:$0xff] %v647
                %v649 = vld [vmem:[%s205 + $0xdd0] sm:$0xff]
                %650 = vst [vmem:[%s206 + $0x6e8] sm:$0xff] %v649
                %v651 = vld [vmem:[%s205 + $0xde0] sm:$0xff]
                %652 = vst [vmem:[%s206 + $0x6f0] sm:$0xff] %v651
                %v653 = vld [vmem:[%s205 + $0xdf0] sm:$0xff]
                %654 = vst [vmem:[%s206 + $0x6f8] sm:$0xff] %v653
                %v655 = vld [vmem:[%s205 + $0xe00] sm:$0xff]
                %656 = vst [vmem:[%s206 + $0x700] sm:$0xff] %v655
                %v657 = vld [vmem:[%s205 + $0xe10] sm:$0xff]
                %658 = vst [vmem:[%s206 + $0x708] sm:$0xff] %v657
                %v659 = vld [vmem:[%s205 + $0xe20] sm:$0xff]
                %660 = vst [vmem:[%s206 + $0x710] sm:$0xff] %v659
                %v661 = vld [vmem:[%s205 + $0xe30] sm:$0xff]
                %662 = vst [vmem:[%s206 + $0x718] sm:$0xff] %v661
                %v663 = vld [vmem:[%s205 + $0xe40] sm:$0xff]
                %664 = vst [vmem:[%s206 + $0x720] sm:$0xff] %v663
                %v665 = vld [vmem:[%s205 + $0xe50] sm:$0xff]
                %666 = vst [vmem:[%s206 + $0x728] sm:$0xff] %v665
                %v667 = vld [vmem:[%s205 + $0xe60] sm:$0xff]
                %668 = vst [vmem:[%s206 + $0x730] sm:$0xff] %v667
                %v669 = vld [vmem:[%s205 + $0xe70] sm:$0xff]
                %670 = vst [vmem:[%s206 + $0x738] sm:$0xff] %v669
                %v671 = vld [vmem:[%s205 + $0xe80] sm:$0xff]
                %672 = vst [vmem:[%s206 + $0x740] sm:$0xff] %v671
                %v673 = vld [vmem:[%s205 + $0xe90] sm:$0xff]
                %674 = vst [vmem:[%s206 + $0x748] sm:$0xff] %v673
                %v675 = vld [vmem:[%s205 + $0xea0] sm:$0xff]
                %676 = vst [vmem:[%s206 + $0x750] sm:$0xff] %v675
                %v677 = vld [vmem:[%s205 + $0xeb0] sm:$0xff]
                %678 = vst [vmem:[%s206 + $0x758] sm:$0xff] %v677
                %v679 = vld [vmem:[%s205 + $0xec0] sm:$0xff]
                %680 = vst [vmem:[%s206 + $0x760] sm:$0xff] %v679
                %v681 = vld [vmem:[%s205 + $0xed0] sm:$0xff]
                %682 = vst [vmem:[%s206 + $0x768] sm:$0xff] %v681
                %v683 = vld [vmem:[%s205 + $0xee0] sm:$0xff]
                %684 = vst [vmem:[%s206 + $0x770] sm:$0xff] %v683
                %v685 = vld [vmem:[%s205 + $0xef0] sm:$0xff]
                %686 = vst [vmem:[%s206 + $0x778] sm:$0xff] %v685
                %v687 = vld [vmem:[%s205 + $0xf00] sm:$0xff]
                %688 = vst [vmem:[%s206 + $0x780] sm:$0xff] %v687
                %v689 = vld [vmem:[%s205 + $0xf10] sm:$0xff]
                %690 = vst [vmem:[%s206 + $0x788] sm:$0xff] %v689
                %v691 = vld [vmem:[%s205 + $0xf20] sm:$0xff]
                %692 = vst [vmem:[%s206 + $0x790] sm:$0xff] %v691
                %v693 = vld [vmem:[%s205 + $0xf30] sm:$0xff]
                %694 = vst [vmem:[%s206 + $0x798] sm:$0xff] %v693
                %v695 = vld [vmem:[%s205 + $0xf40] sm:$0xff]
                %696 = vst [vmem:[%s206 + $0x7a0] sm:$0xff] %v695
                %v697 = vld [vmem:[%s205 + $0xf50] sm:$0xff]
                %698 = vst [vmem:[%s206 + $0x7a8] sm:$0xff] %v697
                %v699 = vld [vmem:[%s205 + $0xf60] sm:$0xff]
                %700 = vst [vmem:[%s206 + $0x7b0] sm:$0xff] %v699
                %v701 = vld [vmem:[%s205 + $0xf70] sm:$0xff]
                %702 = vst [vmem:[%s206 + $0x7b8] sm:$0xff] %v701
                %v703 = vld [vmem:[%s205 + $0xf80] sm:$0xff]
                %704 = vst [vmem:[%s206 + $0x7c0] sm:$0xff] %v703
                %v705 = vld [vmem:[%s205 + $0xf90] sm:$0xff]
                %706 = vst [vmem:[%s206 + $0x7c8] sm:$0xff] %v705
                %v707 = vld [vmem:[%s205 + $0xfa0] sm:$0xff]
                %708 = vst [vmem:[%s206 + $0x7d0] sm:$0xff] %v707
                %v709 = vld [vmem:[%s205 + $0xfb0] sm:$0xff]
                %710 = vst [vmem:[%s206 + $0x7d8] sm:$0xff] %v709
                %v711 = vld [vmem:[%s205 + $0xfc0] sm:$0xff]
                %712 = vst [vmem:[%s206 + $0x7e0] sm:$0xff] %v711
                %v713 = vld [vmem:[%s205 + $0xfd0] sm:$0xff]
                %714 = vst [vmem:[%s206 + $0x7e8] sm:$0xff] %v713
                %v715 = vld [vmem:[%s205 + $0xfe0] sm:$0xff]
                %716 = vst [vmem:[%s206 + $0x7f0] sm:$0xff] %v715
                %v717 = vld [vmem:[%s205 + $0xff0] sm:$0xff]
                %718 = vst [vmem:[%s206 + $0x7f8] sm:$0xff] %v717
                %v719 = vld [vmem:[%s205 + $0x1000] sm:$0xff]
                %720 = vst [vmem:[%s206 + $0x800] sm:$0xff] %v719
                %v721 = vld [vmem:[%s205 + $0x1010] sm:$0xff]
                %722 = vst [vmem:[%s206 + $0x808] sm:$0xff] %v721
                %v723 = vld [vmem:[%s205 + $0x1020] sm:$0xff]
                %724 = vst [vmem:[%s206 + $0x810] sm:$0xff] %v723
                %v725 = vld [vmem:[%s205 + $0x1030] sm:$0xff]
                %726 = vst [vmem:[%s206 + $0x818] sm:$0xff] %v725
                %v727 = vld [vmem:[%s205 + $0x1040] sm:$0xff]
                %728 = vst [vmem:[%s206 + $0x820] sm:$0xff] %v727
                %v729 = vld [vmem:[%s205 + $0x1050] sm:$0xff]
                %730 = vst [vmem:[%s206 + $0x828] sm:$0xff] %v729
                %v731 = vld [vmem:[%s205 + $0x1060] sm:$0xff]
                %732 = vst [vmem:[%s206 + $0x830] sm:$0xff] %v731
                %v733 = vld [vmem:[%s205 + $0x1070] sm:$0xff]
                %734 = vst [vmem:[%s206 + $0x838] sm:$0xff] %v733
                %v735 = vld [vmem:[%s205 + $0x1080] sm:$0xff]
                %736 = vst [vmem:[%s206 + $0x840] sm:$0xff] %v735
                %v737 = vld [vmem:[%s205 + $0x1090] sm:$0xff]
                %738 = vst [vmem:[%s206 + $0x848] sm:$0xff] %v737
                %v739 = vld [vmem:[%s205 + $0x10a0] sm:$0xff]
                %740 = vst [vmem:[%s206 + $0x850] sm:$0xff] %v739
                %v741 = vld [vmem:[%s205 + $0x10b0] sm:$0xff]
                %742 = vst [vmem:[%s206 + $0x858] sm:$0xff] %v741
                %v743 = vld [vmem:[%s205 + $0x10c0] sm:$0xff]
                %744 = vst [vmem:[%s206 + $0x860] sm:$0xff] %v743
                %v745 = vld [vmem:[%s205 + $0x10d0] sm:$0xff]
                %746 = vst [vmem:[%s206 + $0x868] sm:$0xff] %v745
                %v747 = vld [vmem:[%s205 + $0x10e0] sm:$0xff]
                %748 = vst [vmem:[%s206 + $0x870] sm:$0xff] %v747
                %v749 = vld [vmem:[%s205 + $0x10f0] sm:$0xff]
                %750 = vst [vmem:[%s206 + $0x878] sm:$0xff] %v749
                %v751 = vld [vmem:[%s205 + $0x1100] sm:$0xff]
                %752 = vst [vmem:[%s206 + $0x880] sm:$0xff] %v751
                %v753 = vld [vmem:[%s205 + $0x1110] sm:$0xff]
                %754 = vst [vmem:[%s206 + $0x888] sm:$0xff] %v753
                %v755 = vld [vmem:[%s205 + $0x1120] sm:$0xff]
                %756 = vst [vmem:[%s206 + $0x890] sm:$0xff] %v755
                %v757 = vld [vmem:[%s205 + $0x1130] sm:$0xff]
                %758 = vst [vmem:[%s206 + $0x898] sm:$0xff] %v757
                %v759 = vld [vmem:[%s205 + $0x1140] sm:$0xff]
                %760 = vst [vmem:[%s206 + $0x8a0] sm:$0xff] %v759
                %v761 = vld [vmem:[%s205 + $0x1150] sm:$0xff]
                %762 = vst [vmem:[%s206 + $0x8a8] sm:$0xff] %v761
                %v763 = vld [vmem:[%s205 + $0x1160] sm:$0xff]
                %764 = vst [vmem:[%s206 + $0x8b0] sm:$0xff] %v763
                %v765 = vld [vmem:[%s205 + $0x1170] sm:$0xff]
                %766 = vst [vmem:[%s206 + $0x8b8] sm:$0xff] %v765
                %v767 = vld [vmem:[%s205 + $0x1180] sm:$0xff]
                %768 = vst [vmem:[%s206 + $0x8c0] sm:$0xff] %v767
                %v769 = vld [vmem:[%s205 + $0x1190] sm:$0xff]
                %770 = vst [vmem:[%s206 + $0x8c8] sm:$0xff] %v769
                %v771 = vld [vmem:[%s205 + $0x11a0] sm:$0xff]
                %772 = vst [vmem:[%s206 + $0x8d0] sm:$0xff] %v771
                %v773 = vld [vmem:[%s205 + $0x11b0] sm:$0xff]
                %774 = vst [vmem:[%s206 + $0x8d8] sm:$0xff] %v773
                %v775 = vld [vmem:[%s205 + $0x11c0] sm:$0xff]
                %776 = vst [vmem:[%s206 + $0x8e0] sm:$0xff] %v775
                %v777 = vld [vmem:[%s205 + $0x11d0] sm:$0xff]
                %778 = vst [vmem:[%s206 + $0x8e8] sm:$0xff] %v777
                %v779 = vld [vmem:[%s205 + $0x11e0] sm:$0xff]
                %780 = vst [vmem:[%s206 + $0x8f0] sm:$0xff] %v779
                %v781 = vld [vmem:[%s205 + $0x11f0] sm:$0xff]
                %782 = vst [vmem:[%s206 + $0x8f8] sm:$0xff] %v781
                %v783 = vld [vmem:[%s205 + $0x1200] sm:$0xff]
                %784 = vst [vmem:[%s206 + $0x900] sm:$0xff] %v783
                %v785 = vld [vmem:[%s205 + $0x1210] sm:$0xff]
                %786 = vst [vmem:[%s206 + $0x908] sm:$0xff] %v785
                %v787 = vld [vmem:[%s205 + $0x1220] sm:$0xff]
                %788 = vst [vmem:[%s206 + $0x910] sm:$0xff] %v787
                %v789 = vld [vmem:[%s205 + $0x1230] sm:$0xff]
                %790 = vst [vmem:[%s206 + $0x918] sm:$0xff] %v789
                %v791 = vld [vmem:[%s205 + $0x1240] sm:$0xff]
                %792 = vst [vmem:[%s206 + $0x920] sm:$0xff] %v791
                %v793 = vld [vmem:[%s205 + $0x1250] sm:$0xff]
                %794 = vst [vmem:[%s206 + $0x928] sm:$0xff] %v793
                %v795 = vld [vmem:[%s205 + $0x1260] sm:$0xff]
                %796 = vst [vmem:[%s206 + $0x930] sm:$0xff] %v795
                %v797 = vld [vmem:[%s205 + $0x1270] sm:$0xff]
                %798 = vst [vmem:[%s206 + $0x938] sm:$0xff] %v797
                %v799 = vld [vmem:[%s205 + $0x1280] sm:$0xff]
                %800 = vst [vmem:[%s206 + $0x940] sm:$0xff] %v799
                %v801 = vld [vmem:[%s205 + $0x1290] sm:$0xff]
                %802 = vst [vmem:[%s206 + $0x948] sm:$0xff] %v801
                %v803 = vld [vmem:[%s205 + $0x12a0] sm:$0xff]
                %804 = vst [vmem:[%s206 + $0x950] sm:$0xff] %v803
                %v805 = vld [vmem:[%s205 + $0x12b0] sm:$0xff]
                %806 = vst [vmem:[%s206 + $0x958] sm:$0xff] %v805
                %v807 = vld [vmem:[%s205 + $0x12c0] sm:$0xff]
                %808 = vst [vmem:[%s206 + $0x960] sm:$0xff] %v807
                %v809 = vld [vmem:[%s205 + $0x12d0] sm:$0xff]
                %810 = vst [vmem:[%s206 + $0x968] sm:$0xff] %v809
                %v811 = vld [vmem:[%s205 + $0x12e0] sm:$0xff]
                %812 = vst [vmem:[%s206 + $0x970] sm:$0xff] %v811
                %v813 = vld [vmem:[%s205 + $0x12f0] sm:$0xff]
                %814 = vst [vmem:[%s206 + $0x978] sm:$0xff] %v813
                %v815 = vld [vmem:[%s205 + $0x1300] sm:$0xff]
                %816 = vst [vmem:[%s206 + $0x980] sm:$0xff] %v815
                %v817 = vld [vmem:[%s205 + $0x1310] sm:$0xff]
                %818 = vst [vmem:[%s206 + $0x988] sm:$0xff] %v817
                %v819 = vld [vmem:[%s205 + $0x1320] sm:$0xff]
                %820 = vst [vmem:[%s206 + $0x990] sm:$0xff] %v819
                %v821 = vld [vmem:[%s205 + $0x1330] sm:$0xff]
                %822 = vst [vmem:[%s206 + $0x998] sm:$0xff] %v821
                %v823 = vld [vmem:[%s205 + $0x1340] sm:$0xff]
                %824 = vst [vmem:[%s206 + $0x9a0] sm:$0xff] %v823
                %v825 = vld [vmem:[%s205 + $0x1350] sm:$0xff]
                %826 = vst [vmem:[%s206 + $0x9a8] sm:$0xff] %v825
                %v827 = vld [vmem:[%s205 + $0x1360] sm:$0xff]
                %828 = vst [vmem:[%s206 + $0x9b0] sm:$0xff] %v827
                %v829 = vld [vmem:[%s205 + $0x1370] sm:$0xff]
                %830 = vst [vmem:[%s206 + $0x9b8] sm:$0xff] %v829
                %v831 = vld [vmem:[%s205 + $0x1380] sm:$0xff]
                %832 = vst [vmem:[%s206 + $0x9c0] sm:$0xff] %v831
                %v833 = vld [vmem:[%s205 + $0x1390] sm:$0xff]
                %834 = vst [vmem:[%s206 + $0x9c8] sm:$0xff] %v833
                %v835 = vld [vmem:[%s205 + $0x13a0] sm:$0xff]
                %836 = vst [vmem:[%s206 + $0x9d0] sm:$0xff] %v835
                %v837 = vld [vmem:[%s205 + $0x13b0] sm:$0xff]
                %838 = vst [vmem:[%s206 + $0x9d8] sm:$0xff] %v837
                %v839 = vld [vmem:[%s205 + $0x13c0] sm:$0xff]
                %840 = vst [vmem:[%s206 + $0x9e0] sm:$0xff] %v839
                %v841 = vld [vmem:[%s205 + $0x13d0] sm:$0xff]
                %842 = vst [vmem:[%s206 + $0x9e8] sm:$0xff] %v841
                %v843 = vld [vmem:[%s205 + $0x13e0] sm:$0xff]
                %844 = vst [vmem:[%s206 + $0x9f0] sm:$0xff] %v843
                %v845 = vld [vmem:[%s205 + $0x13f0] sm:$0xff]
                %846 = vst [vmem:[%s206 + $0x9f8] sm:$0xff] %v845
                %v847 = vld [vmem:[%s205 + $0x1400] sm:$0xff]
                %848 = vst [vmem:[%s206 + $0xa00] sm:$0xff] %v847
                %v849 = vld [vmem:[%s205 + $0x1410] sm:$0xff]
                %850 = vst [vmem:[%s206 + $0xa08] sm:$0xff] %v849
                %v851 = vld [vmem:[%s205 + $0x1420] sm:$0xff]
                %852 = vst [vmem:[%s206 + $0xa10] sm:$0xff] %v851
                %v853 = vld [vmem:[%s205 + $0x1430] sm:$0xff]
                %854 = vst [vmem:[%s206 + $0xa18] sm:$0xff] %v853
                %v855 = vld [vmem:[%s205 + $0x1440] sm:$0xff]
                %856 = vst [vmem:[%s206 + $0xa20] sm:$0xff] %v855
                %v857 = vld [vmem:[%s205 + $0x1450] sm:$0xff]
                %858 = vst [vmem:[%s206 + $0xa28] sm:$0xff] %v857
                %v859 = vld [vmem:[%s205 + $0x1460] sm:$0xff]
                %860 = vst [vmem:[%s206 + $0xa30] sm:$0xff] %v859
                %v861 = vld [vmem:[%s205 + $0x1470] sm:$0xff]
                %862 = vst [vmem:[%s206 + $0xa38] sm:$0xff] %v861
                %v863 = vld [vmem:[%s205 + $0x1480] sm:$0xff]
                %864 = vst [vmem:[%s206 + $0xa40] sm:$0xff] %v863
                %v865 = vld [vmem:[%s205 + $0x1490] sm:$0xff]
                %866 = vst [vmem:[%s206 + $0xa48] sm:$0xff] %v865
                %v867 = vld [vmem:[%s205 + $0x14a0] sm:$0xff]
                %868 = vst [vmem:[%s206 + $0xa50] sm:$0xff] %v867
                %v869 = vld [vmem:[%s205 + $0x14b0] sm:$0xff]
                %870 = vst [vmem:[%s206 + $0xa58] sm:$0xff] %v869
                %v871 = vld [vmem:[%s205 + $0x14c0] sm:$0xff]
                %872 = vst [vmem:[%s206 + $0xa60] sm:$0xff] %v871
                %v873 = vld [vmem:[%s205 + $0x14d0] sm:$0xff]
                %874 = vst [vmem:[%s206 + $0xa68] sm:$0xff] %v873
                %v875 = vld [vmem:[%s205 + $0x14e0] sm:$0xff]
                %876 = vst [vmem:[%s206 + $0xa70] sm:$0xff] %v875
                %v877 = vld [vmem:[%s205 + $0x14f0] sm:$0xff]
                %878 = vst [vmem:[%s206 + $0xa78] sm:$0xff] %v877
                %v879 = vld [vmem:[%s205 + $0x1500] sm:$0xff]
                %880 = vst [vmem:[%s206 + $0xa80] sm:$0xff] %v879
                %v881 = vld [vmem:[%s205 + $0x1510] sm:$0xff]
                %882 = vst [vmem:[%s206 + $0xa88] sm:$0xff] %v881
                %v883 = vld [vmem:[%s205 + $0x1520] sm:$0xff]
                %884 = vst [vmem:[%s206 + $0xa90] sm:$0xff] %v883
                %v885 = vld [vmem:[%s205 + $0x1530] sm:$0xff]
                %886 = vst [vmem:[%s206 + $0xa98] sm:$0xff] %v885
                %v887 = vld [vmem:[%s205 + $0x1540] sm:$0xff]
                %888 = vst [vmem:[%s206 + $0xaa0] sm:$0xff] %v887
                %v889 = vld [vmem:[%s205 + $0x1550] sm:$0xff]
                %890 = vst [vmem:[%s206 + $0xaa8] sm:$0xff] %v889
                %v891 = vld [vmem:[%s205 + $0x1560] sm:$0xff]
                %892 = vst [vmem:[%s206 + $0xab0] sm:$0xff] %v891
                %v893 = vld [vmem:[%s205 + $0x1570] sm:$0xff]
                %894 = vst [vmem:[%s206 + $0xab8] sm:$0xff] %v893
                %v895 = vld [vmem:[%s205 + $0x1580] sm:$0xff]
                %896 = vst [vmem:[%s206 + $0xac0] sm:$0xff] %v895
                %v897 = vld [vmem:[%s205 + $0x1590] sm:$0xff]
                %898 = vst [vmem:[%s206 + $0xac8] sm:$0xff] %v897
                %v899 = vld [vmem:[%s205 + $0x15a0] sm:$0xff]
                %900 = vst [vmem:[%s206 + $0xad0] sm:$0xff] %v899
                %v901 = vld [vmem:[%s205 + $0x15b0] sm:$0xff]
                %902 = vst [vmem:[%s206 + $0xad8] sm:$0xff] %v901
                %v903 = vld [vmem:[%s205 + $0x15c0] sm:$0xff]
                %904 = vst [vmem:[%s206 + $0xae0] sm:$0xff] %v903
                %v905 = vld [vmem:[%s205 + $0x15d0] sm:$0xff]
                %906 = vst [vmem:[%s206 + $0xae8] sm:$0xff] %v905
                %v907 = vld [vmem:[%s205 + $0x15e0] sm:$0xff]
                %908 = vst [vmem:[%s206 + $0xaf0] sm:$0xff] %v907
                %v909 = vld [vmem:[%s205 + $0x15f0] sm:$0xff]
                %910 = vst [vmem:[%s206 + $0xaf8] sm:$0xff] %v909
                %v911 = vld [vmem:[%s205 + $0x1600] sm:$0xff]
                %912 = vst [vmem:[%s206 + $0xb00] sm:$0xff] %v911
                %v913 = vld [vmem:[%s205 + $0x1610] sm:$0xff]
                %914 = vst [vmem:[%s206 + $0xb08] sm:$0xff] %v913
                %v915 = vld [vmem:[%s205 + $0x1620] sm:$0xff]
                %916 = vst [vmem:[%s206 + $0xb10] sm:$0xff] %v915
                %v917 = vld [vmem:[%s205 + $0x1630] sm:$0xff]
                %918 = vst [vmem:[%s206 + $0xb18] sm:$0xff] %v917
                %v919 = vld [vmem:[%s205 + $0x1640] sm:$0xff]
                %920 = vst [vmem:[%s206 + $0xb20] sm:$0xff] %v919
                %v921 = vld [vmem:[%s205 + $0x1650] sm:$0xff]
                %922 = vst [vmem:[%s206 + $0xb28] sm:$0xff] %v921
                %v923 = vld [vmem:[%s205 + $0x1660] sm:$0xff]
                %924 = vst [vmem:[%s206 + $0xb30] sm:$0xff] %v923
                %v925 = vld [vmem:[%s205 + $0x1670] sm:$0xff]
                %926 = vst [vmem:[%s206 + $0xb38] sm:$0xff] %v925
                %v927 = vld [vmem:[%s205 + $0x1680] sm:$0xff]
                %928 = vst [vmem:[%s206 + $0xb40] sm:$0xff] %v927
                %v929 = vld [vmem:[%s205 + $0x1690] sm:$0xff]
                %930 = vst [vmem:[%s206 + $0xb48] sm:$0xff] %v929
                %v931 = vld [vmem:[%s205 + $0x16a0] sm:$0xff]
                %932 = vst [vmem:[%s206 + $0xb50] sm:$0xff] %v931
                %v933 = vld [vmem:[%s205 + $0x16b0] sm:$0xff]
                %934 = vst [vmem:[%s206 + $0xb58] sm:$0xff] %v933
                %v935 = vld [vmem:[%s205 + $0x16c0] sm:$0xff]
                %936 = vst [vmem:[%s206 + $0xb60] sm:$0xff] %v935
                %v937 = vld [vmem:[%s205 + $0x16d0] sm:$0xff]
                %938 = vst [vmem:[%s206 + $0xb68] sm:$0xff] %v937
                %v939 = vld [vmem:[%s205 + $0x16e0] sm:$0xff]
                %940 = vst [vmem:[%s206 + $0xb70] sm:$0xff] %v939
                %v941 = vld [vmem:[%s205 + $0x16f0] sm:$0xff]
                %942 = vst [vmem:[%s206 + $0xb78] sm:$0xff] %v941
                %v943 = vld [vmem:[%s205 + $0x1700] sm:$0xff]
                %944 = vst [vmem:[%s206 + $0xb80] sm:$0xff] %v943
                %v945 = vld [vmem:[%s205 + $0x1710] sm:$0xff]
                %946 = vst [vmem:[%s206 + $0xb88] sm:$0xff] %v945
                %v947 = vld [vmem:[%s205 + $0x1720] sm:$0xff]
                %948 = vst [vmem:[%s206 + $0xb90] sm:$0xff] %v947
                %v949 = vld [vmem:[%s205 + $0x1730] sm:$0xff]
                %950 = vst [vmem:[%s206 + $0xb98] sm:$0xff] %v949
                %v951 = vld [vmem:[%s205 + $0x1740] sm:$0xff]
                %952 = vst [vmem:[%s206 + $0xba0] sm:$0xff] %v951
                %v953 = vld [vmem:[%s205 + $0x1750] sm:$0xff]
                %954 = vst [vmem:[%s206 + $0xba8] sm:$0xff] %v953
                %v955 = vld [vmem:[%s205 + $0x1760] sm:$0xff]
                %956 = vst [vmem:[%s206 + $0xbb0] sm:$0xff] %v955
                %v957 = vld [vmem:[%s205 + $0x1770] sm:$0xff]
                %958 = vst [vmem:[%s206 + $0xbb8] sm:$0xff] %v957
                %v959 = vld [vmem:[%s205 + $0x1780] sm:$0xff]
                %960 = vst [vmem:[%s206 + $0xbc0] sm:$0xff] %v959
                %v961 = vld [vmem:[%s205 + $0x1790] sm:$0xff]
                %962 = vst [vmem:[%s206 + $0xbc8] sm:$0xff] %v961
                %v963 = vld [vmem:[%s205 + $0x17a0] sm:$0xff]
                %964 = vst [vmem:[%s206 + $0xbd0] sm:$0xff] %v963
                %v965 = vld [vmem:[%s205 + $0x17b0] sm:$0xff]
                %966 = vst [vmem:[%s206 + $0xbd8] sm:$0xff] %v965
                %v967 = vld [vmem:[%s205 + $0x17c0] sm:$0xff]
                %968 = vst [vmem:[%s206 + $0xbe0] sm:$0xff] %v967
                %v969 = vld [vmem:[%s205 + $0x17d0] sm:$0xff]
                %970 = vst [vmem:[%s206 + $0xbe8] sm:$0xff] %v969
                %v971 = vld [vmem:[%s205 + $0x17e0] sm:$0xff]
                %972 = vst [vmem:[%s206 + $0xbf0] sm:$0xff] %v971
                %v973 = vld [vmem:[%s205 + $0x17f0] sm:$0xff]
                %974 = vst [vmem:[%s206 + $0xbf8] sm:$0xff] %v973
                %v975 = vld [vmem:[%s205 + $0x1800] sm:$0xff]
                %976 = vst [vmem:[%s206 + $0xc00] sm:$0xff] %v975
                %v977 = vld [vmem:[%s205 + $0x1810] sm:$0xff]
                %978 = vst [vmem:[%s206 + $0xc08] sm:$0xff] %v977
                %v979 = vld [vmem:[%s205 + $0x1820] sm:$0xff]
                %980 = vst [vmem:[%s206 + $0xc10] sm:$0xff] %v979
                %v981 = vld [vmem:[%s205 + $0x1830] sm:$0xff]
                %982 = vst [vmem:[%s206 + $0xc18] sm:$0xff] %v981
                %v983 = vld [vmem:[%s205 + $0x1840] sm:$0xff]
                %984 = vst [vmem:[%s206 + $0xc20] sm:$0xff] %v983
                %v985 = vld [vmem:[%s205 + $0x1850] sm:$0xff]
                %986 = vst [vmem:[%s206 + $0xc28] sm:$0xff] %v985
                %v987 = vld [vmem:[%s205 + $0x1860] sm:$0xff]
                %988 = vst [vmem:[%s206 + $0xc30] sm:$0xff] %v987
                %v989 = vld [vmem:[%s205 + $0x1870] sm:$0xff]
                %990 = vst [vmem:[%s206 + $0xc38] sm:$0xff] %v989
              $region45: #{nn_vfa_forward.7} parent=39 // loop_footer
                %s204 = sadd.s32 1, %s200
              $region46: #{nn_vfa_forward.7} parent=39 // loop_footer_branch
                %199 = sbr.rel target = $region42
              $region47: #{nn_vfa_forward.7} parent=39 // loop_exit
                _
            $region40: #{nn_vfa_forward.7} parent=31 // pred_fallthru
              _
          $region32: #{nn_vfa_forward.7} parent=27 // pred_fallthru
            _
          %1787 = vnop
        $region28: #{nn_vfa_forward.7} parent=23 // pred_fallthru
          _
        // Predicated region
        $region63: #{nn_vfa_forward.7} parent=23 // pred_check
          %p1788 = pneg %p78
        $region64: #{nn_vfa_forward.7} parent=23 // pred_check_branch
          %1790 = sbr.rel (%p1788) target = $region66
        $region65: #{nn_vfa_forward.7} parent=23 // pred_region
          %s1791 = smul.u32 2, %s11
          %p1792 = scmp.lt.s32.totalorder %s1791, 3
          %s1793 = scalar_select %p1792, %s1791, 3
          %s1794 = scalar_lea.vmem %s2, %s1793
          %s1795 = smul.u32 2, %s11
        $region66: #{nn_vfa_forward.7} parent=23 // pred_fallthru
          _
        // Predicated region
        $region67: #{nn_vfa_forward.7} parent=23 // pred_check
          %p1796 = pneg %p104
        $region68: #{nn_vfa_forward.7} parent=23 // pred_check_branch
          %1798 = sbr.rel (%p1796) target = $region70
        $region69: #{nn_vfa_forward.7} parent=23 // pred_region
          %s1799 = smul.u32 32, %s11
          %p1800 = scmp.lt.s32.totalorder %s1799, 63
          %s1801 = scalar_select %p1800, %s1799, 63
          %s1802 = smul.addr %s1801, 4
          %s1803 = scalar_lea.vmem %s3, %s1802
          %s1804 = smul.u32 32, %s11
        $region70: #{nn_vfa_forward.7} parent=23 // pred_fallthru
          _
      $region24: #{nn_vfa_forward.7} parent=5 // pred_fallthru
        _
      %p1805 = scmp.le.s32.totalorder 1, %s11
      %p1806 = scmp.lt.s32.totalorder %s11, 3
      %p1807 = pnand %p1805, %p1806
      %p1808 = pneg %p1807
      // Predicated region
      $region71: #{nn_vfa_forward.7} parent=5 // pred_check
        _
      $region72: #{nn_vfa_forward.7} parent=5 // pred_check_branch
        %1810 = sbr.rel (%p1807) target = $region74
      $region73: #{nn_vfa_forward.7} parent=5 // pred_region
        %s1811 = ssub.s32 %s11, 1
        %s1812 = sand.u32 %s45, 1
        %s1813 = sand.u32 %s45, 1
        %s1814 = smul.addr %s1813, 3136
        %s1815 = scalar_lea.vmem [#allocation2], %s1814
        // Predicated region
        $region75: #{nn_vfa_forward.7} parent=73 // pred_check
          %p1816 = pneg %p58
        $region76: #{nn_vfa_forward.7} parent=73 // pred_check_branch
          %1818 = sbr.rel (%p1816) target = $region78
        $region77: #{nn_vfa_forward.7} parent=73 // pred_region
          _
        $region78: #{nn_vfa_forward.7} parent=73 // pred_fallthru
          _
        %p1819 = pneg %p32
        %p1820 = pneg %p29
        %s1821 = sand.u32 %s45, 1
        %s1822 = sand.u32 %s45, 1
        %s1823 = smul.addr %s1822, 3136
        %s1824 = scalar_lea.vmem [#allocation2], %s1823
        %p1825 = pneg %p58
        %p1826 = pneg %p55
        %s1827 = smul.u32 2, %s16
        %p1828 = scmp.lt.s32.totalorder %s1827, 3
        %s1829 = scalar_select %p1828, %s1827, 3
        %s1830 = scalar_lea.vmem %s2, %s1829
        %p1831 = pneg %p84
        %p1832 = pneg %p81
        %s1833 = smul.u32 32, %s16
        %p1834 = scmp.lt.s32.totalorder %s1833, 63
        %s1835 = scalar_select %p1834, %s1833, 63
        %s1836 = smul.addr %s1835, 4
        %s1837 = scalar_lea.vmem %s3, %s1836
        %p1838 = pneg %p110
        %p1839 = pneg %p107
        %p1840 = pneg %p131
        %p1841 = pneg %p128
        %p1842 = pneg %p157
        %p1843 = pneg %p154
        %p1844 = scmp.lt.s32.totalorder %s16, 1
        %s1845 = scalar_select %p1844, %s16, 1
        %s1846 = smul.addr %s1845, 2
        %s1847 = scalar_lea.vmem %s5, %s1846
        %s1848 = smul.u32 2, %s16
        %s1849 = smul.u32 2, %s16
        %p1850 = scmp.lt.s32.totalorder %s1849, 3
        %s1851 = scalar_select %p1850, %s1849, 3
        %s1852 = scalar_lea.vmem %s2, %s1851
        %s1853 = smul.u32 2, %s16
        %s1854 = smul.u32 32, %s16
        %p1855 = scmp.lt.s32.totalorder %s1854, 63
        %s1856 = scalar_select %p1855, %s1854, 63
        %s1857 = smul.addr %s1856, 4
        %s1858 = scalar_lea.vmem %s3, %s1857
        %s1859 = smul.u32 32, %s16
        %p1860 = scmp.lt.s32.totalorder %s16, 1
        %s1861 = scalar_select %p1860, %s16, 1
        %s1862 = smul.addr %s1861, 2
        %s1863 = scalar_lea.vmem %s5, %s1862
        %v1865 = vld [vmem:[%s0] sm:$0xff]
        %v1866 = vld [vmem:[%s0 + $0x8] sm:$0xff]
        %v1867 = vld [vmem:[%s0 + $0x10] sm:$0xff]
        %v1868 = vld [vmem:[%s0 + $0x18] sm:$0x1]
        %v1869 = vld [vmem:[%s1815] sm:$0xff]
        %v1870 = vld [vmem:[%s1815 + $0x8] sm:$0xff]
        %v1871 = vld [vmem:[%s1815 + $0x10] sm:$0xff]
        %v1872 = vld [vmem:[%s1815 + $0x18] sm:$0xff]
        %v1873 = vld [vmem:[%s1815 + $0x20] sm:$0xff]
        %v1874 = vld [vmem:[%s1815 + $0x28] sm:$0xff]
        %v1875 = vld [vmem:[%s1815 + $0x30] sm:$0xff]
        %v1876 = vld [vmem:[%s1815 + $0x38] sm:$0xff]
        %v1877 = vld [vmem:[%s1815 + $0x40] sm:$0xff]
        %v1878 = vld [vmem:[%s1815 + $0x48] sm:$0xff]
        %v1879 = vld [vmem:[%s1815 + $0x50] sm:$0xff]
        %v1880 = vld [vmem:[%s1815 + $0x58] sm:$0xff]
        %v1881 = vld [vmem:[%s1815 + $0x60] sm:$0xff]
        %v1882 = vld [vmem:[%s1815 + $0x68] sm:$0xff]
        %v1883 = vld [vmem:[%s1815 + $0x70] sm:$0xff]
        %v1884 = vld [vmem:[%s1815 + $0x78] sm:$0xff]
        %v1885 = vld [vmem:[%s1815 + $0x80] sm:$0xff]
        %v1886 = vld [vmem:[%s1815 + $0x88] sm:$0xff]
        %v1887 = vld [vmem:[%s1815 + $0x90] sm:$0xff]
        %v1888 = vld [vmem:[%s1815 + $0x98] sm:$0xff]
        %v1889 = vld [vmem:[%s1815 + $0xa0] sm:$0xff]
        %v1890 = vld [vmem:[%s1815 + $0xa8] sm:$0xff]
        %v1891 = vld [vmem:[%s1815 + $0xb0] sm:$0xff]
        %v1892 = vld [vmem:[%s1815 + $0xb8] sm:$0xff]
        %v1893 = vld [vmem:[%s1815 + $0xc0] sm:$0xff]
        %v1894 = vld [vmem:[%s1815 + $0xc8] sm:$0xff]
        %v1895 = vld [vmem:[%s1815 + $0xd0] sm:$0xff]
        %v1896 = vld [vmem:[%s1815 + $0xd8] sm:$0xff]
        %v1897 = vld [vmem:[%s1815 + $0xe0] sm:$0xff]
        %v1898 = vld [vmem:[%s1815 + $0xe8] sm:$0xff]
        %v1899 = vld [vmem:[%s1815 + $0xf0] sm:$0xff]
        %v1900 = vld [vmem:[%s1815 + $0xf8] sm:$0xff]
        %v1901 = vld [vmem:[%s1815 + $0x100] sm:$0xff]
        %v1902 = vld [vmem:[%s1815 + $0x108] sm:$0xff]
        %v1903 = vld [vmem:[%s1815 + $0x110] sm:$0xff]
        %v1904 = vld [vmem:[%s1815 + $0x118] sm:$0xff]
        %v1905 = vld [vmem:[%s1815 + $0x120] sm:$0xff]
        %v1906 = vld [vmem:[%s1815 + $0x128] sm:$0xff]
        %v1907 = vld [vmem:[%s1815 + $0x130] sm:$0xff]
        %v1908 = vld [vmem:[%s1815 + $0x138] sm:$0xff]
        %v1909 = vld [vmem:[%s1815 + $0x140] sm:$0xff]
        %v1910 = vld [vmem:[%s1815 + $0x148] sm:$0xff]
        %v1911 = vld [vmem:[%s1815 + $0x150] sm:$0xff]
        %v1912 = vld [vmem:[%s1815 + $0x158] sm:$0xff]
        %v1913 = vld [vmem:[%s1815 + $0x160] sm:$0xff]
        %v1914 = vld [vmem:[%s1815 + $0x168] sm:$0xff]
        %v1915 = vld [vmem:[%s1815 + $0x170] sm:$0xff]
        %v1916 = vld [vmem:[%s1815 + $0x178] sm:$0xff]
        %v1917 = vld [vmem:[%s1815 + $0x180] sm:$0xff]
        %v1918 = vld [vmem:[%s1815 + $0x188] sm:$0xff]
        %v1919 = vld [vmem:[%s1815 + $0x190] sm:$0xff]
        %v1920 = vld [vmem:[%s1815 + $0x198] sm:$0xff]
        %v1921 = vld [vmem:[%s1815 + $0x1a0] sm:$0xff]
        %v1922 = vld [vmem:[%s1815 + $0x1a8] sm:$0xff]
        %v1923 = vld [vmem:[%s1815 + $0x1b0] sm:$0xff]
        %v1924 = vld [vmem:[%s1815 + $0x1b8] sm:$0xff]
        %v1925 = vld [vmem:[%s1815 + $0x1c0] sm:$0xff]
        %v1926 = vld [vmem:[%s1815 + $0x1c8] sm:$0xff]
        %v1927 = vld [vmem:[%s1815 + $0x1d0] sm:$0xff]
        %v1928 = vld [vmem:[%s1815 + $0x1d8] sm:$0xff]
        %v1929 = vld [vmem:[%s1815 + $0x1e0] sm:$0xff]
        %v1930 = vld [vmem:[%s1815 + $0x1e8] sm:$0xff]
        %v1931 = vld [vmem:[%s1815 + $0x1f0] sm:$0xff]
        %v1932 = vld [vmem:[%s1815 + $0x1f8] sm:$0xff]
        %v1933 = vld [vmem:[%s1815 + $0x200] sm:$0xff]
        %v1934 = vld [vmem:[%s1815 + $0x208] sm:$0xff]
        %v1935 = vld [vmem:[%s1815 + $0x210] sm:$0xff]
        %v1936 = vld [vmem:[%s1815 + $0x218] sm:$0xff]
        %v1937 = vld [vmem:[%s1815 + $0x220] sm:$0xff]
        %v1938 = vld [vmem:[%s1815 + $0x228] sm:$0xff]
        %v1939 = vld [vmem:[%s1815 + $0x230] sm:$0xff]
        %v1940 = vld [vmem:[%s1815 + $0x238] sm:$0xff]
        %v1941 = vld [vmem:[%s1815 + $0x240] sm:$0xff]
        %v1942 = vld [vmem:[%s1815 + $0x248] sm:$0xff]
        %v1943 = vld [vmem:[%s1815 + $0x250] sm:$0xff]
        %v1944 = vld [vmem:[%s1815 + $0x258] sm:$0xff]
        %v1945 = vld [vmem:[%s1815 + $0x260] sm:$0xff]
        %v1946 = vld [vmem:[%s1815 + $0x268] sm:$0xff]
        %v1947 = vld [vmem:[%s1815 + $0x270] sm:$0xff]
        %v1948 = vld [vmem:[%s1815 + $0x278] sm:$0xff]
        %v1949 = vld [vmem:[%s1815 + $0x280] sm:$0xff]
        %v1950 = vld [vmem:[%s1815 + $0x288] sm:$0xff]
        %v1951 = vld [vmem:[%s1815 + $0x290] sm:$0xff]
        %v1952 = vld [vmem:[%s1815 + $0x298] sm:$0xff]
        %v1953 = vld [vmem:[%s1815 + $0x2a0] sm:$0xff]
        %v1954 = vld [vmem:[%s1815 + $0x2a8] sm:$0xff]
        %v1955 = vld [vmem:[%s1815 + $0x2b0] sm:$0xff]
        %v1956 = vld [vmem:[%s1815 + $0x2b8] sm:$0xff]
        %v1957 = vld [vmem:[%s1815 + $0x2c0] sm:$0xff]
        %v1958 = vld [vmem:[%s1815 + $0x2c8] sm:$0xff]
        %v1959 = vld [vmem:[%s1815 + $0x2d0] sm:$0xff]
        %v1960 = vld [vmem:[%s1815 + $0x2d8] sm:$0xff]
        %v1961 = vld [vmem:[%s1815 + $0x2e0] sm:$0xff]
        %v1962 = vld [vmem:[%s1815 + $0x2e8] sm:$0xff]
        %v1963 = vld [vmem:[%s1815 + $0x2f0] sm:$0xff]
        %v1964 = vld [vmem:[%s1815 + $0x2f8] sm:$0xff]
        %v1965 = vld [vmem:[%s1815 + $0x300] sm:$0xff]
        %v1966 = vld [vmem:[%s1815 + $0x308] sm:$0xff]
        %v1967 = vld [vmem:[%s1815 + $0x310] sm:$0xff]
        %v1968 = vld [vmem:[%s1815 + $0x318] sm:$0xff]
        %v1969 = vld [vmem:[%s1815 + $0x320] sm:$0xff]
        %v1970 = vld [vmem:[%s1815 + $0x328] sm:$0xff]
        %v1971 = vld [vmem:[%s1815 + $0x330] sm:$0xff]
        %v1972 = vld [vmem:[%s1815 + $0x338] sm:$0xff]
        %v1973 = vld [vmem:[%s1815 + $0x340] sm:$0xff]
        %v1974 = vld [vmem:[%s1815 + $0x348] sm:$0xff]
        %v1975 = vld [vmem:[%s1815 + $0x350] sm:$0xff]
        %v1976 = vld [vmem:[%s1815 + $0x358] sm:$0xff]
        %v1977 = vld [vmem:[%s1815 + $0x360] sm:$0xff]
        %v1978 = vld [vmem:[%s1815 + $0x368] sm:$0xff]
        %v1979 = vld [vmem:[%s1815 + $0x370] sm:$0xff]
        %v1980 = vld [vmem:[%s1815 + $0x378] sm:$0xff]
        %v1981 = vld [vmem:[%s1815 + $0x380] sm:$0xff]
        %v1982 = vld [vmem:[%s1815 + $0x388] sm:$0xff]
        %v1983 = vld [vmem:[%s1815 + $0x390] sm:$0xff]
        %v1984 = vld [vmem:[%s1815 + $0x398] sm:$0xff]
        %v1985 = vld [vmem:[%s1815 + $0x3a0] sm:$0xff]
        %v1986 = vld [vmem:[%s1815 + $0x3a8] sm:$0xff]
        %v1987 = vld [vmem:[%s1815 + $0x3b0] sm:$0xff]
        %v1988 = vld [vmem:[%s1815 + $0x3b8] sm:$0xff]
        %v1989 = vld [vmem:[%s1815 + $0x3c0] sm:$0xff]
        %v1990 = vld [vmem:[%s1815 + $0x3c8] sm:$0xff]
        %v1991 = vld [vmem:[%s1815 + $0x3d0] sm:$0xff]
        %v1992 = vld [vmem:[%s1815 + $0x3d8] sm:$0xff]
        %v1993 = vld [vmem:[%s1815 + $0x3e0] sm:$0xff]
        %v1994 = vld [vmem:[%s1815 + $0x3e8] sm:$0xff]
        %v1995 = vld [vmem:[%s1815 + $0x3f0] sm:$0xff]
        %v1996 = vld [vmem:[%s1815 + $0x3f8] sm:$0xff]
        %v1997 = vld [vmem:[%s1815 + $0x400] sm:$0xff]
        %v1998 = vld [vmem:[%s1815 + $0x408] sm:$0xff]
        %v1999 = vld [vmem:[%s1815 + $0x410] sm:$0xff]
        %v2000 = vld [vmem:[%s1815 + $0x418] sm:$0xff]
        %v2001 = vld [vmem:[%s1815 + $0x420] sm:$0xff]
        %v2002 = vld [vmem:[%s1815 + $0x428] sm:$0xff]
        %v2003 = vld [vmem:[%s1815 + $0x430] sm:$0xff]
        %v2004 = vld [vmem:[%s1815 + $0x438] sm:$0xff]
        %v2005 = vld [vmem:[%s1815 + $0x440] sm:$0xff]
        %v2006 = vld [vmem:[%s1815 + $0x448] sm:$0xff]
        %v2007 = vld [vmem:[%s1815 + $0x450] sm:$0xff]
        %v2008 = vld [vmem:[%s1815 + $0x458] sm:$0xff]
        %v2009 = vld [vmem:[%s1815 + $0x460] sm:$0xff]
        %v2010 = vld [vmem:[%s1815 + $0x468] sm:$0xff]
        %v2011 = vld [vmem:[%s1815 + $0x470] sm:$0xff]
        %v2012 = vld [vmem:[%s1815 + $0x478] sm:$0xff]
        %v2013 = vld [vmem:[%s1815 + $0x480] sm:$0xff]
        %v2014 = vld [vmem:[%s1815 + $0x488] sm:$0xff]
        %v2015 = vld [vmem:[%s1815 + $0x490] sm:$0xff]
        %v2016 = vld [vmem:[%s1815 + $0x498] sm:$0xff]
        %v2017 = vld [vmem:[%s1815 + $0x4a0] sm:$0xff]
        %v2018 = vld [vmem:[%s1815 + $0x4a8] sm:$0xff]
        %v2019 = vld [vmem:[%s1815 + $0x4b0] sm:$0xff]
        %v2020 = vld [vmem:[%s1815 + $0x4b8] sm:$0xff]
        %v2021 = vld [vmem:[%s1815 + $0x4c0] sm:$0xff]
        %v2022 = vld [vmem:[%s1815 + $0x4c8] sm:$0xff]
        %v2023 = vld [vmem:[%s1815 + $0x4d0] sm:$0xff]
        %v2024 = vld [vmem:[%s1815 + $0x4d8] sm:$0xff]
        %v2025 = vld [vmem:[%s1815 + $0x4e0] sm:$0xff]
        %v2026 = vld [vmem:[%s1815 + $0x4e8] sm:$0xff]
        %v2027 = vld [vmem:[%s1815 + $0x4f0] sm:$0xff]
        %v2028 = vld [vmem:[%s1815 + $0x4f8] sm:$0xff]
        %v2029 = vld [vmem:[%s1815 + $0x500] sm:$0xff]
        %v2030 = vld [vmem:[%s1815 + $0x508] sm:$0xff]
        %v2031 = vld [vmem:[%s1815 + $0x510] sm:$0xff]
        %v2032 = vld [vmem:[%s1815 + $0x518] sm:$0xff]
        %v2033 = vld [vmem:[%s1815 + $0x520] sm:$0xff]
        %v2034 = vld [vmem:[%s1815 + $0x528] sm:$0xff]
        %v2035 = vld [vmem:[%s1815 + $0x530] sm:$0xff]
        %v2036 = vld [vmem:[%s1815 + $0x538] sm:$0xff]
        %v2037 = vld [vmem:[%s1815 + $0x540] sm:$0xff]
        %v2038 = vld [vmem:[%s1815 + $0x548] sm:$0xff]
        %v2039 = vld [vmem:[%s1815 + $0x550] sm:$0xff]
        %v2040 = vld [vmem:[%s1815 + $0x558] sm:$0xff]
        %v2041 = vld [vmem:[%s1815 + $0x560] sm:$0xff]
        %v2042 = vld [vmem:[%s1815 + $0x568] sm:$0xff]
        %v2043 = vld [vmem:[%s1815 + $0x570] sm:$0xff]
        %v2044 = vld [vmem:[%s1815 + $0x578] sm:$0xff]
        %v2045 = vld [vmem:[%s1815 + $0x580] sm:$0xff]
        %v2046 = vld [vmem:[%s1815 + $0x588] sm:$0xff]
        %v2047 = vld [vmem:[%s1815 + $0x590] sm:$0xff]
        %v2048 = vld [vmem:[%s1815 + $0x598] sm:$0xff]
        %v2049 = vld [vmem:[%s1815 + $0x5a0] sm:$0xff]
        %v2050 = vld [vmem:[%s1815 + $0x5a8] sm:$0xff]
        %v2051 = vld [vmem:[%s1815 + $0x5b0] sm:$0xff]
        %v2052 = vld [vmem:[%s1815 + $0x5b8] sm:$0xff]
        %v2053 = vld [vmem:[%s1815 + $0x5c0] sm:$0xff]
        %v2054 = vld [vmem:[%s1815 + $0x5c8] sm:$0xff]
        %v2055 = vld [vmem:[%s1815 + $0x5d0] sm:$0xff]
        %v2056 = vld [vmem:[%s1815 + $0x5d8] sm:$0xff]
        %v2057 = vld [vmem:[%s1815 + $0x5e0] sm:$0xff]
        %v2058 = vld [vmem:[%s1815 + $0x5e8] sm:$0xff]
        %v2059 = vld [vmem:[%s1815 + $0x5f0] sm:$0xff]
        %v2060 = vld [vmem:[%s1815 + $0x5f8] sm:$0xff]
        %v2061 = vld [vmem:[%s1815 + $0x600] sm:$0xff]
        %v2062 = vld [vmem:[%s1815 + $0x608] sm:$0xff]
        %v2063 = vld [vmem:[%s1815 + $0x610] sm:$0xff]
        %v2064 = vld [vmem:[%s1815 + $0x618] sm:$0xff]
        %v2065 = vld [vmem:[%s1815 + $0x620] sm:$0xff]
        %v2066 = vld [vmem:[%s1815 + $0x628] sm:$0xff]
        %v2067 = vld [vmem:[%s1815 + $0x630] sm:$0xff]
        %v2068 = vld [vmem:[%s1815 + $0x638] sm:$0xff]
        %v2069 = vld [vmem:[%s1815 + $0x640] sm:$0xff]
        %v2070 = vld [vmem:[%s1815 + $0x648] sm:$0xff]
        %v2071 = vld [vmem:[%s1815 + $0x650] sm:$0xff]
        %v2072 = vld [vmem:[%s1815 + $0x658] sm:$0xff]
        %v2073 = vld [vmem:[%s1815 + $0x660] sm:$0xff]
        %v2074 = vld [vmem:[%s1815 + $0x668] sm:$0xff]
        %v2075 = vld [vmem:[%s1815 + $0x670] sm:$0xff]
        %v2076 = vld [vmem:[%s1815 + $0x678] sm:$0xff]
        %v2077 = vld [vmem:[%s1815 + $0x680] sm:$0xff]
        %v2078 = vld [vmem:[%s1815 + $0x688] sm:$0xff]
        %v2079 = vld [vmem:[%s1815 + $0x690] sm:$0xff]
        %v2080 = vld [vmem:[%s1815 + $0x698] sm:$0xff]
        %v2081 = vld [vmem:[%s1815 + $0x6a0] sm:$0xff]
        %v2082 = vld [vmem:[%s1815 + $0x6a8] sm:$0xff]
        %v2083 = vld [vmem:[%s1815 + $0x6b0] sm:$0xff]
        %v2084 = vld [vmem:[%s1815 + $0x6b8] sm:$0xff]
        %v2085 = vld [vmem:[%s1815 + $0x6c0] sm:$0xff]
        %v2086 = vld [vmem:[%s1815 + $0x6c8] sm:$0xff]
        %v2087 = vld [vmem:[%s1815 + $0x6d0] sm:$0xff]
        %v2088 = vld [vmem:[%s1815 + $0x6d8] sm:$0xff]
        %v2089 = vld [vmem:[%s1815 + $0x6e0] sm:$0xff]
        %v2090 = vld [vmem:[%s1815 + $0x6e8] sm:$0xff]
        %v2091 = vld [vmem:[%s1815 + $0x6f0] sm:$0xff]
        %v2092 = vld [vmem:[%s1815 + $0x6f8] sm:$0xff]
        %v2093 = vld [vmem:[%s1815 + $0x700] sm:$0xff]
        %v2094 = vld [vmem:[%s1815 + $0x708] sm:$0xff]
        %v2095 = vld [vmem:[%s1815 + $0x710] sm:$0xff]
        %v2096 = vld [vmem:[%s1815 + $0x718] sm:$0xff]
        %v2097 = vld [vmem:[%s1815 + $0x720] sm:$0xff]
        %v2098 = vld [vmem:[%s1815 + $0x728] sm:$0xff]
        %v2099 = vld [vmem:[%s1815 + $0x730] sm:$0xff]
        %v2100 = vld [vmem:[%s1815 + $0x738] sm:$0xff]
        %v2101 = vld [vmem:[%s1815 + $0x740] sm:$0xff]
        %v2102 = vld [vmem:[%s1815 + $0x748] sm:$0xff]
        %v2103 = vld [vmem:[%s1815 + $0x750] sm:$0xff]
        %v2104 = vld [vmem:[%s1815 + $0x758] sm:$0xff]
        %v2105 = vld [vmem:[%s1815 + $0x760] sm:$0xff]
        %v2106 = vld [vmem:[%s1815 + $0x768] sm:$0xff]
        %v2107 = vld [vmem:[%s1815 + $0x770] sm:$0xff]
        %v2108 = vld [vmem:[%s1815 + $0x778] sm:$0xff]
        %v2109 = vld [vmem:[%s1815 + $0x780] sm:$0xff]
        %v2110 = vld [vmem:[%s1815 + $0x788] sm:$0xff]
        %v2111 = vld [vmem:[%s1815 + $0x790] sm:$0xff]
        %v2112 = vld [vmem:[%s1815 + $0x798] sm:$0xff]
        %v2113 = vld [vmem:[%s1815 + $0x7a0] sm:$0xff]
        %v2114 = vld [vmem:[%s1815 + $0x7a8] sm:$0xff]
        %v2115 = vld [vmem:[%s1815 + $0x7b0] sm:$0xff]
        %v2116 = vld [vmem:[%s1815 + $0x7b8] sm:$0xff]
        %v2117 = vld [vmem:[%s1815 + $0x7c0] sm:$0xff]
        %v2118 = vld [vmem:[%s1815 + $0x7c8] sm:$0xff]
        %v2119 = vld [vmem:[%s1815 + $0x7d0] sm:$0xff]
        %v2120 = vld [vmem:[%s1815 + $0x7d8] sm:$0xff]
        %v2121 = vld [vmem:[%s1815 + $0x7e0] sm:$0xff]
        %v2122 = vld [vmem:[%s1815 + $0x7e8] sm:$0xff]
        %v2123 = vld [vmem:[%s1815 + $0x7f0] sm:$0xff]
        %v2124 = vld [vmem:[%s1815 + $0x7f8] sm:$0xff]
        %v2125 = vld [vmem:[%s1815 + $0x800] sm:$0xff]
        %v2126 = vld [vmem:[%s1815 + $0x808] sm:$0xff]
        %v2127 = vld [vmem:[%s1815 + $0x810] sm:$0xff]
        %v2128 = vld [vmem:[%s1815 + $0x818] sm:$0xff]
        %v2129 = vld [vmem:[%s1815 + $0x820] sm:$0xff]
        %v2130 = vld [vmem:[%s1815 + $0x828] sm:$0xff]
        %v2131 = vld [vmem:[%s1815 + $0x830] sm:$0xff]
        %v2132 = vld [vmem:[%s1815 + $0x838] sm:$0xff]
        %v2133 = vld [vmem:[%s1815 + $0x840] sm:$0xff]
        %v2134 = vld [vmem:[%s1815 + $0x848] sm:$0xff]
        %v2135 = vld [vmem:[%s1815 + $0x850] sm:$0xff]
        %v2136 = vld [vmem:[%s1815 + $0x858] sm:$0xff]
        %v2137 = vld [vmem:[%s1815 + $0x860] sm:$0xff]
        %v2138 = vld [vmem:[%s1815 + $0x868] sm:$0xff]
        %v2139 = vld [vmem:[%s1815 + $0x870] sm:$0xff]
        %v2140 = vld [vmem:[%s1815 + $0x878] sm:$0xff]
        %v2141 = vld [vmem:[%s1815 + $0x880] sm:$0xff]
        %v2142 = vld [vmem:[%s1815 + $0x888] sm:$0xff]
        %v2143 = vld [vmem:[%s1815 + $0x890] sm:$0xff]
        %v2144 = vld [vmem:[%s1815 + $0x898] sm:$0xff]
        %v2145 = vld [vmem:[%s1815 + $0x8a0] sm:$0xff]
        %v2146 = vld [vmem:[%s1815 + $0x8a8] sm:$0xff]
        %v2147 = vld [vmem:[%s1815 + $0x8b0] sm:$0xff]
        %v2148 = vld [vmem:[%s1815 + $0x8b8] sm:$0xff]
        %v2149 = vld [vmem:[%s1815 + $0x8c0] sm:$0xff]
        %v2150 = vld [vmem:[%s1815 + $0x8c8] sm:$0xff]
        %v2151 = vld [vmem:[%s1815 + $0x8d0] sm:$0xff]
        %v2152 = vld [vmem:[%s1815 + $0x8d8] sm:$0xff]
        %v2153 = vld [vmem:[%s1815 + $0x8e0] sm:$0xff]
        %v2154 = vld [vmem:[%s1815 + $0x8e8] sm:$0xff]
        %v2155 = vld [vmem:[%s1815 + $0x8f0] sm:$0xff]
        %v2156 = vld [vmem:[%s1815 + $0x8f8] sm:$0xff]
        %v2157 = vld [vmem:[%s1815 + $0x900] sm:$0xff]
        %v2158 = vld [vmem:[%s1815 + $0x908] sm:$0xff]
        %v2159 = vld [vmem:[%s1815 + $0x910] sm:$0xff]
        %v2160 = vld [vmem:[%s1815 + $0x918] sm:$0xff]
        %v2161 = vld [vmem:[%s1815 + $0x920] sm:$0xff]
        %v2162 = vld [vmem:[%s1815 + $0x928] sm:$0xff]
        %v2163 = vld [vmem:[%s1815 + $0x930] sm:$0xff]
        %v2164 = vld [vmem:[%s1815 + $0x938] sm:$0xff]
        %v2165 = vld [vmem:[%s1815 + $0x940] sm:$0xff]
        %v2166 = vld [vmem:[%s1815 + $0x948] sm:$0xff]
        %v2167 = vld [vmem:[%s1815 + $0x950] sm:$0xff]
        %v2168 = vld [vmem:[%s1815 + $0x958] sm:$0xff]
        %v2169 = vld [vmem:[%s1815 + $0x960] sm:$0xff]
        %v2170 = vld [vmem:[%s1815 + $0x968] sm:$0xff]
        %v2171 = vld [vmem:[%s1815 + $0x970] sm:$0xff]
        %v2172 = vld [vmem:[%s1815 + $0x978] sm:$0xff]
        %v2173 = vld [vmem:[%s1815 + $0x980] sm:$0xff]
        %v2174 = vld [vmem:[%s1815 + $0x988] sm:$0xff]
        %v2175 = vld [vmem:[%s1815 + $0x990] sm:$0xff]
        %v2176 = vld [vmem:[%s1815 + $0x998] sm:$0xff]
        %v2177 = vld [vmem:[%s1815 + $0x9a0] sm:$0xff]
        %v2178 = vld [vmem:[%s1815 + $0x9a8] sm:$0xff]
        %v2179 = vld [vmem:[%s1815 + $0x9b0] sm:$0xff]
        %v2180 = vld [vmem:[%s1815 + $0x9b8] sm:$0xff]
        %v2181 = vld [vmem:[%s1815 + $0x9c0] sm:$0xff]
        %v2182 = vld [vmem:[%s1815 + $0x9c8] sm:$0xff]
        %v2183 = vld [vmem:[%s1815 + $0x9d0] sm:$0xff]
        %v2184 = vld [vmem:[%s1815 + $0x9d8] sm:$0xff]
        %v2185 = vld [vmem:[%s1815 + $0x9e0] sm:$0xff]
        %v2186 = vld [vmem:[%s1815 + $0x9e8] sm:$0xff]
        %v2187 = vld [vmem:[%s1815 + $0x9f0] sm:$0xff]
        %v2188 = vld [vmem:[%s1815 + $0x9f8] sm:$0xff]
        %v2189 = vld [vmem:[%s1815 + $0xa00] sm:$0xff]
        %v2190 = vld [vmem:[%s1815 + $0xa08] sm:$0xff]
        %v2191 = vld [vmem:[%s1815 + $0xa10] sm:$0xff]
        %v2192 = vld [vmem:[%s1815 + $0xa18] sm:$0xff]
        %v2193 = vld [vmem:[%s1815 + $0xa20] sm:$0xff]
        %v2194 = vld [vmem:[%s1815 + $0xa28] sm:$0xff]
        %v2195 = vld [vmem:[%s1815 + $0xa30] sm:$0xff]
        %v2196 = vld [vmem:[%s1815 + $0xa38] sm:$0xff]
        %v2197 = vld [vmem:[%s1815 + $0xa40] sm:$0xff]
        %v2198 = vld [vmem:[%s1815 + $0xa48] sm:$0xff]
        %v2199 = vld [vmem:[%s1815 + $0xa50] sm:$0xff]
        %v2200 = vld [vmem:[%s1815 + $0xa58] sm:$0xff]
        %v2201 = vld [vmem:[%s1815 + $0xa60] sm:$0xff]
        %v2202 = vld [vmem:[%s1815 + $0xa68] sm:$0xff]
        %v2203 = vld [vmem:[%s1815 + $0xa70] sm:$0xff]
        %v2204 = vld [vmem:[%s1815 + $0xa78] sm:$0xff]
        %v2205 = vld [vmem:[%s1815 + $0xa80] sm:$0xff]
        %v2206 = vld [vmem:[%s1815 + $0xa88] sm:$0xff]
        %v2207 = vld [vmem:[%s1815 + $0xa90] sm:$0xff]
        %v2208 = vld [vmem:[%s1815 + $0xa98] sm:$0xff]
        %v2209 = vld [vmem:[%s1815 + $0xaa0] sm:$0xff]
        %v2210 = vld [vmem:[%s1815 + $0xaa8] sm:$0xff]
        %v2211 = vld [vmem:[%s1815 + $0xab0] sm:$0xff]
        %v2212 = vld [vmem:[%s1815 + $0xab8] sm:$0xff]
        %v2213 = vld [vmem:[%s1815 + $0xac0] sm:$0xff]
        %v2214 = vld [vmem:[%s1815 + $0xac8] sm:$0xff]
        %v2215 = vld [vmem:[%s1815 + $0xad0] sm:$0xff]
        %v2216 = vld [vmem:[%s1815 + $0xad8] sm:$0xff]
        %v2217 = vld [vmem:[%s1815 + $0xae0] sm:$0xff]
        %v2218 = vld [vmem:[%s1815 + $0xae8] sm:$0xff]
        %v2219 = vld [vmem:[%s1815 + $0xaf0] sm:$0xff]
        %v2220 = vld [vmem:[%s1815 + $0xaf8] sm:$0xff]
        %v2221 = vld [vmem:[%s1815 + $0xb00] sm:$0xff]
        %v2222 = vld [vmem:[%s1815 + $0xb08] sm:$0xff]
        %v2223 = vld [vmem:[%s1815 + $0xb10] sm:$0xff]
        %v2224 = vld [vmem:[%s1815 + $0xb18] sm:$0xff]
        %v2225 = vld [vmem:[%s1815 + $0xb20] sm:$0xff]
        %v2226 = vld [vmem:[%s1815 + $0xb28] sm:$0xff]
        %v2227 = vld [vmem:[%s1815 + $0xb30] sm:$0xff]
        %v2228 = vld [vmem:[%s1815 + $0xb38] sm:$0xff]
        %v2229 = vld [vmem:[%s1815 + $0xb40] sm:$0xff]
        %v2230 = vld [vmem:[%s1815 + $0xb48] sm:$0xff]
        %v2231 = vld [vmem:[%s1815 + $0xb50] sm:$0xff]
        %v2232 = vld [vmem:[%s1815 + $0xb58] sm:$0xff]
        %v2233 = vld [vmem:[%s1815 + $0xb60] sm:$0xff]
        %v2234 = vld [vmem:[%s1815 + $0xb68] sm:$0xff]
        %v2235 = vld [vmem:[%s1815 + $0xb70] sm:$0xff]
        %v2236 = vld [vmem:[%s1815 + $0xb78] sm:$0xff]
        %v2237 = vld [vmem:[%s1815 + $0xb80] sm:$0xff]
        %v2238 = vld [vmem:[%s1815 + $0xb88] sm:$0xff]
        %v2239 = vld [vmem:[%s1815 + $0xb90] sm:$0xff]
        %v2240 = vld [vmem:[%s1815 + $0xb98] sm:$0xff]
        %v2241 = vld [vmem:[%s1815 + $0xba0] sm:$0xff]
        %v2242 = vld [vmem:[%s1815 + $0xba8] sm:$0xff]
        %v2243 = vld [vmem:[%s1815 + $0xbb0] sm:$0xff]
        %v2244 = vld [vmem:[%s1815 + $0xbb8] sm:$0xff]
        %v2245 = vld [vmem:[%s1815 + $0xbc0] sm:$0xff]
        %v2246 = vld [vmem:[%s1815 + $0xbc8] sm:$0xff]
        %v2247 = vld [vmem:[%s1815 + $0xbd0] sm:$0xff]
        %v2248 = vld [vmem:[%s1815 + $0xbd8] sm:$0xff]
        %v2249 = vld [vmem:[%s1815 + $0xbe0] sm:$0xff]
        %v2250 = vld [vmem:[%s1815 + $0xbe8] sm:$0xff]
        %v2251 = vld [vmem:[%s1815 + $0xbf0] sm:$0xff]
        %v2252 = vld [vmem:[%s1815 + $0xbf8] sm:$0xff]
        %v2253 = vld [vmem:[%s1815 + $0xc00] sm:$0xff]
        %v2254 = vld [vmem:[%s1815 + $0xc08] sm:$0xff]
        %v2255 = vld [vmem:[%s1815 + $0xc10] sm:$0xff]
        %v2256 = vld [vmem:[%s1815 + $0xc18] sm:$0xff]
        %v2257 = vld [vmem:[%s1815 + $0xc20] sm:$0xff]
        %v2258 = vld [vmem:[%s1815 + $0xc28] sm:$0xff]
        %v2259 = vld [vmem:[%s1815 + $0xc30] sm:$0xff]
        %v2260 = vld [vmem:[%s1815 + $0xc38] sm:$0xff]
        %v2261 = vld [vmem:[%s1852] sm:$0x3]
        %v2263 = vlaneseq
        %v2264 = vshrl.u32 %v2263, 7
        %v2265 = vsub.s32 0, %v2264
        %v2266 = vrot.slane %v2261, %v2265
        %v2267 = vlaneseq
        %v2268 = vshrl.u32 %v2267, 7
        %v2269 = vsub.s32 1, %v2268
        %v2270 = vrot.slane %v2261, %v2269
        %v2277 = vcombine.high %v1865, %v1865
        %v2279 = vunpack.c.l.s4 1966171168
        %v2280 = vunpack.c.0.s8 %v2279
        %v2281 = vlaneseq
        %v2282 = vshrl.u32 %v2281, 7
        %v2283 = vsub.s32 %v2280, %v2282
        %v2284 = vrot.slane %v1865, %v2283
        %v2286 = vunpack.c.l.s4 1966171168
        %v2287 = vunpack.c.0.s8 %v2286
        %v2288 = vlaneseq
        %v2289 = vshrl.u32 %v2288, 7
        %v2290 = vsub.s32 %v2287, %v2289
        %v2291 = vrot.slane %v2277, %v2290
        %v2292 = vcombine.high %v2284, %v2284
        %v2293 = vcombine.high %v2291, %v2291
        %v2295 = vunpack.c.l.s4 1966171168
        %v2296 = vunpack.c.0.s8 %v2295
        %v2297 = vlaneseq
        %v2298 = vshrl.u32 %v2297, 7
        %v2299 = vsub.s32 %v2296, %v2298
        %v2300 = vrot.slane %v2284, %v2299
        %v2302 = vunpack.c.l.s4 1966171168
        %v2303 = vunpack.c.0.s8 %v2302
        %v2304 = vlaneseq
        %v2305 = vshrl.u32 %v2304, 7
        %v2306 = vsub.s32 %v2303, %v2305
        %v2307 = vrot.slane %v2291, %v2306
        %v2309 = vunpack.c.l.s4 1966171168
        %v2310 = vunpack.c.0.s8 %v2309
        %v2311 = vlaneseq
        %v2312 = vshrl.u32 %v2311, 7
        %v2313 = vsub.s32 %v2310, %v2312
        %v2314 = vrot.slane %v2292, %v2313
        %v2316 = vunpack.c.l.s4 1966171168
        %v2317 = vunpack.c.0.s8 %v2316
        %v2318 = vlaneseq
        %v2319 = vshrl.u32 %v2318, 7
        %v2320 = vsub.s32 %v2317, %v2319
        %v2321 = vrot.slane %v2293, %v2320
        %v2322 = vcombine.high %v2300, %v2300
        %v2323 = vcombine.high %v2307, %v2307
        %v2324 = vcombine.high %v2314, %v2314
        %v2325 = vcombine.high %v2321, %v2321
        %v2326 = vcombine.high %v1866, %v1866
        %v2328 = vunpack.c.l.s4 1966171168
        %v2329 = vunpack.c.0.s8 %v2328
        %v2330 = vlaneseq
        %v2331 = vshrl.u32 %v2330, 7
        %v2332 = vsub.s32 %v2329, %v2331
        %v2333 = vrot.slane %v1866, %v2332
        %v2335 = vunpack.c.l.s4 1966171168
        %v2336 = vunpack.c.0.s8 %v2335
        %v2337 = vlaneseq
        %v2338 = vshrl.u32 %v2337, 7
        %v2339 = vsub.s32 %v2336, %v2338
        %v2340 = vrot.slane %v2326, %v2339
        %v2341 = vcombine.high %v2333, %v2333
        %v2342 = vcombine.high %v2340, %v2340
        %v2344 = vunpack.c.l.s4 1966171168
        %v2345 = vunpack.c.0.s8 %v2344
        %v2346 = vlaneseq
        %v2347 = vshrl.u32 %v2346, 7
        %v2348 = vsub.s32 %v2345, %v2347
        %v2349 = vrot.slane %v2333, %v2348
        %v2351 = vunpack.c.l.s4 1966171168
        %v2352 = vunpack.c.0.s8 %v2351
        %v2353 = vlaneseq
        %v2354 = vshrl.u32 %v2353, 7
        %v2355 = vsub.s32 %v2352, %v2354
        %v2356 = vrot.slane %v2340, %v2355
        %v2358 = vunpack.c.l.s4 1966171168
        %v2359 = vunpack.c.0.s8 %v2358
        %v2360 = vlaneseq
        %v2361 = vshrl.u32 %v2360, 7
        %v2362 = vsub.s32 %v2359, %v2361
        %v2363 = vrot.slane %v2341, %v2362
        %v2365 = vunpack.c.l.s4 1966171168
        %v2366 = vunpack.c.0.s8 %v2365
        %v2367 = vlaneseq
        %v2368 = vshrl.u32 %v2367, 7
        %v2369 = vsub.s32 %v2366, %v2368
        %v2370 = vrot.slane %v2342, %v2369
        %v2371 = vcombine.high %v2349, %v2349
        %v2372 = vcombine.high %v2356, %v2356
        %v2373 = vcombine.high %v2363, %v2363
        %v2374 = vcombine.high %v2370, %v2370
        %v2375 = vcombine.high %v1867, %v1867
        %v2377 = vunpack.c.l.s4 1966171168
        %v2378 = vunpack.c.0.s8 %v2377
        %v2379 = vlaneseq
        %v2380 = vshrl.u32 %v2379, 7
        %v2381 = vsub.s32 %v2378, %v2380
        %v2382 = vrot.slane %v1867, %v2381
        %v2384 = vunpack.c.l.s4 1966171168
        %v2385 = vunpack.c.0.s8 %v2384
        %v2386 = vlaneseq
        %v2387 = vshrl.u32 %v2386, 7
        %v2388 = vsub.s32 %v2385, %v2387
        %v2389 = vrot.slane %v2375, %v2388
        %v2390 = vcombine.high %v2382, %v2382
        %v2391 = vcombine.high %v2389, %v2389
        %v2393 = vunpack.c.l.s4 1966171168
        %v2394 = vunpack.c.0.s8 %v2393
        %v2395 = vlaneseq
        %v2396 = vshrl.u32 %v2395, 7
        %v2397 = vsub.s32 %v2394, %v2396
        %v2398 = vrot.slane %v2382, %v2397
        %v2400 = vunpack.c.l.s4 1966171168
        %v2401 = vunpack.c.0.s8 %v2400
        %v2402 = vlaneseq
        %v2403 = vshrl.u32 %v2402, 7
        %v2404 = vsub.s32 %v2401, %v2403
        %v2405 = vrot.slane %v2389, %v2404
        %v2407 = vunpack.c.l.s4 1966171168
        %v2408 = vunpack.c.0.s8 %v2407
        %v2409 = vlaneseq
        %v2410 = vshrl.u32 %v2409, 7
        %v2411 = vsub.s32 %v2408, %v2410
        %v2412 = vrot.slane %v2390, %v2411
        %v2414 = vunpack.c.l.s4 1966171168
        %v2415 = vunpack.c.0.s8 %v2414
        %v2416 = vlaneseq
        %v2417 = vshrl.u32 %v2416, 7
        %v2418 = vsub.s32 %v2415, %v2417
        %v2419 = vrot.slane %v2391, %v2418
        %v2420 = vcombine.high %v2398, %v2398
        %v2421 = vcombine.high %v2405, %v2405
        %v2422 = vcombine.high %v2412, %v2412
        %v2423 = vcombine.high %v2419, %v2419
        %v2425 = vunpack.c.l.s4 1966171168
        %v2426 = vunpack.c.0.s8 %v2425
        %v2427 = vlaneseq
        %v2428 = vshrl.u32 %v2427, 7
        %v2429 = vsub.s32 %v2426, %v2428
        %v2430 = vrot.slane %v1868, %v2429
        %v2432 = vunpack.c.l.s4 1966171168
        %v2433 = vunpack.c.0.s8 %v2432
        %v2434 = vlaneseq
        %v2435 = vshrl.u32 %v2434, 7
        %v2436 = vsub.s32 %v2433, %v2435
        %v2437 = vrot.slane %v2430, %v2436
        %v2854 = vunpack.c.l.b16 %v1869
        %v2855 = vunpack.c.h.b16 %v1869
        %v2856 = vunpack.c.l.b16 %v1870
        %v2857 = vunpack.c.h.b16 %v1870
        %v2858 = vunpack.c.l.b16 %v1871
        %v2859 = vunpack.c.h.b16 %v1871
        %v2860 = vunpack.c.l.b16 %v1872
        %v2861 = vunpack.c.h.b16 %v1872
        %v2862 = vunpack.c.l.b16 %v1873
        %v2863 = vunpack.c.h.b16 %v1873
        %v2864 = vunpack.c.l.b16 %v1874
        %v2865 = vunpack.c.h.b16 %v1874
        %v2866 = vunpack.c.l.b16 %v1875
        %v2867 = vunpack.c.h.b16 %v1875
        %v2868 = vunpack.c.l.b16 %v1876
        %v2869 = vunpack.c.h.b16 %v1876
        %v2870 = vunpack.c.l.b16 %v1877
        %v2871 = vunpack.c.h.b16 %v1877
        %v2872 = vunpack.c.l.b16 %v1878
        %v2873 = vunpack.c.h.b16 %v1878
        %v2874 = vunpack.c.l.b16 %v1879
        %v2875 = vunpack.c.h.b16 %v1879
        %v2876 = vunpack.c.l.b16 %v1880
        %v2877 = vunpack.c.h.b16 %v1880
        %v2878 = vunpack.c.l.b16 %v1881
        %v2879 = vunpack.c.h.b16 %v1881
        %v2880 = vunpack.c.l.b16 %v1882
        %v2881 = vunpack.c.h.b16 %v1882
        %v2882 = vunpack.c.l.b16 %v1883
        %v2883 = vunpack.c.h.b16 %v1883
        %v2884 = vunpack.c.l.b16 %v1884
        %v2885 = vunpack.c.h.b16 %v1884
        %v2886 = vunpack.c.l.b16 %v1885
        %v2887 = vunpack.c.h.b16 %v1885
        %v2888 = vunpack.c.l.b16 %v1886
        %v2889 = vunpack.c.h.b16 %v1886
        %v2890 = vunpack.c.l.b16 %v1887
        %v2891 = vunpack.c.h.b16 %v1887
        %v2892 = vunpack.c.l.b16 %v1888
        %v2893 = vunpack.c.h.b16 %v1888
        %v2894 = vunpack.c.l.b16 %v1889
        %v2895 = vunpack.c.h.b16 %v1889
        %v2896 = vunpack.c.l.b16 %v1890
        %v2897 = vunpack.c.h.b16 %v1890
        %v2898 = vunpack.c.l.b16 %v1891
        %v2899 = vunpack.c.h.b16 %v1891
        %v2900 = vunpack.c.l.b16 %v1892
        %v2901 = vunpack.c.h.b16 %v1892
        %v2902 = vunpack.c.l.b16 %v1893
        %v2903 = vunpack.c.h.b16 %v1893
        %v2904 = vunpack.c.l.b16 %v1894
        %v2905 = vunpack.c.h.b16 %v1894
        %v2906 = vunpack.c.l.b16 %v1895
        %v2907 = vunpack.c.h.b16 %v1895
        %v2908 = vunpack.c.l.b16 %v1896
        %v2909 = vunpack.c.h.b16 %v1896
        %v2910 = vunpack.c.l.b16 %v1897
        %v2911 = vunpack.c.h.b16 %v1897
        %v2912 = vunpack.c.l.b16 %v1898
        %v2913 = vunpack.c.h.b16 %v1898
        %v2914 = vunpack.c.l.b16 %v1899
        %v2915 = vunpack.c.h.b16 %v1899
        %v2916 = vunpack.c.l.b16 %v1900
        %v2917 = vunpack.c.h.b16 %v1900
        %v2918 = vunpack.c.l.b16 %v1901
        %v2919 = vunpack.c.h.b16 %v1901
        %v2920 = vunpack.c.l.b16 %v1902
        %v2921 = vunpack.c.h.b16 %v1902
        %v2922 = vunpack.c.l.b16 %v1903
        %v2923 = vunpack.c.h.b16 %v1903
        %v2924 = vunpack.c.l.b16 %v1904
        %v2925 = vunpack.c.h.b16 %v1904
        %v2926 = vunpack.c.l.b16 %v1905
        %v2927 = vunpack.c.h.b16 %v1905
        %v2928 = vunpack.c.l.b16 %v1906
        %v2929 = vunpack.c.h.b16 %v1906
        %v2930 = vunpack.c.l.b16 %v1907
        %v2931 = vunpack.c.h.b16 %v1907
        %v2932 = vunpack.c.l.b16 %v1908
        %v2933 = vunpack.c.h.b16 %v1908
        %v2934 = vunpack.c.l.b16 %v1909
        %v2935 = vunpack.c.h.b16 %v1909
        %v2936 = vunpack.c.l.b16 %v1910
        %v2937 = vunpack.c.h.b16 %v1910
        %v2938 = vunpack.c.l.b16 %v1911
        %v2939 = vunpack.c.h.b16 %v1911
        %v2940 = vunpack.c.l.b16 %v1912
        %v2941 = vunpack.c.h.b16 %v1912
        %v2942 = vunpack.c.l.b16 %v1913
        %v2943 = vunpack.c.h.b16 %v1913
        %v2944 = vunpack.c.l.b16 %v1914
        %v2945 = vunpack.c.h.b16 %v1914
        %v2946 = vunpack.c.l.b16 %v1915
        %v2947 = vunpack.c.h.b16 %v1915
        %v2948 = vunpack.c.l.b16 %v1916
        %v2949 = vunpack.c.h.b16 %v1916
        %v2950 = vunpack.c.l.b16 %v1917
        %v2951 = vunpack.c.h.b16 %v1917
        %v2952 = vunpack.c.l.b16 %v1918
        %v2953 = vunpack.c.h.b16 %v1918
        %v2954 = vunpack.c.l.b16 %v1919
        %v2955 = vunpack.c.h.b16 %v1919
        %v2956 = vunpack.c.l.b16 %v1920
        %v2957 = vunpack.c.h.b16 %v1920
        %v2958 = vunpack.c.l.b16 %v1921
        %v2959 = vunpack.c.h.b16 %v1921
        %v2960 = vunpack.c.l.b16 %v1922
        %v2961 = vunpack.c.h.b16 %v1922
        %v2962 = vunpack.c.l.b16 %v1923
        %v2963 = vunpack.c.h.b16 %v1923
        %v2964 = vunpack.c.l.b16 %v1924
        %v2965 = vunpack.c.h.b16 %v1924
        %v2966 = vunpack.c.l.b16 %v1925
        %v2967 = vunpack.c.h.b16 %v1925
        %v2968 = vunpack.c.l.b16 %v1926
        %v2969 = vunpack.c.h.b16 %v1926
        %v2970 = vunpack.c.l.b16 %v1927
        %v2971 = vunpack.c.h.b16 %v1927
        %v2972 = vunpack.c.l.b16 %v1928
        %v2973 = vunpack.c.h.b16 %v1928
        %v2974 = vunpack.c.l.b16 %v1929
        %v2975 = vunpack.c.h.b16 %v1929
        %v2976 = vunpack.c.l.b16 %v1930
        %v2977 = vunpack.c.h.b16 %v1930
        %v2978 = vunpack.c.l.b16 %v1931
        %v2979 = vunpack.c.h.b16 %v1931
        %v2980 = vunpack.c.l.b16 %v1932
        %v2981 = vunpack.c.h.b16 %v1932
        %v2982 = vunpack.c.l.b16 %v1933
        %v2983 = vunpack.c.h.b16 %v1933
        %v2984 = vunpack.c.l.b16 %v1934
        %v2985 = vunpack.c.h.b16 %v1934
        %v2986 = vunpack.c.l.b16 %v1935
        %v2987 = vunpack.c.h.b16 %v1935
        %v2988 = vunpack.c.l.b16 %v1936
        %v2989 = vunpack.c.h.b16 %v1936
        %v2990 = vunpack.c.l.b16 %v1937
        %v2991 = vunpack.c.h.b16 %v1937
        %v2992 = vunpack.c.l.b16 %v1938
        %v2993 = vunpack.c.h.b16 %v1938
        %v2994 = vunpack.c.l.b16 %v1939
        %v2995 = vunpack.c.h.b16 %v1939
        %v2996 = vunpack.c.l.b16 %v1940
        %v2997 = vunpack.c.h.b16 %v1940
        %v2998 = vunpack.c.l.b16 %v1941
        %v2999 = vunpack.c.h.b16 %v1941
        %v3000 = vunpack.c.l.b16 %v1942
        %v3001 = vunpack.c.h.b16 %v1942
        %v3002 = vunpack.c.l.b16 %v1943
        %v3003 = vunpack.c.h.b16 %v1943
        %v3004 = vunpack.c.l.b16 %v1944
        %v3005 = vunpack.c.h.b16 %v1944
        %v3006 = vunpack.c.l.b16 %v1945
        %v3007 = vunpack.c.h.b16 %v1945
        %v3008 = vunpack.c.l.b16 %v1946
        %v3009 = vunpack.c.h.b16 %v1946
        %v3010 = vunpack.c.l.b16 %v1947
        %v3011 = vunpack.c.h.b16 %v1947
        %v3012 = vunpack.c.l.b16 %v1948
        %v3013 = vunpack.c.h.b16 %v1948
        %v3014 = vunpack.c.l.b16 %v1949
        %v3015 = vunpack.c.h.b16 %v1949
        %v3016 = vunpack.c.l.b16 %v1950
        %v3017 = vunpack.c.h.b16 %v1950
        %v3018 = vunpack.c.l.b16 %v1951
        %v3019 = vunpack.c.h.b16 %v1951
        %v3020 = vunpack.c.l.b16 %v1952
        %v3021 = vunpack.c.h.b16 %v1952
        %v3022 = vunpack.c.l.b16 %v1953
        %v3023 = vunpack.c.h.b16 %v1953
        %v3024 = vunpack.c.l.b16 %v1954
        %v3025 = vunpack.c.h.b16 %v1954
        %v3026 = vunpack.c.l.b16 %v1955
        %v3027 = vunpack.c.h.b16 %v1955
        %v3028 = vunpack.c.l.b16 %v1956
        %v3029 = vunpack.c.h.b16 %v1956
        %v3030 = vunpack.c.l.b16 %v1957
        %v3031 = vunpack.c.h.b16 %v1957
        %v3032 = vunpack.c.l.b16 %v1958
        %v3033 = vunpack.c.h.b16 %v1958
        %v3034 = vunpack.c.l.b16 %v1959
        %v3035 = vunpack.c.h.b16 %v1959
        %v3036 = vunpack.c.l.b16 %v1960
        %v3037 = vunpack.c.h.b16 %v1960
        %v3038 = vunpack.c.l.b16 %v1961
        %v3039 = vunpack.c.h.b16 %v1961
        %v3040 = vunpack.c.l.b16 %v1962
        %v3041 = vunpack.c.h.b16 %v1962
        %v3042 = vunpack.c.l.b16 %v1963
        %v3043 = vunpack.c.h.b16 %v1963
        %v3044 = vunpack.c.l.b16 %v1964
        %v3045 = vunpack.c.h.b16 %v1964
        %v3046 = vunpack.c.l.b16 %v1965
        %v3047 = vunpack.c.h.b16 %v1965
        %v3048 = vunpack.c.l.b16 %v1966
        %v3049 = vunpack.c.h.b16 %v1966
        %v3050 = vunpack.c.l.b16 %v1967
        %v3051 = vunpack.c.h.b16 %v1967
        %v3052 = vunpack.c.l.b16 %v1968
        %v3053 = vunpack.c.h.b16 %v1968
        %v3054 = vunpack.c.l.b16 %v1969
        %v3055 = vunpack.c.h.b16 %v1969
        %v3056 = vunpack.c.l.b16 %v1970
        %v3057 = vunpack.c.h.b16 %v1970
        %v3058 = vunpack.c.l.b16 %v1971
        %v3059 = vunpack.c.h.b16 %v1971
        %v3060 = vunpack.c.l.b16 %v1972
        %v3061 = vunpack.c.h.b16 %v1972
        %v3062 = vunpack.c.l.b16 %v1973
        %v3063 = vunpack.c.h.b16 %v1973
        %v3064 = vunpack.c.l.b16 %v1974
        %v3065 = vunpack.c.h.b16 %v1974
        %v3066 = vunpack.c.l.b16 %v1975
        %v3067 = vunpack.c.h.b16 %v1975
        %v3068 = vunpack.c.l.b16 %v1976
        %v3069 = vunpack.c.h.b16 %v1976
        %v3070 = vunpack.c.l.b16 %v1977
        %v3071 = vunpack.c.h.b16 %v1977
        %v3072 = vunpack.c.l.b16 %v1978
        %v3073 = vunpack.c.h.b16 %v1978
        %v3074 = vunpack.c.l.b16 %v1979
        %v3075 = vunpack.c.h.b16 %v1979
        %v3076 = vunpack.c.l.b16 %v1980
        %v3077 = vunpack.c.h.b16 %v1980
        %v3078 = vunpack.c.l.b16 %v1981
        %v3079 = vunpack.c.h.b16 %v1981
        %v3080 = vunpack.c.l.b16 %v1982
        %v3081 = vunpack.c.h.b16 %v1982
        %v3082 = vunpack.c.l.b16 %v1983
        %v3083 = vunpack.c.h.b16 %v1983
        %v3084 = vunpack.c.l.b16 %v1984
        %v3085 = vunpack.c.h.b16 %v1984
        %v3086 = vunpack.c.l.b16 %v1985
        %v3087 = vunpack.c.h.b16 %v1985
        %v3088 = vunpack.c.l.b16 %v1986
        %v3089 = vunpack.c.h.b16 %v1986
        %v3090 = vunpack.c.l.b16 %v1987
        %v3091 = vunpack.c.h.b16 %v1987
        %v3092 = vunpack.c.l.b16 %v1988
        %v3093 = vunpack.c.h.b16 %v1988
        %v3094 = vunpack.c.l.b16 %v1989
        %v3095 = vunpack.c.h.b16 %v1989
        %v3096 = vunpack.c.l.b16 %v1990
        %v3097 = vunpack.c.h.b16 %v1990
        %v3098 = vunpack.c.l.b16 %v1991
        %v3099 = vunpack.c.h.b16 %v1991
        %v3100 = vunpack.c.l.b16 %v1992
        %v3101 = vunpack.c.h.b16 %v1992
        %v3102 = vunpack.c.l.b16 %v1993
        %v3103 = vunpack.c.h.b16 %v1993
        %v3104 = vunpack.c.l.b16 %v1994
        %v3105 = vunpack.c.h.b16 %v1994
        %v3106 = vunpack.c.l.b16 %v1995
        %v3107 = vunpack.c.h.b16 %v1995
        %v3108 = vunpack.c.l.b16 %v1996
        %v3109 = vunpack.c.h.b16 %v1996
        %v3110 = vunpack.c.l.b16 %v1997
        %v3111 = vunpack.c.h.b16 %v1997
        %v3112 = vunpack.c.l.b16 %v1998
        %v3113 = vunpack.c.h.b16 %v1998
        %v3114 = vunpack.c.l.b16 %v1999
        %v3115 = vunpack.c.h.b16 %v1999
        %v3116 = vunpack.c.l.b16 %v2000
        %v3117 = vunpack.c.h.b16 %v2000
        %v3118 = vunpack.c.l.b16 %v2001
        %v3119 = vunpack.c.h.b16 %v2001
        %v3120 = vunpack.c.l.b16 %v2002
        %v3121 = vunpack.c.h.b16 %v2002
        %v3122 = vunpack.c.l.b16 %v2003
        %v3123 = vunpack.c.h.b16 %v2003
        %v3124 = vunpack.c.l.b16 %v2004
        %v3125 = vunpack.c.h.b16 %v2004
        %v3126 = vunpack.c.l.b16 %v2005
        %v3127 = vunpack.c.h.b16 %v2005
        %v3128 = vunpack.c.l.b16 %v2006
        %v3129 = vunpack.c.h.b16 %v2006
        %v3130 = vunpack.c.l.b16 %v2007
        %v3131 = vunpack.c.h.b16 %v2007
        %v3132 = vunpack.c.l.b16 %v2008
        %v3133 = vunpack.c.h.b16 %v2008
        %v3134 = vunpack.c.l.b16 %v2009
        %v3135 = vunpack.c.h.b16 %v2009
        %v3136 = vunpack.c.l.b16 %v2010
        %v3137 = vunpack.c.h.b16 %v2010
        %v3138 = vunpack.c.l.b16 %v2011
        %v3139 = vunpack.c.h.b16 %v2011
        %v3140 = vunpack.c.l.b16 %v2012
        %v3141 = vunpack.c.h.b16 %v2012
        %v3142 = vunpack.c.l.b16 %v2013
        %v3143 = vunpack.c.h.b16 %v2013
        %v3144 = vunpack.c.l.b16 %v2014
        %v3145 = vunpack.c.h.b16 %v2014
        %v3146 = vunpack.c.l.b16 %v2015
        %v3147 = vunpack.c.h.b16 %v2015
        %v3148 = vunpack.c.l.b16 %v2016
        %v3149 = vunpack.c.h.b16 %v2016
        %v3150 = vunpack.c.l.b16 %v2017
        %v3151 = vunpack.c.h.b16 %v2017
        %v3152 = vunpack.c.l.b16 %v2018
        %v3153 = vunpack.c.h.b16 %v2018
        %v3154 = vunpack.c.l.b16 %v2019
        %v3155 = vunpack.c.h.b16 %v2019
        %v3156 = vunpack.c.l.b16 %v2020
        %v3157 = vunpack.c.h.b16 %v2020
        %v3158 = vunpack.c.l.b16 %v2021
        %v3159 = vunpack.c.h.b16 %v2021
        %v3160 = vunpack.c.l.b16 %v2022
        %v3161 = vunpack.c.h.b16 %v2022
        %v3162 = vunpack.c.l.b16 %v2023
        %v3163 = vunpack.c.h.b16 %v2023
        %v3164 = vunpack.c.l.b16 %v2024
        %v3165 = vunpack.c.h.b16 %v2024
        %v3166 = vunpack.c.l.b16 %v2025
        %v3167 = vunpack.c.h.b16 %v2025
        %v3168 = vunpack.c.l.b16 %v2026
        %v3169 = vunpack.c.h.b16 %v2026
        %v3170 = vunpack.c.l.b16 %v2027
        %v3171 = vunpack.c.h.b16 %v2027
        %v3172 = vunpack.c.l.b16 %v2028
        %v3173 = vunpack.c.h.b16 %v2028
        %v3174 = vunpack.c.l.b16 %v2029
        %v3175 = vunpack.c.h.b16 %v2029
        %v3176 = vunpack.c.l.b16 %v2030
        %v3177 = vunpack.c.h.b16 %v2030
        %v3178 = vunpack.c.l.b16 %v2031
        %v3179 = vunpack.c.h.b16 %v2031
        %v3180 = vunpack.c.l.b16 %v2032
        %v3181 = vunpack.c.h.b16 %v2032
        %v3182 = vunpack.c.l.b16 %v2033
        %v3183 = vunpack.c.h.b16 %v2033
        %v3184 = vunpack.c.l.b16 %v2034
        %v3185 = vunpack.c.h.b16 %v2034
        %v3186 = vunpack.c.l.b16 %v2035
        %v3187 = vunpack.c.h.b16 %v2035
        %v3188 = vunpack.c.l.b16 %v2036
        %v3189 = vunpack.c.h.b16 %v2036
        %v3190 = vunpack.c.l.b16 %v2037
        %v3191 = vunpack.c.h.b16 %v2037
        %v3192 = vunpack.c.l.b16 %v2038
        %v3193 = vunpack.c.h.b16 %v2038
        %v3194 = vunpack.c.l.b16 %v2039
        %v3195 = vunpack.c.h.b16 %v2039
        %v3196 = vunpack.c.l.b16 %v2040
        %v3197 = vunpack.c.h.b16 %v2040
        %v3198 = vunpack.c.l.b16 %v2041
        %v3199 = vunpack.c.h.b16 %v2041
        %v3200 = vunpack.c.l.b16 %v2042
        %v3201 = vunpack.c.h.b16 %v2042
        %v3202 = vunpack.c.l.b16 %v2043
        %v3203 = vunpack.c.h.b16 %v2043
        %v3204 = vunpack.c.l.b16 %v2044
        %v3205 = vunpack.c.h.b16 %v2044
        %v3206 = vunpack.c.l.b16 %v2045
        %v3207 = vunpack.c.h.b16 %v2045
        %v3208 = vunpack.c.l.b16 %v2046
        %v3209 = vunpack.c.h.b16 %v2046
        %v3210 = vunpack.c.l.b16 %v2047
        %v3211 = vunpack.c.h.b16 %v2047
        %v3212 = vunpack.c.l.b16 %v2048
        %v3213 = vunpack.c.h.b16 %v2048
        %v3214 = vunpack.c.l.b16 %v2049
        %v3215 = vunpack.c.h.b16 %v2049
        %v3216 = vunpack.c.l.b16 %v2050
        %v3217 = vunpack.c.h.b16 %v2050
        %v3218 = vunpack.c.l.b16 %v2051
        %v3219 = vunpack.c.h.b16 %v2051
        %v3220 = vunpack.c.l.b16 %v2052
        %v3221 = vunpack.c.h.b16 %v2052
        %v3222 = vunpack.c.l.b16 %v2053
        %v3223 = vunpack.c.h.b16 %v2053
        %v3224 = vunpack.c.l.b16 %v2054
        %v3225 = vunpack.c.h.b16 %v2054
        %v3226 = vunpack.c.l.b16 %v2055
        %v3227 = vunpack.c.h.b16 %v2055
        %v3228 = vunpack.c.l.b16 %v2056
        %v3229 = vunpack.c.h.b16 %v2056
        %v3230 = vunpack.c.l.b16 %v2057
        %v3231 = vunpack.c.h.b16 %v2057
        %v3232 = vunpack.c.l.b16 %v2058
        %v3233 = vunpack.c.h.b16 %v2058
        %v3234 = vunpack.c.l.b16 %v2059
        %v3235 = vunpack.c.h.b16 %v2059
        %v3236 = vunpack.c.l.b16 %v2060
        %v3237 = vunpack.c.h.b16 %v2060
        %v3238 = vunpack.c.l.b16 %v2061
        %v3239 = vunpack.c.h.b16 %v2061
        %v3240 = vunpack.c.l.b16 %v2062
        %v3241 = vunpack.c.h.b16 %v2062
        %v3242 = vunpack.c.l.b16 %v2063
        %v3243 = vunpack.c.h.b16 %v2063
        %v3244 = vunpack.c.l.b16 %v2064
        %v3245 = vunpack.c.h.b16 %v2064
        %v3246 = vunpack.c.l.b16 %v2065
        %v3247 = vunpack.c.h.b16 %v2065
        %v3248 = vunpack.c.l.b16 %v2066
        %v3249 = vunpack.c.h.b16 %v2066
        %v3250 = vunpack.c.l.b16 %v2067
        %v3251 = vunpack.c.h.b16 %v2067
        %v3252 = vunpack.c.l.b16 %v2068
        %v3253 = vunpack.c.h.b16 %v2068
        %v3254 = vunpack.c.l.b16 %v2069
        %v3255 = vunpack.c.h.b16 %v2069
        %v3256 = vunpack.c.l.b16 %v2070
        %v3257 = vunpack.c.h.b16 %v2070
        %v3258 = vunpack.c.l.b16 %v2071
        %v3259 = vunpack.c.h.b16 %v2071
        %v3260 = vunpack.c.l.b16 %v2072
        %v3261 = vunpack.c.h.b16 %v2072
        %v3262 = vunpack.c.l.b16 %v2073
        %v3263 = vunpack.c.h.b16 %v2073
        %v3264 = vunpack.c.l.b16 %v2074
        %v3265 = vunpack.c.h.b16 %v2074
        %v3266 = vunpack.c.l.b16 %v2075
        %v3267 = vunpack.c.h.b16 %v2075
        %v3268 = vunpack.c.l.b16 %v2076
        %v3269 = vunpack.c.h.b16 %v2076
        %v3270 = vunpack.c.l.b16 %v2077
        %v3271 = vunpack.c.h.b16 %v2077
        %v3272 = vunpack.c.l.b16 %v2078
        %v3273 = vunpack.c.h.b16 %v2078
        %v3274 = vunpack.c.l.b16 %v2079
        %v3275 = vunpack.c.h.b16 %v2079
        %v3276 = vunpack.c.l.b16 %v2080
        %v3277 = vunpack.c.h.b16 %v2080
        %v3278 = vunpack.c.l.b16 %v2081
        %v3279 = vunpack.c.h.b16 %v2081
        %v3280 = vunpack.c.l.b16 %v2082
        %v3281 = vunpack.c.h.b16 %v2082
        %v3282 = vunpack.c.l.b16 %v2083
        %v3283 = vunpack.c.h.b16 %v2083
        %v3284 = vunpack.c.l.b16 %v2084
        %v3285 = vunpack.c.h.b16 %v2084
        %v3286 = vunpack.c.l.b16 %v2085
        %v3287 = vunpack.c.h.b16 %v2085
        %v3288 = vunpack.c.l.b16 %v2086
        %v3289 = vunpack.c.h.b16 %v2086
        %v3290 = vunpack.c.l.b16 %v2087
        %v3291 = vunpack.c.h.b16 %v2087
        %v3292 = vunpack.c.l.b16 %v2088
        %v3293 = vunpack.c.h.b16 %v2088
        %v3294 = vunpack.c.l.b16 %v2089
        %v3295 = vunpack.c.h.b16 %v2089
        %v3296 = vunpack.c.l.b16 %v2090
        %v3297 = vunpack.c.h.b16 %v2090
        %v3298 = vunpack.c.l.b16 %v2091
        %v3299 = vunpack.c.h.b16 %v2091
        %v3300 = vunpack.c.l.b16 %v2092
        %v3301 = vunpack.c.h.b16 %v2092
        %v3302 = vunpack.c.l.b16 %v2093
        %v3303 = vunpack.c.h.b16 %v2093
        %v3304 = vunpack.c.l.b16 %v2094
        %v3305 = vunpack.c.h.b16 %v2094
        %v3306 = vunpack.c.l.b16 %v2095
        %v3307 = vunpack.c.h.b16 %v2095
        %v3308 = vunpack.c.l.b16 %v2096
        %v3309 = vunpack.c.h.b16 %v2096
        %v3310 = vunpack.c.l.b16 %v2097
        %v3311 = vunpack.c.h.b16 %v2097
        %v3312 = vunpack.c.l.b16 %v2098
        %v3313 = vunpack.c.h.b16 %v2098
        %v3314 = vunpack.c.l.b16 %v2099
        %v3315 = vunpack.c.h.b16 %v2099
        %v3316 = vunpack.c.l.b16 %v2100
        %v3317 = vunpack.c.h.b16 %v2100
        %v3318 = vunpack.c.l.b16 %v2101
        %v3319 = vunpack.c.h.b16 %v2101
        %v3320 = vunpack.c.l.b16 %v2102
        %v3321 = vunpack.c.h.b16 %v2102
        %v3322 = vunpack.c.l.b16 %v2103
        %v3323 = vunpack.c.h.b16 %v2103
        %v3324 = vunpack.c.l.b16 %v2104
        %v3325 = vunpack.c.h.b16 %v2104
        %v3326 = vunpack.c.l.b16 %v2105
        %v3327 = vunpack.c.h.b16 %v2105
        %v3328 = vunpack.c.l.b16 %v2106
        %v3329 = vunpack.c.h.b16 %v2106
        %v3330 = vunpack.c.l.b16 %v2107
        %v3331 = vunpack.c.h.b16 %v2107
        %v3332 = vunpack.c.l.b16 %v2108
        %v3333 = vunpack.c.h.b16 %v2108
        %v3334 = vunpack.c.l.b16 %v2109
        %v3335 = vunpack.c.h.b16 %v2109
        %v3336 = vunpack.c.l.b16 %v2110
        %v3337 = vunpack.c.h.b16 %v2110
        %v3338 = vunpack.c.l.b16 %v2111
        %v3339 = vunpack.c.h.b16 %v2111
        %v3340 = vunpack.c.l.b16 %v2112
        %v3341 = vunpack.c.h.b16 %v2112
        %v3342 = vunpack.c.l.b16 %v2113
        %v3343 = vunpack.c.h.b16 %v2113
        %v3344 = vunpack.c.l.b16 %v2114
        %v3345 = vunpack.c.h.b16 %v2114
        %v3346 = vunpack.c.l.b16 %v2115
        %v3347 = vunpack.c.h.b16 %v2115
        %v3348 = vunpack.c.l.b16 %v2116
        %v3349 = vunpack.c.h.b16 %v2116
        %v3350 = vunpack.c.l.b16 %v2117
        %v3351 = vunpack.c.h.b16 %v2117
        %v3352 = vunpack.c.l.b16 %v2118
        %v3353 = vunpack.c.h.b16 %v2118
        %v3354 = vunpack.c.l.b16 %v2119
        %v3355 = vunpack.c.h.b16 %v2119
        %v3356 = vunpack.c.l.b16 %v2120
        %v3357 = vunpack.c.h.b16 %v2120
        %v3358 = vunpack.c.l.b16 %v2121
        %v3359 = vunpack.c.h.b16 %v2121
        %v3360 = vunpack.c.l.b16 %v2122
        %v3361 = vunpack.c.h.b16 %v2122
        %v3362 = vunpack.c.l.b16 %v2123
        %v3363 = vunpack.c.h.b16 %v2123
        %v3364 = vunpack.c.l.b16 %v2124
        %v3365 = vunpack.c.h.b16 %v2124
        %v3366 = vunpack.c.l.b16 %v2125
        %v3367 = vunpack.c.h.b16 %v2125
        %v3368 = vunpack.c.l.b16 %v2126
        %v3369 = vunpack.c.h.b16 %v2126
        %v3370 = vunpack.c.l.b16 %v2127
        %v3371 = vunpack.c.h.b16 %v2127
        %v3372 = vunpack.c.l.b16 %v2128
        %v3373 = vunpack.c.h.b16 %v2128
        %v3374 = vunpack.c.l.b16 %v2129
        %v3375 = vunpack.c.h.b16 %v2129
        %v3376 = vunpack.c.l.b16 %v2130
        %v3377 = vunpack.c.h.b16 %v2130
        %v3378 = vunpack.c.l.b16 %v2131
        %v3379 = vunpack.c.h.b16 %v2131
        %v3380 = vunpack.c.l.b16 %v2132
        %v3381 = vunpack.c.h.b16 %v2132
        %v3382 = vunpack.c.l.b16 %v2133
        %v3383 = vunpack.c.h.b16 %v2133
        %v3384 = vunpack.c.l.b16 %v2134
        %v3385 = vunpack.c.h.b16 %v2134
        %v3386 = vunpack.c.l.b16 %v2135
        %v3387 = vunpack.c.h.b16 %v2135
        %v3388 = vunpack.c.l.b16 %v2136
        %v3389 = vunpack.c.h.b16 %v2136
        %v3390 = vunpack.c.l.b16 %v2137
        %v3391 = vunpack.c.h.b16 %v2137
        %v3392 = vunpack.c.l.b16 %v2138
        %v3393 = vunpack.c.h.b16 %v2138
        %v3394 = vunpack.c.l.b16 %v2139
        %v3395 = vunpack.c.h.b16 %v2139
        %v3396 = vunpack.c.l.b16 %v2140
        %v3397 = vunpack.c.h.b16 %v2140
        %v3398 = vunpack.c.l.b16 %v2141
        %v3399 = vunpack.c.h.b16 %v2141
        %v3400 = vunpack.c.l.b16 %v2142
        %v3401 = vunpack.c.h.b16 %v2142
        %v3402 = vunpack.c.l.b16 %v2143
        %v3403 = vunpack.c.h.b16 %v2143
        %v3404 = vunpack.c.l.b16 %v2144
        %v3405 = vunpack.c.h.b16 %v2144
        %v3406 = vunpack.c.l.b16 %v2145
        %v3407 = vunpack.c.h.b16 %v2145
        %v3408 = vunpack.c.l.b16 %v2146
        %v3409 = vunpack.c.h.b16 %v2146
        %v3410 = vunpack.c.l.b16 %v2147
        %v3411 = vunpack.c.h.b16 %v2147
        %v3412 = vunpack.c.l.b16 %v2148
        %v3413 = vunpack.c.h.b16 %v2148
        %v3414 = vunpack.c.l.b16 %v2149
        %v3415 = vunpack.c.h.b16 %v2149
        %v3416 = vunpack.c.l.b16 %v2150
        %v3417 = vunpack.c.h.b16 %v2150
        %v3418 = vunpack.c.l.b16 %v2151
        %v3419 = vunpack.c.h.b16 %v2151
        %v3420 = vunpack.c.l.b16 %v2152
        %v3421 = vunpack.c.h.b16 %v2152
        %v3422 = vunpack.c.l.b16 %v2153
        %v3423 = vunpack.c.h.b16 %v2153
        %v3424 = vunpack.c.l.b16 %v2154
        %v3425 = vunpack.c.h.b16 %v2154
        %v3426 = vunpack.c.l.b16 %v2155
        %v3427 = vunpack.c.h.b16 %v2155
        %v3428 = vunpack.c.l.b16 %v2156
        %v3429 = vunpack.c.h.b16 %v2156
        %v3430 = vunpack.c.l.b16 %v2157
        %v3431 = vunpack.c.h.b16 %v2157
        %v3432 = vunpack.c.l.b16 %v2158
        %v3433 = vunpack.c.h.b16 %v2158
        %v3434 = vunpack.c.l.b16 %v2159
        %v3435 = vunpack.c.h.b16 %v2159
        %v3436 = vunpack.c.l.b16 %v2160
        %v3437 = vunpack.c.h.b16 %v2160
        %v3438 = vunpack.c.l.b16 %v2161
        %v3439 = vunpack.c.h.b16 %v2161
        %v3440 = vunpack.c.l.b16 %v2162
        %v3441 = vunpack.c.h.b16 %v2162
        %v3442 = vunpack.c.l.b16 %v2163
        %v3443 = vunpack.c.h.b16 %v2163
        %v3444 = vunpack.c.l.b16 %v2164
        %v3445 = vunpack.c.h.b16 %v2164
        %v3446 = vunpack.c.l.b16 %v2165
        %v3447 = vunpack.c.h.b16 %v2165
        %v3448 = vunpack.c.l.b16 %v2166
        %v3449 = vunpack.c.h.b16 %v2166
        %v3450 = vunpack.c.l.b16 %v2167
        %v3451 = vunpack.c.h.b16 %v2167
        %v3452 = vunpack.c.l.b16 %v2168
        %v3453 = vunpack.c.h.b16 %v2168
        %v3454 = vunpack.c.l.b16 %v2169
        %v3455 = vunpack.c.h.b16 %v2169
        %v3456 = vunpack.c.l.b16 %v2170
        %v3457 = vunpack.c.h.b16 %v2170
        %v3458 = vunpack.c.l.b16 %v2171
        %v3459 = vunpack.c.h.b16 %v2171
        %v3460 = vunpack.c.l.b16 %v2172
        %v3461 = vunpack.c.h.b16 %v2172
        %v3462 = vunpack.c.l.b16 %v2173
        %v3463 = vunpack.c.h.b16 %v2173
        %v3464 = vunpack.c.l.b16 %v2174
        %v3465 = vunpack.c.h.b16 %v2174
        %v3466 = vunpack.c.l.b16 %v2175
        %v3467 = vunpack.c.h.b16 %v2175
        %v3468 = vunpack.c.l.b16 %v2176
        %v3469 = vunpack.c.h.b16 %v2176
        %v3470 = vunpack.c.l.b16 %v2177
        %v3471 = vunpack.c.h.b16 %v2177
        %v3472 = vunpack.c.l.b16 %v2178
        %v3473 = vunpack.c.h.b16 %v2178
        %v3474 = vunpack.c.l.b16 %v2179
        %v3475 = vunpack.c.h.b16 %v2179
        %v3476 = vunpack.c.l.b16 %v2180
        %v3477 = vunpack.c.h.b16 %v2180
        %v3478 = vunpack.c.l.b16 %v2181
        %v3479 = vunpack.c.h.b16 %v2181
        %v3480 = vunpack.c.l.b16 %v2182
        %v3481 = vunpack.c.h.b16 %v2182
        %v3482 = vunpack.c.l.b16 %v2183
        %v3483 = vunpack.c.h.b16 %v2183
        %v3484 = vunpack.c.l.b16 %v2184
        %v3485 = vunpack.c.h.b16 %v2184
        %v3486 = vunpack.c.l.b16 %v2185
        %v3487 = vunpack.c.h.b16 %v2185
        %v3488 = vunpack.c.l.b16 %v2186
        %v3489 = vunpack.c.h.b16 %v2186
        %v3490 = vunpack.c.l.b16 %v2187
        %v3491 = vunpack.c.h.b16 %v2187
        %v3492 = vunpack.c.l.b16 %v2188
        %v3493 = vunpack.c.h.b16 %v2188
        %v3494 = vunpack.c.l.b16 %v2189
        %v3495 = vunpack.c.h.b16 %v2189
        %v3496 = vunpack.c.l.b16 %v2190
        %v3497 = vunpack.c.h.b16 %v2190
        %v3498 = vunpack.c.l.b16 %v2191
        %v3499 = vunpack.c.h.b16 %v2191
        %v3500 = vunpack.c.l.b16 %v2192
        %v3501 = vunpack.c.h.b16 %v2192
        %v3502 = vunpack.c.l.b16 %v2193
        %v3503 = vunpack.c.h.b16 %v2193
        %v3504 = vunpack.c.l.b16 %v2194
        %v3505 = vunpack.c.h.b16 %v2194
        %v3506 = vunpack.c.l.b16 %v2195
        %v3507 = vunpack.c.h.b16 %v2195
        %v3508 = vunpack.c.l.b16 %v2196
        %v3509 = vunpack.c.h.b16 %v2196
        %v3510 = vunpack.c.l.b16 %v2197
        %v3511 = vunpack.c.h.b16 %v2197
        %v3512 = vunpack.c.l.b16 %v2198
        %v3513 = vunpack.c.h.b16 %v2198
        %v3514 = vunpack.c.l.b16 %v2199
        %v3515 = vunpack.c.h.b16 %v2199
        %v3516 = vunpack.c.l.b16 %v2200
        %v3517 = vunpack.c.h.b16 %v2200
        %v3518 = vunpack.c.l.b16 %v2201
        %v3519 = vunpack.c.h.b16 %v2201
        %v3520 = vunpack.c.l.b16 %v2202
        %v3521 = vunpack.c.h.b16 %v2202
        %v3522 = vunpack.c.l.b16 %v2203
        %v3523 = vunpack.c.h.b16 %v2203
        %v3524 = vunpack.c.l.b16 %v2204
        %v3525 = vunpack.c.h.b16 %v2204
        %v3526 = vunpack.c.l.b16 %v2205
        %v3527 = vunpack.c.h.b16 %v2205
        %v3528 = vunpack.c.l.b16 %v2206
        %v3529 = vunpack.c.h.b16 %v2206
        %v3530 = vunpack.c.l.b16 %v2207
        %v3531 = vunpack.c.h.b16 %v2207
        %v3532 = vunpack.c.l.b16 %v2208
        %v3533 = vunpack.c.h.b16 %v2208
        %v3534 = vunpack.c.l.b16 %v2209
        %v3535 = vunpack.c.h.b16 %v2209
        %v3536 = vunpack.c.l.b16 %v2210
        %v3537 = vunpack.c.h.b16 %v2210
        %v3538 = vunpack.c.l.b16 %v2211
        %v3539 = vunpack.c.h.b16 %v2211
        %v3540 = vunpack.c.l.b16 %v2212
        %v3541 = vunpack.c.h.b16 %v2212
        %v3542 = vunpack.c.l.b16 %v2213
        %v3543 = vunpack.c.h.b16 %v2213
        %v3544 = vunpack.c.l.b16 %v2214
        %v3545 = vunpack.c.h.b16 %v2214
        %v3546 = vunpack.c.l.b16 %v2215
        %v3547 = vunpack.c.h.b16 %v2215
        %v3548 = vunpack.c.l.b16 %v2216
        %v3549 = vunpack.c.h.b16 %v2216
        %v3550 = vunpack.c.l.b16 %v2217
        %v3551 = vunpack.c.h.b16 %v2217
        %v3552 = vunpack.c.l.b16 %v2218
        %v3553 = vunpack.c.h.b16 %v2218
        %v3554 = vunpack.c.l.b16 %v2219
        %v3555 = vunpack.c.h.b16 %v2219
        %v3556 = vunpack.c.l.b16 %v2220
        %v3557 = vunpack.c.h.b16 %v2220
        %v3558 = vunpack.c.l.b16 %v2221
        %v3559 = vunpack.c.h.b16 %v2221
        %v3560 = vunpack.c.l.b16 %v2222
        %v3561 = vunpack.c.h.b16 %v2222
        %v3562 = vunpack.c.l.b16 %v2223
        %v3563 = vunpack.c.h.b16 %v2223
        %v3564 = vunpack.c.l.b16 %v2224
        %v3565 = vunpack.c.h.b16 %v2224
        %v3566 = vunpack.c.l.b16 %v2225
        %v3567 = vunpack.c.h.b16 %v2225
        %v3568 = vunpack.c.l.b16 %v2226
        %v3569 = vunpack.c.h.b16 %v2226
        %v3570 = vunpack.c.l.b16 %v2227
        %v3571 = vunpack.c.h.b16 %v2227
        %v3572 = vunpack.c.l.b16 %v2228
        %v3573 = vunpack.c.h.b16 %v2228
        %v3574 = vunpack.c.l.b16 %v2229
        %v3575 = vunpack.c.h.b16 %v2229
        %v3576 = vunpack.c.l.b16 %v2230
        %v3577 = vunpack.c.h.b16 %v2230
        %v3578 = vunpack.c.l.b16 %v2231
        %v3579 = vunpack.c.h.b16 %v2231
        %v3580 = vunpack.c.l.b16 %v2232
        %v3581 = vunpack.c.h.b16 %v2232
        %v3582 = vunpack.c.l.b16 %v2233
        %v3583 = vunpack.c.h.b16 %v2233
        %v3584 = vunpack.c.l.b16 %v2234
        %v3585 = vunpack.c.h.b16 %v2234
        %v3586 = vunpack.c.l.b16 %v2235
        %v3587 = vunpack.c.h.b16 %v2235
        %v3588 = vunpack.c.l.b16 %v2236
        %v3589 = vunpack.c.h.b16 %v2236
        %v3590 = vunpack.c.l.b16 %v2237
        %v3591 = vunpack.c.h.b16 %v2237
        %v3592 = vunpack.c.l.b16 %v2238
        %v3593 = vunpack.c.h.b16 %v2238
        %v3594 = vunpack.c.l.b16 %v2239
        %v3595 = vunpack.c.h.b16 %v2239
        %v3596 = vunpack.c.l.b16 %v2240
        %v3597 = vunpack.c.h.b16 %v2240
        %v3598 = vunpack.c.l.b16 %v2241
        %v3599 = vunpack.c.h.b16 %v2241
        %v3600 = vunpack.c.l.b16 %v2242
        %v3601 = vunpack.c.h.b16 %v2242
        %v3602 = vunpack.c.l.b16 %v2243
        %v3603 = vunpack.c.h.b16 %v2243
        %v3604 = vunpack.c.l.b16 %v2244
        %v3605 = vunpack.c.h.b16 %v2244
        %v3606 = vunpack.c.l.b16 %v2245
        %v3607 = vunpack.c.h.b16 %v2245
        %v3608 = vunpack.c.l.b16 %v2246
        %v3609 = vunpack.c.h.b16 %v2246
        %v3610 = vunpack.c.l.b16 %v2247
        %v3611 = vunpack.c.h.b16 %v2247
        %v3612 = vunpack.c.l.b16 %v2248
        %v3613 = vunpack.c.h.b16 %v2248
        %v3614 = vunpack.c.l.b16 %v2249
        %v3615 = vunpack.c.h.b16 %v2249
        %v3616 = vunpack.c.l.b16 %v2250
        %v3617 = vunpack.c.h.b16 %v2250
        %v3618 = vunpack.c.l.b16 %v2251
        %v3619 = vunpack.c.h.b16 %v2251
        %v3620 = vunpack.c.l.b16 %v2252
        %v3621 = vunpack.c.h.b16 %v2252
        %v3622 = vunpack.c.l.b16 %v2253
        %v3623 = vunpack.c.h.b16 %v2253
        %v3624 = vunpack.c.l.b16 %v2254
        %v3625 = vunpack.c.h.b16 %v2254
        %v3626 = vunpack.c.l.b16 %v2255
        %v3627 = vunpack.c.h.b16 %v2255
        %v3628 = vunpack.c.l.b16 %v2256
        %v3629 = vunpack.c.h.b16 %v2256
        %v3630 = vunpack.c.l.b16 %v2257
        %v3631 = vunpack.c.h.b16 %v2257
        %v3632 = vunpack.c.l.b16 %v2258
        %v3633 = vunpack.c.h.b16 %v2258
        %v3634 = vunpack.c.l.b16 %v2259
        %v3635 = vunpack.c.h.b16 %v2259
        %v3636 = vunpack.c.l.b16 %v2260
        %v3637 = vunpack.c.h.b16 %v2260
        %v3638 = vpack.c.b16 %v2856, %v2854
        %v3639 = vpack.c.b16 %v2857, %v2855
        %v3640 = vpack.c.b16 %v2860, %v2858
        %v3641 = vpack.c.b16 %v2861, %v2859
        %v3642 = vpack.c.b16 %v2864, %v2862
        %v3643 = vpack.c.b16 %v2865, %v2863
        %v3644 = vpack.c.b16 %v2868, %v2866
        %v3645 = vpack.c.b16 %v2869, %v2867
        %v3646 = vpack.c.b16 %v2872, %v2870
        %v3647 = vpack.c.b16 %v2873, %v2871
        %v3648 = vpack.c.b16 %v2876, %v2874
        %v3649 = vpack.c.b16 %v2877, %v2875
        %v3650 = vpack.c.b16 %v2880, %v2878
        %v3651 = vpack.c.b16 %v2881, %v2879
        %v3652 = vpack.c.b16 %v2884, %v2882
        %v3653 = vpack.c.b16 %v2885, %v2883
        %v3654 = vpack.c.b16 %v2888, %v2886
        %v3655 = vpack.c.b16 %v2889, %v2887
        %v3656 = vpack.c.b16 %v2892, %v2890
        %v3657 = vpack.c.b16 %v2893, %v2891
        %v3658 = vpack.c.b16 %v2896, %v2894
        %v3659 = vpack.c.b16 %v2897, %v2895
        %v3660 = vpack.c.b16 %v2900, %v2898
        %v3661 = vpack.c.b16 %v2901, %v2899
        %v3662 = vpack.c.b16 %v2904, %v2902
        %v3663 = vpack.c.b16 %v2905, %v2903
        %v3664 = vpack.c.b16 %v2908, %v2906
        %v3665 = vpack.c.b16 %v2909, %v2907
        %v3666 = vpack.c.b16 %v2912, %v2910
        %v3667 = vpack.c.b16 %v2913, %v2911
        %v3668 = vpack.c.b16 %v2916, %v2914
        %v3669 = vpack.c.b16 %v2917, %v2915
        %v3670 = vpack.c.b16 %v2920, %v2918
        %v3671 = vpack.c.b16 %v2921, %v2919
        %v3672 = vpack.c.b16 %v2924, %v2922
        %v3673 = vpack.c.b16 %v2925, %v2923
        %v3674 = vpack.c.b16 %v2928, %v2926
        %v3675 = vpack.c.b16 %v2929, %v2927
        %v3676 = vpack.c.b16 %v2932, %v2930
        %v3677 = vpack.c.b16 %v2933, %v2931
        %v3678 = vpack.c.b16 %v2936, %v2934
        %v3679 = vpack.c.b16 %v2937, %v2935
        %v3680 = vpack.c.b16 %v2940, %v2938
        %v3681 = vpack.c.b16 %v2941, %v2939
        %v3682 = vpack.c.b16 %v2944, %v2942
        %v3683 = vpack.c.b16 %v2945, %v2943
        %v3684 = vpack.c.b16 %v2948, %v2946
        %v3685 = vpack.c.b16 %v2949, %v2947
        %v3686 = vpack.c.b16 %v2952, %v2950
        %v3687 = vpack.c.b16 %v2953, %v2951
        %v3688 = vpack.c.b16 %v2956, %v2954
        %v3689 = vpack.c.b16 %v2957, %v2955
        %v3690 = vpack.c.b16 %v2960, %v2958
        %v3691 = vpack.c.b16 %v2961, %v2959
        %v3692 = vpack.c.b16 %v2964, %v2962
        %v3693 = vpack.c.b16 %v2965, %v2963
        %v3694 = vpack.c.b16 %v2968, %v2966
        %v3695 = vpack.c.b16 %v2969, %v2967
        %v3696 = vpack.c.b16 %v2972, %v2970
        %v3697 = vpack.c.b16 %v2973, %v2971
        %v3698 = vpack.c.b16 %v2976, %v2974
        %v3699 = vpack.c.b16 %v2977, %v2975
        %v3700 = vpack.c.b16 %v2980, %v2978
        %v3701 = vpack.c.b16 %v2981, %v2979
        %v3702 = vpack.c.b16 %v2984, %v2982
        %v3703 = vpack.c.b16 %v2985, %v2983
        %v3704 = vpack.c.b16 %v2988, %v2986
        %v3705 = vpack.c.b16 %v2989, %v2987
        %v3706 = vpack.c.b16 %v2992, %v2990
        %v3707 = vpack.c.b16 %v2993, %v2991
        %v3708 = vpack.c.b16 %v2996, %v2994
        %v3709 = vpack.c.b16 %v2997, %v2995
        %v3710 = vpack.c.b16 %v3000, %v2998
        %v3711 = vpack.c.b16 %v3001, %v2999
        %v3712 = vpack.c.b16 %v3004, %v3002
        %v3713 = vpack.c.b16 %v3005, %v3003
        %v3714 = vpack.c.b16 %v3008, %v3006
        %v3715 = vpack.c.b16 %v3009, %v3007
        %v3716 = vpack.c.b16 %v3012, %v3010
        %v3717 = vpack.c.b16 %v3013, %v3011
        %v3718 = vpack.c.b16 %v3016, %v3014
        %v3719 = vpack.c.b16 %v3017, %v3015
        %v3720 = vpack.c.b16 %v3020, %v3018
        %v3721 = vpack.c.b16 %v3021, %v3019
        %v3722 = vpack.c.b16 %v3024, %v3022
        %v3723 = vpack.c.b16 %v3025, %v3023
        %v3724 = vpack.c.b16 %v3028, %v3026
        %v3725 = vpack.c.b16 %v3029, %v3027
        %v3726 = vpack.c.b16 %v3032, %v3030
        %v3727 = vpack.c.b16 %v3033, %v3031
        %v3728 = vpack.c.b16 %v3036, %v3034
        %v3729 = vpack.c.b16 %v3037, %v3035
        %v3730 = vpack.c.b16 %v3040, %v3038
        %v3731 = vpack.c.b16 %v3041, %v3039
        %v3732 = vpack.c.b16 %v3044, %v3042
        %v3733 = vpack.c.b16 %v3045, %v3043
        %v3734 = vpack.c.b16 %v3048, %v3046
        %v3735 = vpack.c.b16 %v3049, %v3047
        %v3736 = vpack.c.b16 %v3052, %v3050
        %v3737 = vpack.c.b16 %v3053, %v3051
        %v3738 = vpack.c.b16 %v3056, %v3054
        %v3739 = vpack.c.b16 %v3057, %v3055
        %v3740 = vpack.c.b16 %v3060, %v3058
        %v3741 = vpack.c.b16 %v3061, %v3059
        %v3742 = vpack.c.b16 %v3064, %v3062
        %v3743 = vpack.c.b16 %v3065, %v3063
        %v3744 = vpack.c.b16 %v3068, %v3066
        %v3745 = vpack.c.b16 %v3069, %v3067
        %v3746 = vpack.c.b16 %v3072, %v3070
        %v3747 = vpack.c.b16 %v3073, %v3071
        %v3748 = vpack.c.b16 %v3076, %v3074
        %v3749 = vpack.c.b16 %v3077, %v3075
        %v3750 = vpack.c.b16 %v3080, %v3078
        %v3751 = vpack.c.b16 %v3081, %v3079
        %v3752 = vpack.c.b16 %v3084, %v3082
        %v3753 = vpack.c.b16 %v3085, %v3083
        %v3754 = vpack.c.b16 %v3088, %v3086
        %v3755 = vpack.c.b16 %v3089, %v3087
        %v3756 = vpack.c.b16 %v3092, %v3090
        %v3757 = vpack.c.b16 %v3093, %v3091
        %v3758 = vpack.c.b16 %v3096, %v3094
        %v3759 = vpack.c.b16 %v3097, %v3095
        %v3760 = vpack.c.b16 %v3100, %v3098
        %v3761 = vpack.c.b16 %v3101, %v3099
        %v3762 = vpack.c.b16 %v3104, %v3102
        %v3763 = vpack.c.b16 %v3105, %v3103
        %v3764 = vpack.c.b16 %v3108, %v3106
        %v3765 = vpack.c.b16 %v3109, %v3107
        %v3766 = vpack.c.b16 %v3112, %v3110
        %v3767 = vpack.c.b16 %v3113, %v3111
        %v3768 = vpack.c.b16 %v3116, %v3114
        %v3769 = vpack.c.b16 %v3117, %v3115
        %v3770 = vpack.c.b16 %v3120, %v3118
        %v3771 = vpack.c.b16 %v3121, %v3119
        %v3772 = vpack.c.b16 %v3124, %v3122
        %v3773 = vpack.c.b16 %v3125, %v3123
        %v3774 = vpack.c.b16 %v3128, %v3126
        %v3775 = vpack.c.b16 %v3129, %v3127
        %v3776 = vpack.c.b16 %v3132, %v3130
        %v3777 = vpack.c.b16 %v3133, %v3131
        %v3778 = vpack.c.b16 %v3136, %v3134
        %v3779 = vpack.c.b16 %v3137, %v3135
        %v3780 = vpack.c.b16 %v3140, %v3138
        %v3781 = vpack.c.b16 %v3141, %v3139
        %v3782 = vpack.c.b16 %v3144, %v3142
        %v3783 = vpack.c.b16 %v3145, %v3143
        %v3784 = vpack.c.b16 %v3148, %v3146
        %v3785 = vpack.c.b16 %v3149, %v3147
        %v3786 = vpack.c.b16 %v3152, %v3150
        %v3787 = vpack.c.b16 %v3153, %v3151
        %v3788 = vpack.c.b16 %v3156, %v3154
        %v3789 = vpack.c.b16 %v3157, %v3155
        %v3790 = vpack.c.b16 %v3160, %v3158
        %v3791 = vpack.c.b16 %v3161, %v3159
        %v3792 = vpack.c.b16 %v3164, %v3162
        %v3793 = vpack.c.b16 %v3165, %v3163
        %v3794 = vpack.c.b16 %v3168, %v3166
        %v3795 = vpack.c.b16 %v3169, %v3167
        %v3796 = vpack.c.b16 %v3172, %v3170
        %v3797 = vpack.c.b16 %v3173, %v3171
        %v3798 = vpack.c.b16 %v3176, %v3174
        %v3799 = vpack.c.b16 %v3177, %v3175
        %v3800 = vpack.c.b16 %v3180, %v3178
        %v3801 = vpack.c.b16 %v3181, %v3179
        %v3802 = vpack.c.b16 %v3184, %v3182
        %v3803 = vpack.c.b16 %v3185, %v3183
        %v3804 = vpack.c.b16 %v3188, %v3186
        %v3805 = vpack.c.b16 %v3189, %v3187
        %v3806 = vpack.c.b16 %v3192, %v3190
        %v3807 = vpack.c.b16 %v3193, %v3191
        %v3808 = vpack.c.b16 %v3196, %v3194
        %v3809 = vpack.c.b16 %v3197, %v3195
        %v3810 = vpack.c.b16 %v3200, %v3198
        %v3811 = vpack.c.b16 %v3201, %v3199
        %v3812 = vpack.c.b16 %v3204, %v3202
        %v3813 = vpack.c.b16 %v3205, %v3203
        %v3814 = vpack.c.b16 %v3208, %v3206
        %v3815 = vpack.c.b16 %v3209, %v3207
        %v3816 = vpack.c.b16 %v3212, %v3210
        %v3817 = vpack.c.b16 %v3213, %v3211
        %v3818 = vpack.c.b16 %v3216, %v3214
        %v3819 = vpack.c.b16 %v3217, %v3215
        %v3820 = vpack.c.b16 %v3220, %v3218
        %v3821 = vpack.c.b16 %v3221, %v3219
        %v3822 = vpack.c.b16 %v3224, %v3222
        %v3823 = vpack.c.b16 %v3225, %v3223
        %v3824 = vpack.c.b16 %v3228, %v3226
        %v3825 = vpack.c.b16 %v3229, %v3227
        %v3826 = vpack.c.b16 %v3232, %v3230
        %v3827 = vpack.c.b16 %v3233, %v3231
        %v3828 = vpack.c.b16 %v3236, %v3234
        %v3829 = vpack.c.b16 %v3237, %v3235
        %v3830 = vpack.c.b16 %v3240, %v3238
        %v3831 = vpack.c.b16 %v3241, %v3239
        %v3832 = vpack.c.b16 %v3244, %v3242
        %v3833 = vpack.c.b16 %v3245, %v3243
        %v3834 = vpack.c.b16 %v3248, %v3246
        %v3835 = vpack.c.b16 %v3249, %v3247
        %v3836 = vpack.c.b16 %v3252, %v3250
        %v3837 = vpack.c.b16 %v3253, %v3251
        %v3838 = vpack.c.b16 %v3256, %v3254
        %v3839 = vpack.c.b16 %v3257, %v3255
        %v3840 = vpack.c.b16 %v3260, %v3258
        %v3841 = vpack.c.b16 %v3261, %v3259
        %v3842 = vpack.c.b16 %v3264, %v3262
        %v3843 = vpack.c.b16 %v3265, %v3263
        %v3844 = vpack.c.b16 %v3268, %v3266
        %v3845 = vpack.c.b16 %v3269, %v3267
        %v3846 = vpack.c.b16 %v3272, %v3270
        %v3847 = vpack.c.b16 %v3273, %v3271
        %v3848 = vpack.c.b16 %v3276, %v3274
        %v3849 = vpack.c.b16 %v3277, %v3275
        %v3850 = vpack.c.b16 %v3280, %v3278
        %v3851 = vpack.c.b16 %v3281, %v3279
        %v3852 = vpack.c.b16 %v3284, %v3282
        %v3853 = vpack.c.b16 %v3285, %v3283
        %v3854 = vpack.c.b16 %v3288, %v3286
        %v3855 = vpack.c.b16 %v3289, %v3287
        %v3856 = vpack.c.b16 %v3292, %v3290
        %v3857 = vpack.c.b16 %v3293, %v3291
        %v3858 = vpack.c.b16 %v3296, %v3294
        %v3859 = vpack.c.b16 %v3297, %v3295
        %v3860 = vpack.c.b16 %v3300, %v3298
        %v3861 = vpack.c.b16 %v3301, %v3299
        %v3862 = vpack.c.b16 %v3304, %v3302
        %v3863 = vpack.c.b16 %v3305, %v3303
        %v3864 = vpack.c.b16 %v3308, %v3306
        %v3865 = vpack.c.b16 %v3309, %v3307
        %v3866 = vpack.c.b16 %v3312, %v3310
        %v3867 = vpack.c.b16 %v3313, %v3311
        %v3868 = vpack.c.b16 %v3316, %v3314
        %v3869 = vpack.c.b16 %v3317, %v3315
        %v3870 = vpack.c.b16 %v3320, %v3318
        %v3871 = vpack.c.b16 %v3321, %v3319
        %v3872 = vpack.c.b16 %v3324, %v3322
        %v3873 = vpack.c.b16 %v3325, %v3323
        %v3874 = vpack.c.b16 %v3328, %v3326
        %v3875 = vpack.c.b16 %v3329, %v3327
        %v3876 = vpack.c.b16 %v3332, %v3330
        %v3877 = vpack.c.b16 %v3333, %v3331
        %v3878 = vpack.c.b16 %v3336, %v3334
        %v3879 = vpack.c.b16 %v3337, %v3335
        %v3880 = vpack.c.b16 %v3340, %v3338
        %v3881 = vpack.c.b16 %v3341, %v3339
        %v3882 = vpack.c.b16 %v3344, %v3342
        %v3883 = vpack.c.b16 %v3345, %v3343
        %v3884 = vpack.c.b16 %v3348, %v3346
        %v3885 = vpack.c.b16 %v3349, %v3347
        %v3886 = vpack.c.b16 %v3352, %v3350
        %v3887 = vpack.c.b16 %v3353, %v3351
        %v3888 = vpack.c.b16 %v3356, %v3354
        %v3889 = vpack.c.b16 %v3357, %v3355
        %v3890 = vpack.c.b16 %v3360, %v3358
        %v3891 = vpack.c.b16 %v3361, %v3359
        %v3892 = vpack.c.b16 %v3364, %v3362
        %v3893 = vpack.c.b16 %v3365, %v3363
        %v3894 = vpack.c.b16 %v3368, %v3366
        %v3895 = vpack.c.b16 %v3369, %v3367
        %v3896 = vpack.c.b16 %v3372, %v3370
        %v3897 = vpack.c.b16 %v3373, %v3371
        %v3898 = vpack.c.b16 %v3376, %v3374
        %v3899 = vpack.c.b16 %v3377, %v3375
        %v3900 = vpack.c.b16 %v3380, %v3378
        %v3901 = vpack.c.b16 %v3381, %v3379
        %v3902 = vpack.c.b16 %v3384, %v3382
        %v3903 = vpack.c.b16 %v3385, %v3383
        %v3904 = vpack.c.b16 %v3388, %v3386
        %v3905 = vpack.c.b16 %v3389, %v3387
        %v3906 = vpack.c.b16 %v3392, %v3390
        %v3907 = vpack.c.b16 %v3393, %v3391
        %v3908 = vpack.c.b16 %v3396, %v3394
        %v3909 = vpack.c.b16 %v3397, %v3395
        %v3910 = vpack.c.b16 %v3400, %v3398
        %v3911 = vpack.c.b16 %v3401, %v3399
        %v3912 = vpack.c.b16 %v3404, %v3402
        %v3913 = vpack.c.b16 %v3405, %v3403
        %v3914 = vpack.c.b16 %v3408, %v3406
        %v3915 = vpack.c.b16 %v3409, %v3407
        %v3916 = vpack.c.b16 %v3412, %v3410
        %v3917 = vpack.c.b16 %v3413, %v3411
        %v3918 = vpack.c.b16 %v3416, %v3414
        %v3919 = vpack.c.b16 %v3417, %v3415
        %v3920 = vpack.c.b16 %v3420, %v3418
        %v3921 = vpack.c.b16 %v3421, %v3419
        %v3922 = vpack.c.b16 %v3424, %v3422
        %v3923 = vpack.c.b16 %v3425, %v3423
        %v3924 = vpack.c.b16 %v3428, %v3426
        %v3925 = vpack.c.b16 %v3429, %v3427
        %v3926 = vpack.c.b16 %v3432, %v3430
        %v3927 = vpack.c.b16 %v3433, %v3431
        %v3928 = vpack.c.b16 %v3436, %v3434
        %v3929 = vpack.c.b16 %v3437, %v3435
        %v3930 = vpack.c.b16 %v3440, %v3438
        %v3931 = vpack.c.b16 %v3441, %v3439
        %v3932 = vpack.c.b16 %v3444, %v3442
        %v3933 = vpack.c.b16 %v3445, %v3443
        %v3934 = vpack.c.b16 %v3448, %v3446
        %v3935 = vpack.c.b16 %v3449, %v3447
        %v3936 = vpack.c.b16 %v3452, %v3450
        %v3937 = vpack.c.b16 %v3453, %v3451
        %v3938 = vpack.c.b16 %v3456, %v3454
        %v3939 = vpack.c.b16 %v3457, %v3455
        %v3940 = vpack.c.b16 %v3460, %v3458
        %v3941 = vpack.c.b16 %v3461, %v3459
        %v3942 = vpack.c.b16 %v3464, %v3462
        %v3943 = vpack.c.b16 %v3465, %v3463
        %v3944 = vpack.c.b16 %v3468, %v3466
        %v3945 = vpack.c.b16 %v3469, %v3467
        %v3946 = vpack.c.b16 %v3472, %v3470
        %v3947 = vpack.c.b16 %v3473, %v3471
        %v3948 = vpack.c.b16 %v3476, %v3474
        %v3949 = vpack.c.b16 %v3477, %v3475
        %v3950 = vpack.c.b16 %v3480, %v3478
        %v3951 = vpack.c.b16 %v3481, %v3479
        %v3952 = vpack.c.b16 %v3484, %v3482
        %v3953 = vpack.c.b16 %v3485, %v3483
        %v3954 = vpack.c.b16 %v3488, %v3486
        %v3955 = vpack.c.b16 %v3489, %v3487
        %v3956 = vpack.c.b16 %v3492, %v3490
        %v3957 = vpack.c.b16 %v3493, %v3491
        %v3958 = vpack.c.b16 %v3496, %v3494
        %v3959 = vpack.c.b16 %v3497, %v3495
        %v3960 = vpack.c.b16 %v3500, %v3498
        %v3961 = vpack.c.b16 %v3501, %v3499
        %v3962 = vpack.c.b16 %v3504, %v3502
        %v3963 = vpack.c.b16 %v3505, %v3503
        %v3964 = vpack.c.b16 %v3508, %v3506
        %v3965 = vpack.c.b16 %v3509, %v3507
        %v3966 = vpack.c.b16 %v3512, %v3510
        %v3967 = vpack.c.b16 %v3513, %v3511
        %v3968 = vpack.c.b16 %v3516, %v3514
        %v3969 = vpack.c.b16 %v3517, %v3515
        %v3970 = vpack.c.b16 %v3520, %v3518
        %v3971 = vpack.c.b16 %v3521, %v3519
        %v3972 = vpack.c.b16 %v3524, %v3522
        %v3973 = vpack.c.b16 %v3525, %v3523
        %v3974 = vpack.c.b16 %v3528, %v3526
        %v3975 = vpack.c.b16 %v3529, %v3527
        %v3976 = vpack.c.b16 %v3532, %v3530
        %v3977 = vpack.c.b16 %v3533, %v3531
        %v3978 = vpack.c.b16 %v3536, %v3534
        %v3979 = vpack.c.b16 %v3537, %v3535
        %v3980 = vpack.c.b16 %v3540, %v3538
        %v3981 = vpack.c.b16 %v3541, %v3539
        %v3982 = vpack.c.b16 %v3544, %v3542
        %v3983 = vpack.c.b16 %v3545, %v3543
        %v3984 = vpack.c.b16 %v3548, %v3546
        %v3985 = vpack.c.b16 %v3549, %v3547
        %v3986 = vpack.c.b16 %v3552, %v3550
        %v3987 = vpack.c.b16 %v3553, %v3551
        %v3988 = vpack.c.b16 %v3556, %v3554
        %v3989 = vpack.c.b16 %v3557, %v3555
        %v3990 = vpack.c.b16 %v3560, %v3558
        %v3991 = vpack.c.b16 %v3561, %v3559
        %v3992 = vpack.c.b16 %v3564, %v3562
        %v3993 = vpack.c.b16 %v3565, %v3563
        %v3994 = vpack.c.b16 %v3568, %v3566
        %v3995 = vpack.c.b16 %v3569, %v3567
        %v3996 = vpack.c.b16 %v3572, %v3570
        %v3997 = vpack.c.b16 %v3573, %v3571
        %v3998 = vpack.c.b16 %v3576, %v3574
        %v3999 = vpack.c.b16 %v3577, %v3575
        %v4000 = vpack.c.b16 %v3580, %v3578
        %v4001 = vpack.c.b16 %v3581, %v3579
        %v4002 = vpack.c.b16 %v3584, %v3582
        %v4003 = vpack.c.b16 %v3585, %v3583
        %v4004 = vpack.c.b16 %v3588, %v3586
        %v4005 = vpack.c.b16 %v3589, %v3587
        %v4006 = vpack.c.b16 %v3592, %v3590
        %v4007 = vpack.c.b16 %v3593, %v3591
        %v4008 = vpack.c.b16 %v3596, %v3594
        %v4009 = vpack.c.b16 %v3597, %v3595
        %v4010 = vpack.c.b16 %v3600, %v3598
        %v4011 = vpack.c.b16 %v3601, %v3599
        %v4012 = vpack.c.b16 %v3604, %v3602
        %v4013 = vpack.c.b16 %v3605, %v3603
        %v4014 = vpack.c.b16 %v3608, %v3606
        %v4015 = vpack.c.b16 %v3609, %v3607
        %v4016 = vpack.c.b16 %v3612, %v3610
        %v4017 = vpack.c.b16 %v3613, %v3611
        %v4018 = vpack.c.b16 %v3616, %v3614
        %v4019 = vpack.c.b16 %v3617, %v3615
        %v4020 = vpack.c.b16 %v3620, %v3618
        %v4021 = vpack.c.b16 %v3621, %v3619
        %v4022 = vpack.c.b16 %v3624, %v3622
        %v4023 = vpack.c.b16 %v3625, %v3623
        %v4024 = vpack.c.b16 %v3628, %v3626
        %v4025 = vpack.c.b16 %v3629, %v3627
        %v4026 = vpack.c.b16 %v3632, %v3630
        %v4027 = vpack.c.b16 %v3633, %v3631
        %v4028 = vpack.c.b16 %v3636, %v3634
        %v4029 = vpack.c.b16 %v3637, %v3635
        %vm4422 = vcmask 523264
        %v4424 = vsel %vm4422, %v2437, 0
        %4426 = vmatprep.subr.bf16.mxu0 %v3639
        %4427 = vmatpush1.bf16.msra.mxu0 %v3638
        %4428 = vmatprep.subr.bf16.mxu0 %v3641
        %4429 = vmatpush1.bf16.msra.mxu0 %v3640
        %4430 = vmatprep.subr.bf16.mxu0 %v3643
        %4431 = vmatpush1.bf16.msra.mxu0 %v3642
        %4432 = vmatprep.subr.bf16.mxu0 %v3645
        %4433 = vmatpush1.bf16.msra.mxu0 %v3644
        %4434 = vmatprep.subr.bf16.mxu0 %v3647
        %4435 = vmatpush1.bf16.msra.mxu0 %v3646
        %4436 = vmatprep.subr.bf16.mxu0 %v3649
        %4437 = vmatpush1.bf16.msra.mxu0 %v3648
        %4438 = vmatprep.subr.bf16.mxu0 %v3651
        %4439 = vmatpush1.bf16.msra.mxu0 %v3650
        %4440 = vmatprep.subr.bf16.mxu0 %v3653
        %4441 = vmatpush1.bf16.msra.mxu0 %v3652
        %4442 = vmatprep.subr.bf16.mxu0 %v3655
        %4443 = vmatpush1.bf16.msra.mxu0 %v3654
        %4444 = vmatprep.subr.bf16.mxu0 %v3657
        %4445 = vmatpush1.bf16.msra.mxu0 %v3656
        %4446 = vmatprep.subr.bf16.mxu0 %v3659
        %4447 = vmatpush1.bf16.msra.mxu0 %v3658
        %4448 = vmatprep.subr.bf16.mxu0 %v3661
        %4449 = vmatpush1.bf16.msra.mxu0 %v3660
        %4450 = vmatprep.subr.bf16.mxu0 %v3663
        %4451 = vmatpush1.bf16.msra.mxu0 %v3662
        %4452 = vmatprep.subr.bf16.mxu0 %v3665
        %4453 = vmatpush1.bf16.msra.mxu0 %v3664
        %4454 = vmatprep.subr.bf16.mxu0 %v3667
        %4455 = vmatpush1.bf16.msra.mxu0 %v3666
        %4456 = vmatprep.subr.bf16.mxu0 %v3669
        %4457 = vmatpush1.bf16.msra.mxu0 %v3668
        %4458 = vmatprep.mubr.bf16.mxu0 %v2314
        %4459 = vmatmul.mubr.bf16.gmra.mrb[0].mxu0 %v2300
        %v4460 = vpop.f32.mrb[0].mxu0
        %v4461 = vadd.f32 %v2266, %v4460
        %v4462 = vpop.f32.mrb[0].mxu0
        %v4463 = vadd.f32 %v2270, %v4462
        %v4464 = vpop.f32.mrb[0].mxu0
        %v4465 = vpop.f32.mrb[0].mxu0
        %4466 = vdwg.mxu0
        %4467 = vmatprep.subr.bf16.mxu0 %v3671
        %4468 = vmatpush1.bf16.msra.mxu0 %v3670
        %4469 = vmatprep.subr.bf16.mxu0 %v3673
        %4470 = vmatpush1.bf16.msra.mxu0 %v3672
        %4471 = vmatprep.subr.bf16.mxu0 %v3675
        %4472 = vmatpush1.bf16.msra.mxu0 %v3674
        %4473 = vmatprep.subr.bf16.mxu0 %v3677
        %4474 = vmatpush1.bf16.msra.mxu0 %v3676
        %4475 = vmatprep.subr.bf16.mxu0 %v3679
        %4476 = vmatpush1.bf16.msra.mxu0 %v3678
        %4477 = vmatprep.subr.bf16.mxu0 %v3681
        %4478 = vmatpush1.bf16.msra.mxu0 %v3680
        %4479 = vmatprep.subr.bf16.mxu0 %v3683
        %4480 = vmatpush1.bf16.msra.mxu0 %v3682
        %4481 = vmatprep.subr.bf16.mxu0 %v3685
        %4482 = vmatpush1.bf16.msra.mxu0 %v3684
        %4483 = vmatprep.subr.bf16.mxu0 %v3687
        %4484 = vmatpush1.bf16.msra.mxu0 %v3686
        %4485 = vmatprep.subr.bf16.mxu0 %v3689
        %4486 = vmatpush1.bf16.msra.mxu0 %v3688
        %4487 = vmatprep.subr.bf16.mxu0 %v3691
        %4488 = vmatpush1.bf16.msra.mxu0 %v3690
        %4489 = vmatprep.subr.bf16.mxu0 %v3693
        %4490 = vmatpush1.bf16.msra.mxu0 %v3692
        %4491 = vmatprep.subr.bf16.mxu0 %v3695
        %4492 = vmatpush1.bf16.msra.mxu0 %v3694
        %4493 = vmatprep.subr.bf16.mxu0 %v3697
        %4494 = vmatpush1.bf16.msra.mxu0 %v3696
        %4495 = vmatprep.subr.bf16.mxu0 %v3699
        %4496 = vmatpush1.bf16.msra.mxu0 %v3698
        %4497 = vmatprep.subr.bf16.mxu0 %v3701
        %4498 = vmatpush1.bf16.msra.mxu0 %v3700
        %4499 = vmatprep.mubr.bf16.mxu0 %v2324
        %4500 = vmatmul.mubr.bf16.gmra.mrb[0].mxu0 %v2322
        %v4501 = vpop.f32.mrb[0].mxu0
        %v4502 = vadd.f32 %v4461, %v4501
        %v4503 = vpop.f32.mrb[0].mxu0
        %v4504 = vadd.f32 %v4463, %v4503
        %v4505 = vpop.f32.mrb[0].mxu0
        %v4506 = vpop.f32.mrb[0].mxu0
        %4507 = vdwg.mxu0
        %4508 = vmatprep.subr.bf16.mxu0 %v3703
        %4509 = vmatpush1.bf16.msra.mxu0 %v3702
        %4510 = vmatprep.subr.bf16.mxu0 %v3705
        %4511 = vmatpush1.bf16.msra.mxu0 %v3704
        %4512 = vmatprep.subr.bf16.mxu0 %v3707
        %4513 = vmatpush1.bf16.msra.mxu0 %v3706
        %4514 = vmatprep.subr.bf16.mxu0 %v3709
        %4515 = vmatpush1.bf16.msra.mxu0 %v3708
        %4516 = vmatprep.subr.bf16.mxu0 %v3711
        %4517 = vmatpush1.bf16.msra.mxu0 %v3710
        %4518 = vmatprep.subr.bf16.mxu0 %v3713
        %4519 = vmatpush1.bf16.msra.mxu0 %v3712
        %4520 = vmatprep.subr.bf16.mxu0 %v3715
        %4521 = vmatpush1.bf16.msra.mxu0 %v3714
        %4522 = vmatprep.subr.bf16.mxu0 %v3717
        %4523 = vmatpush1.bf16.msra.mxu0 %v3716
        %4524 = vmatprep.subr.bf16.mxu0 %v3719
        %4525 = vmatpush1.bf16.msra.mxu0 %v3718
        %4526 = vmatprep.subr.bf16.mxu0 %v3721
        %4527 = vmatpush1.bf16.msra.mxu0 %v3720
        %4528 = vmatprep.subr.bf16.mxu0 %v3723
        %4529 = vmatpush1.bf16.msra.mxu0 %v3722
        %4530 = vmatprep.subr.bf16.mxu0 %v3725
        %4531 = vmatpush1.bf16.msra.mxu0 %v3724
        %4532 = vmatprep.subr.bf16.mxu0 %v3727
        %4533 = vmatpush1.bf16.msra.mxu0 %v3726
        %4534 = vmatprep.subr.bf16.mxu0 %v3729
        %4535 = vmatpush1.bf16.msra.mxu0 %v3728
        %4536 = vmatprep.subr.bf16.mxu0 %v3731
        %4537 = vmatpush1.bf16.msra.mxu0 %v3730
        %4538 = vmatprep.subr.bf16.mxu0 %v3733
        %4539 = vmatpush1.bf16.msra.mxu0 %v3732
        %4540 = vmatprep.mubr.bf16.mxu0 %v2321
        %4541 = vmatmul.mubr.bf16.gmra.mrb[0].mxu0 %v2307
        %v4542 = vpop.f32.mrb[0].mxu0
        %v4543 = vadd.f32 %v4502, %v4542
        %v4544 = vpop.f32.mrb[0].mxu0
        %v4545 = vadd.f32 %v4504, %v4544
        %v4546 = vpop.f32.mrb[0].mxu0
        %v4547 = vpop.f32.mrb[0].mxu0
        %4548 = vdwg.mxu0
        %4549 = vmatprep.subr.bf16.mxu0 %v3735
        %4550 = vmatpush1.bf16.msra.mxu0 %v3734
        %4551 = vmatprep.subr.bf16.mxu0 %v3737
        %4552 = vmatpush1.bf16.msra.mxu0 %v3736
        %4553 = vmatprep.subr.bf16.mxu0 %v3739
        %4554 = vmatpush1.bf16.msra.mxu0 %v3738
        %4555 = vmatprep.subr.bf16.mxu0 %v3741
        %4556 = vmatpush1.bf16.msra.mxu0 %v3740
        %4557 = vmatprep.subr.bf16.mxu0 %v3743
        %4558 = vmatpush1.bf16.msra.mxu0 %v3742
        %4559 = vmatprep.subr.bf16.mxu0 %v3745
        %4560 = vmatpush1.bf16.msra.mxu0 %v3744
        %4561 = vmatprep.subr.bf16.mxu0 %v3747
        %4562 = vmatpush1.bf16.msra.mxu0 %v3746
        %4563 = vmatprep.subr.bf16.mxu0 %v3749
        %4564 = vmatpush1.bf16.msra.mxu0 %v3748
        %4565 = vmatprep.subr.bf16.mxu0 %v3751
        %4566 = vmatpush1.bf16.msra.mxu0 %v3750
        %4567 = vmatprep.subr.bf16.mxu0 %v3753
        %4568 = vmatpush1.bf16.msra.mxu0 %v3752
        %4569 = vmatprep.subr.bf16.mxu0 %v3755
        %4570 = vmatpush1.bf16.msra.mxu0 %v3754
        %4571 = vmatprep.subr.bf16.mxu0 %v3757
        %4572 = vmatpush1.bf16.msra.mxu0 %v3756
        %4573 = vmatprep.subr.bf16.mxu0 %v3759
        %4574 = vmatpush1.bf16.msra.mxu0 %v3758
        %4575 = vmatprep.subr.bf16.mxu0 %v3761
        %4576 = vmatpush1.bf16.msra.mxu0 %v3760
        %4577 = vmatprep.subr.bf16.mxu0 %v3763
        %4578 = vmatpush1.bf16.msra.mxu0 %v3762
        %4579 = vmatprep.subr.bf16.mxu0 %v3765
        %4580 = vmatpush1.bf16.msra.mxu0 %v3764
        %4581 = vmatprep.mubr.bf16.mxu0 %v2325
        %4582 = vmatmul.mubr.bf16.gmra.mrb[0].mxu0 %v2323
        %v4583 = vpop.f32.mrb[0].mxu0
        %v4584 = vadd.f32 %v4543, %v4583
        %v4585 = vpop.f32.mrb[0].mxu0
        %v4586 = vadd.f32 %v4545, %v4585
        %v4587 = vpop.f32.mrb[0].mxu0
        %v4588 = vpop.f32.mrb[0].mxu0
        %4589 = vdwg.mxu0
        %4590 = vmatprep.subr.bf16.mxu0 %v3767
        %4591 = vmatpush1.bf16.msra.mxu0 %v3766
        %4592 = vmatprep.subr.bf16.mxu0 %v3769
        %4593 = vmatpush1.bf16.msra.mxu0 %v3768
        %4594 = vmatprep.subr.bf16.mxu0 %v3771
        %4595 = vmatpush1.bf16.msra.mxu0 %v3770
        %4596 = vmatprep.subr.bf16.mxu0 %v3773
        %4597 = vmatpush1.bf16.msra.mxu0 %v3772
        %4598 = vmatprep.subr.bf16.mxu0 %v3775
        %4599 = vmatpush1.bf16.msra.mxu0 %v3774
        %4600 = vmatprep.subr.bf16.mxu0 %v3777
        %4601 = vmatpush1.bf16.msra.mxu0 %v3776
        %4602 = vmatprep.subr.bf16.mxu0 %v3779
        %4603 = vmatpush1.bf16.msra.mxu0 %v3778
        %4604 = vmatprep.subr.bf16.mxu0 %v3781
        %4605 = vmatpush1.bf16.msra.mxu0 %v3780
        %4606 = vmatprep.subr.bf16.mxu0 %v3783
        %4607 = vmatpush1.bf16.msra.mxu0 %v3782
        %4608 = vmatprep.subr.bf16.mxu0 %v3785
        %4609 = vmatpush1.bf16.msra.mxu0 %v3784
        %4610 = vmatprep.subr.bf16.mxu0 %v3787
        %4611 = vmatpush1.bf16.msra.mxu0 %v3786
        %4612 = vmatprep.subr.bf16.mxu0 %v3789
        %4613 = vmatpush1.bf16.msra.mxu0 %v3788
        %4614 = vmatprep.subr.bf16.mxu0 %v3791
        %4615 = vmatpush1.bf16.msra.mxu0 %v3790
        %4616 = vmatprep.subr.bf16.mxu0 %v3793
        %4617 = vmatpush1.bf16.msra.mxu0 %v3792
        %4618 = vmatprep.subr.bf16.mxu0 %v3795
        %4619 = vmatpush1.bf16.msra.mxu0 %v3794
        %4620 = vmatprep.subr.bf16.mxu0 %v3797
        %4621 = vmatpush1.bf16.msra.mxu0 %v3796
        %4622 = vmatprep.mubr.bf16.mxu0 %v2363
        %4623 = vmatmul.mubr.bf16.gmra.mrb[0].mxu0 %v2349
        %v4624 = vpop.f32.mrb[0].mxu0
        %v4625 = vadd.f32 %v4584, %v4624
        %v4626 = vpop.f32.mrb[0].mxu0
        %v4627 = vadd.f32 %v4586, %v4626
        %v4628 = vpop.f32.mrb[0].mxu0
        %v4629 = vpop.f32.mrb[0].mxu0
        %4630 = vdwg.mxu0
        %4631 = vmatprep.subr.bf16.mxu0 %v3799
        %4632 = vmatpush1.bf16.msra.mxu0 %v3798
        %4633 = vmatprep.subr.bf16.mxu0 %v3801
        %4634 = vmatpush1.bf16.msra.mxu0 %v3800
        %4635 = vmatprep.subr.bf16.mxu0 %v3803
        %4636 = vmatpush1.bf16.msra.mxu0 %v3802
        %4637 = vmatprep.subr.bf16.mxu0 %v3805
        %4638 = vmatpush1.bf16.msra.mxu0 %v3804
        %4639 = vmatprep.subr.bf16.mxu0 %v3807
        %4640 = vmatpush1.bf16.msra.mxu0 %v3806
        %4641 = vmatprep.subr.bf16.mxu0 %v3809
        %4642 = vmatpush1.bf16.msra.mxu0 %v3808
        %4643 = vmatprep.subr.bf16.mxu0 %v3811
        %4644 = vmatpush1.bf16.msra.mxu0 %v3810
        %4645 = vmatprep.subr.bf16.mxu0 %v3813
        %4646 = vmatpush1.bf16.msra.mxu0 %v3812
        %4647 = vmatprep.subr.bf16.mxu0 %v3815
        %4648 = vmatpush1.bf16.msra.mxu0 %v3814
        %4649 = vmatprep.subr.bf16.mxu0 %v3817
        %4650 = vmatpush1.bf16.msra.mxu0 %v3816
        %4651 = vmatprep.subr.bf16.mxu0 %v3819
        %4652 = vmatpush1.bf16.msra.mxu0 %v3818
        %4653 = vmatprep.subr.bf16.mxu0 %v3821
        %4654 = vmatpush1.bf16.msra.mxu0 %v3820
        %4655 = vmatprep.subr.bf16.mxu0 %v3823
        %4656 = vmatpush1.bf16.msra.mxu0 %v3822
        %4657 = vmatprep.subr.bf16.mxu0 %v3825
        %4658 = vmatpush1.bf16.msra.mxu0 %v3824
        %4659 = vmatprep.subr.bf16.mxu0 %v3827
        %4660 = vmatpush1.bf16.msra.mxu0 %v3826
        %4661 = vmatprep.subr.bf16.mxu0 %v3829
        %4662 = vmatpush1.bf16.msra.mxu0 %v3828
        %4663 = vmatprep.mubr.bf16.mxu0 %v2373
        %4664 = vmatmul.mubr.bf16.gmra.mrb[0].mxu0 %v2371
        %v4665 = vpop.f32.mrb[0].mxu0
        %v4666 = vadd.f32 %v4625, %v4665
        %v4667 = vpop.f32.mrb[0].mxu0
        %v4668 = vadd.f32 %v4627, %v4667
        %v4669 = vpop.f32.mrb[0].mxu0
        %v4670 = vpop.f32.mrb[0].mxu0
        %4671 = vdwg.mxu0
        %4672 = vmatprep.subr.bf16.mxu0 %v3831
        %4673 = vmatpush1.bf16.msra.mxu0 %v3830
        %4674 = vmatprep.subr.bf16.mxu0 %v3833
        %4675 = vmatpush1.bf16.msra.mxu0 %v3832
        %4676 = vmatprep.subr.bf16.mxu0 %v3835
        %4677 = vmatpush1.bf16.msra.mxu0 %v3834
        %4678 = vmatprep.subr.bf16.mxu0 %v3837
        %4679 = vmatpush1.bf16.msra.mxu0 %v3836
        %4680 = vmatprep.subr.bf16.mxu0 %v3839
        %4681 = vmatpush1.bf16.msra.mxu0 %v3838
        %4682 = vmatprep.subr.bf16.mxu0 %v3841
        %4683 = vmatpush1.bf16.msra.mxu0 %v3840
        %4684 = vmatprep.subr.bf16.mxu0 %v3843
        %4685 = vmatpush1.bf16.msra.mxu0 %v3842
        %4686 = vmatprep.subr.bf16.mxu0 %v3845
        %4687 = vmatpush1.bf16.msra.mxu0 %v3844
        %4688 = vmatprep.subr.bf16.mxu0 %v3847
        %4689 = vmatpush1.bf16.msra.mxu0 %v3846
        %4690 = vmatprep.subr.bf16.mxu0 %v3849
        %4691 = vmatpush1.bf16.msra.mxu0 %v3848
        %4692 = vmatprep.subr.bf16.mxu0 %v3851
        %4693 = vmatpush1.bf16.msra.mxu0 %v3850
        %4694 = vmatprep.subr.bf16.mxu0 %v3853
        %4695 = vmatpush1.bf16.msra.mxu0 %v3852
        %4696 = vmatprep.subr.bf16.mxu0 %v3855
        %4697 = vmatpush1.bf16.msra.mxu0 %v3854
        %4698 = vmatprep.subr.bf16.mxu0 %v3857
        %4699 = vmatpush1.bf16.msra.mxu0 %v3856
        %4700 = vmatprep.subr.bf16.mxu0 %v3859
        %4701 = vmatpush1.bf16.msra.mxu0 %v3858
        %4702 = vmatprep.subr.bf16.mxu0 %v3861
        %4703 = vmatpush1.bf16.msra.mxu0 %v3860
        %4704 = vmatprep.mubr.bf16.mxu0 %v2370
        %4705 = vmatmul.mubr.bf16.gmra.mrb[0].mxu0 %v2356
        %v4706 = vpop.f32.mrb[0].mxu0
        %v4707 = vadd.f32 %v4666, %v4706
        %v4708 = vpop.f32.mrb[0].mxu0
        %v4709 = vadd.f32 %v4668, %v4708
        %v4710 = vpop.f32.mrb[0].mxu0
        %v4711 = vpop.f32.mrb[0].mxu0
        %4712 = vdwg.mxu0
        %4713 = vmatprep.subr.bf16.mxu0 %v3863
        %4714 = vmatpush1.bf16.msra.mxu0 %v3862
        %4715 = vmatprep.subr.bf16.mxu0 %v3865
        %4716 = vmatpush1.bf16.msra.mxu0 %v3864
        %4717 = vmatprep.subr.bf16.mxu0 %v3867
        %4718 = vmatpush1.bf16.msra.mxu0 %v3866
        %4719 = vmatprep.subr.bf16.mxu0 %v3869
        %4720 = vmatpush1.bf16.msra.mxu0 %v3868
        %4721 = vmatprep.subr.bf16.mxu0 %v3871
        %4722 = vmatpush1.bf16.msra.mxu0 %v3870
        %4723 = vmatprep.subr.bf16.mxu0 %v3873
        %4724 = vmatpush1.bf16.msra.mxu0 %v3872
        %4725 = vmatprep.subr.bf16.mxu0 %v3875
        %4726 = vmatpush1.bf16.msra.mxu0 %v3874
        %4727 = vmatprep.subr.bf16.mxu0 %v3877
        %4728 = vmatpush1.bf16.msra.mxu0 %v3876
        %4729 = vmatprep.subr.bf16.mxu0 %v3879
        %4730 = vmatpush1.bf16.msra.mxu0 %v3878
        %4731 = vmatprep.subr.bf16.mxu0 %v3881
        %4732 = vmatpush1.bf16.msra.mxu0 %v3880
        %4733 = vmatprep.subr.bf16.mxu0 %v3883
        %4734 = vmatpush1.bf16.msra.mxu0 %v3882
        %4735 = vmatprep.subr.bf16.mxu0 %v3885
        %4736 = vmatpush1.bf16.msra.mxu0 %v3884
        %4737 = vmatprep.subr.bf16.mxu0 %v3887
        %4738 = vmatpush1.bf16.msra.mxu0 %v3886
        %4739 = vmatprep.subr.bf16.mxu0 %v3889
        %4740 = vmatpush1.bf16.msra.mxu0 %v3888
        %4741 = vmatprep.subr.bf16.mxu0 %v3891
        %4742 = vmatpush1.bf16.msra.mxu0 %v3890
        %4743 = vmatprep.subr.bf16.mxu0 %v3893
        %4744 = vmatpush1.bf16.msra.mxu0 %v3892
        %4745 = vmatprep.mubr.bf16.mxu0 %v2374
        %4746 = vmatmul.mubr.bf16.gmra.mrb[0].mxu0 %v2372
        %v4747 = vpop.f32.mrb[0].mxu0
        %v4748 = vadd.f32 %v4707, %v4747
        %v4749 = vpop.f32.mrb[0].mxu0
        %v4750 = vadd.f32 %v4709, %v4749
        %v4751 = vpop.f32.mrb[0].mxu0
        %v4752 = vpop.f32.mrb[0].mxu0
        %4753 = vdwg.mxu0
        %4754 = vmatprep.subr.bf16.mxu0 %v3895
        %4755 = vmatpush1.bf16.msra.mxu0 %v3894
        %4756 = vmatprep.subr.bf16.mxu0 %v3897
        %4757 = vmatpush1.bf16.msra.mxu0 %v3896
        %4758 = vmatprep.subr.bf16.mxu0 %v3899
        %4759 = vmatpush1.bf16.msra.mxu0 %v3898
        %4760 = vmatprep.subr.bf16.mxu0 %v3901
        %4761 = vmatpush1.bf16.msra.mxu0 %v3900
        %4762 = vmatprep.subr.bf16.mxu0 %v3903
        %4763 = vmatpush1.bf16.msra.mxu0 %v3902
        %4764 = vmatprep.subr.bf16.mxu0 %v3905
        %4765 = vmatpush1.bf16.msra.mxu0 %v3904
        %4766 = vmatprep.subr.bf16.mxu0 %v3907
        %4767 = vmatpush1.bf16.msra.mxu0 %v3906
        %4768 = vmatprep.subr.bf16.mxu0 %v3909
        %4769 = vmatpush1.bf16.msra.mxu0 %v3908
        %4770 = vmatprep.subr.bf16.mxu0 %v3911
        %4771 = vmatpush1.bf16.msra.mxu0 %v3910
        %4772 = vmatprep.subr.bf16.mxu0 %v3913
        %4773 = vmatpush1.bf16.msra.mxu0 %v3912
        %4774 = vmatprep.subr.bf16.mxu0 %v3915
        %4775 = vmatpush1.bf16.msra.mxu0 %v3914
        %4776 = vmatprep.subr.bf16.mxu0 %v3917
        %4777 = vmatpush1.bf16.msra.mxu0 %v3916
        %4778 = vmatprep.subr.bf16.mxu0 %v3919
        %4779 = vmatpush1.bf16.msra.mxu0 %v3918
        %4780 = vmatprep.subr.bf16.mxu0 %v3921
        %4781 = vmatpush1.bf16.msra.mxu0 %v3920
        %4782 = vmatprep.subr.bf16.mxu0 %v3923
        %4783 = vmatpush1.bf16.msra.mxu0 %v3922
        %4784 = vmatprep.subr.bf16.mxu0 %v3925
        %4785 = vmatpush1.bf16.msra.mxu0 %v3924
        %4786 = vmatprep.mubr.bf16.mxu0 %v2412
        %4787 = vmatmul.mubr.bf16.gmra.mrb[0].mxu0 %v2398
        %v4788 = vpop.f32.mrb[0].mxu0
        %v4789 = vadd.f32 %v4748, %v4788
        %v4790 = vpop.f32.mrb[0].mxu0
        %v4791 = vadd.f32 %v4750, %v4790
        %v4792 = vpop.f32.mrb[0].mxu0
        %v4793 = vpop.f32.mrb[0].mxu0
        %4794 = vdwg.mxu0
        %4795 = vmatprep.subr.bf16.mxu0 %v3927
        %4796 = vmatpush1.bf16.msra.mxu0 %v3926
        %4797 = vmatprep.subr.bf16.mxu0 %v3929
        %4798 = vmatpush1.bf16.msra.mxu0 %v3928
        %4799 = vmatprep.subr.bf16.mxu0 %v3931
        %4800 = vmatpush1.bf16.msra.mxu0 %v3930
        %4801 = vmatprep.subr.bf16.mxu0 %v3933
        %4802 = vmatpush1.bf16.msra.mxu0 %v3932
        %4803 = vmatprep.subr.bf16.mxu0 %v3935
        %4804 = vmatpush1.bf16.msra.mxu0 %v3934
        %4805 = vmatprep.subr.bf16.mxu0 %v3937
        %4806 = vmatpush1.bf16.msra.mxu0 %v3936
        %4807 = vmatprep.subr.bf16.mxu0 %v3939
        %4808 = vmatpush1.bf16.msra.mxu0 %v3938
        %4809 = vmatprep.subr.bf16.mxu0 %v3941
        %4810 = vmatpush1.bf16.msra.mxu0 %v3940
        %4811 = vmatprep.subr.bf16.mxu0 %v3943
        %4812 = vmatpush1.bf16.msra.mxu0 %v3942
        %4813 = vmatprep.subr.bf16.mxu0 %v3945
        %4814 = vmatpush1.bf16.msra.mxu0 %v3944
        %4815 = vmatprep.subr.bf16.mxu0 %v3947
        %4816 = vmatpush1.bf16.msra.mxu0 %v3946
        %4817 = vmatprep.subr.bf16.mxu0 %v3949
        %4818 = vmatpush1.bf16.msra.mxu0 %v3948
        %4819 = vmatprep.subr.bf16.mxu0 %v3951
        %4820 = vmatpush1.bf16.msra.mxu0 %v3950
        %4821 = vmatprep.subr.bf16.mxu0 %v3953
        %4822 = vmatpush1.bf16.msra.mxu0 %v3952
        %4823 = vmatprep.subr.bf16.mxu0 %v3955
        %4824 = vmatpush1.bf16.msra.mxu0 %v3954
        %4825 = vmatprep.subr.bf16.mxu0 %v3957
        %4826 = vmatpush1.bf16.msra.mxu0 %v3956
        %4827 = vmatprep.mubr.bf16.mxu0 %v2422
        %4828 = vmatmul.mubr.bf16.gmra.mrb[0].mxu0 %v2420
        %v4829 = vpop.f32.mrb[0].mxu0
        %v4830 = vadd.f32 %v4789, %v4829
        %v4831 = vpop.f32.mrb[0].mxu0
        %v4832 = vadd.f32 %v4791, %v4831
        %v4833 = vpop.f32.mrb[0].mxu0
        %v4834 = vpop.f32.mrb[0].mxu0
        %4835 = vdwg.mxu0
        %4836 = vmatprep.subr.bf16.mxu0 %v3959
        %4837 = vmatpush1.bf16.msra.mxu0 %v3958
        %4838 = vmatprep.subr.bf16.mxu0 %v3961
        %4839 = vmatpush1.bf16.msra.mxu0 %v3960
        %4840 = vmatprep.subr.bf16.mxu0 %v3963
        %4841 = vmatpush1.bf16.msra.mxu0 %v3962
        %4842 = vmatprep.subr.bf16.mxu0 %v3965
        %4843 = vmatpush1.bf16.msra.mxu0 %v3964
        %4844 = vmatprep.subr.bf16.mxu0 %v3967
        %4845 = vmatpush1.bf16.msra.mxu0 %v3966
        %4846 = vmatprep.subr.bf16.mxu0 %v3969
        %4847 = vmatpush1.bf16.msra.mxu0 %v3968
        %4848 = vmatprep.subr.bf16.mxu0 %v3971
        %4849 = vmatpush1.bf16.msra.mxu0 %v3970
        %4850 = vmatprep.subr.bf16.mxu0 %v3973
        %4851 = vmatpush1.bf16.msra.mxu0 %v3972
        %4852 = vmatprep.subr.bf16.mxu0 %v3975
        %4853 = vmatpush1.bf16.msra.mxu0 %v3974
        %4854 = vmatprep.subr.bf16.mxu0 %v3977
        %4855 = vmatpush1.bf16.msra.mxu0 %v3976
        %4856 = vmatprep.subr.bf16.mxu0 %v3979
        %4857 = vmatpush1.bf16.msra.mxu0 %v3978
        %4858 = vmatprep.subr.bf16.mxu0 %v3981
        %4859 = vmatpush1.bf16.msra.mxu0 %v3980
        %4860 = vmatprep.subr.bf16.mxu0 %v3983
        %4861 = vmatpush1.bf16.msra.mxu0 %v3982
        %4862 = vmatprep.subr.bf16.mxu0 %v3985
        %4863 = vmatpush1.bf16.msra.mxu0 %v3984
        %4864 = vmatprep.subr.bf16.mxu0 %v3987
        %4865 = vmatpush1.bf16.msra.mxu0 %v3986
        %4866 = vmatprep.subr.bf16.mxu0 %v3989
        %4867 = vmatpush1.bf16.msra.mxu0 %v3988
        %4868 = vmatprep.mubr.bf16.mxu0 %v2419
        %4869 = vmatmul.mubr.bf16.gmra.mrb[0].mxu0 %v2405
        %v4870 = vpop.f32.mrb[0].mxu0
        %v4871 = vadd.f32 %v4830, %v4870
        %v4872 = vpop.f32.mrb[0].mxu0
        %v4873 = vadd.f32 %v4832, %v4872
        %v4874 = vpop.f32.mrb[0].mxu0
        %v4875 = vpop.f32.mrb[0].mxu0
        %4876 = vdwg.mxu0
        %4877 = vmatprep.subr.bf16.mxu0 %v3991
        %4878 = vmatpush1.bf16.msra.mxu0 %v3990
        %4879 = vmatprep.subr.bf16.mxu0 %v3993
        %4880 = vmatpush1.bf16.msra.mxu0 %v3992
        %4881 = vmatprep.subr.bf16.mxu0 %v3995
        %4882 = vmatpush1.bf16.msra.mxu0 %v3994
        %4883 = vmatprep.subr.bf16.mxu0 %v3997
        %4884 = vmatpush1.bf16.msra.mxu0 %v3996
        %4885 = vmatprep.subr.bf16.mxu0 %v3999
        %4886 = vmatpush1.bf16.msra.mxu0 %v3998
        %4887 = vmatprep.subr.bf16.mxu0 %v4001
        %4888 = vmatpush1.bf16.msra.mxu0 %v4000
        %4889 = vmatprep.subr.bf16.mxu0 %v4003
        %4890 = vmatpush1.bf16.msra.mxu0 %v4002
        %4891 = vmatprep.subr.bf16.mxu0 %v4005
        %4892 = vmatpush1.bf16.msra.mxu0 %v4004
        %4893 = vmatprep.subr.bf16.mxu0 %v4007
        %4894 = vmatpush1.bf16.msra.mxu0 %v4006
        %4895 = vmatprep.subr.bf16.mxu0 %v4009
        %4896 = vmatpush1.bf16.msra.mxu0 %v4008
        %4897 = vmatprep.subr.bf16.mxu0 %v4011
        %4898 = vmatpush1.bf16.msra.mxu0 %v4010
        %4899 = vmatprep.subr.bf16.mxu0 %v4013
        %4900 = vmatpush1.bf16.msra.mxu0 %v4012
        %4901 = vmatprep.subr.bf16.mxu0 %v4015
        %4902 = vmatpush1.bf16.msra.mxu0 %v4014
        %4903 = vmatprep.subr.bf16.mxu0 %v4017
        %4904 = vmatpush1.bf16.msra.mxu0 %v4016
        %4905 = vmatprep.subr.bf16.mxu0 %v4019
        %4906 = vmatpush1.bf16.msra.mxu0 %v4018
        %4907 = vmatprep.subr.bf16.mxu0 %v4021
        %4908 = vmatpush1.bf16.msra.mxu0 %v4020
        %4909 = vmatprep.mubr.bf16.mxu0 %v2423
        %4910 = vmatmul.mubr.bf16.gmra.mrb[0].mxu0 %v2421
        %v4911 = vpop.f32.mrb[0].mxu0
        %v4912 = vadd.f32 %v4871, %v4911
        %v4913 = vpop.f32.mrb[0].mxu0
        %v4914 = vadd.f32 %v4873, %v4913
        %v4915 = vpop.f32.mrb[0].mxu0
        %v4916 = vpop.f32.mrb[0].mxu0
        %4917 = vdwg.mxu0
        %4918 = vmatprep.subr.bf16.mxu0 %v4023
        %4919 = vmatpush1.bf16.msra.mxu0 %v4022
        %4920 = vmatprep.subr.bf16.mxu0 %v4025
        %4921 = vmatpush1.bf16.msra.mxu0 %v4024
        %4922 = vmatprep.subr.bf16.mxu0 %v4027
        %4923 = vmatpush1.bf16.msra.mxu0 %v4026
        %4924 = vmatprep.subr.bf16.mxu0 %v4029
        %4925 = vmatpush1.bf16.msra.mxu0 %v4028
        %4926 = vmatprep.subr.bf16.mxu0 0
        %4927 = vmatpush1.bf16.msra.mxu0 0
        %4928 = vmatprep.subr.bf16.mxu0 0
        %4929 = vmatpush1.bf16.msra.mxu0 0
        %4930 = vmatprep.subr.bf16.mxu0 0
        %4931 = vmatpush1.bf16.msra.mxu0 0
        %4932 = vmatprep.subr.bf16.mxu0 0
        %4933 = vmatpush1.bf16.msra.mxu0 0
        %4934 = vmatprep.subr.bf16.mxu0 0
        %4935 = vmatpush1.bf16.msra.mxu0 0
        %4936 = vmatprep.subr.bf16.mxu0 0
        %4937 = vmatpush1.bf16.msra.mxu0 0
        %4938 = vmatprep.subr.bf16.mxu0 0
        %4939 = vmatpush1.bf16.msra.mxu0 0
        %4940 = vmatprep.subr.bf16.mxu0 0
        %4941 = vmatpush1.bf16.msra.mxu0 0
        %4942 = vmatprep.subr.bf16.mxu0 0
        %4943 = vmatpush1.bf16.msra.mxu0 0
        %4944 = vmatprep.subr.bf16.mxu0 0
        %4945 = vmatpush1.bf16.msra.mxu0 0
        %4946 = vmatprep.subr.bf16.mxu0 0
        %4947 = vmatpush1.bf16.msra.mxu0 0
        %4948 = vmatprep.subr.bf16.mxu0 0
        %4949 = vmatpush1.bf16.msra.mxu0 0
        %4950 = vmatprep.mubr.bf16.mxu0 0
        %4951 = vmatmul.mubr.bf16.gmra.mrb[0].mxu0 %v4424
        %v4952 = vpop.f32.mrb[0].mxu0
        %v4953 = vadd.f32 %v4912, %v4952
        %v4954 = vpop.f32.mrb[0].mxu0
        %v4955 = vadd.f32 %v4914, %v4954
        %v4956 = vpop.f32.mrb[0].mxu0
        %v4957 = vpop.f32.mrb[0].mxu0
        %4958 = vdwg.mxu0
        %v4959 = vmax.f32 %v4953, 0.0
        %v4960 = vmax.f32 %v4955, 0.0
        %v4961 = vpack.c.bf16 %v4959, %v4959
        %v4962 = vpack.c.bf16 %v4960, %v4960
        %v4963 = vld [vmem:[%s1858] sm:$0xf]
        %v4964 = vld [vmem:[%s1858 + $0x4] sm:$0xf]
        %v4965 = vld [vmem:[%s1858 + $0x8] sm:$0xf]
        %v4966 = vld [vmem:[%s1858 + $0xc] sm:$0xf]
        %v4967 = vld [vmem:[%s1858 + $0x10] sm:$0xf]
        %v4968 = vld [vmem:[%s1858 + $0x14] sm:$0xf]
        %v4969 = vld [vmem:[%s1858 + $0x18] sm:$0xf]
        %v4970 = vld [vmem:[%s1858 + $0x1c] sm:$0xf]
        %v4971 = vld [vmem:[%s1858 + $0x20] sm:$0xf]
        %v4972 = vld [vmem:[%s1858 + $0x24] sm:$0xf]
        %v4973 = vld [vmem:[%s1858 + $0x28] sm:$0xf]
        %v4974 = vld [vmem:[%s1858 + $0x2c] sm:$0xf]
        %v4975 = vld [vmem:[%s1858 + $0x30] sm:$0xf]
        %v4976 = vld [vmem:[%s1858 + $0x34] sm:$0xf]
        %v4977 = vld [vmem:[%s1858 + $0x38] sm:$0xf]
        %v4978 = vld [vmem:[%s1858 + $0x3c] sm:$0xf]
        %v4979 = vld [vmem:[%s1858 + $0x40] sm:$0xf]
        %v4980 = vld [vmem:[%s1858 + $0x44] sm:$0xf]
        %v4981 = vld [vmem:[%s1858 + $0x48] sm:$0xf]
        %v4982 = vld [vmem:[%s1858 + $0x4c] sm:$0xf]
        %v4983 = vld [vmem:[%s1858 + $0x50] sm:$0xf]
        %v4984 = vld [vmem:[%s1858 + $0x54] sm:$0xf]
        %v4985 = vld [vmem:[%s1858 + $0x58] sm:$0xf]
        %v4986 = vld [vmem:[%s1858 + $0x5c] sm:$0xf]
        %v4987 = vld [vmem:[%s1858 + $0x60] sm:$0xf]
        %v4988 = vld [vmem:[%s1858 + $0x64] sm:$0xf]
        %v4989 = vld [vmem:[%s1858 + $0x68] sm:$0xf]
        %v4990 = vld [vmem:[%s1858 + $0x6c] sm:$0xf]
        %v4991 = vld [vmem:[%s1858 + $0x70] sm:$0xf]
        %v4992 = vld [vmem:[%s1858 + $0x74] sm:$0xf]
        %v4993 = vld [vmem:[%s1858 + $0x78] sm:$0xf]
        %v4994 = vld [vmem:[%s1858 + $0x7c] sm:$0xf]
        %p4995 = scmp.eq.s32.totalorder %s16, 0
        %s4996 = scalar_select %p4995, 1, 0
        %s4997 = scvt.s32.f32 %s4996
        %v4998 = vld [vmem:[%s4] sm:$0x1]
        %v4999 = vstv %s4997
        %v5000 = vmul.f32 %v4999, %v4998
        %v5002 = vlaneseq
        %v5003 = vshrl.u32 %v5002, 7
        %v5004 = vsub.s32 0, %v5003
        %v5005 = vrot.slane %v5000, %v5004
        %v5039 = vunpack.c.l.b16 %v4963
        %v5040 = vunpack.c.l.b16 %v4964
        %v5041 = vunpack.c.l.b16 %v4965
        %v5042 = vunpack.c.l.b16 %v4966
        %v5043 = vunpack.c.l.b16 %v4967
        %v5044 = vunpack.c.l.b16 %v4968
        %v5045 = vunpack.c.l.b16 %v4969
        %v5046 = vunpack.c.l.b16 %v4970
        %v5047 = vunpack.c.l.b16 %v4971
        %v5048 = vunpack.c.l.b16 %v4972
        %v5049 = vunpack.c.l.b16 %v4973
        %v5050 = vunpack.c.l.b16 %v4974
        %v5051 = vunpack.c.l.b16 %v4975
        %v5052 = vunpack.c.l.b16 %v4976
        %v5053 = vunpack.c.l.b16 %v4977
        %v5054 = vunpack.c.l.b16 %v4978
        %v5055 = vunpack.c.l.b16 %v4979
        %v5056 = vunpack.c.l.b16 %v4980
        %v5057 = vunpack.c.l.b16 %v4981
        %v5058 = vunpack.c.l.b16 %v4982
        %v5059 = vunpack.c.l.b16 %v4983
        %v5060 = vunpack.c.l.b16 %v4984
        %v5061 = vunpack.c.l.b16 %v4985
        %v5062 = vunpack.c.l.b16 %v4986
        %v5063 = vunpack.c.l.b16 %v4987
        %v5064 = vunpack.c.l.b16 %v4988
        %v5065 = vunpack.c.l.b16 %v4989
        %v5066 = vunpack.c.l.b16 %v4990
        %v5067 = vunpack.c.l.b16 %v4991
        %v5068 = vunpack.c.l.b16 %v4992
        %v5069 = vunpack.c.l.b16 %v4993
        %v5070 = vunpack.c.l.b16 %v4994
        %v5071 = vpack.c.b16 %v5040, %v5039
        %v5072 = vpack.c.b16 %v5042, %v5041
        %v5073 = vpack.c.b16 %v5044, %v5043
        %v5074 = vpack.c.b16 %v5046, %v5045
        %v5075 = vpack.c.b16 %v5048, %v5047
        %v5076 = vpack.c.b16 %v5050, %v5049
        %v5077 = vpack.c.b16 %v5052, %v5051
        %v5078 = vpack.c.b16 %v5054, %v5053
        %v5079 = vpack.c.b16 %v5056, %v5055
        %v5080 = vpack.c.b16 %v5058, %v5057
        %v5081 = vpack.c.b16 %v5060, %v5059
        %v5082 = vpack.c.b16 %v5062, %v5061
        %v5083 = vpack.c.b16 %v5064, %v5063
        %v5084 = vpack.c.b16 %v5066, %v5065
        %v5085 = vpack.c.b16 %v5068, %v5067
        %v5086 = vpack.c.b16 %v5070, %v5069
        %5103 = vmatprep.subr.bf16.mxu0 0
        %5104 = vmatpush1.bf16.msra.mxu0 %v5071
        %5105 = vmatprep.subr.bf16.mxu0 0
        %5106 = vmatpush1.bf16.msra.mxu0 %v5072
        %5107 = vmatprep.subr.bf16.mxu0 0
        %5108 = vmatpush1.bf16.msra.mxu0 %v5073
        %5109 = vmatprep.subr.bf16.mxu0 0
        %5110 = vmatpush1.bf16.msra.mxu0 %v5074
        %5111 = vmatprep.subr.bf16.mxu0 0
        %5112 = vmatpush1.bf16.msra.mxu0 %v5075
        %5113 = vmatprep.subr.bf16.mxu0 0
        %5114 = vmatpush1.bf16.msra.mxu0 %v5076
        %5115 = vmatprep.subr.bf16.mxu0 0
        %5116 = vmatpush1.bf16.msra.mxu0 %v5077
        %5117 = vmatprep.subr.bf16.mxu0 0
        %5118 = vmatpush1.bf16.msra.mxu0 %v5078
        %5119 = vmatprep.subr.bf16.mxu0 0
        %5120 = vmatpush1.bf16.msra.mxu0 %v5079
        %5121 = vmatprep.subr.bf16.mxu0 0
        %5122 = vmatpush1.bf16.msra.mxu0 %v5080
        %5123 = vmatprep.subr.bf16.mxu0 0
        %5124 = vmatpush1.bf16.msra.mxu0 %v5081
        %5125 = vmatprep.subr.bf16.mxu0 0
        %5126 = vmatpush1.bf16.msra.mxu0 %v5082
        %5127 = vmatprep.subr.bf16.mxu0 0
        %5128 = vmatpush1.bf16.msra.mxu0 %v5083
        %5129 = vmatprep.subr.bf16.mxu0 0
        %5130 = vmatpush1.bf16.msra.mxu0 %v5084
        %5131 = vmatprep.subr.bf16.mxu0 0
        %5132 = vmatpush1.bf16.msra.mxu0 %v5085
        %5133 = vmatprep.subr.bf16.mxu0 0
        %5134 = vmatpush1.bf16.msra.mxu0 %v5086
        %5135 = vmatprep.mubr.bf16.mxu0 %v4962
        %5136 = vmatmul.mubr.bf16.gmra.mrb[0].mxu0 %v4961
        %v5137 = vpop.f32.mrb[0].mxu0
        %v5138 = vadd.f32 %v5005, %v5137
        %v5139 = vpop.f32.mrb[0].mxu0
        %v5140 = vpop.f32.mrb[0].mxu0
        %v5141 = vpop.f32.mrb[0].mxu0
        %5142 = vdwg.mxu0
        %5143 = vst [vmem:[%s1863] sm:$0x3] %v5138
        %p5144 = scmp.lt.s32.totalorder %s16, 1
        %s5145 = scalar_select %p5144, %s16, 1
        %s5146 = smul.addr %s5145, 2
        %s5147 = scalar_lea.vmem %s5, %s5146
        // Predicated region
        $region79: #{nn_vfa_forward.7} parent=73 // pred_check
          %p5148 = pneg %p154
        $region80: #{nn_vfa_forward.7} parent=73 // pred_check_branch
          %5150 = sbr.rel (%p5148) target = $region82
        $region81: #{nn_vfa_forward.7} parent=73 // pred_region
          _
        $region82: #{nn_vfa_forward.7} parent=73 // pred_fallthru
          _
      $region74: #{nn_vfa_forward.7} parent=5 // pred_fallthru
        _
      %p5151 = scmp.le.s32.totalorder 2, %s11
      // Predicated region
      $region83: #{nn_vfa_forward.7} parent=5 // pred_check
        %p5152 = pneg %p5151
      $region84: #{nn_vfa_forward.7} parent=5 // pred_check_branch
        %5154 = sbr.rel (%p5152) target = $region86
      $region85: #{nn_vfa_forward.7} parent=5 // pred_region
        %s5155 = ssub.s32 %s11, 2
        // Predicated region
        $region87: #{nn_vfa_forward.7} parent=85 // pred_check
          %p5156 = pneg %p160
        $region88: #{nn_vfa_forward.7} parent=85 // pred_check_branch
          %5158 = sbr.rel (%p5156) target = $region90
        $region89: #{nn_vfa_forward.7} parent=85 // pred_region
          %p5159 = scmp.lt.s32.totalorder %s17, 1
          %s5160 = scalar_select %p5159, %s17, 1
          %s5161 = smul.addr %s5160, 2
          %s5162 = scalar_lea.vmem %s5, %s5161
        $region90: #{nn_vfa_forward.7} parent=85 // pred_fallthru
          _
      $region86: #{nn_vfa_forward.7} parent=5 // pred_fallthru
        _
    $region6: #{nn_vfa_forward.7} parent=1 // loop_footer
      %s15 = sadd.s32 1, %s11
    $region7: #{nn_vfa_forward.7} parent=1 // loop_footer_branch
      %10 = sbr.rel target = $region3
    $region8: #{nn_vfa_forward.7} parent=1 // loop_exit
      _

</llo_original>
